<compile_context>
chip_gen: v7x
topology: tpu7x:2x2x1
jax: 0.10.0
libtpu: 0.0.40
codegen_flags: <defaults>
</compile_context>

<pallas_src>
import functools

import jax
import jax.numpy as jnp
from jax.experimental import pallas as pl
from jax.experimental.pallas import tpu as pltpu


# ----------------------------------------------------------------------------- #
# Kernels
# ----------------------------------------------------------------------------- #

def _stn_kernel(x_ref, w1_ref, s1_ref, t1_ref, w2_ref, s2_ref, t2_ref,
                wfc_ref, bfc_ref, out_ref, gmax_ref):
    """STNkD: conv+bn+relu x2, running max over N, fc (+identity in bias)."""
    nt = pl.program_id(1)

    @pl.when(nt == 0)
    def _():
        gmax_ref[...] = jnp.full_like(gmax_ref, -jnp.inf)

    x = x_ref[0]                                                   # (tn, Cin) bf16
    h = jnp.dot(x, w1_ref[...], preferred_element_type=jnp.float32)
    h = jnp.maximum(h * s1_ref[...] + t1_ref[...], 0.0)           # (tn, 64) f32
    h = jnp.dot(h.astype(jnp.bfloat16), w2_ref[...],
                preferred_element_type=jnp.float32)
    h = jnp.maximum(h * s2_ref[...] + t2_ref[...], 0.0)           # (tn, 256) f32
    gmax_ref[...] = jnp.maximum(gmax_ref[...],
                                jnp.max(h, axis=0, keepdims=True))

    @pl.when(nt == pl.num_programs(1) - 1)
    def _():
        g = gmax_ref[...]                                          # (1, 256) f32
        out_ref[0] = (jnp.dot(g, wfc_ref[...],
                              preferred_element_type=jnp.float32)
                      + bfc_ref[...])                              # (1, c*c)


def _conv_pb_kernel(x_ref, w_ref, s_ref, t_ref, o_ref):
    """1x1 conv with a per-batch (stn-composed) weight, + folded BN + ReLU."""
    y = jnp.dot(x_ref[0], w_ref[0], preferred_element_type=jnp.float32)
    y = jnp.maximum(y * s_ref[...] + t_ref[...], 0.0)
    o_ref[0] = y.astype(o_ref.dtype)


def _trunk_kernel(h_ref, w3_ref, s3_ref, t3_ref, w4_ref, s4_ref, t4_ref,
                  w5_ref, s5_ref, t5_ref, o_ref, gmax_ref):
    """conv3 (per-batch, stn2-composed) -> conv4 -> conv5 -> running max."""
    nt = pl.program_id(1)

    @pl.when(nt == 0)
    def _():
        gmax_ref[...] = jnp.full_like(gmax_ref, -jnp.inf)

    h = h_ref[0]                                                   # (tn, 64) bf16
    y = jnp.dot(h, w3_ref[0], preferred_element_type=jnp.float32)
    y = jnp.maximum(y * s3_ref[...] + t3_ref[...], 0.0)
    y = jnp.dot(y.astype(jnp.bfloat16), w4_ref[...],
                preferred_element_type=jnp.float32)
    y = jnp.maximum(y * s4_ref[...] + t4_ref[...], 0.0)
    y = jnp.dot(y.astype(jnp.bfloat16), w5_ref[...],
                preferred_element_type=jnp.float32)
    y = jnp.maximum(y * s5_ref[...] + t5_ref[...], 0.0)           # (tn, out_dim)
    gmax_ref[...] = jnp.maximum(gmax_ref[...],
                                jnp.max(y, axis=0, keepdims=True))

    @pl.when(nt == pl.num_programs(1) - 1)
    def _():
        o_ref[0] = gmax_ref[...]


# ----------------------------------------------------------------------------- #
# Wrappers (pallas_call glue)
# ----------------------------------------------------------------------------- #

def _pick_tile(n, max_tile=512):
    """Largest N-tile <= max_tile that divides N and keeps sublane alignment."""
    if n <= max_tile:
        return n
    for t in range(max_tile, 0, -1):
        if n % t == 0 and t % 8 == 0:
            return t
    return n


def stn_transform(x_bf16, p, tile_n):
    """x: (B, N, Cin) bf16  ->  (B, c*c) f32 transform (identity already folded)."""
    B, N, Cin = x_bf16.shape
    cc = p['w3'].shape[1]
    nt = N // tile_n
    out = pl.pallas_call(
        _stn_kernel,
        out_shape=jax.ShapeDtypeStruct((B, 1, cc), jnp.float32),
        grid=(B, nt),
        in_specs=[
            pl.BlockSpec((1, tile_n, Cin), lambda b, n: (b, n, 0)),
            pl.BlockSpec((Cin, 64), lambda b, n: (0, 0)),
            pl.BlockSpec((1, 64), lambda b, n: (0, 0)),
            pl.BlockSpec((1, 64), lambda b, n: (0, 0)),
            pl.BlockSpec((64, 256), lambda b, n: (0, 0)),
            pl.BlockSpec((1, 256), lambda b, n: (0, 0)),
            pl.BlockSpec((1, 256), lambda b, n: (0, 0)),
            pl.BlockSpec((256, cc), lambda b, n: (0, 0)),
            pl.BlockSpec((1, cc), lambda b, n: (0, 0)),
        ],
        out_specs=pl.BlockSpec((1, 1, cc), lambda b, n: (b, 0, 0)),
        scratch_shapes=[pltpu.VMEM((1, 256), jnp.float32)],
        compiler_params=pltpu.CompilerParams(
            dimension_semantics=("parallel", "arbitrary")),
    )(x_bf16,
      p['w1'].astype(jnp.bfloat16), p['s1'], p['t1'],
      p['w2'].astype(jnp.bfloat16), p['s2'], p['t2'],
      p['w3'], p['b3'])
    return out.reshape(B, cc)


def conv_bn_relu_pb(x_bf16, w_eff_bf16, scale, shift, tile_n):
    """Per-batch-weight 1x1 conv + BN + ReLU.  (B,N,Cin) -> (B,N,Cout) bf16."""
    B, N, Cin = x_bf16.shape
    Cout = w_eff_bf16.shape[-1]
    nt = N // tile_n
    return pl.pallas_call(
        _conv_pb_kernel,
        out_shape=jax.ShapeDtypeStruct((B, N, Cout), jnp.bfloat16),
        grid=(B, nt),
        in_specs=[
            pl.BlockSpec((1, tile_n, Cin), lambda b, n: (b, n, 0)),
            pl.BlockSpec((1, Cin, Cout), lambda b, n: (b, 0, 0)),
            pl.BlockSpec((1, Cout), lambda b, n: (0, 0)),
            pl.BlockSpec((1, Cout), lambda b, n: (0, 0)),
        ],
        out_specs=pl.BlockSpec((1, tile_n, Cout), lambda b, n: (b, n, 0)),
        compiler_params=pltpu.CompilerParams(
            dimension_semantics=("parallel", "parallel")),
    )(x_bf16, w_eff_bf16, scale, shift)


def trunk_fused(h_bf16, w3_eff_bf16, s3, t3, w4_bf16, s4, t4,
                w5_bf16, s5, t5, tile_n):
    """conv3(per-batch) -> conv4 -> conv5 -> max over points.  Returns (B, out_dim)."""
    B, N, C = h_bf16.shape
    C4 = w4_bf16.shape[1]
    Cout = w5_bf16.shape[1]
    nt = N // tile_n
    out = pl.pallas_call(
        _trunk_kernel,
        out_shape=jax.ShapeDtypeStruct((B, 1, Cout), jnp.float32),
        grid=(B, nt),
        in_specs=[
            pl.BlockSpec((1, tile_n, C), lambda b, n: (b, n, 0)),
            pl.BlockSpec((1, C, C), lambda b, n: (b, 0, 0)),
            pl.BlockSpec((1, C), lambda b, n: (0, 0)),
            pl.BlockSpec((1, C), lambda b, n: (0, 0)),
            pl.BlockSpec((C, C4), lambda b, n: (0, 0)),
            pl.BlockSpec((1, C4), lambda b, n: (0, 0)),
            pl.BlockSpec((1, C4), lambda b, n: (0, 0)),
            pl.BlockSpec((C4, Cout), lambda b, n: (0, 0)),
            pl.BlockSpec((1, Cout), lambda b, n: (0, 0)),
            pl.BlockSpec((1, Cout), lambda b, n: (0, 0)),
        ],
        out_specs=pl.BlockSpec((1, 1, Cout), lambda b, n: (b, 0, 0)),
        scratch_shapes=[pltpu.VMEM((1, Cout), jnp.float32)],
        compiler_params=pltpu.CompilerParams(
            dimension_semantics=("parallel", "arbitrary")),
    )(h_bf16, w3_eff_bf16, s3, t3, w4_bf16, s4, t4, w5_bf16, s5, t5)
    return out.reshape(B, Cout)


# ----------------------------------------------------------------------------- #
# Deterministic parameter initialization (synthetic; matches module shapes)
# ----------------------------------------------------------------------------- #

def _conv_bn_params(key, cin, cout, eps=1e-5):
    k = jax.random.split(key, 6)
    w = jax.random.normal(k[0], (cin, cout), jnp.float32) / jnp.sqrt(float(cin))
    b = 0.05 * jax.random.normal(k[1], (cout,), jnp.float32)
    gamma = 1.0 + 0.1 * jax.random.normal(k[2], (cout,), jnp.float32)
    beta = 0.1 * jax.random.normal(k[3], (cout,), jnp.float32)
    rmean = 0.1 * jax.random.normal(k[4], (cout,), jnp.float32)
    rvar = 1.0 + 0.1 * jnp.abs(jax.random.normal(k[5], (cout,), jnp.float32))
    scale = gamma / jnp.sqrt(rvar + eps)
    shift = (b - rmean) * scale + beta
    return w, scale.reshape(1, cout), shift.reshape(1, cout)


def _stn_params(key, c):
    # NOTE: no Python-int 'c' stored in the (jit-traced) pytree; c is recovered
    # statically from w3.shape at trace time.
    k1, k2, kw, kb = jax.random.split(key, 4)
    w1, s1, t1 = _conv_bn_params(k1, c, 64)
    w2, s2, t2 = _conv_bn_params(k2, 64, 256)
    w3 = jax.random.normal(kw, (256, c * c), jnp.float32) / 16.0
    b3 = 0.05 * jax.random.normal(kb, (c * c,), jnp.float32)
    # fold the "+ identity" of STNkD into the fc bias
    b3_eff = (b3 + jnp.eye(c, dtype=jnp.float32).reshape(-1)).reshape(1, c * c)
    return dict(w1=w1, s1=s1, t1=t1, w2=w2, s2=s2, t2=t2, w3=w3, b3=b3_eff)


def init_pointnet_params(key, c=4, out_dim=512):
    ks = jax.random.split(key, 6)
    return dict(
        stn1=_stn_params(ks[0], c),
        conv1=_conv_bn_params(ks[1], c, 64),
        stn2=_stn_params(ks[2], 64),
        conv3=_conv_bn_params(ks[3], 64, 64),
        conv4=_conv_bn_params(ks[4], 64, 128),
        conv5=_conv_bn_params(ks[5], 128, out_dim),
    )


# ----------------------------------------------------------------------------- #
# Forward pass
# ----------------------------------------------------------------------------- #

@functools.partial(jax.jit)
def pointnet_feat(x, params):
    # x: (B, N, c) float32 (the PyTorch module receives (B, N, c) and transposes)
    B, N, _ = x.shape
    tile_n = _pick_tile(N)
    xb = x.astype(jnp.bfloat16)

    # ---- STN-1 + conv1 (bmm folded into conv weight) ----
    t1 = stn_transform(xb, params['stn1'], tile_n)           # (B, c*c) f32
    c1 = int(round(t1.shape[1] ** 0.5))                       # static
    stn1 = t1.reshape(B, c1, c1)
    w1, s1, sh1 = params['conv1']
    # torch.bmm(stn, x_ncw) followed by 1x1 conv  ==  x @ (stn^T @ w)  per batch
    w_eff1 = jnp.einsum('bji,jk->bik', stn1, w1)               # (B, c, 64) f32
    h1 = conv_bn_relu_pb(xb, w_eff1.astype(jnp.bfloat16), s1, sh1, tile_n)

    # ---- STN-2 + conv3..conv5 + maxpool, fused trunk ----
    t2 = stn_transform(h1, params['stn2'], tile_n)             # (B, 4096) f32
    stn2 = t2.reshape(B, 64, 64)
    w3, s3, sh3 = params['conv3']
    w_eff3 = jnp.einsum('bji,jk->bik', stn2, w3)               # (B, 64, 64) f32
    w4, s4, sh4 = params['conv4']
    w5, s5, sh5 = params['conv5']
    g = trunk_fused(h1, w_eff3.astype(jnp.bfloat16), s3, sh3,
                    w4.astype(jnp.bfloat16), s4, sh4,
                    w5.astype(jnp.bfloat16), s5, sh5, tile_n)  # (B, out_dim) f32
    return g


if __name__ == "__main__":
    key = jax.random.PRNGKey(0)
    kx, kp = jax.random.split(key)
    B, N, c, out_dim = 2, 16, 4, 512
    x = jax.random.normal(kx, (B, N, c), jnp.float32)
    params = init_pointnet_params(kp, c=c, out_dim=out_dim)

    out = pointnet_feat(x, params)
    out = jax.block_until_ready(out)

    assert out.shape == (B, out_dim), out.shape
    assert bool(jnp.all(jnp.isfinite(out)))
    print("KERNEL_OK")
</pallas_src>

<mosaic_0001>
module attributes {stable_mosaic.version = 11 : i64} {
  func.func @_conv_pb_kernel(%arg0: i32, %arg1: i32, %arg2: memref<1x16x4xbf16, #tpu.memory_space<vmem>>, %arg3: memref<1x4x64xbf16, #tpu.memory_space<vmem>>, %arg4: memref<1x64xf32, #tpu.memory_space<vmem>>, %arg5: memref<1x64xf32, #tpu.memory_space<vmem>>, %arg6: memref<1x16x64xbf16, #tpu.memory_space<vmem>>) attributes {dimension_semantics = [#tpu.dimension_semantics<parallel>, #tpu.dimension_semantics<parallel>], iteration_bounds = array<i64: 2, 1>, scalar_prefetch = 0 : i64, scratch_operands = 0 : i64, tpu.core_type = #tpu.core_type<tc>, window_params = [{transform_indices = @transform_0, window_bounds = array<i64: 1, 16, 4>}, {transform_indices = @transform_1, window_bounds = array<i64: 1, 4, 64>}, {pipeline_mode = #tpu.pipeline_mode<synchronous>, transform_indices = @transform_2, window_bounds = array<i64: 1, 64>}, {pipeline_mode = #tpu.pipeline_mode<synchronous>, transform_indices = @transform_3, window_bounds = array<i64: 1, 64>}, {transform_indices = @transform_4, window_bounds = array<i64: 1, 16, 64>}]} {
    %c0 = arith.constant 0 : index
    %c0_0 = arith.constant 0 : index
    %c0_1 = arith.constant 0 : index
    %0 = vector.load %arg2[%c0, %c0_0, %c0_1] : memref<1x16x4xbf16, #tpu.memory_space<vmem>>, vector<1x16x4xbf16>
    %1 = vector.shape_cast %0 : vector<1x16x4xbf16> to vector<16x4xbf16>
    %c0_2 = arith.constant 0 : index
    %c0_3 = arith.constant 0 : index
    %c0_4 = arith.constant 0 : index
    %2 = vector.load %arg3[%c0_2, %c0_3, %c0_4] : memref<1x4x64xbf16, #tpu.memory_space<vmem>>, vector<1x4x64xbf16>
    %3 = vector.shape_cast %2 : vector<1x4x64xbf16> to vector<4x64xbf16>
    %cst = arith.constant dense<0.000000e+00> : vector<16x64xf32>
    %4 = tpu.matmul %1, %3, %cst {dimension_numbers = #tpu.dot_dimension_numbers<[1], [0], [0], [1], [0, 0, 1, 1], [], []>} : vector<16x4xbf16>, vector<4x64xbf16>, vector<16x64xf32> -> vector<16x64xf32>
    %c0_5 = arith.constant 0 : index
    %c0_6 = arith.constant 0 : index
    %5 = vector.load %arg4[%c0_5, %c0_6] : memref<1x64xf32, #tpu.memory_space<vmem>>, vector<1x64xf32>
    %6 = vector.broadcast %5 : vector<1x64xf32> to vector<16x64xf32>
    %7 = arith.mulf %4, %6 : vector<16x64xf32>
    %c0_7 = arith.constant 0 : index
    %c0_8 = arith.constant 0 : index
    %8 = vector.load %arg5[%c0_7, %c0_8] : memref<1x64xf32, #tpu.memory_space<vmem>>, vector<1x64xf32>
    %9 = vector.broadcast %8 : vector<1x64xf32> to vector<16x64xf32>
    %10 = arith.addf %7, %9 : vector<16x64xf32>
    %cst_9 = arith.constant 0.000000e+00 : f32
    %11 = vector.broadcast %cst_9 : f32 to vector<16x64xf32>
    %12 = arith.maximumf %10, %11 : vector<16x64xf32>
    %13 = arith.truncf %12 : vector<16x64xf32> to vector<16x64xbf16>
    %c0_10 = arith.constant 0 : index
    %c0_11 = arith.constant 0 : index
    %c0_12 = arith.constant 0 : index
    %14 = vector.load %arg6[%c0_10, %c0_11, %c0_12] : memref<1x16x64xbf16, #tpu.memory_space<vmem>>, vector<1x16x64xbf16>
    %15 = vector.shape_cast %14 : vector<1x16x64xbf16> to vector<16x64xbf16>
    %16 = vector.shape_cast %13 : vector<16x64xbf16> to vector<1x16x64xbf16>
    tpu.vector_store %arg6[%c0_10, %c0_11, %c0_12], %16 {strides = array<i32>} : memref<1x16x64xbf16, #tpu.memory_space<vmem>>, vector<1x16x64xbf16>,
    return
  }
  func.func @transform_0(%arg0: i32, %arg1: i32) -> (i32, i32, i32) {
    %c0_i32 = arith.constant 0 : i32
    %c0_i32_0 = arith.constant 0 : i32
    return %arg0, %arg1, %c0_i32 : i32, i32, i32
  }
  func.func @transform_1(%arg0: i32, %arg1: i32) -> (i32, i32, i32) {
    %c0_i32 = arith.constant 0 : i32
    %c0_i32_0 = arith.constant 0 : i32
    %c0_i32_1 = arith.constant 0 : i32
    return %arg0, %c0_i32, %c0_i32_0 : i32, i32, i32
  }
  func.func @transform_2(%arg0: i32, %arg1: i32) -> (i32, i32) {
    %c0_i32 = arith.constant 0 : i32
    %c0_i32_0 = arith.constant 0 : i32
    %c0_i32_1 = arith.constant 0 : i32
    return %c0_i32, %c0_i32_0 : i32, i32
  }
  func.func @transform_3(%arg0: i32, %arg1: i32) -> (i32, i32) {
    %c0_i32 = arith.constant 0 : i32
    %c0_i32_0 = arith.constant 0 : i32
    %c0_i32_1 = arith.constant 0 : i32
    return %c0_i32, %c0_i32_0 : i32, i32
  }
  func.func @transform_4(%arg0: i32, %arg1: i32) -> (i32, i32, i32) {
    %c0_i32 = arith.constant 0 : i32
    %c0_i32_0 = arith.constant 0 : i32
    return %arg0, %arg1, %c0_i32 : i32, i32, i32
  }
}

module attributes {stable_mosaic.version = 11 : i64} {
  func.func @_stn_kernel(%arg0: i32, %arg1: i32, %arg2: memref<1x16x4xbf16, #tpu.memory_space<vmem>>, %arg3: memref<4x64xbf16, #tpu.memory_space<vmem>>, %arg4: memref<1x64xf32, #tpu.memory_space<vmem>>, %arg5: memref<1x64xf32, #tpu.memory_space<vmem>>, %arg6: memref<64x256xbf16, #tpu.memory_space<vmem>>, %arg7: memref<1x256xf32, #tpu.memory_space<vmem>>, %arg8: memref<1x256xf32, #tpu.memory_space<vmem>>, %arg9: memref<256x16xf32, #tpu.memory_space<vmem>>, %arg10: memref<1x16xf32, #tpu.memory_space<vmem>>, %arg11: memref<1x1x16xf32, #tpu.memory_space<vmem>>, %arg12: memref<1x256xf32, #tpu.memory_space<vmem>>) attributes {dimension_semantics = [#tpu.dimension_semantics<parallel>, #tpu.dimension_semantics<arbitrary>], iteration_bounds = array<i64: 2, 1>, scalar_prefetch = 0 : i64, scratch_operands = 1 : i64, tpu.core_type = #tpu.core_type<tc>, window_params = [{transform_indices = @transform_0, window_bounds = array<i64: 1, 16, 4>}, {pipeline_mode = #tpu.pipeline_mode<synchronous>, transform_indices = @transform_1, window_bounds = array<i64: 4, 64>}, {pipeline_mode = #tpu.pipeline_mode<synchronous>, transform_indices = @transform_2, window_bounds = array<i64: 1, 64>}, {pipeline_mode = #tpu.pipeline_mode<synchronous>, transform_indices = @transform_3, window_bounds = array<i64: 1, 64>}, {pipeline_mode = #tpu.pipeline_mode<synchronous>, transform_indices = @transform_4, window_bounds = array<i64: 64, 256>}, {pipeline_mode = #tpu.pipeline_mode<synchronous>, transform_indices = @transform_5, window_bounds = array<i64: 1, 256>}, {pipeline_mode = #tpu.pipeline_mode<synchronous>, transform_indices = @transform_6, window_bounds = array<i64: 1, 256>}, {pipeline_mode = #tpu.pipeline_mode<synchronous>, transform_indices = @transform_7, window_bounds = array<i64: 256, 16>}, {pipeline_mode = #tpu.pipeline_mode<synchronous>, transform_indices = @transform_8, window_bounds = array<i64: 1, 16>}, {transform_indices = @transform_9, window_bounds = array<i64: 1, 1, 16>}]} {
    %c0_i32 = arith.constant 0 : i32
    %0 = arith.cmpi eq, %arg1, %c0_i32 : i32
    %1 = arith.extui %0 : i1 to i32
    %c0_i32_0 = arith.constant 0 : i32
    %2 = arith.cmpi ne, %1, %c0_i32_0 : i32
    scf.if %2 {
      %cst_25 = arith.constant 0xFF800000 : f32
      %34 = vector.broadcast %cst_25 : f32 to vector<1x256xf32>
      %c0_26 = arith.constant 0 : index
      %c0_27 = arith.constant 0 : index
      %35 = vector.load %arg12[%c0_26, %c0_27] : memref<1x256xf32, #tpu.memory_space<vmem>>, vector<1x256xf32>
      tpu.vector_store %arg12[%c0_26, %c0_27], %34 {strides = array<i32>} : memref<1x256xf32, #tpu.memory_space<vmem>>, vector<1x256xf32>,
    } else {
    }
    %c0 = arith.constant 0 : index
    %c0_1 = arith.constant 0 : index
    %c0_2 = arith.constant 0 : index
    %3 = vector.load %arg2[%c0, %c0_1, %c0_2] : memref<1x16x4xbf16, #tpu.memory_space<vmem>>, vector<1x16x4xbf16>
    %4 = vector.shape_cast %3 : vector<1x16x4xbf16> to vector<16x4xbf16>
    %c0_3 = arith.constant 0 : index
    %c0_4 = arith.constant 0 : index
    %5 = vector.load %arg3[%c0_3, %c0_4] : memref<4x64xbf16, #tpu.memory_space<vmem>>, vector<4x64xbf16>
    %cst = arith.constant dense<0.000000e+00> : vector<16x64xf32>
    %6 = tpu.matmul %4, %5, %cst {dimension_numbers = #tpu.dot_dimension_numbers<[1], [0], [0], [1], [0, 0, 1, 1], [], []>} : vector<16x4xbf16>, vector<4x64xbf16>, vector<16x64xf32> -> vector<16x64xf32>
    %c0_5 = arith.constant 0 : index
    %c0_6 = arith.constant 0 : index
    %7 = vector.load %arg4[%c0_5, %c0_6] : memref<1x64xf32, #tpu.memory_space<vmem>>, vector<1x64xf32>
    %8 = vector.broadcast %7 : vector<1x64xf32> to vector<16x64xf32>
    %9 = arith.mulf %6, %8 : vector<16x64xf32>
    %c0_7 = arith.constant 0 : index
    %c0_8 = arith.constant 0 : index
    %10 = vector.load %arg5[%c0_7, %c0_8] : memref<1x64xf32, #tpu.memory_space<vmem>>, vector<1x64xf32>
    %11 = vector.broadcast %10 : vector<1x64xf32> to vector<16x64xf32>
    %12 = arith.addf %9, %11 : vector<16x64xf32>
    %cst_9 = arith.constant 0.000000e+00 : f32
    %13 = vector.broadcast %cst_9 : f32 to vector<16x64xf32>
    %14 = arith.maximumf %12, %13 : vector<16x64xf32>
    %15 = arith.truncf %14 : vector<16x64xf32> to vector<16x64xbf16>
    %c0_10 = arith.constant 0 : index
    %c0_11 = arith.constant 0 : index
    %16 = vector.load %arg6[%c0_10, %c0_11] : memref<64x256xbf16, #tpu.memory_space<vmem>>, vector<64x256xbf16>
    %cst_12 = arith.constant dense<0.000000e+00> : vector<16x256xf32>
    %17 = tpu.matmul %15, %16, %cst_12 {dimension_numbers = #tpu.dot_dimension_numbers<[1], [0], [0], [1], [0, 0, 1, 1], [], []>} : vector<16x64xbf16>, vector<64x256xbf16>, vector<16x256xf32> -> vector<16x256xf32>
    %c0_13 = arith.constant 0 : index
    %c0_14 = arith.constant 0 : index
    %18 = vector.load %arg7[%c0_13, %c0_14] : memref<1x256xf32, #tpu.memory_space<vmem>>, vector<1x256xf32>
    %19 = vector.broadcast %18 : vector<1x256xf32> to vector<16x256xf32>
    %20 = arith.mulf %17, %19 : vector<16x256xf32>
    %c0_15 = arith.constant 0 : index
    %c0_16 = arith.constant 0 : index
    %21 = vector.load %arg8[%c0_15, %c0_16] : memref<1x256xf32, #tpu.memory_space<vmem>>, vector<1x256xf32>
    %22 = vector.broadcast %21 : vector<1x256xf32> to vector<16x256xf32>
    %23 = arith.addf %20, %22 : vector<16x256xf32>
    %cst_17 = arith.constant 0.000000e+00 : f32
    %24 = vector.broadcast %cst_17 : f32 to vector<16x256xf32>
    %25 = arith.maximumf %23, %24 : vector<16x256xf32>
    %c0_18 = arith.constant 0 : index
    %c0_19 = arith.constant 0 : index
    %26 = vector.load %arg12[%c0_18, %c0_19] : memref<1x256xf32, #tpu.memory_space<vmem>>, vector<1x256xf32>
    %cst_20 = arith.constant dense<0xFF800000> : vector<256xf32>
    %27 = vector.multi_reduction <maximumf>, %25, %cst_20 [0] : vector<16x256xf32> to vector<256xf32>
    %28 = vector.shape_cast %27 : vector<256xf32> to vector<1x256xf32>
    %29 = arith.maximumf %26, %28 : vector<1x256xf32>
    %c0_21 = arith.constant 0 : index
    %c0_22 = arith.constant 0 : index
    %30 = vector.load %arg12[%c0_21, %c0_22] : memref<1x256xf32, #tpu.memory_space<vmem>>, vector<1x256xf32>
    tpu.vector_store %arg12[%c0_21, %c0_22], %29 {strides = array<i32>} : memref<1x256xf32, #tpu.memory_space<vmem>>, vector<1x256xf32>,
    %c0_i32_23 = arith.constant 0 : i32
    %31 = arith.cmpi eq, %arg1, %c0_i32_23 : i32
    %32 = arith.extui %31 : i1 to i32
    %c0_i32_24 = arith.constant 0 : i32
    %33 = arith.cmpi ne, %32, %c0_i32_24 : i32
    scf.if %33 {
      %c0_25 = arith.constant 0 : index
      %c0_26 = arith.constant 0 : index
      %34 = vector.load %arg12[%c0_25, %c0_26] : memref<1x256xf32, #tpu.memory_space<vmem>>, vector<1x256xf32>
      %c0_27 = arith.constant 0 : index
      %c0_28 = arith.constant 0 : index
      %35 = vector.load %arg9[%c0_27, %c0_28] : memref<256x16xf32, #tpu.memory_space<vmem>>, vector<256x16xf32>
      %cst_29 = arith.constant dense<0.000000e+00> : vector<1x16xf32>
      %36 = tpu.matmul %34, %35, %cst_29 {dimension_numbers = #tpu.dot_dimension_numbers<[1], [0], [0], [1], [0, 0, 1, 1], [], []>} : vector<1x256xf32>, vector<256x16xf32>, vector<1x16xf32> -> vector<1x16xf32>
      %c0_30 = arith.constant 0 : index
      %c0_31 = arith.constant 0 : index
      %37 = vector.load %arg10[%c0_30, %c0_31] : memref<1x16xf32, #tpu.memory_space<vmem>>, vector<1x16xf32>
      %38 = arith.addf %36, %37 : vector<1x16xf32>
      %c0_32 = arith.constant 0 : index
      %c0_33 = arith.constant 0 : index
      %c0_34 = arith.constant 0 : index
      %39 = vector.load %arg11[%c0_32, %c0_33, %c0_34] : memref<1x1x16xf32, #tpu.memory_space<vmem>>, vector<1x1x16xf32>
      %40 = vector.shape_cast %39 : vector<1x1x16xf32> to vector<1x16xf32>
      %41 = vector.shape_cast %38 : vector<1x16xf32> to vector<1x1x16xf32>
      tpu.vector_store %arg11[%c0_32, %c0_33, %c0_34], %41 {strides = array<i32>} : memref<1x1x16xf32, #tpu.memory_space<vmem>>, vector<1x1x16xf32>,
    } else {
    }
    return
  }
  func.func @transform_0(%arg0: i32, %arg1: i32) -> (i32, i32, i32) {
    %c0_i32 = arith.constant 0 : i32
    %c0_i32_0 = arith.constant 0 : i32
    return %arg0, %arg1, %c0_i32 : i32, i32, i32
  }
  func.func @transform_1(%arg0: i32, %arg1: i32) -> (i32, i32) {
    %c0_i32 = arith.constant 0 : i32
    %c0_i32_0 = arith.constant 0 : i32
    %c0_i32_1 = arith.constant 0 : i32
    return %c0_i32, %c0_i32_0 : i32, i32
  }
  func.func @transform_2(%arg0: i32, %arg1: i32) -> (i32, i32) {
    %c0_i32 = arith.constant 0 : i32
    %c0_i32_0 = arith.constant 0 : i32
    %c0_i32_1 = arith.constant 0 : i32
    return %c0_i32, %c0_i32_0 : i32, i32
  }
  func.func @transform_3(%arg0: i32, %arg1: i32) -> (i32, i32) {
    %c0_i32 = arith.constant 0 : i32
    %c0_i32_0 = arith.constant 0 : i32
    %c0_i32_1 = arith.constant 0 : i32
    return %c0_i32, %c0_i32_0 : i32, i32
  }
  func.func @transform_4(%arg0: i32, %arg1: i32) -> (i32, i32) {
    %c0_i32 = arith.constant 0 : i32
    %c0_i32_0 = arith.constant 0 : i32
    %c0_i32_1 = arith.constant 0 : i32
    return %c0_i32, %c0_i32_0 : i32, i32
  }
  func.func @transform_5(%arg0: i32, %arg1: i32) -> (i32, i32) {
    %c0_i32 = arith.constant 0 : i32
    %c0_i32_0 = arith.constant 0 : i32
    %c0_i32_1 = arith.constant 0 : i32
    return %c0_i32, %c0_i32_0 : i32, i32
  }
  func.func @transform_6(%arg0: i32, %arg1: i32) -> (i32, i32) {
    %c0_i32 = arith.constant 0 : i32
    %c0_i32_0 = arith.constant 0 : i32
    %c0_i32_1 = arith.constant 0 : i32
    return %c0_i32, %c0_i32_0 : i32, i32
  }
  func.func @transform_7(%arg0: i32, %arg1: i32) -> (i32, i32) {
    %c0_i32 = arith.constant 0 : i32
    %c0_i32_0 = arith.constant 0 : i32
    %c0_i32_1 = arith.constant 0 : i32
    return %c0_i32, %c0_i32_0 : i32, i32
  }
  func.func @transform_8(%arg0: i32, %arg1: i32) -> (i32, i32) {
    %c0_i32 = arith.constant 0 : i32
    %c0_i32_0 = arith.constant 0 : i32
    %c0_i32_1 = arith.constant 0 : i32
    return %c0_i32, %c0_i32_0 : i32, i32
  }
  func.func @transform_9(%arg0: i32, %arg1: i32) -> (i32, i32, i32) {
    %c0_i32 = arith.constant 0 : i32
    %c0_i32_0 = arith.constant 0 : i32
    %c0_i32_1 = arith.constant 0 : i32
    return %arg0, %c0_i32, %c0_i32_0 : i32, i32, i32
  }
}

module attributes {stable_mosaic.version = 11 : i64} {
  func.func @_stn_kernel(%arg0: i32, %arg1: i32, %arg2: memref<1x16x64xbf16, #tpu.memory_space<vmem>>, %arg3: memref<64x64xbf16, #tpu.memory_space<vmem>>, %arg4: memref<1x64xf32, #tpu.memory_space<vmem>>, %arg5: memref<1x64xf32, #tpu.memory_space<vmem>>, %arg6: memref<64x256xbf16, #tpu.memory_space<vmem>>, %arg7: memref<1x256xf32, #tpu.memory_space<vmem>>, %arg8: memref<1x256xf32, #tpu.memory_space<vmem>>, %arg9: memref<256x4096xf32, #tpu.memory_space<vmem>>, %arg10: memref<1x4096xf32, #tpu.memory_space<vmem>>, %arg11: memref<1x1x4096xf32, #tpu.memory_space<vmem>>, %arg12: memref<1x256xf32, #tpu.memory_space<vmem>>) attributes {dimension_semantics = [#tpu.dimension_semantics<parallel>, #tpu.dimension_semantics<arbitrary>], iteration_bounds = array<i64: 2, 1>, scalar_prefetch = 0 : i64, scratch_operands = 1 : i64, tpu.core_type = #tpu.core_type<tc>, window_params = [{transform_indices = @transform_0, window_bounds = array<i64: 1, 16, 64>}, {pipeline_mode = #tpu.pipeline_mode<synchronous>, transform_indices = @transform_1, window_bounds = array<i64: 64, 64>}, {pipeline_mode = #tpu.pipeline_mode<synchronous>, transform_indices = @transform_2, window_bounds = array<i64: 1, 64>}, {pipeline_mode = #tpu.pipeline_mode<synchronous>, transform_indices = @transform_3, window_bounds = array<i64: 1, 64>}, {pipeline_mode = #tpu.pipeline_mode<synchronous>, transform_indices = @transform_4, window_bounds = array<i64: 64, 256>}, {pipeline_mode = #tpu.pipeline_mode<synchronous>, transform_indices = @transform_5, window_bounds = array<i64: 1, 256>}, {pipeline_mode = #tpu.pipeline_mode<synchronous>, transform_indices = @transform_6, window_bounds = array<i64: 1, 256>}, {pipeline_mode = #tpu.pipeline_mode<synchronous>, transform_indices = @transform_7, window_bounds = array<i64: 256, 4096>}, {pipeline_mode = #tpu.pipeline_mode<synchronous>, transform_indices = @transform_8, window_bounds = array<i64: 1, 4096>}, {transform_indices = @transform_9, window_bounds = array<i64: 1, 1, 4096>}]} {
    %c0_i32 = arith.constant 0 : i32
    %0 = arith.cmpi eq, %arg1, %c0_i32 : i32
    %1 = arith.extui %0 : i1 to i32
    %c0_i32_0 = arith.constant 0 : i32
    %2 = arith.cmpi ne, %1, %c0_i32_0 : i32
    scf.if %2 {
      %cst_25 = arith.constant 0xFF800000 : f32
      %34 = vector.broadcast %cst_25 : f32 to vector<1x256xf32>
      %c0_26 = arith.constant 0 : index
      %c0_27 = arith.constant 0 : index
      %35 = vector.load %arg12[%c0_26, %c0_27] : memref<1x256xf32, #tpu.memory_space<vmem>>, vector<1x256xf32>
      tpu.vector_store %arg12[%c0_26, %c0_27], %34 {strides = array<i32>} : memref<1x256xf32, #tpu.memory_space<vmem>>, vector<1x256xf32>,
    } else {
    }
    %c0 = arith.constant 0 : index
    %c0_1 = arith.constant 0 : index
    %c0_2 = arith.constant 0 : index
    %3 = vector.load %arg2[%c0, %c0_1, %c0_2] : memref<1x16x64xbf16, #tpu.memory_space<vmem>>, vector<1x16x64xbf16>
    %4 = vector.shape_cast %3 : vector<1x16x64xbf16> to vector<16x64xbf16>
    %c0_3 = arith.constant 0 : index
    %c0_4 = arith.constant 0 : index
    %5 = vector.load %arg3[%c0_3, %c0_4] : memref<64x64xbf16, #tpu.memory_space<vmem>>, vector<64x64xbf16>
    %cst = arith.constant dense<0.000000e+00> : vector<16x64xf32>
    %6 = tpu.matmul %4, %5, %cst {dimension_numbers = #tpu.dot_dimension_numbers<[1], [0], [0], [1], [0, 0, 1, 1], [], []>} : vector<16x64xbf16>, vector<64x64xbf16>, vector<16x64xf32> -> vector<16x64xf32>
    %c0_5 = arith.constant 0 : index
    %c0_6 = arith.constant 0 : index
    %7 = vector.load %arg4[%c0_5, %c0_6] : memref<1x64xf32, #tpu.memory_space<vmem>>, vector<1x64xf32>
    %8 = vector.broadcast %7 : vector<1x64xf32> to vector<16x64xf32>
    %9 = arith.mulf %6, %8 : vector<16x64xf32>
    %c0_7 = arith.constant 0 : index
    %c0_8 = arith.constant 0 : index
    %10 = vector.load %arg5[%c0_7, %c0_8] : memref<1x64xf32, #tpu.memory_space<vmem>>, vector<1x64xf32>
    %11 = vector.broadcast %10 : vector<1x64xf32> to vector<16x64xf32>
    %12 = arith.addf %9, %11 : vector<16x64xf32>
    %cst_9 = arith.constant 0.000000e+00 : f32
    %13 = vector.broadcast %cst_9 : f32 to vector<16x64xf32>
    %14 = arith.maximumf %12, %13 : vector<16x64xf32>
    %15 = arith.truncf %14 : vector<16x64xf32> to vector<16x64xbf16>
    %c0_10 = arith.constant 0 : index
    %c0_11 = arith.constant 0 : index
    %16 = vector.load %arg6[%c0_10, %c0_11] : memref<64x256xbf16, #tpu.memory_space<vmem>>, vector<64x256xbf16>
    %cst_12 = arith.constant dense<0.000000e+00> : vector<16x256xf32>
    %17 = tpu.matmul %15, %16, %cst_12 {dimension_numbers = #tpu.dot_dimension_numbers<[1], [0], [0], [1], [0, 0, 1, 1], [], []>} : vector<16x64xbf16>, vector<64x256xbf16>, vector<16x256xf32> -> vector<16x256xf32>
    %c0_13 = arith.constant 0 : index
    %c0_14 = arith.constant 0 : index
    %18 = vector.load %arg7[%c0_13, %c0_14] : memref<1x256xf32, #tpu.memory_space<vmem>>, vector<1x256xf32>
    %19 = vector.broadcast %18 : vector<1x256xf32> to vector<16x256xf32>
    %20 = arith.mulf %17, %19 : vector<16x256xf32>
    %c0_15 = arith.constant 0 : index
    %c0_16 = arith.constant 0 : index
    %21 = vector.load %arg8[%c0_15, %c0_16] : memref<1x256xf32, #tpu.memory_space<vmem>>, vector<1x256xf32>
    %22 = vector.broadcast %21 : vector<1x256xf32> to vector<16x256xf32>
    %23 = arith.addf %20, %22 : vector<16x256xf32>
    %cst_17 = arith.constant 0.000000e+00 : f32
    %24 = vector.broadcast %cst_17 : f32 to vector<16x256xf32>
    %25 = arith.maximumf %23, %24 : vector<16x256xf32>
    %c0_18 = arith.constant 0 : index
    %c0_19 = arith.constant 0 : index
    %26 = vector.load %arg12[%c0_18, %c0_19] : memref<1x256xf32, #tpu.memory_space<vmem>>, vector<1x256xf32>
    %cst_20 = arith.constant dense<0xFF800000> : vector<256xf32>
    %27 = vector.multi_reduction <maximumf>, %25, %cst_20 [0] : vector<16x256xf32> to vector<256xf32>
    %28 = vector.shape_cast %27 : vector<256xf32> to vector<1x256xf32>
    %29 = arith.maximumf %26, %28 : vector<1x256xf32>
    %c0_21 = arith.constant 0 : index
    %c0_22 = arith.constant 0 : index
    %30 = vector.load %arg12[%c0_21, %c0_22] : memref<1x256xf32, #tpu.memory_space<vmem>>, vector<1x256xf32>
    tpu.vector_store %arg12[%c0_21, %c0_22], %29 {strides = array<i32>} : memref<1x256xf32, #tpu.memory_space<vmem>>, vector<1x256xf32>,
    %c0_i32_23 = arith.constant 0 : i32
    %31 = arith.cmpi eq, %arg1, %c0_i32_23 : i32
    %32 = arith.extui %31 : i1 to i32
    %c0_i32_24 = arith.constant 0 : i32
    %33 = arith.cmpi ne, %32, %c0_i32_24 : i32
    scf.if %33 {
      %c0_25 = arith.constant 0 : index
      %c0_26 = arith.constant 0 : index
      %34 = vector.load %arg12[%c0_25, %c0_26] : memref<1x256xf32, #tpu.memory_space<vmem>>, vector<1x256xf32>
      %c0_27 = arith.constant 0 : index
      %c0_28 = arith.constant 0 : index
      %35 = vector.load %arg9[%c0_27, %c0_28] : memref<256x4096xf32, #tpu.memory_space<vmem>>, vector<256x4096xf32>
      %cst_29 = arith.constant dense<0.000000e+00> : vector<1x4096xf32>
      %36 = tpu.matmul %34, %35, %cst_29 {dimension_numbers = #tpu.dot_dimension_numbers<[1], [0], [0], [1], [0, 0, 1, 1], [], []>} : vector<1x256xf32>, vector<256x4096xf32>, vector<1x4096xf32> -> vector<1x4096xf32>
      %c0_30 = arith.constant 0 : index
      %c0_31 = arith.constant 0 : index
      %37 = vector.load %arg10[%c0_30, %c0_31] : memref<1x4096xf32, #tpu.memory_space<vmem>>, vector<1x4096xf32>
      %38 = arith.addf %36, %37 : vector<1x4096xf32>
      %c0_32 = arith.constant 0 : index
      %c0_33 = arith.constant 0 : index
      %c0_34 = arith.constant 0 : index
      %39 = vector.load %arg11[%c0_32, %c0_33, %c0_34] : memref<1x1x4096xf32, #tpu.memory_space<vmem>>, vector<1x1x4096xf32>
      %40 = vector.shape_cast %39 : vector<1x1x4096xf32> to vector<1x4096xf32>
      %41 = vector.shape_cast %38 : vector<1x4096xf32> to vector<1x1x4096xf32>
      tpu.vector_store %arg11[%c0_32, %c0_33, %c0_34], %41 {strides = array<i32>} : memref<1x1x4096xf32, #tpu.memory_space<vmem>>, vector<1x1x4096xf32>,
    } else {
    }
    return
  }
  func.func @transform_0(%arg0: i32, %arg1: i32) -> (i32, i32, i32) {
    %c0_i32 = arith.constant 0 : i32
    %c0_i32_0 = arith.constant 0 : i32
    return %arg0, %arg1, %c0_i32 : i32, i32, i32
  }
  func.func @transform_1(%arg0: i32, %arg1: i32) -> (i32, i32) {
    %c0_i32 = arith.constant 0 : i32
    %c0_i32_0 = arith.constant 0 : i32
    %c0_i32_1 = arith.constant 0 : i32
    return %c0_i32, %c0_i32_0 : i32, i32
  }
  func.func @transform_2(%arg0: i32, %arg1: i32) -> (i32, i32) {
    %c0_i32 = arith.constant 0 : i32
    %c0_i32_0 = arith.constant 0 : i32
    %c0_i32_1 = arith.constant 0 : i32
    return %c0_i32, %c0_i32_0 : i32, i32
  }
  func.func @transform_3(%arg0: i32, %arg1: i32) -> (i32, i32) {
    %c0_i32 = arith.constant 0 : i32
    %c0_i32_0 = arith.constant 0 : i32
    %c0_i32_1 = arith.constant 0 : i32
    return %c0_i32, %c0_i32_0 : i32, i32
  }
  func.func @transform_4(%arg0: i32, %arg1: i32) -> (i32, i32) {
    %c0_i32 = arith.constant 0 : i32
    %c0_i32_0 = arith.constant 0 : i32
    %c0_i32_1 = arith.constant 0 : i32
    return %c0_i32, %c0_i32_0 : i32, i32
  }
  func.func @transform_5(%arg0: i32, %arg1: i32) -> (i32, i32) {
    %c0_i32 = arith.constant 0 : i32
    %c0_i32_0 = arith.constant 0 : i32
    %c0_i32_1 = arith.constant 0 : i32
    return %c0_i32, %c0_i32_0 : i32, i32
  }
  func.func @transform_6(%arg0: i32, %arg1: i32) -> (i32, i32) {
    %c0_i32 = arith.constant 0 : i32
    %c0_i32_0 = arith.constant 0 : i32
    %c0_i32_1 = arith.constant 0 : i32
    return %c0_i32, %c0_i32_0 : i32, i32
  }
  func.func @transform_7(%arg0: i32, %arg1: i32) -> (i32, i32) {
    %c0_i32 = arith.constant 0 : i32
    %c0_i32_0 = arith.constant 0 : i32
    %c0_i32_1 = arith.constant 0 : i32
    return %c0_i32, %c0_i32_0 : i32, i32
  }
  func.func @transform_8(%arg0: i32, %arg1: i32) -> (i32, i32) {
    %c0_i32 = arith.constant 0 : i32
    %c0_i32_0 = arith.constant 0 : i32
    %c0_i32_1 = arith.constant 0 : i32
    return %c0_i32, %c0_i32_0 : i32, i32
  }
  func.func @transform_9(%arg0: i32, %arg1: i32) -> (i32, i32, i32) {
    %c0_i32 = arith.constant 0 : i32
    %c0_i32_0 = arith.constant 0 : i32
    %c0_i32_1 = arith.constant 0 : i32
    return %arg0, %c0_i32, %c0_i32_0 : i32, i32, i32
  }
}

module attributes {stable_mosaic.version = 11 : i64} {
  func.func @_trunk_kernel(%arg0: i32, %arg1: i32, %arg2: memref<1x16x64xbf16, #tpu.memory_space<vmem>>, %arg3: memref<1x64x64xbf16, #tpu.memory_space<vmem>>, %arg4: memref<1x64xf32, #tpu.memory_space<vmem>>, %arg5: memref<1x64xf32, #tpu.memory_space<vmem>>, %arg6: memref<64x128xbf16, #tpu.memory_space<vmem>>, %arg7: memref<1x128xf32, #tpu.memory_space<vmem>>, %arg8: memref<1x128xf32, #tpu.memory_space<vmem>>, %arg9: memref<128x512xbf16, #tpu.memory_space<vmem>>, %arg10: memref<1x512xf32, #tpu.memory_space<vmem>>, %arg11: memref<1x512xf32, #tpu.memory_space<vmem>>, %arg12: memref<1x1x512xf32, #tpu.memory_space<vmem>>, %arg13: memref<1x512xf32, #tpu.memory_space<vmem>>) attributes {dimension_semantics = [#tpu.dimension_semantics<parallel>, #tpu.dimension_semantics<arbitrary>], iteration_bounds = array<i64: 2, 1>, scalar_prefetch = 0 : i64, scratch_operands = 1 : i64, tpu.core_type = #tpu.core_type<tc>, window_params = [{transform_indices = @transform_0, window_bounds = array<i64: 1, 16, 64>}, {transform_indices = @transform_1, window_bounds = array<i64: 1, 64, 64>}, {pipeline_mode = #tpu.pipeline_mode<synchronous>, transform_indices = @transform_2, window_bounds = array<i64: 1, 64>}, {pipeline_mode = #tpu.pipeline_mode<synchronous>, transform_indices = @transform_3, window_bounds = array<i64: 1, 64>}, {pipeline_mode = #tpu.pipeline_mode<synchronous>, transform_indices = @transform_4, window_bounds = array<i64: 64, 128>}, {pipeline_mode = #tpu.pipeline_mode<synchronous>, transform_indices = @transform_5, window_bounds = array<i64: 1, 128>}, {pipeline_mode = #tpu.pipeline_mode<synchronous>, transform_indices = @transform_6, window_bounds = array<i64: 1, 128>}, {pipeline_mode = #tpu.pipeline_mode<synchronous>, transform_indices = @transform_7, window_bounds = array<i64: 128, 512>}, {pipeline_mode = #tpu.pipeline_mode<synchronous>, transform_indices = @transform_8, window_bounds = array<i64: 1, 512>}, {pipeline_mode = #tpu.pipeline_mode<synchronous>, transform_indices = @transform_9, window_bounds = array<i64: 1, 512>}, {transform_indices = @transform_10, window_bounds = array<i64: 1, 1, 512>}]} {
    %c0_i32 = arith.constant 0 : i32
    %0 = arith.cmpi eq, %arg1, %c0_i32 : i32
    %1 = arith.extui %0 : i1 to i32
    %c0_i32_0 = arith.constant 0 : i32
    %2 = arith.cmpi ne, %1, %c0_i32_0 : i32
    scf.if %2 {
      %cst_34 = arith.constant 0xFF800000 : f32
      %46 = vector.broadcast %cst_34 : f32 to vector<1x512xf32>
      %c0_35 = arith.constant 0 : index
      %c0_36 = arith.constant 0 : index
      %47 = vector.load %arg13[%c0_35, %c0_36] : memref<1x512xf32, #tpu.memory_space<vmem>>, vector<1x512xf32>
      tpu.vector_store %arg13[%c0_35, %c0_36], %46 {strides = array<i32>} : memref<1x512xf32, #tpu.memory_space<vmem>>, vector<1x512xf32>,
    } else {
    }
    %c0 = arith.constant 0 : index
    %c0_1 = arith.constant 0 : index
    %c0_2 = arith.constant 0 : index
    %3 = vector.load %arg2[%c0, %c0_1, %c0_2] : memref<1x16x64xbf16, #tpu.memory_space<vmem>>, vector<1x16x64xbf16>
    %4 = vector.shape_cast %3 : vector<1x16x64xbf16> to vector<16x64xbf16>
    %c0_3 = arith.constant 0 : index
    %c0_4 = arith.constant 0 : index
    %c0_5 = arith.constant 0 : index
    %5 = vector.load %arg3[%c0_3, %c0_4, %c0_5] : memref<1x64x64xbf16, #tpu.memory_space<vmem>>, vector<1x64x64xbf16>
    %6 = vector.shape_cast %5 : vector<1x64x64xbf16> to vector<64x64xbf16>
    %cst = arith.constant dense<0.000000e+00> : vector<16x64xf32>
    %7 = tpu.matmul %4, %6, %cst {dimension_numbers = #tpu.dot_dimension_numbers<[1], [0], [0], [1], [0, 0, 1, 1], [], []>} : vector<16x64xbf16>, vector<64x64xbf16>, vector<16x64xf32> -> vector<16x64xf32>
    %c0_6 = arith.constant 0 : index
    %c0_7 = arith.constant 0 : index
    %8 = vector.load %arg4[%c0_6, %c0_7] : memref<1x64xf32, #tpu.memory_space<vmem>>, vector<1x64xf32>
    %9 = vector.broadcast %8 : vector<1x64xf32> to vector<16x64xf32>
    %10 = arith.mulf %7, %9 : vector<16x64xf32>
    %c0_8 = arith.constant 0 : index
    %c0_9 = arith.constant 0 : index
    %11 = vector.load %arg5[%c0_8, %c0_9] : memref<1x64xf32, #tpu.memory_space<vmem>>, vector<1x64xf32>
    %12 = vector.broadcast %11 : vector<1x64xf32> to vector<16x64xf32>
    %13 = arith.addf %10, %12 : vector<16x64xf32>
    %cst_10 = arith.constant 0.000000e+00 : f32
    %14 = vector.broadcast %cst_10 : f32 to vector<16x64xf32>
    %15 = arith.maximumf %13, %14 : vector<16x64xf32>
    %16 = arith.truncf %15 : vector<16x64xf32> to vector<16x64xbf16>
    %c0_11 = arith.constant 0 : index
    %c0_12 = arith.constant 0 : index
    %17 = vector.load %arg6[%c0_11, %c0_12] : memref<64x128xbf16, #tpu.memory_space<vmem>>, vector<64x128xbf16>
    %cst_13 = arith.constant dense<0.000000e+00> : vector<16x128xf32>
    %18 = tpu.matmul %16, %17, %cst_13 {dimension_numbers = #tpu.dot_dimension_numbers<[1], [0], [0], [1], [0, 0, 1, 1], [], []>} : vector<16x64xbf16>, vector<64x128xbf16>, vector<16x128xf32> -> vector<16x128xf32>
    %c0_14 = arith.constant 0 : index
    %c0_15 = arith.constant 0 : index
    %19 = vector.load %arg7[%c0_14, %c0_15] : memref<1x128xf32, #tpu.memory_space<vmem>>, vector<1x128xf32>
    %20 = vector.broadcast %19 : vector<1x128xf32> to vector<16x128xf32>
    %21 = arith.mulf %18, %20 : vector<16x128xf32>
    %c0_16 = arith.constant 0 : index
    %c0_17 = arith.constant 0 : index
    %22 = vector.load %arg8[%c0_16, %c0_17] : memref<1x128xf32, #tpu.memory_space<vmem>>, vector<1x128xf32>
    %23 = vector.broadcast %22 : vector<1x128xf32> to vector<16x128xf32>
    %24 = arith.addf %21, %23 : vector<16x128xf32>
    %cst_18 = arith.constant 0.000000e+00 : f32
    %25 = vector.broadcast %cst_18 : f32 to vector<16x128xf32>
    %26 = arith.maximumf %24, %25 : vector<16x128xf32>
    %27 = arith.truncf %26 : vector<16x128xf32> to vector<16x128xbf16>
    %c0_19 = arith.constant 0 : index
    %c0_20 = arith.constant 0 : index
    %28 = vector.load %arg9[%c0_19, %c0_20] : memref<128x512xbf16, #tpu.memory_space<vmem>>, vector<128x512xbf16>
    %cst_21 = arith.constant dense<0.000000e+00> : vector<16x512xf32>
    %29 = tpu.matmul %27, %28, %cst_21 {dimension_numbers = #tpu.dot_dimension_numbers<[1], [0], [0], [1], [0, 0, 1, 1], [], []>} : vector<16x128xbf16>, vector<128x512xbf16>, vector<16x512xf32> -> vector<16x512xf32>
    %c0_22 = arith.constant 0 : index
    %c0_23 = arith.constant 0 : index
    %30 = vector.load %arg10[%c0_22, %c0_23] : memref<1x512xf32, #tpu.memory_space<vmem>>, vector<1x512xf32>
    %31 = vector.broadcast %30 : vector<1x512xf32> to vector<16x512xf32>
    %32 = arith.mulf %29, %31 : vector<16x512xf32>
    %c0_24 = arith.constant 0 : index
    %c0_25 = arith.constant 0 : index
    %33 = vector.load %arg11[%c0_24, %c0_25] : memref<1x512xf32, #tpu.memory_space<vmem>>, vector<1x512xf32>
    %34 = vector.broadcast %33 : vector<1x512xf32> to vector<16x512xf32>
    %35 = arith.addf %32, %34 : vector<16x512xf32>
    %cst_26 = arith.constant 0.000000e+00 : f32
    %36 = vector.broadcast %cst_26 : f32 to vector<16x512xf32>
    %37 = arith.maximumf %35, %36 : vector<16x512xf32>
    %c0_27 = arith.constant 0 : index
    %c0_28 = arith.constant 0 : index
    %38 = vector.load %arg13[%c0_27, %c0_28] : memref<1x512xf32, #tpu.memory_space<vmem>>, vector<1x512xf32>
    %cst_29 = arith.constant dense<0xFF800000> : vector<512xf32>
    %39 = vector.multi_reduction <maximumf>, %37, %cst_29 [0] : vector<16x512xf32> to vector<512xf32>
    %40 = vector.shape_cast %39 : vector<512xf32> to vector<1x512xf32>
    %41 = arith.maximumf %38, %40 : vector<1x512xf32>
    %c0_30 = arith.constant 0 : index
    %c0_31 = arith.constant 0 : index
    %42 = vector.load %arg13[%c0_30, %c0_31] : memref<1x512xf32, #tpu.memory_space<vmem>>, vector<1x512xf32>
    tpu.vector_store %arg13[%c0_30, %c0_31], %41 {strides = array<i32>} : memref<1x512xf32, #tpu.memory_space<vmem>>, vector<1x512xf32>,
    %c0_i32_32 = arith.constant 0 : i32
    %43 = arith.cmpi eq, %arg1, %c0_i32_32 : i32
    %44 = arith.extui %43 : i1 to i32
    %c0_i32_33 = arith.constant 0 : i32
    %45 = arith.cmpi ne, %44, %c0_i32_33 : i32
    scf.if %45 {
      %c0_34 = arith.constant 0 : index
      %c0_35 = arith.constant 0 : index
      %46 = vector.load %arg13[%c0_34, %c0_35] : memref<1x512xf32, #tpu.memory_space<vmem>>, vector<1x512xf32>
      %c0_36 = arith.constant 0 : index
      %c0_37 = arith.constant 0 : index
      %c0_38 = arith.constant 0 : index
      %47 = vector.load %arg12[%c0_36, %c0_37, %c0_38] : memref<1x1x512xf32, #tpu.memory_space<vmem>>, vector<1x1x512xf32>
      %48 = vector.shape_cast %47 : vector<1x1x512xf32> to vector<1x512xf32>
      %49 = vector.shape_cast %46 : vector<1x512xf32> to vector<1x1x512xf32>
      tpu.vector_store %arg12[%c0_36, %c0_37, %c0_38], %49 {strides = array<i32>} : memref<1x1x512xf32, #tpu.memory_space<vmem>>, vector<1x1x512xf32>,
    } else {
    }
    return
  }
  func.func @transform_0(%arg0: i32, %arg1: i32) -> (i32, i32, i32) {
    %c0_i32 = arith.constant 0 : i32
    %c0_i32_0 = arith.constant 0 : i32
    return %arg0, %arg1, %c0_i32 : i32, i32, i32
  }
  func.func @transform_1(%arg0: i32, %arg1: i32) -> (i32, i32, i32) {
    %c0_i32 = arith.constant 0 : i32
    %c0_i32_0 = arith.constant 0 : i32
    %c0_i32_1 = arith.constant 0 : i32
    return %arg0, %c0_i32, %c0_i32_0 : i32, i32, i32
  }
  func.func @transform_2(%arg0: i32, %arg1: i32) -> (i32, i32) {
    %c0_i32 = arith.constant 0 : i32
    %c0_i32_0 = arith.constant 0 : i32
    %c0_i32_1 = arith.constant 0 : i32
    return %c0_i32, %c0_i32_0 : i32, i32
  }
  func.func @transform_3(%arg0: i32, %arg1: i32) -> (i32, i32) {
    %c0_i32 = arith.constant 0 : i32
    %c0_i32_0 = arith.constant 0 : i32
    %c0_i32_1 = arith.constant 0 : i32
    return %c0_i32, %c0_i32_0 : i32, i32
  }
  func.func @transform_4(%arg0: i32, %arg1: i32) -> (i32, i32) {
    %c0_i32 = arith.constant 0 : i32
    %c0_i32_0 = arith.constant 0 : i32
    %c0_i32_1 = arith.constant 0 : i32
    return %c0_i32, %c0_i32_0 : i32, i32
  }
  func.func @transform_5(%arg0: i32, %arg1: i32) -> (i32, i32) {
    %c0_i32 = arith.constant 0 : i32
    %c0_i32_0 = arith.constant 0 : i32
    %c0_i32_1 = arith.constant 0 : i32
    return %c0_i32, %c0_i32_0 : i32, i32
  }
  func.func @transform_6(%arg0: i32, %arg1: i32) -> (i32, i32) {
    %c0_i32 = arith.constant 0 : i32
    %c0_i32_0 = arith.constant 0 : i32
    %c0_i32_1 = arith.constant 0 : i32
    return %c0_i32, %c0_i32_0 : i32, i32
  }
  func.func @transform_7(%arg0: i32, %arg1: i32) -> (i32, i32) {
    %c0_i32 = arith.constant 0 : i32
    %c0_i32_0 = arith.constant 0 : i32
    %c0_i32_1 = arith.constant 0 : i32
    return %c0_i32, %c0_i32_0 : i32, i32
  }
  func.func @transform_8(%arg0: i32, %arg1: i32) -> (i32, i32) {
    %c0_i32 = arith.constant 0 : i32
    %c0_i32_0 = arith.constant 0 : i32
    %c0_i32_1 = arith.constant 0 : i32
    return %c0_i32, %c0_i32_0 : i32, i32
  }
  func.func @transform_9(%arg0: i32, %arg1: i32) -> (i32, i32) {
    %c0_i32 = arith.constant 0 : i32
    %c0_i32_0 = arith.constant 0 : i32
    %c0_i32_1 = arith.constant 0 : i32
    return %c0_i32, %c0_i32_0 : i32, i32
  }
  func.func @transform_10(%arg0: i32, %arg1: i32) -> (i32, i32, i32) {
    %c0_i32 = arith.constant 0 : i32
    %c0_i32_0 = arith.constant 0 : i32
    %c0_i32_1 = arith.constant 0 : i32
    return %arg0, %c0_i32, %c0_i32_0 : i32, i32, i32
  }
}

</mosaic_0001>

<llo_original>
// kernel: pointnet_feat.5
$region0: #{pointnet_feat.5}
  #allocation0 [shape = 'u32[]', space=smem, size = 0x4, offset = 0x4, fixed_abs, tag = 'smem constant byte address 0x4 - core index']
  #allocation1 [shape = 'u32[144,128]{1,0:T(1,128)}', space=vmem, size = 0x12000, scoped, tag = 'internal scratch']
  %s0 = inlined_call_operand.vmem [shape: bf16[2,16,4], index: 0, kind: input, shape index: {}]
  %s1 = inlined_call_operand.vmem [shape: bf16[2,4,64], index: 1, kind: input, shape index: {}]
  %s2 = inlined_call_operand.hbm [shape: f32[1,64], index: 2, kind: input, shape index: {}]
  %s3 = inlined_call_operand.hbm [shape: f32[1,64], index: 3, kind: input, shape index: {}]
  %s4 = inlined_call_operand.vmem [shape: bf16[2,16,64], index: 4, kind: output, shape index: {}]
  %s5 = sld [smem:[#allocation0]]
  $region57: #{pointnet_feat.5} parent=0
    _
  %s7 = ssub.s32 1, %s5
  %s8 = scalar_select 0, %s7, %s5
  $region1: #{pointnet_feat.5} parent=0
    #allocation2 [shape = 'u8[512]{0}', space=vmem, size = 0x400, scoped, tag = 'input window, operand 2, single buffered']
    #allocation3 [shape = 's32[2]{0}', space=sflag, size = 0x8, scoped, tag = 'scoped memory for pointnet_feat.5']
    #allocation4 [shape = 'u8[512]{0}', space=vmem, size = 0x400, scoped, tag = 'input window, operand 3, single buffered']
    #allocation5 [shape = 's32[1]{0}', space=sflag, size = 0x4, scoped, tag = 'scoped memory for pointnet_feat.5']
    %9 = vsyncpa [#allocation3], 0
    %10 = vsyncpa [#allocation5], 0
    loop: start=0, step=1, limit=4
    $region2: #{pointnet_feat.5} parent=1 // loop_pre_header
      _
    $region3: #{pointnet_feat.5} parent=1 // loop_header
      %s12 = sphi 0, %s16
      %p13 = scmp.ge.s32.totalorder %s12, 4
      %s19 = sphi 0, %s31
      %s20 = sphi 0, %s27
      %s21 = sphi 0, %s19
      %s22 = sphi 0, %s20
      %s23 = sphi 0, %s21
      %s24 = sphi 0, %s22
      %s36 = sphi 0, %s38
      %s39 = sphi 0, %s36
      %s40 = sphi 0, %s39
      %s56 = sphi 0, %s40
      %s62 = sphi 0, %s64
      %s65 = sphi 0, %s62
      %s66 = sphi 0, %s65
      %s82 = sphi 0, %s66
      %s86 = sphi 0, %s86
      %s88 = sphi 0, %s86
      %s89 = sphi 0, %s88
      %s103 = sphi 0, %s89
      %s107 = sphi 0, %s107
      %s109 = sphi 0, %s107
      %s110 = sphi 0, %s109
      %s124 = sphi 0, %s110
      %s132 = sphi 0, %s134
      %s135 = sphi 0, %s132
      %s136 = sphi 0, %s135
      %s152 = sphi 0, %s136
    $region4: #{pointnet_feat.5} parent=1 // loop_header_branch
      %15 = sbr.rel (%p13) target = $region8
    $region5: #{pointnet_feat.5} parent=1 // loop_body
      %s17 = ssub.s32 %s12, 1
      %s18 = ssub.s32 %s12, 2
      %s25 = sadd.s32 1, %s20
      %p26 = scmp.ge.s32.totalorder %s25, 1
      %s27 = scalar_select %p26, 0, %s25
      %s28 = sadd.s32 1, %s19
      %s29 = scalar_select %p26, %s28, %s19
      %p30 = scmp.ge.s32.totalorder %s29, 2
      %s31 = scalar_select %p30, 0, %s29
      %s32 = ssub.s32 %s19, %s31
      %s33 = ssub.s32 %s20, %s27
      %s34 = sor.u32 %s32, %s33
      %p35 = scmp.eq.s32.totalorder %s34, 0
      %s37 = sadd.s32 %s36, 1
      %s38 = scalar_select %p35, %s36, %s37
      %p41 = pneg %p35
      %p42 = scmp.eq.s32.totalorder %s12, 1
      %p43 = por %p41, %p42
      %p44 = scmp.ne.s32.totalorder %s36, %s39
      %p45 = scmp.eq.s32.totalorder %s12, 0
      %p46 = por %p44, %p45
      %p47 = scmp.ne.s32.totalorder %s36, %s39
      %p48 = scmp.eq.s32.totalorder %s17, 1
      %p49 = por %p47, %p48
      %p50 = scmp.ne.s32.totalorder %s39, %s40
      %p51 = scmp.eq.s32.totalorder %s17, 0
      %p52 = por %p50, %p51
      %p53 = scmp.ne.s32.totalorder %s39, %s40
      %p54 = scmp.eq.s32.totalorder %s18, 1
      %p55 = por %p53, %p54
      %p57 = scmp.ne.s32.totalorder %s40, %s56
      %p58 = scmp.eq.s32.totalorder %s18, 0
      %p59 = por %p57, %p58
      %s60 = ssub.s32 %s19, %s31
      %p61 = scmp.eq.s32.totalorder %s60, 0
      %s63 = sadd.s32 %s62, 1
      %s64 = scalar_select %p61, %s62, %s63
      %p67 = pneg %p61
      %p68 = scmp.eq.s32.totalorder %s12, 1
      %p69 = por %p67, %p68
      %p70 = scmp.ne.s32.totalorder %s62, %s65
      %p71 = scmp.eq.s32.totalorder %s12, 0
      %p72 = por %p70, %p71
      %p73 = scmp.ne.s32.totalorder %s62, %s65
      %p74 = scmp.eq.s32.totalorder %s17, 1
      %p75 = por %p73, %p74
      %p76 = scmp.ne.s32.totalorder %s65, %s66
      %p77 = scmp.eq.s32.totalorder %s17, 0
      %p78 = por %p76, %p77
      %p79 = scmp.ne.s32.totalorder %s65, %s66
      %p80 = scmp.eq.s32.totalorder %s18, 1
      %p81 = por %p79, %p80
      %p83 = scmp.ne.s32.totalorder %s66, %s82
      %p84 = scmp.eq.s32.totalorder %s18, 0
      %p85 = por %p83, %p84
      %s87 = sadd.s32 %s86, 1
      %p90 = scmp.eq.s32.totalorder %s12, 1
      %p91 = scmp.ne.s32.totalorder %s86, %s88
      %p92 = scmp.eq.s32.totalorder %s12, 0
      %p93 = por %p91, %p92
      %p94 = scmp.ne.s32.totalorder %s86, %s88
      %p95 = scmp.eq.s32.totalorder %s17, 1
      %p96 = por %p94, %p95
      %p97 = scmp.ne.s32.totalorder %s88, %s89
      %p98 = scmp.eq.s32.totalorder %s17, 0
      %p99 = por %p97, %p98
      %p100 = scmp.ne.s32.totalorder %s88, %s89
      %p101 = scmp.eq.s32.totalorder %s18, 1
      %p102 = por %p100, %p101
      %p104 = scmp.ne.s32.totalorder %s89, %s103
      %p105 = scmp.eq.s32.totalorder %s18, 0
      %p106 = por %p104, %p105
      %s108 = sadd.s32 %s107, 1
      %p111 = scmp.eq.s32.totalorder %s12, 1
      %p112 = scmp.ne.s32.totalorder %s107, %s109
      %p113 = scmp.eq.s32.totalorder %s12, 0
      %p114 = por %p112, %p113
      %p115 = scmp.ne.s32.totalorder %s107, %s109
      %p116 = scmp.eq.s32.totalorder %s17, 1
      %p117 = por %p115, %p116
      %p118 = scmp.ne.s32.totalorder %s109, %s110
      %p119 = scmp.eq.s32.totalorder %s17, 0
      %p120 = por %p118, %p119
      %p121 = scmp.ne.s32.totalorder %s109, %s110
      %p122 = scmp.eq.s32.totalorder %s18, 1
      %p123 = por %p121, %p122
      %p125 = scmp.ne.s32.totalorder %s110, %s124
      %p126 = scmp.eq.s32.totalorder %s18, 0
      %p127 = por %p125, %p126
      %s128 = ssub.s32 %s19, %s31
      %s129 = ssub.s32 %s20, %s27
      %s130 = sor.u32 %s128, %s129
      %p131 = scmp.eq.s32.totalorder %s130, 0
      %s133 = sadd.s32 %s132, 1
      %s134 = scalar_select %p131, %s132, %s133
      %p137 = pneg %p131
      %p138 = scmp.eq.s32.totalorder %s12, 1
      %p139 = por %p137, %p138
      %p140 = scmp.ne.s32.totalorder %s132, %s135
      %p141 = scmp.eq.s32.totalorder %s12, 0
      %p142 = por %p140, %p141
      %p143 = scmp.ne.s32.totalorder %s132, %s135
      %p144 = scmp.eq.s32.totalorder %s17, 1
      %p145 = por %p143, %p144
      %p146 = scmp.ne.s32.totalorder %s135, %s136
      %p147 = scmp.eq.s32.totalorder %s17, 0
      %p148 = por %p146, %p147
      %p149 = scmp.ne.s32.totalorder %s135, %s136
      %p150 = scmp.eq.s32.totalorder %s18, 1
      %p151 = por %p149, %p150
      %p153 = scmp.ne.s32.totalorder %s136, %s152
      %p154 = scmp.eq.s32.totalorder %s18, 0
      %p155 = por %p153, %p154
      %p156 = scmp.le.s32.totalorder 1, %s12
      %p157 = scmp.lt.s32.totalorder %s12, 3
      %p158 = pnand %p156, %p157
      %p159 = pneg %p158
      // Predicated region
      $region9: #{pointnet_feat.5} parent=5 // pred_check
        _
      $region10: #{pointnet_feat.5} parent=5 // pred_check_branch
        %161 = sbr.rel (%p158) target = $region12
      $region11: #{pointnet_feat.5} parent=5 // pred_region
        %s162 = ssub.s32 %s12, 1
        // Predicated region
        $region13: #{pointnet_feat.5} parent=11 // pred_check
          %p163 = pneg %p99
        $region14: #{pointnet_feat.5} parent=11 // pred_check_branch
          %165 = sbr.rel (%p163) target = $region16
        $region15: #{pointnet_feat.5} parent=11 // pred_region
          %s167 = ssub.s32 16, 16
          %168 = vsyncadd [#allocation3], %s167
          %s170 = sshll.u32 [#allocation2], 4
          %s171 = int_to_ptr.vmem [resolvable:$true] %s170
          %173 = dma.hbm_to_vmem [thread:$0]  %s2, 16, %s171, [#allocation3]
        $region16: #{pointnet_feat.5} parent=11 // pred_fallthru
          _
        // Predicated region
        $region17: #{pointnet_feat.5} parent=11 // pred_check
          %p174 = pneg %p120
        $region18: #{pointnet_feat.5} parent=11 // pred_check_branch
          %176 = sbr.rel (%p174) target = $region20
        $region19: #{pointnet_feat.5} parent=11 // pred_region
          %s178 = ssub.s32 16, 16
          %179 = vsyncadd [#allocation5], %s178
          %s181 = sshll.u32 [#allocation4], 4
          %s182 = int_to_ptr.vmem [resolvable:$true] %s181
          %184 = dma.hbm_to_vmem [thread:$0]  %s3, 16, %s182, [#allocation5]
        $region20: #{pointnet_feat.5} parent=11 // pred_fallthru
          _
      $region12: #{pointnet_feat.5} parent=5 // pred_fallthru
        _
      %p185 = scmp.lt.s32.totalorder %s12, 2
      // Predicated region
      $region21: #{pointnet_feat.5} parent=5 // pred_check
        %p186 = pneg %p185
      $region22: #{pointnet_feat.5} parent=5 // pred_check_branch
        %188 = sbr.rel (%p186) target = $region24
      $region23: #{pointnet_feat.5} parent=5 // pred_region
        // Predicated region
        $region25: #{pointnet_feat.5} parent=23 // pred_check
          %p189 = pneg %p46
        $region26: #{pointnet_feat.5} parent=23 // pred_check_branch
          %191 = sbr.rel (%p189) target = $region28
        $region27: #{pointnet_feat.5} parent=23 // pred_region
          %s192 = smul.u32 2, %s20
          %p193 = scmp.lt.s32.totalorder %s19, 1
          %s194 = scalar_select %p193, %s19, 1
          %p195 = scmp.lt.s32.totalorder %s192, 1
          %s196 = scalar_select %p195, %s192, 1
          %s197 = smul.addr %s194, 2
          %s198 = sadd.s32 %s196, %s197
          %s199 = smul.addr %s198, 4
          %s200 = scalar_lea.vmem %s0, %s199
          %s201 = smul.u32 2, %s20
        $region28: #{pointnet_feat.5} parent=23 // pred_fallthru
          _
        // Predicated region
        $region29: #{pointnet_feat.5} parent=23 // pred_check
          %p202 = pneg %p72
        $region30: #{pointnet_feat.5} parent=23 // pred_check_branch
          %204 = sbr.rel (%p202) target = $region32
        $region31: #{pointnet_feat.5} parent=23 // pred_region
          %p205 = scmp.lt.s32.totalorder %s19, 1
          %s206 = scalar_select %p205, %s19, 1
          %s207 = smul.addr %s206, 2
          %s208 = scalar_lea.vmem %s1, %s207
        $region32: #{pointnet_feat.5} parent=23 // pred_fallthru
          _
      $region24: #{pointnet_feat.5} parent=5 // pred_fallthru
        _
      %p209 = scmp.le.s32.totalorder 1, %s12
      %p210 = scmp.lt.s32.totalorder %s12, 3
      %p211 = pnand %p209, %p210
      %p212 = pneg %p211
      // Predicated region
      $region33: #{pointnet_feat.5} parent=5 // pred_check
        _
      $region34: #{pointnet_feat.5} parent=5 // pred_check_branch
        %214 = sbr.rel (%p211) target = $region36
      $region35: #{pointnet_feat.5} parent=5 // pred_region
        %s215 = ssub.s32 %s12, 1
        // Predicated region
        $region37: #{pointnet_feat.5} parent=35 // pred_check
          %p216 = pneg %p99
        $region38: #{pointnet_feat.5} parent=35 // pred_check_branch
          %218 = sbr.rel (%p216) target = $region40
        $region39: #{pointnet_feat.5} parent=35 // pred_region
          %219 = dma.done [#allocation3], 16
        $region40: #{pointnet_feat.5} parent=35 // pred_fallthru
          _
        // Predicated region
        $region41: #{pointnet_feat.5} parent=35 // pred_check
          %p220 = pneg %p120
        $region42: #{pointnet_feat.5} parent=35 // pred_check_branch
          %222 = sbr.rel (%p220) target = $region44
        $region43: #{pointnet_feat.5} parent=35 // pred_region
          %223 = dma.done [#allocation5], 16
        $region44: #{pointnet_feat.5} parent=35 // pred_fallthru
          _
        %s224 = smul.u32 2, %s22
        %p225 = scmp.lt.s32.totalorder %s21, 1
        %s226 = scalar_select %p225, %s21, 1
        %p227 = scmp.lt.s32.totalorder %s224, 1
        %s228 = scalar_select %p227, %s224, 1
        %s229 = smul.addr %s226, 2
        %s230 = sadd.s32 %s228, %s229
        %s231 = smul.addr %s230, 4
        %s232 = scalar_lea.vmem %s0, %s231
        %p233 = pneg %p52
        %p234 = pneg %p49
        %p235 = scmp.lt.s32.totalorder %s21, 1
        %s236 = scalar_select %p235, %s21, 1
        %s237 = smul.addr %s236, 2
        %s238 = scalar_lea.vmem %s1, %s237
        %p239 = pneg %p78
        %p240 = pneg %p75
        %p241 = pneg %p99
        %p242 = pneg %p96
        %p243 = pneg %p120
        %p244 = pneg %p117
        %p245 = pneg %p148
        %p246 = pneg %p145
        %s247 = smul.u32 2, %s22
        %p248 = scmp.lt.s32.totalorder %s21, 1
        %s249 = scalar_select %p248, %s21, 1
        %p250 = scmp.lt.s32.totalorder %s247, 1
        %s251 = scalar_select %p250, %s247, 1
        %s252 = smul.addr %s249, 2
        %s253 = sadd.s32 %s251, %s252
        %s254 = smul.addr %s253, 4
        %s255 = scalar_lea.vmem %s4, %s254
        %s256 = smul.u32 2, %s22
        %p257 = scmp.lt.s32.totalorder %s21, 1
        %s258 = scalar_select %p257, %s21, 1
        %p259 = scmp.lt.s32.totalorder %s256, 1
        %s260 = scalar_select %p259, %s256, 1
        %s261 = smul.addr %s258, 2
        %s262 = sadd.s32 %s260, %s261
        %s263 = smul.addr %s262, 4
        %s264 = scalar_lea.vmem %s0, %s263
        %s265 = smul.u32 2, %s22
        %p266 = scmp.lt.s32.totalorder %s21, 1
        %s267 = scalar_select %p266, %s21, 1
        %s268 = smul.addr %s267, 2
        %s269 = scalar_lea.vmem %s1, %s268
        %s270 = smul.u32 2, %s22
        %p271 = scmp.lt.s32.totalorder %s21, 1
        %s272 = scalar_select %p271, %s21, 1
        %p273 = scmp.lt.s32.totalorder %s270, 1
        %s274 = scalar_select %p273, %s270, 1
        %s275 = smul.addr %s272, 2
        %s276 = sadd.s32 %s274, %s275
        %s277 = smul.addr %s276, 4
        %s278 = scalar_lea.vmem %s4, %s277
        %s279 = smul.u32 2, %s22
        %v281 = vld [vmem:[%s264] sm:$0xf]
        %v282 = vld [vmem:[%s264 + $0x4] sm:$0xf]
        %v283 = vld [vmem:[%s269] sm:$0x3]
        %v286 = vunpack.c.l.b16 %v281
        %v287 = vunpack.c.l.b16 %v282
        %v288 = vpack.c.b16 %v287, %v286
        %vm289 = vcmask 31744
        %v291 = vsel %vm289, %v288, 0
        %vm293 = vcmask 1041408
        %v295 = vsel %vm293, %v283, 0
        %297 = vmatprep.subr.bf16.mxu0 0
        %298 = vmatpush1.bf16.msra.mxu0 %v295
        %299 = vmatprep.subr.bf16.mxu0 0
        %300 = vmatpush1.bf16.msra.mxu0 0
        %301 = vmatprep.subr.bf16.mxu0 0
        %302 = vmatpush1.bf16.msra.mxu0 0
        %303 = vmatprep.subr.bf16.mxu0 0
        %304 = vmatpush1.bf16.msra.mxu0 0
        %305 = vmatprep.subr.bf16.mxu0 0
        %306 = vmatpush1.bf16.msra.mxu0 0
        %307 = vmatprep.subr.bf16.mxu0 0
        %308 = vmatpush1.bf16.msra.mxu0 0
        %309 = vmatprep.subr.bf16.mxu0 0
        %310 = vmatpush1.bf16.msra.mxu0 0
        %311 = vmatprep.subr.bf16.mxu0 0
        %312 = vmatpush1.bf16.msra.mxu0 0
        %313 = vmatprep.subr.bf16.mxu0 0
        %314 = vmatpush1.bf16.msra.mxu0 0
        %315 = vmatprep.subr.bf16.mxu0 0
        %316 = vmatpush1.bf16.msra.mxu0 0
        %317 = vmatprep.subr.bf16.mxu0 0
        %318 = vmatpush1.bf16.msra.mxu0 0
        %319 = vmatprep.subr.bf16.mxu0 0
        %320 = vmatpush1.bf16.msra.mxu0 0
        %321 = vmatprep.subr.bf16.mxu0 0
        %322 = vmatpush1.bf16.msra.mxu0 0
        %323 = vmatprep.subr.bf16.mxu0 0
        %324 = vmatpush1.bf16.msra.mxu0 0
        %325 = vmatprep.subr.bf16.mxu0 0
        %326 = vmatpush1.bf16.msra.mxu0 0
        %327 = vmatprep.subr.bf16.mxu0 0
        %328 = vmatpush1.bf16.msra.mxu0 0
        %329 = vmatprep.mubr.bf16.mxu0 0
        %330 = vmatmul.mubr.bf16.gmra.mrb[0].mxu0 %v291
        %v331 = vpop.f32.mrb[0].mxu0
        %v332 = vadd.f32 0.0, %v331
        %v333 = vpop.f32.mrb[0].mxu0
        %v334 = vpop.f32.mrb[0].mxu0
        %v335 = vadd.f32 0.0, %v334
        %v336 = vpop.f32.mrb[0].mxu0
        %337 = vdwg.mxu0
        %v338 = vld [vmem:[#allocation2] sm:$0x1]
        %v340 = vlaneseq
        %v341 = vshrl.u32 %v340, 7
        %v342 = vsub.s32 0, %v341
        %v343 = vrot.slane %v338, %v342
        %v345 = vmul.f32 %v332, %v343
        %v346 = vmul.f32 %v335, %v343
        %v347 = vld [vmem:[#allocation4] sm:$0x1]
        %v349 = vlaneseq
        %v350 = vshrl.u32 %v349, 7
        %v351 = vsub.s32 0, %v350
        %v352 = vrot.slane %v347, %v351
        %v354 = vadd.f32 %v345, %v352
        %v355 = vadd.f32 %v346, %v352
        %v356 = vmax.f32 %v354, 0.0
        %v357 = vmax.f32 %v355, 0.0
        %v358 = vpack.c.bf16 %v357, %v356
        %v360 = vunpack.c.l.b16 %v358
        %v361 = vunpack.c.h.b16 %v358
        %v362 = vpack.c.b16 %v360, %v360
        %v363 = vpack.c.b16 %v361, %v361
        %vm366 = vcmask 519168
        %367 = vst.msk [vmem:[%s278] sm:$0xf] %vm366, %v362
        %368 = vst.msk [vmem:[%s278 + $0x4] sm:$0xf] %vm366, %v363
        %s369 = smul.u32 2, %s22
        %p370 = scmp.lt.s32.totalorder %s21, 1
        %s371 = scalar_select %p370, %s21, 1
        %p372 = scmp.lt.s32.totalorder %s369, 1
        %s373 = scalar_select %p372, %s369, 1
        %s374 = smul.addr %s371, 2
        %s375 = sadd.s32 %s373, %s374
        %s376 = smul.addr %s375, 4
        %s377 = scalar_lea.vmem %s4, %s376
        // Predicated region
        $region45: #{pointnet_feat.5} parent=35 // pred_check
          %p378 = pneg %p145
        $region46: #{pointnet_feat.5} parent=35 // pred_check_branch
          %380 = sbr.rel (%p378) target = $region48
        $region47: #{pointnet_feat.5} parent=35 // pred_region
          %s381 = smul.u32 2, %s22
        $region48: #{pointnet_feat.5} parent=35 // pred_fallthru
          _
      $region36: #{pointnet_feat.5} parent=5 // pred_fallthru
        _
      %p382 = scmp.le.s32.totalorder 2, %s12
      // Predicated region
      $region49: #{pointnet_feat.5} parent=5 // pred_check
        %p383 = pneg %p382
      $region50: #{pointnet_feat.5} parent=5 // pred_check_branch
        %385 = sbr.rel (%p383) target = $region52
      $region51: #{pointnet_feat.5} parent=5 // pred_region
        %s386 = ssub.s32 %s12, 2
        // Predicated region
        $region53: #{pointnet_feat.5} parent=51 // pred_check
          %p387 = pneg %p151
        $region54: #{pointnet_feat.5} parent=51 // pred_check_branch
          %389 = sbr.rel (%p387) target = $region56
        $region55: #{pointnet_feat.5} parent=51 // pred_region
          %s390 = smul.u32 2, %s24
          %p391 = scmp.lt.s32.totalorder %s23, 1
          %s392 = scalar_select %p391, %s23, 1
          %p393 = scmp.lt.s32.totalorder %s390, 1
          %s394 = scalar_select %p393, %s390, 1
          %s395 = smul.addr %s392, 2
          %s396 = sadd.s32 %s394, %s395
          %s397 = smul.addr %s396, 4
          %s398 = scalar_lea.vmem %s4, %s397
        $region56: #{pointnet_feat.5} parent=51 // pred_fallthru
          _
      $region52: #{pointnet_feat.5} parent=5 // pred_fallthru
        _
    $region6: #{pointnet_feat.5} parent=1 // loop_footer
      %s16 = sadd.s32 1, %s12
    $region7: #{pointnet_feat.5} parent=1 // loop_footer_branch
      %11 = sbr.rel target = $region3
    $region8: #{pointnet_feat.5} parent=1 // loop_exit
      _
    %399 = vsyncpa [#allocation3], 1
    %s400 = scalar_lea.sflag [#allocation3], 1
    %401 = vsyncpa %s400, 1
    %402 = vsyncpa [#allocation5], 1

// kernel: pointnet_feat.4
$region0: #{pointnet_feat.4}
  #allocation0 [shape = 'u32[]', space=smem, size = 0x4, offset = 0x4, fixed_abs, tag = 'smem constant byte address 0x4 - core index']
  #allocation1 [shape = 'u32[144,128]{1,0:T(1,128)}', space=vmem, size = 0x12000, scoped, tag = 'internal scratch']
  #allocation2 [shape = 'f32[1,256]{1,0:T(1,128)}', space=vmem, size = 0x400, scoped, tag = 'scratch operand']
  %s0 = inlined_call_operand.vmem [shape: bf16[2,16,4], index: 0, kind: input, shape index: {}]
  %s1 = inlined_call_operand.vmem [shape: bf16[4,64], index: 1, kind: input, shape index: {}]
  %s2 = inlined_call_operand.hbm [shape: f32[1,64], index: 2, kind: input, shape index: {}]
  %s3 = inlined_call_operand.hbm [shape: f32[1,64], index: 3, kind: input, shape index: {}]
  %s4 = inlined_call_operand.vmem [shape: bf16[64,256], index: 4, kind: input, shape index: {}]
  %s5 = inlined_call_operand.hbm [shape: f32[1,256], index: 5, kind: input, shape index: {}]
  %s6 = inlined_call_operand.hbm [shape: f32[1,256], index: 6, kind: input, shape index: {}]
  %s7 = inlined_call_operand.vmem [shape: f32[256,16], index: 7, kind: input, shape index: {}]
  %s8 = inlined_call_operand.hbm [shape: f32[1,16], index: 8, kind: input, shape index: {}]
  %s9 = inlined_call_operand.vmem [shape: f32[2,1,16], index: 9, kind: output, shape index: {}]
  %s10 = sld [smem:[#allocation0]]
  $region97: #{pointnet_feat.4} parent=0
    _
  %s12 = ssub.s32 1, %s10
  %s13 = scalar_select 0, %s12, %s10
  $region1: #{pointnet_feat.4} parent=0
    #allocation3 [shape = 'u8[512]{0}', space=vmem, size = 0x400, scoped, tag = 'input window, operand 2, single buffered']
    #allocation4 [shape = 's32[2]{0}', space=sflag, size = 0x8, scoped, tag = 'scoped memory for pointnet_feat.4']
    #allocation5 [shape = 'u8[512]{0}', space=vmem, size = 0x400, scoped, tag = 'input window, operand 3, single buffered']
    #allocation6 [shape = 's32[1]{0}', space=sflag, size = 0x4, scoped, tag = 'scoped memory for pointnet_feat.4']
    #allocation7 [shape = 'u8[1024]{0}', space=vmem, size = 0x400, scoped, tag = 'input window, operand 5, single buffered']
    #allocation8 [shape = 'u8[1024]{0}', space=vmem, size = 0x400, scoped, tag = 'input window, operand 6, single buffered']
    #allocation9 [shape = 's32[1]{0}', space=sflag, size = 0x4, scoped, tag = 'scoped memory for pointnet_feat.4']
    #allocation10 [shape = 'u8[512]{0}', space=vmem, size = 0x400, scoped, tag = 'input window, operand 8, single buffered']
    %14 = vsyncpa [#allocation4], 0
    %15 = vsyncpa [#allocation6], 0
    %16 = vsyncpa [#allocation9], 0
    loop: start=0, step=1, limit=4
    $region2: #{pointnet_feat.4} parent=1 // loop_pre_header
      _
    $region3: #{pointnet_feat.4} parent=1 // loop_header
      %s18 = sphi 0, %s22
      %p19 = scmp.ge.s32.totalorder %s18, 4
      %s25 = sphi 0, %s37
      %s26 = sphi 0, %s33
      %s27 = sphi 0, %s25
      %s28 = sphi 0, %s26
      %s29 = sphi 0, %s27
      %s30 = sphi 0, %s28
      %s42 = sphi 0, %s44
      %s45 = sphi 0, %s42
      %s46 = sphi 0, %s45
      %s62 = sphi 0, %s46
      %s66 = sphi 0, %s66
      %s68 = sphi 0, %s66
      %s69 = sphi 0, %s68
      %s83 = sphi 0, %s69
      %s87 = sphi 0, %s87
      %s89 = sphi 0, %s87
      %s90 = sphi 0, %s89
      %s104 = sphi 0, %s90
      %s108 = sphi 0, %s108
      %s110 = sphi 0, %s108
      %s111 = sphi 0, %s110
      %s125 = sphi 0, %s111
      %s129 = sphi 0, %s129
      %s131 = sphi 0, %s129
      %s132 = sphi 0, %s131
      %s146 = sphi 0, %s132
      %s150 = sphi 0, %s150
      %s152 = sphi 0, %s150
      %s153 = sphi 0, %s152
      %s167 = sphi 0, %s153
      %s171 = sphi 0, %s171
      %s173 = sphi 0, %s171
      %s174 = sphi 0, %s173
      %s188 = sphi 0, %s174
      %s192 = sphi 0, %s192
      %s194 = sphi 0, %s192
      %s195 = sphi 0, %s194
      %s209 = sphi 0, %s195
      %s213 = sphi 0, %s213
      %s215 = sphi 0, %s213
      %s216 = sphi 0, %s215
      %s230 = sphi 0, %s216
      %s236 = sphi 0, %s238
      %s239 = sphi 0, %s236
      %s240 = sphi 0, %s239
      %s256 = sphi 0, %s240
    $region4: #{pointnet_feat.4} parent=1 // loop_header_branch
      %21 = sbr.rel (%p19) target = $region8
    $region5: #{pointnet_feat.4} parent=1 // loop_body
      %s23 = ssub.s32 %s18, 1
      %s24 = ssub.s32 %s18, 2
      %s31 = sadd.s32 1, %s26
      %p32 = scmp.ge.s32.totalorder %s31, 1
      %s33 = scalar_select %p32, 0, %s31
      %s34 = sadd.s32 1, %s25
      %s35 = scalar_select %p32, %s34, %s25
      %p36 = scmp.ge.s32.totalorder %s35, 2
      %s37 = scalar_select %p36, 0, %s35
      %s38 = ssub.s32 %s25, %s37
      %s39 = ssub.s32 %s26, %s33
      %s40 = sor.u32 %s38, %s39
      %p41 = scmp.eq.s32.totalorder %s40, 0
      %s43 = sadd.s32 %s42, 1
      %s44 = scalar_select %p41, %s42, %s43
      %p47 = pneg %p41
      %p48 = scmp.eq.s32.totalorder %s18, 1
      %p49 = por %p47, %p48
      %p50 = scmp.ne.s32.totalorder %s42, %s45
      %p51 = scmp.eq.s32.totalorder %s18, 0
      %p52 = por %p50, %p51
      %p53 = scmp.ne.s32.totalorder %s42, %s45
      %p54 = scmp.eq.s32.totalorder %s23, 1
      %p55 = por %p53, %p54
      %p56 = scmp.ne.s32.totalorder %s45, %s46
      %p57 = scmp.eq.s32.totalorder %s23, 0
      %p58 = por %p56, %p57
      %p59 = scmp.ne.s32.totalorder %s45, %s46
      %p60 = scmp.eq.s32.totalorder %s24, 1
      %p61 = por %p59, %p60
      %p63 = scmp.ne.s32.totalorder %s46, %s62
      %p64 = scmp.eq.s32.totalorder %s24, 0
      %p65 = por %p63, %p64
      %s67 = sadd.s32 %s66, 1
      %p70 = scmp.eq.s32.totalorder %s18, 1
      %p71 = scmp.ne.s32.totalorder %s66, %s68
      %p72 = scmp.eq.s32.totalorder %s18, 0
      %p73 = por %p71, %p72
      %p74 = scmp.ne.s32.totalorder %s66, %s68
      %p75 = scmp.eq.s32.totalorder %s23, 1
      %p76 = por %p74, %p75
      %p77 = scmp.ne.s32.totalorder %s68, %s69
      %p78 = scmp.eq.s32.totalorder %s23, 0
      %p79 = por %p77, %p78
      %p80 = scmp.ne.s32.totalorder %s68, %s69
      %p81 = scmp.eq.s32.totalorder %s24, 1
      %p82 = por %p80, %p81
      %p84 = scmp.ne.s32.totalorder %s69, %s83
      %p85 = scmp.eq.s32.totalorder %s24, 0
      %p86 = por %p84, %p85
      %s88 = sadd.s32 %s87, 1
      %p91 = scmp.eq.s32.totalorder %s18, 1
      %p92 = scmp.ne.s32.totalorder %s87, %s89
      %p93 = scmp.eq.s32.totalorder %s18, 0
      %p94 = por %p92, %p93
      %p95 = scmp.ne.s32.totalorder %s87, %s89
      %p96 = scmp.eq.s32.totalorder %s23, 1
      %p97 = por %p95, %p96
      %p98 = scmp.ne.s32.totalorder %s89, %s90
      %p99 = scmp.eq.s32.totalorder %s23, 0
      %p100 = por %p98, %p99
      %p101 = scmp.ne.s32.totalorder %s89, %s90
      %p102 = scmp.eq.s32.totalorder %s24, 1
      %p103 = por %p101, %p102
      %p105 = scmp.ne.s32.totalorder %s90, %s104
      %p106 = scmp.eq.s32.totalorder %s24, 0
      %p107 = por %p105, %p106
      %s109 = sadd.s32 %s108, 1
      %p112 = scmp.eq.s32.totalorder %s18, 1
      %p113 = scmp.ne.s32.totalorder %s108, %s110
      %p114 = scmp.eq.s32.totalorder %s18, 0
      %p115 = por %p113, %p114
      %p116 = scmp.ne.s32.totalorder %s108, %s110
      %p117 = scmp.eq.s32.totalorder %s23, 1
      %p118 = por %p116, %p117
      %p119 = scmp.ne.s32.totalorder %s110, %s111
      %p120 = scmp.eq.s32.totalorder %s23, 0
      %p121 = por %p119, %p120
      %p122 = scmp.ne.s32.totalorder %s110, %s111
      %p123 = scmp.eq.s32.totalorder %s24, 1
      %p124 = por %p122, %p123
      %p126 = scmp.ne.s32.totalorder %s111, %s125
      %p127 = scmp.eq.s32.totalorder %s24, 0
      %p128 = por %p126, %p127
      %s130 = sadd.s32 %s129, 1
      %p133 = scmp.eq.s32.totalorder %s18, 1
      %p134 = scmp.ne.s32.totalorder %s129, %s131
      %p135 = scmp.eq.s32.totalorder %s18, 0
      %p136 = por %p134, %p135
      %p137 = scmp.ne.s32.totalorder %s129, %s131
      %p138 = scmp.eq.s32.totalorder %s23, 1
      %p139 = por %p137, %p138
      %p140 = scmp.ne.s32.totalorder %s131, %s132
      %p141 = scmp.eq.s32.totalorder %s23, 0
      %p142 = por %p140, %p141
      %p143 = scmp.ne.s32.totalorder %s131, %s132
      %p144 = scmp.eq.s32.totalorder %s24, 1
      %p145 = por %p143, %p144
      %p147 = scmp.ne.s32.totalorder %s132, %s146
      %p148 = scmp.eq.s32.totalorder %s24, 0
      %p149 = por %p147, %p148
      %s151 = sadd.s32 %s150, 1
      %p154 = scmp.eq.s32.totalorder %s18, 1
      %p155 = scmp.ne.s32.totalorder %s150, %s152
      %p156 = scmp.eq.s32.totalorder %s18, 0
      %p157 = por %p155, %p156
      %p158 = scmp.ne.s32.totalorder %s150, %s152
      %p159 = scmp.eq.s32.totalorder %s23, 1
      %p160 = por %p158, %p159
      %p161 = scmp.ne.s32.totalorder %s152, %s153
      %p162 = scmp.eq.s32.totalorder %s23, 0
      %p163 = por %p161, %p162
      %p164 = scmp.ne.s32.totalorder %s152, %s153
      %p165 = scmp.eq.s32.totalorder %s24, 1
      %p166 = por %p164, %p165
      %p168 = scmp.ne.s32.totalorder %s153, %s167
      %p169 = scmp.eq.s32.totalorder %s24, 0
      %p170 = por %p168, %p169
      %s172 = sadd.s32 %s171, 1
      %p175 = scmp.eq.s32.totalorder %s18, 1
      %p176 = scmp.ne.s32.totalorder %s171, %s173
      %p177 = scmp.eq.s32.totalorder %s18, 0
      %p178 = por %p176, %p177
      %p179 = scmp.ne.s32.totalorder %s171, %s173
      %p180 = scmp.eq.s32.totalorder %s23, 1
      %p181 = por %p179, %p180
      %p182 = scmp.ne.s32.totalorder %s173, %s174
      %p183 = scmp.eq.s32.totalorder %s23, 0
      %p184 = por %p182, %p183
      %p185 = scmp.ne.s32.totalorder %s173, %s174
      %p186 = scmp.eq.s32.totalorder %s24, 1
      %p187 = por %p185, %p186
      %p189 = scmp.ne.s32.totalorder %s174, %s188
      %p190 = scmp.eq.s32.totalorder %s24, 0
      %p191 = por %p189, %p190
      %s193 = sadd.s32 %s192, 1
      %p196 = scmp.eq.s32.totalorder %s18, 1
      %p197 = scmp.ne.s32.totalorder %s192, %s194
      %p198 = scmp.eq.s32.totalorder %s18, 0
      %p199 = por %p197, %p198
      %p200 = scmp.ne.s32.totalorder %s192, %s194
      %p201 = scmp.eq.s32.totalorder %s23, 1
      %p202 = por %p200, %p201
      %p203 = scmp.ne.s32.totalorder %s194, %s195
      %p204 = scmp.eq.s32.totalorder %s23, 0
      %p205 = por %p203, %p204
      %p206 = scmp.ne.s32.totalorder %s194, %s195
      %p207 = scmp.eq.s32.totalorder %s24, 1
      %p208 = por %p206, %p207
      %p210 = scmp.ne.s32.totalorder %s195, %s209
      %p211 = scmp.eq.s32.totalorder %s24, 0
      %p212 = por %p210, %p211
      %s214 = sadd.s32 %s213, 1
      %p217 = scmp.eq.s32.totalorder %s18, 1
      %p218 = scmp.ne.s32.totalorder %s213, %s215
      %p219 = scmp.eq.s32.totalorder %s18, 0
      %p220 = por %p218, %p219
      %p221 = scmp.ne.s32.totalorder %s213, %s215
      %p222 = scmp.eq.s32.totalorder %s23, 1
      %p223 = por %p221, %p222
      %p224 = scmp.ne.s32.totalorder %s215, %s216
      %p225 = scmp.eq.s32.totalorder %s23, 0
      %p226 = por %p224, %p225
      %p227 = scmp.ne.s32.totalorder %s215, %s216
      %p228 = scmp.eq.s32.totalorder %s24, 1
      %p229 = por %p227, %p228
      %p231 = scmp.ne.s32.totalorder %s216, %s230
      %p232 = scmp.eq.s32.totalorder %s24, 0
      %p233 = por %p231, %p232
      %s234 = ssub.s32 %s25, %s37
      %p235 = scmp.eq.s32.totalorder %s234, 0
      %s237 = sadd.s32 %s236, 1
      %s238 = scalar_select %p235, %s236, %s237
      %p241 = pneg %p235
      %p242 = scmp.eq.s32.totalorder %s18, 1
      %p243 = por %p241, %p242
      %p244 = scmp.ne.s32.totalorder %s236, %s239
      %p245 = scmp.eq.s32.totalorder %s18, 0
      %p246 = por %p244, %p245
      %p247 = scmp.ne.s32.totalorder %s236, %s239
      %p248 = scmp.eq.s32.totalorder %s23, 1
      %p249 = por %p247, %p248
      %p250 = scmp.ne.s32.totalorder %s239, %s240
      %p251 = scmp.eq.s32.totalorder %s23, 0
      %p252 = por %p250, %p251
      %p253 = scmp.ne.s32.totalorder %s239, %s240
      %p254 = scmp.eq.s32.totalorder %s24, 1
      %p255 = por %p253, %p254
      %p257 = scmp.ne.s32.totalorder %s240, %s256
      %p258 = scmp.eq.s32.totalorder %s24, 0
      %p259 = por %p257, %p258
      %p260 = scmp.le.s32.totalorder 1, %s18
      %p261 = scmp.lt.s32.totalorder %s18, 3
      %p262 = pnand %p260, %p261
      %p263 = pneg %p262
      // Predicated region
      $region9: #{pointnet_feat.4} parent=5 // pred_check
        _
      $region10: #{pointnet_feat.4} parent=5 // pred_check_branch
        %265 = sbr.rel (%p262) target = $region12
      $region11: #{pointnet_feat.4} parent=5 // pred_region
        %s266 = ssub.s32 %s18, 1
        // Predicated region
        $region13: #{pointnet_feat.4} parent=11 // pred_check
          %p267 = pneg %p79
        $region14: #{pointnet_feat.4} parent=11 // pred_check_branch
          %269 = sbr.rel (%p267) target = $region16
        $region15: #{pointnet_feat.4} parent=11 // pred_region
          _
        $region16: #{pointnet_feat.4} parent=11 // pred_fallthru
          _
        // Predicated region
        $region17: #{pointnet_feat.4} parent=11 // pred_check
          %p270 = pneg %p100
        $region18: #{pointnet_feat.4} parent=11 // pred_check_branch
          %272 = sbr.rel (%p270) target = $region20
        $region19: #{pointnet_feat.4} parent=11 // pred_region
          %s274 = ssub.s32 16, 16
          %275 = vsyncadd [#allocation4], %s274
          %s277 = sshll.u32 [#allocation3], 4
          %s278 = int_to_ptr.vmem [resolvable:$true] %s277
          %280 = dma.hbm_to_vmem [thread:$0]  %s2, 16, %s278, [#allocation4]
        $region20: #{pointnet_feat.4} parent=11 // pred_fallthru
          _
        // Predicated region
        $region21: #{pointnet_feat.4} parent=11 // pred_check
          %p281 = pneg %p121
        $region22: #{pointnet_feat.4} parent=11 // pred_check_branch
          %283 = sbr.rel (%p281) target = $region24
        $region23: #{pointnet_feat.4} parent=11 // pred_region
          %s285 = ssub.s32 16, 16
          %286 = vsyncadd [#allocation6], %s285
          %s288 = sshll.u32 [#allocation5], 4
          %s289 = int_to_ptr.vmem [resolvable:$true] %s288
          %291 = dma.hbm_to_vmem [thread:$0]  %s3, 16, %s289, [#allocation6]
        $region24: #{pointnet_feat.4} parent=11 // pred_fallthru
          _
        // Predicated region
        $region25: #{pointnet_feat.4} parent=11 // pred_check
          %p292 = pneg %p142
        $region26: #{pointnet_feat.4} parent=11 // pred_check_branch
          %294 = sbr.rel (%p292) target = $region28
        $region27: #{pointnet_feat.4} parent=11 // pred_region
          _
        $region28: #{pointnet_feat.4} parent=11 // pred_fallthru
          _
        // Predicated region
        $region29: #{pointnet_feat.4} parent=11 // pred_check
          %p295 = pneg %p163
        $region30: #{pointnet_feat.4} parent=11 // pred_check_branch
          %297 = sbr.rel (%p295) target = $region32
        $region31: #{pointnet_feat.4} parent=11 // pred_region
          %s299 = ssub.s32 32, 32
          %300 = vsyncadd [#allocation6], %s299
          %s302 = sshll.u32 [#allocation7], 4
          %s303 = int_to_ptr.vmem [resolvable:$true] %s302
          %305 = dma.hbm_to_vmem [thread:$0]  %s5, 32, %s303, [#allocation6]
        $region32: #{pointnet_feat.4} parent=11 // pred_fallthru
          _
        // Predicated region
        $region33: #{pointnet_feat.4} parent=11 // pred_check
          %p306 = pneg %p184
        $region34: #{pointnet_feat.4} parent=11 // pred_check_branch
          %308 = sbr.rel (%p306) target = $region36
        $region35: #{pointnet_feat.4} parent=11 // pred_region
          %s310 = ssub.s32 32, 32
          %311 = vsyncadd [#allocation9], %s310
          %s313 = sshll.u32 [#allocation8], 4
          %s314 = int_to_ptr.vmem [resolvable:$true] %s313
          %316 = dma.hbm_to_vmem [thread:$0]  %s6, 32, %s314, [#allocation9]
        $region36: #{pointnet_feat.4} parent=11 // pred_fallthru
          _
        // Predicated region
        $region37: #{pointnet_feat.4} parent=11 // pred_check
          %p317 = pneg %p205
        $region38: #{pointnet_feat.4} parent=11 // pred_check_branch
          %319 = sbr.rel (%p317) target = $region40
        $region39: #{pointnet_feat.4} parent=11 // pred_region
          _
        $region40: #{pointnet_feat.4} parent=11 // pred_fallthru
          _
        // Predicated region
        $region41: #{pointnet_feat.4} parent=11 // pred_check
          %p320 = pneg %p226
        $region42: #{pointnet_feat.4} parent=11 // pred_check_branch
          %322 = sbr.rel (%p320) target = $region44
        $region43: #{pointnet_feat.4} parent=11 // pred_region
          %s324 = ssub.s32 16, 16
          %325 = vsyncadd [#allocation9], %s324
          %s327 = sshll.u32 [#allocation10], 4
          %s328 = int_to_ptr.vmem [resolvable:$true] %s327
          %330 = dma.hbm_to_vmem [thread:$0]  %s8, 16, %s328, [#allocation9]
        $region44: #{pointnet_feat.4} parent=11 // pred_fallthru
          _
      $region12: #{pointnet_feat.4} parent=5 // pred_fallthru
        _
      %p331 = scmp.lt.s32.totalorder %s18, 2
      // Predicated region
      $region45: #{pointnet_feat.4} parent=5 // pred_check
        %p332 = pneg %p331
      $region46: #{pointnet_feat.4} parent=5 // pred_check_branch
        %334 = sbr.rel (%p332) target = $region48
      $region47: #{pointnet_feat.4} parent=5 // pred_region
        // Predicated region
        $region49: #{pointnet_feat.4} parent=47 // pred_check
          %p335 = pneg %p52
        $region50: #{pointnet_feat.4} parent=47 // pred_check_branch
          %337 = sbr.rel (%p335) target = $region52
        $region51: #{pointnet_feat.4} parent=47 // pred_region
          %s338 = smul.u32 2, %s26
          %p339 = scmp.lt.s32.totalorder %s25, 1
          %s340 = scalar_select %p339, %s25, 1
          %p341 = scmp.lt.s32.totalorder %s338, 1
          %s342 = scalar_select %p341, %s338, 1
          %s343 = smul.addr %s340, 2
          %s344 = sadd.s32 %s342, %s343
          %s345 = smul.addr %s344, 4
          %s346 = scalar_lea.vmem %s0, %s345
          %s347 = smul.u32 2, %s26
        $region52: #{pointnet_feat.4} parent=47 // pred_fallthru
          _
      $region48: #{pointnet_feat.4} parent=5 // pred_fallthru
        _
      %p348 = scmp.le.s32.totalorder 1, %s18
      %p349 = scmp.lt.s32.totalorder %s18, 3
      %p350 = pnand %p348, %p349
      %p351 = pneg %p350
      // Predicated region
      $region53: #{pointnet_feat.4} parent=5 // pred_check
        _
      $region54: #{pointnet_feat.4} parent=5 // pred_check_branch
        %353 = sbr.rel (%p350) target = $region56
      $region55: #{pointnet_feat.4} parent=5 // pred_region
        %s354 = ssub.s32 %s18, 1
        // Predicated region
        $region57: #{pointnet_feat.4} parent=55 // pred_check
          %p355 = pneg %p100
        $region58: #{pointnet_feat.4} parent=55 // pred_check_branch
          %357 = sbr.rel (%p355) target = $region60
        $region59: #{pointnet_feat.4} parent=55 // pred_region
          %358 = dma.done [#allocation4], 16
        $region60: #{pointnet_feat.4} parent=55 // pred_fallthru
          _
        // Predicated region
        $region61: #{pointnet_feat.4} parent=55 // pred_check
          %p359 = pneg %p121
        $region62: #{pointnet_feat.4} parent=55 // pred_check_branch
          %361 = sbr.rel (%p359) target = $region64
        $region63: #{pointnet_feat.4} parent=55 // pred_region
          %362 = dma.done [#allocation6], 16
        $region64: #{pointnet_feat.4} parent=55 // pred_fallthru
          _
        // Predicated region
        $region65: #{pointnet_feat.4} parent=55 // pred_check
          %p363 = pneg %p163
        $region66: #{pointnet_feat.4} parent=55 // pred_check_branch
          %365 = sbr.rel (%p363) target = $region68
        $region67: #{pointnet_feat.4} parent=55 // pred_region
          %366 = dma.done [#allocation6], 32
        $region68: #{pointnet_feat.4} parent=55 // pred_fallthru
          _
        // Predicated region
        $region69: #{pointnet_feat.4} parent=55 // pred_check
          %p367 = pneg %p184
        $region70: #{pointnet_feat.4} parent=55 // pred_check_branch
          %369 = sbr.rel (%p367) target = $region72
        $region71: #{pointnet_feat.4} parent=55 // pred_region
          %370 = dma.done [#allocation9], 32
        $region72: #{pointnet_feat.4} parent=55 // pred_fallthru
          _
        // Predicated region
        $region73: #{pointnet_feat.4} parent=55 // pred_check
          %p371 = pneg %p226
        $region74: #{pointnet_feat.4} parent=55 // pred_check_branch
          %373 = sbr.rel (%p371) target = $region76
        $region75: #{pointnet_feat.4} parent=55 // pred_region
          %374 = dma.done [#allocation9], 16
        $region76: #{pointnet_feat.4} parent=55 // pred_fallthru
          _
        %s375 = smul.u32 2, %s28
        %p376 = scmp.lt.s32.totalorder %s27, 1
        %s377 = scalar_select %p376, %s27, 1
        %p378 = scmp.lt.s32.totalorder %s375, 1
        %s379 = scalar_select %p378, %s375, 1
        %s380 = smul.addr %s377, 2
        %s381 = sadd.s32 %s379, %s380
        %s382 = smul.addr %s381, 4
        %s383 = scalar_lea.vmem %s0, %s382
        %p384 = pneg %p58
        %p385 = pneg %p55
        %p386 = pneg %p79
        %p387 = pneg %p76
        %p388 = pneg %p100
        %p389 = pneg %p97
        %p390 = pneg %p121
        %p391 = pneg %p118
        %p392 = pneg %p142
        %p393 = pneg %p139
        %p394 = pneg %p163
        %p395 = pneg %p160
        %p396 = pneg %p184
        %p397 = pneg %p181
        %p398 = pneg %p205
        %p399 = pneg %p202
        %p400 = pneg %p226
        %p401 = pneg %p223
        %p402 = pneg %p252
        %p403 = pneg %p249
        %p404 = scmp.lt.s32.totalorder %s27, 1
        %s405 = scalar_select %p404, %s27, 1
        %s406 = scalar_lea.vmem %s9, %s405
        %s407 = smul.u32 2, %s28
        %p408 = scmp.lt.s32.totalorder %s27, 1
        %s409 = scalar_select %p408, %s27, 1
        %p410 = scmp.lt.s32.totalorder %s407, 1
        %s411 = scalar_select %p410, %s407, 1
        %s412 = smul.addr %s409, 2
        %s413 = sadd.s32 %s411, %s412
        %s414 = smul.addr %s413, 4
        %s415 = scalar_lea.vmem %s0, %s414
        %s416 = smul.u32 2, %s28
        %p417 = scmp.lt.s32.totalorder %s27, 1
        %s418 = scalar_select %p417, %s27, 1
        %s419 = scalar_lea.vmem %s9, %s418
        %p421 = scmp.eq.s32.totalorder %s28, 0
        // Predicated region
        $region77: #{pointnet_feat.4} parent=55 // pred_check
          %p422 = pneg %p421
        $region78: #{pointnet_feat.4} parent=55 // pred_check_branch
          %424 = sbr.rel (%p422) target = $region80
        $region79: #{pointnet_feat.4} parent=55 // pred_region
          %v425 = vlaneseq
          %vm426 = vcmp.ge.s32.totalorder %v425, 0
          %vm427 = vcmp.lt.s32.totalorder %v425, 256
          %vm428 = vmand %vm426, %vm427
          %429 = vst.msk [vmem:[#allocation2] sm:$0x3] %vm428, -inf
        $region80: #{pointnet_feat.4} parent=55 // pred_fallthru
          _
        %v430 = vld [vmem:[%s415] sm:$0xf]
        %v431 = vld [vmem:[%s415 + $0x4] sm:$0xf]
        %v432 = vld [vmem:[%s1] sm:$0x3]
        %v435 = vunpack.c.l.b16 %v430
        %v436 = vunpack.c.l.b16 %v431
        %v437 = vpack.c.b16 %v436, %v435
        %vm438 = vcmask 31744
        %v440 = vsel %vm438, %v437, 0
        %vm442 = vcmask 1041408
        %v444 = vsel %vm442, %v432, 0
        %446 = vmatprep.subr.bf16.mxu0 0
        %447 = vmatpush1.bf16.msra.mxu0 %v444
        %448 = vmatprep.subr.bf16.mxu0 0
        %449 = vmatpush1.bf16.msra.mxu0 0
        %450 = vmatprep.subr.bf16.mxu0 0
        %451 = vmatpush1.bf16.msra.mxu0 0
        %452 = vmatprep.subr.bf16.mxu0 0
        %453 = vmatpush1.bf16.msra.mxu0 0
        %454 = vmatprep.subr.bf16.mxu0 0
        %455 = vmatpush1.bf16.msra.mxu0 0
        %456 = vmatprep.subr.bf16.mxu0 0
        %457 = vmatpush1.bf16.msra.mxu0 0
        %458 = vmatprep.subr.bf16.mxu0 0
        %459 = vmatpush1.bf16.msra.mxu0 0
        %460 = vmatprep.subr.bf16.mxu0 0
        %461 = vmatpush1.bf16.msra.mxu0 0
        %462 = vmatprep.subr.bf16.mxu0 0
        %463 = vmatpush1.bf16.msra.mxu0 0
        %464 = vmatprep.subr.bf16.mxu0 0
        %465 = vmatpush1.bf16.msra.mxu0 0
        %466 = vmatprep.subr.bf16.mxu0 0
        %467 = vmatpush1.bf16.msra.mxu0 0
        %468 = vmatprep.subr.bf16.mxu0 0
        %469 = vmatpush1.bf16.msra.mxu0 0
        %470 = vmatprep.subr.bf16.mxu0 0
        %471 = vmatpush1.bf16.msra.mxu0 0
        %472 = vmatprep.subr.bf16.mxu0 0
        %473 = vmatpush1.bf16.msra.mxu0 0
        %474 = vmatprep.subr.bf16.mxu0 0
        %475 = vmatpush1.bf16.msra.mxu0 0
        %476 = vmatprep.subr.bf16.mxu0 0
        %477 = vmatpush1.bf16.msra.mxu0 0
        %478 = vmatprep.mubr.bf16.mxu0 0
        %479 = vmatmul.mubr.bf16.gmra.mrb[0].mxu0 %v440
        %v480 = vpop.f32.mrb[0].mxu0
        %v481 = vadd.f32 0.0, %v480
        %v482 = vpop.f32.mrb[0].mxu0
        %v483 = vpop.f32.mrb[0].mxu0
        %v484 = vadd.f32 0.0, %v483
        %v485 = vpop.f32.mrb[0].mxu0
        %486 = vdwg.mxu0
        %v487 = vld [vmem:[#allocation3] sm:$0x1]
        %v489 = vlaneseq
        %v490 = vshrl.u32 %v489, 7
        %v491 = vsub.s32 0, %v490
        %v492 = vrot.slane %v487, %v491
        %v494 = vmul.f32 %v481, %v492
        %v495 = vmul.f32 %v484, %v492
        %v496 = vld [vmem:[#allocation5] sm:$0x1]
        %v498 = vlaneseq
        %v499 = vshrl.u32 %v498, 7
        %v500 = vsub.s32 0, %v499
        %v501 = vrot.slane %v496, %v500
        %v503 = vadd.f32 %v494, %v501
        %v504 = vadd.f32 %v495, %v501
        %v505 = vmax.f32 %v503, 0.0
        %v506 = vmax.f32 %v504, 0.0
        %v507 = vpack.c.bf16 %v506, %v505
        %v508 = vld [vmem:[%s4] sm:$0xff]
        %v509 = vld [vmem:[%s4 + $0x8] sm:$0xff]
        %v510 = vld [vmem:[%s4 + $0x10] sm:$0xff]
        %v511 = vld [vmem:[%s4 + $0x18] sm:$0xff]
        %v512 = vld [vmem:[%s4 + $0x20] sm:$0xff]
        %v513 = vld [vmem:[%s4 + $0x28] sm:$0xff]
        %v514 = vld [vmem:[%s4 + $0x30] sm:$0xff]
        %v515 = vld [vmem:[%s4 + $0x38] sm:$0xff]
        %v524 = vunpack.c.l.b16 %v508
        %v525 = vunpack.c.h.b16 %v508
        %v526 = vunpack.c.l.b16 %v509
        %v527 = vunpack.c.h.b16 %v509
        %v528 = vunpack.c.l.b16 %v510
        %v529 = vunpack.c.h.b16 %v510
        %v530 = vunpack.c.l.b16 %v511
        %v531 = vunpack.c.h.b16 %v511
        %v532 = vunpack.c.l.b16 %v512
        %v533 = vunpack.c.h.b16 %v512
        %v534 = vunpack.c.l.b16 %v513
        %v535 = vunpack.c.h.b16 %v513
        %v536 = vunpack.c.l.b16 %v514
        %v537 = vunpack.c.h.b16 %v514
        %v538 = vunpack.c.l.b16 %v515
        %v539 = vunpack.c.h.b16 %v515
        %v540 = vpack.c.b16 %v526, %v524
        %v541 = vpack.c.b16 %v527, %v525
        %v542 = vpack.c.b16 %v530, %v528
        %v543 = vpack.c.b16 %v531, %v529
        %v544 = vpack.c.b16 %v534, %v532
        %v545 = vpack.c.b16 %v535, %v533
        %v546 = vpack.c.b16 %v538, %v536
        %v547 = vpack.c.b16 %v539, %v537
        %vm556 = vcmask 523264
        %v558 = vsel %vm556, %v507, 0
        %560 = vmatprep.subr.bf16.mxu0 %v541
        %561 = vmatpush1.bf16.msra.mxu0 %v540
        %562 = vmatprep.subr.bf16.mxu0 %v543
        %563 = vmatpush1.bf16.msra.mxu0 %v542
        %564 = vmatprep.subr.bf16.mxu0 %v545
        %565 = vmatpush1.bf16.msra.mxu0 %v544
        %566 = vmatprep.subr.bf16.mxu0 %v547
        %567 = vmatpush1.bf16.msra.mxu0 %v546
        %568 = vmatprep.subr.bf16.mxu0 0
        %569 = vmatpush1.bf16.msra.mxu0 0
        %570 = vmatprep.subr.bf16.mxu0 0
        %571 = vmatpush1.bf16.msra.mxu0 0
        %572 = vmatprep.subr.bf16.mxu0 0
        %573 = vmatpush1.bf16.msra.mxu0 0
        %574 = vmatprep.subr.bf16.mxu0 0
        %575 = vmatpush1.bf16.msra.mxu0 0
        %576 = vmatprep.subr.bf16.mxu0 0
        %577 = vmatpush1.bf16.msra.mxu0 0
        %578 = vmatprep.subr.bf16.mxu0 0
        %579 = vmatpush1.bf16.msra.mxu0 0
        %580 = vmatprep.subr.bf16.mxu0 0
        %581 = vmatpush1.bf16.msra.mxu0 0
        %582 = vmatprep.subr.bf16.mxu0 0
        %583 = vmatpush1.bf16.msra.mxu0 0
        %584 = vmatprep.subr.bf16.mxu0 0
        %585 = vmatpush1.bf16.msra.mxu0 0
        %586 = vmatprep.subr.bf16.mxu0 0
        %587 = vmatpush1.bf16.msra.mxu0 0
        %588 = vmatprep.subr.bf16.mxu0 0
        %589 = vmatpush1.bf16.msra.mxu0 0
        %590 = vmatprep.subr.bf16.mxu0 0
        %591 = vmatpush1.bf16.msra.mxu0 0
        %592 = vmatprep.mubr.bf16.mxu0 0
        %593 = vmatmul.mubr.bf16.gmra.mrb[0].mxu0 %v558
        %v594 = vpop.f32.mrb[0].mxu0
        %v595 = vadd.f32 0.0, %v594
        %v596 = vpop.f32.mrb[0].mxu0
        %v597 = vadd.f32 0.0, %v596
        %v598 = vpop.f32.mrb[0].mxu0
        %v599 = vadd.f32 0.0, %v598
        %v600 = vpop.f32.mrb[0].mxu0
        %v601 = vadd.f32 0.0, %v600
        %602 = vdwg.mxu0
        %v603 = vld [vmem:[#allocation7] sm:$0x3]
        %v605 = vlaneseq
        %v606 = vshrl.u32 %v605, 7
        %v607 = vsub.s32 0, %v606
        %v608 = vrot.slane %v603, %v607
        %v609 = vlaneseq
        %v610 = vshrl.u32 %v609, 7
        %v611 = vsub.s32 1, %v610
        %v612 = vrot.slane %v603, %v611
        %v615 = vmul.f32 %v595, %v608
        %v616 = vmul.f32 %v597, %v612
        %v617 = vmul.f32 %v599, %v608
        %v618 = vmul.f32 %v601, %v612
        %v619 = vld [vmem:[#allocation8] sm:$0x3]
        %v621 = vlaneseq
        %v622 = vshrl.u32 %v621, 7
        %v623 = vsub.s32 0, %v622
        %v624 = vrot.slane %v619, %v623
        %v625 = vlaneseq
        %v626 = vshrl.u32 %v625, 7
        %v627 = vsub.s32 1, %v626
        %v628 = vrot.slane %v619, %v627
        %v631 = vadd.f32 %v615, %v624
        %v632 = vadd.f32 %v616, %v628
        %v633 = vadd.f32 %v617, %v624
        %v634 = vadd.f32 %v618, %v628
        %v635 = vmax.f32 %v631, 0.0
        %v636 = vmax.f32 %v632, 0.0
        %v637 = vmax.f32 %v633, 0.0
        %v638 = vmax.f32 %v634, 0.0
        %v639 = vld [vmem:[#allocation2] sm:$0x3]
        %v640 = vmax.f32 %v635, %v637
        %v641 = vrot.slane %v640, 4
        %v642 = vmax.f32 %v640, %v641
        %v643 = vrot.slane %v642, 2
        %v644 = vmax.f32 %v642, %v643
        %v645 = vrot.slane %v644, 1
        %v646 = vmax.f32 %v644, %v645
        %v647 = vmax.f32 %v636, %v638
        %v648 = vrot.slane %v647, 4
        %v649 = vmax.f32 %v647, %v648
        %v650 = vrot.slane %v649, 2
        %v651 = vmax.f32 %v649, %v650
        %v652 = vrot.slane %v651, 1
        %v653 = vmax.f32 %v651, %v652
        %v656 = vcombine.low %v646, %v653
        %v658 = vunpack.c.l.s4 1966171168
        %v659 = vunpack.c.0.s8 %v658
        %v660 = vlaneseq
        %v661 = vshrl.u32 %v660, 7
        %v662 = vsub.s32 %v659, %v661
        %v663 = vrot.slane %v656, %v662
        %v665 = vunpack.c.l.s4 1966171168
        %v666 = vunpack.c.0.s8 %v665
        %v667 = vlaneseq
        %v668 = vshrl.u32 %v667, 7
        %v669 = vsub.s32 %v666, %v668
        %v670 = vrot.slane %v663, %v669
        %v672 = vmax.f32 %v639, %v670
        %v673 = vlaneseq
        %vm674 = vcmp.ge.s32.totalorder %v673, 0
        %vm675 = vcmp.lt.s32.totalorder %v673, 256
        %vm676 = vmand %vm674, %vm675
        %677 = vst.msk [vmem:[#allocation2] sm:$0x3] %vm676, %v672
        // Predicated region
        $region81: #{pointnet_feat.4} parent=55 // pred_check
          %p678 = pneg %p421
        $region82: #{pointnet_feat.4} parent=55 // pred_check_branch
          %680 = sbr.rel (%p678) target = $region84
        $region83: #{pointnet_feat.4} parent=55 // pred_region
          %v681 = vld [vmem:[#allocation2] sm:$0x3]
          %v682 = vld [vmem:[%s7] sm:$0xff]
          %v683 = vld [vmem:[%s7 + $0x8] sm:$0xff]
          %v684 = vld [vmem:[%s7 + $0x10] sm:$0xff]
          %v685 = vld [vmem:[%s7 + $0x18] sm:$0xff]
          %v686 = vld [vmem:[%s7 + $0x20] sm:$0xff]
          %v687 = vld [vmem:[%s7 + $0x28] sm:$0xff]
          %v688 = vld [vmem:[%s7 + $0x30] sm:$0xff]
          %v689 = vld [vmem:[%s7 + $0x38] sm:$0xff]
          %v690 = vld [vmem:[%s7 + $0x40] sm:$0xff]
          %v691 = vld [vmem:[%s7 + $0x48] sm:$0xff]
          %v692 = vld [vmem:[%s7 + $0x50] sm:$0xff]
          %v693 = vld [vmem:[%s7 + $0x58] sm:$0xff]
          %v694 = vld [vmem:[%s7 + $0x60] sm:$0xff]
          %v695 = vld [vmem:[%s7 + $0x68] sm:$0xff]
          %v696 = vld [vmem:[%s7 + $0x70] sm:$0xff]
          %v697 = vld [vmem:[%s7 + $0x78] sm:$0xff]
          %v698 = vld [vmem:[%s7 + $0x80] sm:$0xff]
          %v699 = vld [vmem:[%s7 + $0x88] sm:$0xff]
          %v700 = vld [vmem:[%s7 + $0x90] sm:$0xff]
          %v701 = vld [vmem:[%s7 + $0x98] sm:$0xff]
          %v702 = vld [vmem:[%s7 + $0xa0] sm:$0xff]
          %v703 = vld [vmem:[%s7 + $0xa8] sm:$0xff]
          %v704 = vld [vmem:[%s7 + $0xb0] sm:$0xff]
          %v705 = vld [vmem:[%s7 + $0xb8] sm:$0xff]
          %v706 = vld [vmem:[%s7 + $0xc0] sm:$0xff]
          %v707 = vld [vmem:[%s7 + $0xc8] sm:$0xff]
          %v708 = vld [vmem:[%s7 + $0xd0] sm:$0xff]
          %v709 = vld [vmem:[%s7 + $0xd8] sm:$0xff]
          %v710 = vld [vmem:[%s7 + $0xe0] sm:$0xff]
          %v711 = vld [vmem:[%s7 + $0xe8] sm:$0xff]
          %v712 = vld [vmem:[%s7 + $0xf0] sm:$0xff]
          %v713 = vld [vmem:[%s7 + $0xf8] sm:$0xff]
          %v714 = vld [vmem:[#allocation10] sm:$0x1]
          %v716 = vlaneseq
          %v717 = vshrl.u32 %v716, 7
          %v718 = vsub.s32 0, %v717
          %v719 = vrot.slane %v681, %v718
          %v720 = vlaneseq
          %v721 = vshrl.u32 %v720, 7
          %v722 = vsub.s32 1, %v721
          %v723 = vrot.slane %v681, %v722
          %726 = vmatprep.subr.mxu0 0.0
          %727 = vmatpush1.msra.mxu0 %v682
          %728 = vmatprep.subr.mxu0 0.0
          %729 = vmatpush1.msra.mxu0 %v683
          %730 = vmatprep.subr.mxu0 0.0
          %731 = vmatpush1.msra.mxu0 %v684
          %732 = vmatprep.subr.mxu0 0.0
          %733 = vmatpush1.msra.mxu0 %v685
          %734 = vmatprep.subr.mxu0 0.0
          %735 = vmatpush1.msra.mxu0 %v686
          %736 = vmatprep.subr.mxu0 0.0
          %737 = vmatpush1.msra.mxu0 %v687
          %738 = vmatprep.subr.mxu0 0.0
          %739 = vmatpush1.msra.mxu0 %v688
          %740 = vmatprep.subr.mxu0 0.0
          %741 = vmatpush1.msra.mxu0 %v689
          %742 = vmatprep.subr.mxu0 0.0
          %743 = vmatpush1.msra.mxu0 %v690
          %744 = vmatprep.subr.mxu0 0.0
          %745 = vmatpush1.msra.mxu0 %v691
          %746 = vmatprep.subr.mxu0 0.0
          %747 = vmatpush1.msra.mxu0 %v692
          %748 = vmatprep.subr.mxu0 0.0
          %749 = vmatpush1.msra.mxu0 %v693
          %750 = vmatprep.subr.mxu0 0.0
          %751 = vmatpush1.msra.mxu0 %v694
          %752 = vmatprep.subr.mxu0 0.0
          %753 = vmatpush1.msra.mxu0 %v695
          %754 = vmatprep.subr.mxu0 0.0
          %755 = vmatpush1.msra.mxu0 %v696
          %756 = vmatprep.subr.mxu0 0.0
          %757 = vmatpush1.msra.mxu0 %v697
          %758 = vmatprep.subr.mxu0 0.0
          %759 = vmatpush1.msra.mxu0 %v698
          %760 = vmatprep.subr.mxu0 0.0
          %761 = vmatpush1.msra.mxu0 %v699
          %762 = vmatprep.subr.mxu0 0.0
          %763 = vmatpush1.msra.mxu0 %v700
          %764 = vmatprep.subr.mxu0 0.0
          %765 = vmatpush1.msra.mxu0 %v701
          %766 = vmatprep.subr.mxu0 0.0
          %767 = vmatpush1.msra.mxu0 %v702
          %768 = vmatprep.subr.mxu0 0.0
          %769 = vmatpush1.msra.mxu0 %v703
          %770 = vmatprep.subr.mxu0 0.0
          %771 = vmatpush1.msra.mxu0 %v704
          %772 = vmatprep.subr.mxu0 0.0
          %773 = vmatpush1.msra.mxu0 %v705
          %774 = vmatprep.subr.mxu0 0.0
          %775 = vmatpush1.msra.mxu0 %v706
          %776 = vmatprep.subr.mxu0 0.0
          %777 = vmatpush1.msra.mxu0 %v707
          %778 = vmatprep.subr.mxu0 0.0
          %779 = vmatpush1.msra.mxu0 %v708
          %780 = vmatprep.subr.mxu0 0.0
          %781 = vmatpush1.msra.mxu0 %v709
          %782 = vmatprep.subr.mxu0 0.0
          %783 = vmatpush1.msra.mxu0 %v710
          %784 = vmatprep.subr.mxu0 0.0
          %785 = vmatpush1.msra.mxu0 %v711
          %786 = vmatprep.subr.mxu0 0.0
          %787 = vmatpush1.msra.mxu0 %v712
          %788 = vmatprep.subr.mxu0 0.0
          %789 = vmatpush1.msra.mxu0 %v713
          %790 = vmatprep.mubr.f32.mxu0 %v723
          %791 = vmatmul.mubr.f32.gmra.mrb[0].mxu0 %v719
          %v792 = vpop.f32.mrb[0].mxu0
          %v793 = vadd.f32 %v714, %v792
          %v794 = vpop.f32.mrb[0].mxu0
          %795 = vdwg.mxu0
          %vm796 = vcmask 122880
          %797 = vst.msk [vmem:[%s419] sm:$0x1] %vm796, %v793
        $region84: #{pointnet_feat.4} parent=55 // pred_fallthru
          _
        %p798 = scmp.lt.s32.totalorder %s27, 1
        %s799 = scalar_select %p798, %s27, 1
        %s800 = scalar_lea.vmem %s9, %s799
        // Predicated region
        $region85: #{pointnet_feat.4} parent=55 // pred_check
          %p801 = pneg %p249
        $region86: #{pointnet_feat.4} parent=55 // pred_check_branch
          %803 = sbr.rel (%p801) target = $region88
        $region87: #{pointnet_feat.4} parent=55 // pred_region
          _
        $region88: #{pointnet_feat.4} parent=55 // pred_fallthru
          _
      $region56: #{pointnet_feat.4} parent=5 // pred_fallthru
        _
      %p804 = scmp.le.s32.totalorder 2, %s18
      // Predicated region
      $region89: #{pointnet_feat.4} parent=5 // pred_check
        %p805 = pneg %p804
      $region90: #{pointnet_feat.4} parent=5 // pred_check_branch
        %807 = sbr.rel (%p805) target = $region92
      $region91: #{pointnet_feat.4} parent=5 // pred_region
        %s808 = ssub.s32 %s18, 2
        // Predicated region
        $region93: #{pointnet_feat.4} parent=91 // pred_check
          %p809 = pneg %p255
        $region94: #{pointnet_feat.4} parent=91 // pred_check_branch
          %811 = sbr.rel (%p809) target = $region96
        $region95: #{pointnet_feat.4} parent=91 // pred_region
          %p812 = scmp.lt.s32.totalorder %s29, 1
          %s813 = scalar_select %p812, %s29, 1
          %s814 = scalar_lea.vmem %s9, %s813
        $region96: #{pointnet_feat.4} parent=91 // pred_fallthru
          _
      $region92: #{pointnet_feat.4} parent=5 // pred_fallthru
        _
    $region6: #{pointnet_feat.4} parent=1 // loop_footer
      %s22 = sadd.s32 1, %s18
    $region7: #{pointnet_feat.4} parent=1 // loop_footer_branch
      %17 = sbr.rel target = $region3
    $region8: #{pointnet_feat.4} parent=1 // loop_exit
      _
    %815 = vsyncpa [#allocation4], 1
    %s816 = scalar_lea.sflag [#allocation4], 1
    %817 = vsyncpa %s816, 1
    %818 = vsyncpa [#allocation6], 1
    %819 = vsyncpa [#allocation9], 1

// kernel: pointnet_feat.7
$region0: #{pointnet_feat.7}
  #allocation0 [shape = 'u32[]', space=smem, size = 0x4, offset = 0x4, fixed_abs, tag = 'smem constant byte address 0x4 - core index']
  #allocation1 [shape = 'u32[144,128]{1,0:T(1,128)}', space=vmem, size = 0x12000, scoped, tag = 'internal scratch']
  #allocation2 [shape = 'f32[1,512]{1,0:T(1,128)}', space=vmem, size = 0x800, scoped, tag = 'scratch operand']
  %s0 = inlined_call_operand.vmem [shape: bf16[2,16,64], index: 0, kind: input, shape index: {}]
  %s1 = inlined_call_operand.vmem [shape: bf16[2,64,64], index: 1, kind: input, shape index: {}]
  %s2 = inlined_call_operand.vmem [shape: f32[1,64], index: 2, kind: input, shape index: {}]
  %s3 = inlined_call_operand.vmem [shape: f32[1,64], index: 3, kind: input, shape index: {}]
  %s4 = inlined_call_operand.vmem [shape: bf16[64,128], index: 4, kind: input, shape index: {}]
  %s5 = inlined_call_operand.vmem [shape: f32[1,128], index: 5, kind: input, shape index: {}]
  %s6 = inlined_call_operand.vmem [shape: f32[1,128], index: 6, kind: input, shape index: {}]
  %s7 = inlined_call_operand.vmem [shape: bf16[128,512], index: 7, kind: input, shape index: {}]
  %s8 = inlined_call_operand.vmem [shape: f32[1,512], index: 8, kind: input, shape index: {}]
  %s9 = inlined_call_operand.vmem [shape: f32[1,512], index: 9, kind: input, shape index: {}]
  %s10 = inlined_call_operand.vmem [shape: f32[2,1,512], index: 10, kind: output, shape index: {}]
  %s11 = sld [smem:[#allocation0]]
  $region81: #{pointnet_feat.7} parent=0
    _
  %s13 = ssub.s32 1, %s11
  %s14 = scalar_select 0, %s13, %s11
  loop: start=0, step=1, limit=4
  $region2: #{pointnet_feat.7} parent=0 // loop_pre_header
    _
  $region3: #{pointnet_feat.7} parent=0 // loop_header
    %s16 = sphi 0, %s20
    %p17 = scmp.ge.s32.totalorder %s16, 4
    %s23 = sphi 0, %s35
    %s24 = sphi 0, %s31
    %s25 = sphi 0, %s23
    %s26 = sphi 0, %s24
    %s27 = sphi 0, %s25
    %s28 = sphi 0, %s26
    %s40 = sphi 0, %s42
    %s43 = sphi 0, %s40
    %s44 = sphi 0, %s43
    %s60 = sphi 0, %s44
    %s66 = sphi 0, %s68
    %s69 = sphi 0, %s66
    %s70 = sphi 0, %s69
    %s86 = sphi 0, %s70
    %s90 = sphi 0, %s90
    %s92 = sphi 0, %s90
    %s93 = sphi 0, %s92
    %s107 = sphi 0, %s93
    %s111 = sphi 0, %s111
    %s113 = sphi 0, %s111
    %s114 = sphi 0, %s113
    %s128 = sphi 0, %s114
    %s132 = sphi 0, %s132
    %s134 = sphi 0, %s132
    %s135 = sphi 0, %s134
    %s149 = sphi 0, %s135
    %s153 = sphi 0, %s153
    %s155 = sphi 0, %s153
    %s156 = sphi 0, %s155
    %s170 = sphi 0, %s156
    %s174 = sphi 0, %s174
    %s176 = sphi 0, %s174
    %s177 = sphi 0, %s176
    %s191 = sphi 0, %s177
    %s195 = sphi 0, %s195
    %s197 = sphi 0, %s195
    %s198 = sphi 0, %s197
    %s212 = sphi 0, %s198
    %s216 = sphi 0, %s216
    %s218 = sphi 0, %s216
    %s219 = sphi 0, %s218
    %s233 = sphi 0, %s219
    %s237 = sphi 0, %s237
    %s239 = sphi 0, %s237
    %s240 = sphi 0, %s239
    %s254 = sphi 0, %s240
    %s260 = sphi 0, %s262
    %s263 = sphi 0, %s260
    %s264 = sphi 0, %s263
    %s280 = sphi 0, %s264
  $region4: #{pointnet_feat.7} parent=0 // loop_header_branch
    %19 = sbr.rel (%p17) target = $region8
  $region5: #{pointnet_feat.7} parent=0 // loop_body
    %s21 = ssub.s32 %s16, 1
    %s22 = ssub.s32 %s16, 2
    %s29 = sadd.s32 1, %s24
    %p30 = scmp.ge.s32.totalorder %s29, 1
    %s31 = scalar_select %p30, 0, %s29
    %s32 = sadd.s32 1, %s23
    %s33 = scalar_select %p30, %s32, %s23
    %p34 = scmp.ge.s32.totalorder %s33, 2
    %s35 = scalar_select %p34, 0, %s33
    %s36 = ssub.s32 %s23, %s35
    %s37 = ssub.s32 %s24, %s31
    %s38 = sor.u32 %s36, %s37
    %p39 = scmp.eq.s32.totalorder %s38, 0
    %s41 = sadd.s32 %s40, 1
    %s42 = scalar_select %p39, %s40, %s41
    %p45 = pneg %p39
    %p46 = scmp.eq.s32.totalorder %s16, 1
    %p47 = por %p45, %p46
    %p48 = scmp.ne.s32.totalorder %s40, %s43
    %p49 = scmp.eq.s32.totalorder %s16, 0
    %p50 = por %p48, %p49
    %p51 = scmp.ne.s32.totalorder %s40, %s43
    %p52 = scmp.eq.s32.totalorder %s21, 1
    %p53 = por %p51, %p52
    %p54 = scmp.ne.s32.totalorder %s43, %s44
    %p55 = scmp.eq.s32.totalorder %s21, 0
    %p56 = por %p54, %p55
    %p57 = scmp.ne.s32.totalorder %s43, %s44
    %p58 = scmp.eq.s32.totalorder %s22, 1
    %p59 = por %p57, %p58
    %p61 = scmp.ne.s32.totalorder %s44, %s60
    %p62 = scmp.eq.s32.totalorder %s22, 0
    %p63 = por %p61, %p62
    %s64 = ssub.s32 %s23, %s35
    %p65 = scmp.eq.s32.totalorder %s64, 0
    %s67 = sadd.s32 %s66, 1
    %s68 = scalar_select %p65, %s66, %s67
    %p71 = pneg %p65
    %p72 = scmp.eq.s32.totalorder %s16, 1
    %p73 = por %p71, %p72
    %p74 = scmp.ne.s32.totalorder %s66, %s69
    %p75 = scmp.eq.s32.totalorder %s16, 0
    %p76 = por %p74, %p75
    %p77 = scmp.ne.s32.totalorder %s66, %s69
    %p78 = scmp.eq.s32.totalorder %s21, 1
    %p79 = por %p77, %p78
    %p80 = scmp.ne.s32.totalorder %s69, %s70
    %p81 = scmp.eq.s32.totalorder %s21, 0
    %p82 = por %p80, %p81
    %p83 = scmp.ne.s32.totalorder %s69, %s70
    %p84 = scmp.eq.s32.totalorder %s22, 1
    %p85 = por %p83, %p84
    %p87 = scmp.ne.s32.totalorder %s70, %s86
    %p88 = scmp.eq.s32.totalorder %s22, 0
    %p89 = por %p87, %p88
    %s91 = sadd.s32 %s90, 1
    %p94 = scmp.eq.s32.totalorder %s16, 1
    %p95 = scmp.ne.s32.totalorder %s90, %s92
    %p96 = scmp.eq.s32.totalorder %s16, 0
    %p97 = por %p95, %p96
    %p98 = scmp.ne.s32.totalorder %s90, %s92
    %p99 = scmp.eq.s32.totalorder %s21, 1
    %p100 = por %p98, %p99
    %p101 = scmp.ne.s32.totalorder %s92, %s93
    %p102 = scmp.eq.s32.totalorder %s21, 0
    %p103 = por %p101, %p102
    %p104 = scmp.ne.s32.totalorder %s92, %s93
    %p105 = scmp.eq.s32.totalorder %s22, 1
    %p106 = por %p104, %p105
    %p108 = scmp.ne.s32.totalorder %s93, %s107
    %p109 = scmp.eq.s32.totalorder %s22, 0
    %p110 = por %p108, %p109
    %s112 = sadd.s32 %s111, 1
    %p115 = scmp.eq.s32.totalorder %s16, 1
    %p116 = scmp.ne.s32.totalorder %s111, %s113
    %p117 = scmp.eq.s32.totalorder %s16, 0
    %p118 = por %p116, %p117
    %p119 = scmp.ne.s32.totalorder %s111, %s113
    %p120 = scmp.eq.s32.totalorder %s21, 1
    %p121 = por %p119, %p120
    %p122 = scmp.ne.s32.totalorder %s113, %s114
    %p123 = scmp.eq.s32.totalorder %s21, 0
    %p124 = por %p122, %p123
    %p125 = scmp.ne.s32.totalorder %s113, %s114
    %p126 = scmp.eq.s32.totalorder %s22, 1
    %p127 = por %p125, %p126
    %p129 = scmp.ne.s32.totalorder %s114, %s128
    %p130 = scmp.eq.s32.totalorder %s22, 0
    %p131 = por %p129, %p130
    %s133 = sadd.s32 %s132, 1
    %p136 = scmp.eq.s32.totalorder %s16, 1
    %p137 = scmp.ne.s32.totalorder %s132, %s134
    %p138 = scmp.eq.s32.totalorder %s16, 0
    %p139 = por %p137, %p138
    %p140 = scmp.ne.s32.totalorder %s132, %s134
    %p141 = scmp.eq.s32.totalorder %s21, 1
    %p142 = por %p140, %p141
    %p143 = scmp.ne.s32.totalorder %s134, %s135
    %p144 = scmp.eq.s32.totalorder %s21, 0
    %p145 = por %p143, %p144
    %p146 = scmp.ne.s32.totalorder %s134, %s135
    %p147 = scmp.eq.s32.totalorder %s22, 1
    %p148 = por %p146, %p147
    %p150 = scmp.ne.s32.totalorder %s135, %s149
    %p151 = scmp.eq.s32.totalorder %s22, 0
    %p152 = por %p150, %p151
    %s154 = sadd.s32 %s153, 1
    %p157 = scmp.eq.s32.totalorder %s16, 1
    %p158 = scmp.ne.s32.totalorder %s153, %s155
    %p159 = scmp.eq.s32.totalorder %s16, 0
    %p160 = por %p158, %p159
    %p161 = scmp.ne.s32.totalorder %s153, %s155
    %p162 = scmp.eq.s32.totalorder %s21, 1
    %p163 = por %p161, %p162
    %p164 = scmp.ne.s32.totalorder %s155, %s156
    %p165 = scmp.eq.s32.totalorder %s21, 0
    %p166 = por %p164, %p165
    %p167 = scmp.ne.s32.totalorder %s155, %s156
    %p168 = scmp.eq.s32.totalorder %s22, 1
    %p169 = por %p167, %p168
    %p171 = scmp.ne.s32.totalorder %s156, %s170
    %p172 = scmp.eq.s32.totalorder %s22, 0
    %p173 = por %p171, %p172
    %s175 = sadd.s32 %s174, 1
    %p178 = scmp.eq.s32.totalorder %s16, 1
    %p179 = scmp.ne.s32.totalorder %s174, %s176
    %p180 = scmp.eq.s32.totalorder %s16, 0
    %p181 = por %p179, %p180
    %p182 = scmp.ne.s32.totalorder %s174, %s176
    %p183 = scmp.eq.s32.totalorder %s21, 1
    %p184 = por %p182, %p183
    %p185 = scmp.ne.s32.totalorder %s176, %s177
    %p186 = scmp.eq.s32.totalorder %s21, 0
    %p187 = por %p185, %p186
    %p188 = scmp.ne.s32.totalorder %s176, %s177
    %p189 = scmp.eq.s32.totalorder %s22, 1
    %p190 = por %p188, %p189
    %p192 = scmp.ne.s32.totalorder %s177, %s191
    %p193 = scmp.eq.s32.totalorder %s22, 0
    %p194 = por %p192, %p193
    %s196 = sadd.s32 %s195, 1
    %p199 = scmp.eq.s32.totalorder %s16, 1
    %p200 = scmp.ne.s32.totalorder %s195, %s197
    %p201 = scmp.eq.s32.totalorder %s16, 0
    %p202 = por %p200, %p201
    %p203 = scmp.ne.s32.totalorder %s195, %s197
    %p204 = scmp.eq.s32.totalorder %s21, 1
    %p205 = por %p203, %p204
    %p206 = scmp.ne.s32.totalorder %s197, %s198
    %p207 = scmp.eq.s32.totalorder %s21, 0
    %p208 = por %p206, %p207
    %p209 = scmp.ne.s32.totalorder %s197, %s198
    %p210 = scmp.eq.s32.totalorder %s22, 1
    %p211 = por %p209, %p210
    %p213 = scmp.ne.s32.totalorder %s198, %s212
    %p214 = scmp.eq.s32.totalorder %s22, 0
    %p215 = por %p213, %p214
    %s217 = sadd.s32 %s216, 1
    %p220 = scmp.eq.s32.totalorder %s16, 1
    %p221 = scmp.ne.s32.totalorder %s216, %s218
    %p222 = scmp.eq.s32.totalorder %s16, 0
    %p223 = por %p221, %p222
    %p224 = scmp.ne.s32.totalorder %s216, %s218
    %p225 = scmp.eq.s32.totalorder %s21, 1
    %p226 = por %p224, %p225
    %p227 = scmp.ne.s32.totalorder %s218, %s219
    %p228 = scmp.eq.s32.totalorder %s21, 0
    %p229 = por %p227, %p228
    %p230 = scmp.ne.s32.totalorder %s218, %s219
    %p231 = scmp.eq.s32.totalorder %s22, 1
    %p232 = por %p230, %p231
    %p234 = scmp.ne.s32.totalorder %s219, %s233
    %p235 = scmp.eq.s32.totalorder %s22, 0
    %p236 = por %p234, %p235
    %s238 = sadd.s32 %s237, 1
    %p241 = scmp.eq.s32.totalorder %s16, 1
    %p242 = scmp.ne.s32.totalorder %s237, %s239
    %p243 = scmp.eq.s32.totalorder %s16, 0
    %p244 = por %p242, %p243
    %p245 = scmp.ne.s32.totalorder %s237, %s239
    %p246 = scmp.eq.s32.totalorder %s21, 1
    %p247 = por %p245, %p246
    %p248 = scmp.ne.s32.totalorder %s239, %s240
    %p249 = scmp.eq.s32.totalorder %s21, 0
    %p250 = por %p248, %p249
    %p251 = scmp.ne.s32.totalorder %s239, %s240
    %p252 = scmp.eq.s32.totalorder %s22, 1
    %p253 = por %p251, %p252
    %p255 = scmp.ne.s32.totalorder %s240, %s254
    %p256 = scmp.eq.s32.totalorder %s22, 0
    %p257 = por %p255, %p256
    %s258 = ssub.s32 %s23, %s35
    %p259 = scmp.eq.s32.totalorder %s258, 0
    %s261 = sadd.s32 %s260, 1
    %s262 = scalar_select %p259, %s260, %s261
    %p265 = pneg %p259
    %p266 = scmp.eq.s32.totalorder %s16, 1
    %p267 = por %p265, %p266
    %p268 = scmp.ne.s32.totalorder %s260, %s263
    %p269 = scmp.eq.s32.totalorder %s16, 0
    %p270 = por %p268, %p269
    %p271 = scmp.ne.s32.totalorder %s260, %s263
    %p272 = scmp.eq.s32.totalorder %s21, 1
    %p273 = por %p271, %p272
    %p274 = scmp.ne.s32.totalorder %s263, %s264
    %p275 = scmp.eq.s32.totalorder %s21, 0
    %p276 = por %p274, %p275
    %p277 = scmp.ne.s32.totalorder %s263, %s264
    %p278 = scmp.eq.s32.totalorder %s22, 1
    %p279 = por %p277, %p278
    %p281 = scmp.ne.s32.totalorder %s264, %s280
    %p282 = scmp.eq.s32.totalorder %s22, 0
    %p283 = por %p281, %p282
    %p284 = scmp.le.s32.totalorder 1, %s16
    %p285 = scmp.lt.s32.totalorder %s16, 3
    %p286 = pnand %p284, %p285
    %p287 = pneg %p286
    // Predicated region
    $region9: #{pointnet_feat.7} parent=5 // pred_check
      _
    $region10: #{pointnet_feat.7} parent=5 // pred_check_branch
      %289 = sbr.rel (%p286) target = $region12
    $region11: #{pointnet_feat.7} parent=5 // pred_region
      %s290 = ssub.s32 %s16, 1
      // Predicated region
      $region13: #{pointnet_feat.7} parent=11 // pred_check
        %p291 = pneg %p103
      $region14: #{pointnet_feat.7} parent=11 // pred_check_branch
        %293 = sbr.rel (%p291) target = $region16
      $region15: #{pointnet_feat.7} parent=11 // pred_region
        _
      $region16: #{pointnet_feat.7} parent=11 // pred_fallthru
        _
      // Predicated region
      $region17: #{pointnet_feat.7} parent=11 // pred_check
        %p294 = pneg %p124
      $region18: #{pointnet_feat.7} parent=11 // pred_check_branch
        %296 = sbr.rel (%p294) target = $region20
      $region19: #{pointnet_feat.7} parent=11 // pred_region
        _
      $region20: #{pointnet_feat.7} parent=11 // pred_fallthru
        _
      // Predicated region
      $region21: #{pointnet_feat.7} parent=11 // pred_check
        %p297 = pneg %p145
      $region22: #{pointnet_feat.7} parent=11 // pred_check_branch
        %299 = sbr.rel (%p297) target = $region24
      $region23: #{pointnet_feat.7} parent=11 // pred_region
        _
      $region24: #{pointnet_feat.7} parent=11 // pred_fallthru
        _
      // Predicated region
      $region25: #{pointnet_feat.7} parent=11 // pred_check
        %p300 = pneg %p166
      $region26: #{pointnet_feat.7} parent=11 // pred_check_branch
        %302 = sbr.rel (%p300) target = $region28
      $region27: #{pointnet_feat.7} parent=11 // pred_region
        _
      $region28: #{pointnet_feat.7} parent=11 // pred_fallthru
        _
      // Predicated region
      $region29: #{pointnet_feat.7} parent=11 // pred_check
        %p303 = pneg %p187
      $region30: #{pointnet_feat.7} parent=11 // pred_check_branch
        %305 = sbr.rel (%p303) target = $region32
      $region31: #{pointnet_feat.7} parent=11 // pred_region
        _
      $region32: #{pointnet_feat.7} parent=11 // pred_fallthru
        _
      // Predicated region
      $region33: #{pointnet_feat.7} parent=11 // pred_check
        %p306 = pneg %p208
      $region34: #{pointnet_feat.7} parent=11 // pred_check_branch
        %308 = sbr.rel (%p306) target = $region36
      $region35: #{pointnet_feat.7} parent=11 // pred_region
        _
      $region36: #{pointnet_feat.7} parent=11 // pred_fallthru
        _
      // Predicated region
      $region37: #{pointnet_feat.7} parent=11 // pred_check
        %p309 = pneg %p229
      $region38: #{pointnet_feat.7} parent=11 // pred_check_branch
        %311 = sbr.rel (%p309) target = $region40
      $region39: #{pointnet_feat.7} parent=11 // pred_region
        _
      $region40: #{pointnet_feat.7} parent=11 // pred_fallthru
        _
      // Predicated region
      $region41: #{pointnet_feat.7} parent=11 // pred_check
        %p312 = pneg %p250
      $region42: #{pointnet_feat.7} parent=11 // pred_check_branch
        %314 = sbr.rel (%p312) target = $region44
      $region43: #{pointnet_feat.7} parent=11 // pred_region
        _
      $region44: #{pointnet_feat.7} parent=11 // pred_fallthru
        _
    $region12: #{pointnet_feat.7} parent=5 // pred_fallthru
      _
    %p315 = scmp.lt.s32.totalorder %s16, 2
    // Predicated region
    $region45: #{pointnet_feat.7} parent=5 // pred_check
      %p316 = pneg %p315
    $region46: #{pointnet_feat.7} parent=5 // pred_check_branch
      %318 = sbr.rel (%p316) target = $region48
    $region47: #{pointnet_feat.7} parent=5 // pred_region
      // Predicated region
      $region49: #{pointnet_feat.7} parent=47 // pred_check
        %p319 = pneg %p50
      $region50: #{pointnet_feat.7} parent=47 // pred_check_branch
        %321 = sbr.rel (%p319) target = $region52
      $region51: #{pointnet_feat.7} parent=47 // pred_region
        %s322 = smul.u32 2, %s24
        %p323 = scmp.lt.s32.totalorder %s23, 1
        %s324 = scalar_select %p323, %s23, 1
        %p325 = scmp.lt.s32.totalorder %s322, 1
        %s326 = scalar_select %p325, %s322, 1
        %s327 = smul.addr %s324, 2
        %s328 = sadd.s32 %s326, %s327
        %s329 = smul.addr %s328, 4
        %s330 = scalar_lea.vmem %s0, %s329
        %s331 = smul.u32 2, %s24
      $region52: #{pointnet_feat.7} parent=47 // pred_fallthru
        _
      // Predicated region
      $region53: #{pointnet_feat.7} parent=47 // pred_check
        %p332 = pneg %p76
      $region54: #{pointnet_feat.7} parent=47 // pred_check_branch
        %334 = sbr.rel (%p332) target = $region56
      $region55: #{pointnet_feat.7} parent=47 // pred_region
        %p335 = scmp.lt.s32.totalorder %s23, 1
        %s336 = scalar_select %p335, %s23, 1
        %s337 = smul.addr %s336, 8
        %s338 = smul.addr %s337, 4
        %s339 = scalar_lea.vmem %s1, %s338
      $region56: #{pointnet_feat.7} parent=47 // pred_fallthru
        _
    $region48: #{pointnet_feat.7} parent=5 // pred_fallthru
      _
    %p340 = scmp.le.s32.totalorder 1, %s16
    %p341 = scmp.lt.s32.totalorder %s16, 3
    %p342 = pnand %p340, %p341
    %p343 = pneg %p342
    // Predicated region
    $region57: #{pointnet_feat.7} parent=5 // pred_check
      _
    $region58: #{pointnet_feat.7} parent=5 // pred_check_branch
      %345 = sbr.rel (%p342) target = $region60
    $region59: #{pointnet_feat.7} parent=5 // pred_region
      %s346 = ssub.s32 %s16, 1
      %s347 = smul.u32 2, %s26
      %p348 = scmp.lt.s32.totalorder %s25, 1
      %s349 = scalar_select %p348, %s25, 1
      %p350 = scmp.lt.s32.totalorder %s347, 1
      %s351 = scalar_select %p350, %s347, 1
      %s352 = smul.addr %s349, 2
      %s353 = sadd.s32 %s351, %s352
      %s354 = smul.addr %s353, 4
      %s355 = scalar_lea.vmem %s0, %s354
      %p356 = pneg %p56
      %p357 = pneg %p53
      %p358 = scmp.lt.s32.totalorder %s25, 1
      %s359 = scalar_select %p358, %s25, 1
      %s360 = smul.addr %s359, 8
      %s361 = smul.addr %s360, 4
      %s362 = scalar_lea.vmem %s1, %s361
      %p363 = pneg %p82
      %p364 = pneg %p79
      %p365 = pneg %p103
      %p366 = pneg %p100
      %p367 = pneg %p124
      %p368 = pneg %p121
      %p369 = pneg %p145
      %p370 = pneg %p142
      %p371 = pneg %p166
      %p372 = pneg %p163
      %p373 = pneg %p187
      %p374 = pneg %p184
      %p375 = pneg %p208
      %p376 = pneg %p205
      %p377 = pneg %p229
      %p378 = pneg %p226
      %p379 = pneg %p250
      %p380 = pneg %p247
      %p381 = pneg %p276
      %p382 = pneg %p273
      %p383 = scmp.lt.s32.totalorder %s25, 1
      %s384 = scalar_select %p383, %s25, 1
      %s385 = smul.addr %s384, 4
      %s386 = scalar_lea.vmem %s10, %s385
      %s387 = smul.u32 2, %s26
      %p388 = scmp.lt.s32.totalorder %s25, 1
      %s389 = scalar_select %p388, %s25, 1
      %p390 = scmp.lt.s32.totalorder %s387, 1
      %s391 = scalar_select %p390, %s387, 1
      %s392 = smul.addr %s389, 2
      %s393 = sadd.s32 %s391, %s392
      %s394 = smul.addr %s393, 4
      %s395 = scalar_lea.vmem %s0, %s394
      %s396 = smul.u32 2, %s26
      %p397 = scmp.lt.s32.totalorder %s25, 1
      %s398 = scalar_select %p397, %s25, 1
      %s399 = smul.addr %s398, 8
      %s400 = smul.addr %s399, 4
      %s401 = scalar_lea.vmem %s1, %s400
      %p402 = scmp.lt.s32.totalorder %s25, 1
      %s403 = scalar_select %p402, %s25, 1
      %s404 = smul.addr %s403, 4
      %s405 = scalar_lea.vmem %s10, %s404
      %p407 = scmp.eq.s32.totalorder %s26, 0
      // Predicated region
      $region61: #{pointnet_feat.7} parent=59 // pred_check
        %p408 = pneg %p407
      $region62: #{pointnet_feat.7} parent=59 // pred_check_branch
        %410 = sbr.rel (%p408) target = $region64
      $region63: #{pointnet_feat.7} parent=59 // pred_region
        %v411 = vlaneseq
        %vm412 = vcmp.ge.s32.totalorder %v411, 0
        %vm413 = vcmp.lt.s32.totalorder %v411, 512
        %vm414 = vmand %vm412, %vm413
        %415 = vst.msk [vmem:[#allocation2] sm:$0xf] %vm414, -inf
      $region64: #{pointnet_feat.7} parent=59 // pred_fallthru
        _
      %v416 = vld [vmem:[%s395] sm:$0xf]
      %v417 = vld [vmem:[%s395 + $0x4] sm:$0xf]
      %v418 = vld [vmem:[%s401] sm:$0xf]
      %v419 = vld [vmem:[%s401 + $0x4] sm:$0xf]
      %v420 = vld [vmem:[%s401 + $0x8] sm:$0xf]
      %v421 = vld [vmem:[%s401 + $0xc] sm:$0xf]
      %v422 = vld [vmem:[%s401 + $0x10] sm:$0xf]
      %v423 = vld [vmem:[%s401 + $0x14] sm:$0xf]
      %v424 = vld [vmem:[%s401 + $0x18] sm:$0xf]
      %v425 = vld [vmem:[%s401 + $0x1c] sm:$0xf]
      %v428 = vunpack.c.l.b16 %v416
      %v429 = vunpack.c.l.b16 %v417
      %v430 = vpack.c.b16 %v429, %v428
      %v439 = vunpack.c.l.b16 %v418
      %v440 = vunpack.c.l.b16 %v419
      %v441 = vunpack.c.l.b16 %v420
      %v442 = vunpack.c.l.b16 %v421
      %v443 = vunpack.c.l.b16 %v422
      %v444 = vunpack.c.l.b16 %v423
      %v445 = vunpack.c.l.b16 %v424
      %v446 = vunpack.c.l.b16 %v425
      %v447 = vpack.c.b16 %v440, %v439
      %v448 = vpack.c.b16 %v442, %v441
      %v449 = vpack.c.b16 %v444, %v443
      %v450 = vpack.c.b16 %v446, %v445
      %vm455 = vcmask 523264
      %v457 = vsel %vm455, %v430, 0
      %459 = vmatprep.subr.bf16.mxu0 0
      %460 = vmatpush1.bf16.msra.mxu0 %v447
      %461 = vmatprep.subr.bf16.mxu0 0
      %462 = vmatpush1.bf16.msra.mxu0 %v448
      %463 = vmatprep.subr.bf16.mxu0 0
      %464 = vmatpush1.bf16.msra.mxu0 %v449
      %465 = vmatprep.subr.bf16.mxu0 0
      %466 = vmatpush1.bf16.msra.mxu0 %v450
      %467 = vmatprep.subr.bf16.mxu0 0
      %468 = vmatpush1.bf16.msra.mxu0 0
      %469 = vmatprep.subr.bf16.mxu0 0
      %470 = vmatpush1.bf16.msra.mxu0 0
      %471 = vmatprep.subr.bf16.mxu0 0
      %472 = vmatpush1.bf16.msra.mxu0 0
      %473 = vmatprep.subr.bf16.mxu0 0
      %474 = vmatpush1.bf16.msra.mxu0 0
      %475 = vmatprep.subr.bf16.mxu0 0
      %476 = vmatpush1.bf16.msra.mxu0 0
      %477 = vmatprep.subr.bf16.mxu0 0
      %478 = vmatpush1.bf16.msra.mxu0 0
      %479 = vmatprep.subr.bf16.mxu0 0
      %480 = vmatpush1.bf16.msra.mxu0 0
      %481 = vmatprep.subr.bf16.mxu0 0
      %482 = vmatpush1.bf16.msra.mxu0 0
      %483 = vmatprep.subr.bf16.mxu0 0
      %484 = vmatpush1.bf16.msra.mxu0 0
      %485 = vmatprep.subr.bf16.mxu0 0
      %486 = vmatpush1.bf16.msra.mxu0 0
      %487 = vmatprep.subr.bf16.mxu0 0
      %488 = vmatpush1.bf16.msra.mxu0 0
      %489 = vmatprep.subr.bf16.mxu0 0
      %490 = vmatpush1.bf16.msra.mxu0 0
      %491 = vmatprep.mubr.bf16.mxu0 0
      %492 = vmatmul.mubr.bf16.gmra.mrb[0].mxu0 %v457
      %v493 = vpop.f32.mrb[0].mxu0
      %v494 = vadd.f32 0.0, %v493
      %v495 = vpop.f32.mrb[0].mxu0
      %v496 = vpop.f32.mrb[0].mxu0
      %v497 = vadd.f32 0.0, %v496
      %v498 = vpop.f32.mrb[0].mxu0
      %499 = vdwg.mxu0
      %v500 = vld [vmem:[%s2] sm:$0x1]
      %v502 = vlaneseq
      %v503 = vshrl.u32 %v502, 7
      %v504 = vsub.s32 0, %v503
      %v505 = vrot.slane %v500, %v504
      %v507 = vmul.f32 %v494, %v505
      %v508 = vmul.f32 %v497, %v505
      %v509 = vld [vmem:[%s3] sm:$0x1]
      %v511 = vlaneseq
      %v512 = vshrl.u32 %v511, 7
      %v513 = vsub.s32 0, %v512
      %v514 = vrot.slane %v509, %v513
      %v516 = vadd.f32 %v507, %v514
      %v517 = vadd.f32 %v508, %v514
      %v518 = vmax.f32 %v516, 0.0
      %v519 = vmax.f32 %v517, 0.0
      %v520 = vpack.c.bf16 %v519, %v518
      %v521 = vld [vmem:[%s4] sm:$0xf]
      %v522 = vld [vmem:[%s4 + $0x4] sm:$0xf]
      %v523 = vld [vmem:[%s4 + $0x8] sm:$0xf]
      %v524 = vld [vmem:[%s4 + $0xc] sm:$0xf]
      %v525 = vld [vmem:[%s4 + $0x10] sm:$0xf]
      %v526 = vld [vmem:[%s4 + $0x14] sm:$0xf]
      %v527 = vld [vmem:[%s4 + $0x18] sm:$0xf]
      %v528 = vld [vmem:[%s4 + $0x1c] sm:$0xf]
      %v537 = vunpack.c.l.b16 %v521
      %v538 = vunpack.c.l.b16 %v522
      %v539 = vunpack.c.l.b16 %v523
      %v540 = vunpack.c.l.b16 %v524
      %v541 = vunpack.c.l.b16 %v525
      %v542 = vunpack.c.l.b16 %v526
      %v543 = vunpack.c.l.b16 %v527
      %v544 = vunpack.c.l.b16 %v528
      %v545 = vpack.c.b16 %v538, %v537
      %v546 = vpack.c.b16 %v540, %v539
      %v547 = vpack.c.b16 %v542, %v541
      %v548 = vpack.c.b16 %v544, %v543
      %v554 = vsel %vm455, %v520, 0
      %556 = vmatprep.subr.bf16.mxu0 0
      %557 = vmatpush1.bf16.msra.mxu0 %v545
      %558 = vmatprep.subr.bf16.mxu0 0
      %559 = vmatpush1.bf16.msra.mxu0 %v546
      %560 = vmatprep.subr.bf16.mxu0 0
      %561 = vmatpush1.bf16.msra.mxu0 %v547
      %562 = vmatprep.subr.bf16.mxu0 0
      %563 = vmatpush1.bf16.msra.mxu0 %v548
      %564 = vmatprep.subr.bf16.mxu0 0
      %565 = vmatpush1.bf16.msra.mxu0 0
      %566 = vmatprep.subr.bf16.mxu0 0
      %567 = vmatpush1.bf16.msra.mxu0 0
      %568 = vmatprep.subr.bf16.mxu0 0
      %569 = vmatpush1.bf16.msra.mxu0 0
      %570 = vmatprep.subr.bf16.mxu0 0
      %571 = vmatpush1.bf16.msra.mxu0 0
      %572 = vmatprep.subr.bf16.mxu0 0
      %573 = vmatpush1.bf16.msra.mxu0 0
      %574 = vmatprep.subr.bf16.mxu0 0
      %575 = vmatpush1.bf16.msra.mxu0 0
      %576 = vmatprep.subr.bf16.mxu0 0
      %577 = vmatpush1.bf16.msra.mxu0 0
      %578 = vmatprep.subr.bf16.mxu0 0
      %579 = vmatpush1.bf16.msra.mxu0 0
      %580 = vmatprep.subr.bf16.mxu0 0
      %581 = vmatpush1.bf16.msra.mxu0 0
      %582 = vmatprep.subr.bf16.mxu0 0
      %583 = vmatpush1.bf16.msra.mxu0 0
      %584 = vmatprep.subr.bf16.mxu0 0
      %585 = vmatpush1.bf16.msra.mxu0 0
      %586 = vmatprep.subr.bf16.mxu0 0
      %587 = vmatpush1.bf16.msra.mxu0 0
      %588 = vmatprep.mubr.bf16.mxu0 0
      %589 = vmatmul.mubr.bf16.gmra.mrb[0].mxu0 %v554
      %v590 = vpop.f32.mrb[0].mxu0
      %v591 = vadd.f32 0.0, %v590
      %v592 = vpop.f32.mrb[0].mxu0
      %v593 = vpop.f32.mrb[0].mxu0
      %v594 = vadd.f32 0.0, %v593
      %v595 = vpop.f32.mrb[0].mxu0
      %596 = vdwg.mxu0
      %v597 = vld [vmem:[%s5] sm:$0x1]
      %v599 = vlaneseq
      %v600 = vshrl.u32 %v599, 7
      %v601 = vsub.s32 0, %v600
      %v602 = vrot.slane %v597, %v601
      %v604 = vmul.f32 %v591, %v602
      %v605 = vmul.f32 %v594, %v602
      %v606 = vld [vmem:[%s6] sm:$0x1]
      %v608 = vlaneseq
      %v609 = vshrl.u32 %v608, 7
      %v610 = vsub.s32 0, %v609
      %v611 = vrot.slane %v606, %v610
      %v613 = vadd.f32 %v604, %v611
      %v614 = vadd.f32 %v605, %v611
      %v615 = vmax.f32 %v613, 0.0
      %v616 = vmax.f32 %v614, 0.0
      %v617 = vpack.c.bf16 %v616, %v615
      %v618 = vld [vmem:[%s7] sm:$0xff]
      %v619 = vld [vmem:[%s7 + $0x8] sm:$0xff]
      %v620 = vld [vmem:[%s7 + $0x10] sm:$0xff]
      %v621 = vld [vmem:[%s7 + $0x18] sm:$0xff]
      %v622 = vld [vmem:[%s7 + $0x20] sm:$0xff]
      %v623 = vld [vmem:[%s7 + $0x28] sm:$0xff]
      %v624 = vld [vmem:[%s7 + $0x30] sm:$0xff]
      %v625 = vld [vmem:[%s7 + $0x38] sm:$0xff]
      %v626 = vld [vmem:[%s7 + $0x40] sm:$0xff]
      %v627 = vld [vmem:[%s7 + $0x48] sm:$0xff]
      %v628 = vld [vmem:[%s7 + $0x50] sm:$0xff]
      %v629 = vld [vmem:[%s7 + $0x58] sm:$0xff]
      %v630 = vld [vmem:[%s7 + $0x60] sm:$0xff]
      %v631 = vld [vmem:[%s7 + $0x68] sm:$0xff]
      %v632 = vld [vmem:[%s7 + $0x70] sm:$0xff]
      %v633 = vld [vmem:[%s7 + $0x78] sm:$0xff]
      %v634 = vld [vmem:[%s7 + $0x80] sm:$0xff]
      %v635 = vld [vmem:[%s7 + $0x88] sm:$0xff]
      %v636 = vld [vmem:[%s7 + $0x90] sm:$0xff]
      %v637 = vld [vmem:[%s7 + $0x98] sm:$0xff]
      %v638 = vld [vmem:[%s7 + $0xa0] sm:$0xff]
      %v639 = vld [vmem:[%s7 + $0xa8] sm:$0xff]
      %v640 = vld [vmem:[%s7 + $0xb0] sm:$0xff]
      %v641 = vld [vmem:[%s7 + $0xb8] sm:$0xff]
      %v642 = vld [vmem:[%s7 + $0xc0] sm:$0xff]
      %v643 = vld [vmem:[%s7 + $0xc8] sm:$0xff]
      %v644 = vld [vmem:[%s7 + $0xd0] sm:$0xff]
      %v645 = vld [vmem:[%s7 + $0xd8] sm:$0xff]
      %v646 = vld [vmem:[%s7 + $0xe0] sm:$0xff]
      %v647 = vld [vmem:[%s7 + $0xe8] sm:$0xff]
      %v648 = vld [vmem:[%s7 + $0xf0] sm:$0xff]
      %v649 = vld [vmem:[%s7 + $0xf8] sm:$0xff]
      %v682 = vunpack.c.l.b16 %v618
      %v683 = vunpack.c.h.b16 %v618
      %v684 = vunpack.c.l.b16 %v619
      %v685 = vunpack.c.h.b16 %v619
      %v686 = vunpack.c.l.b16 %v620
      %v687 = vunpack.c.h.b16 %v620
      %v688 = vunpack.c.l.b16 %v621
      %v689 = vunpack.c.h.b16 %v621
      %v690 = vunpack.c.l.b16 %v622
      %v691 = vunpack.c.h.b16 %v622
      %v692 = vunpack.c.l.b16 %v623
      %v693 = vunpack.c.h.b16 %v623
      %v694 = vunpack.c.l.b16 %v624
      %v695 = vunpack.c.h.b16 %v624
      %v696 = vunpack.c.l.b16 %v625
      %v697 = vunpack.c.h.b16 %v625
      %v698 = vunpack.c.l.b16 %v626
      %v699 = vunpack.c.h.b16 %v626
      %v700 = vunpack.c.l.b16 %v627
      %v701 = vunpack.c.h.b16 %v627
      %v702 = vunpack.c.l.b16 %v628
      %v703 = vunpack.c.h.b16 %v628
      %v704 = vunpack.c.l.b16 %v629
      %v705 = vunpack.c.h.b16 %v629
      %v706 = vunpack.c.l.b16 %v630
      %v707 = vunpack.c.h.b16 %v630
      %v708 = vunpack.c.l.b16 %v631
      %v709 = vunpack.c.h.b16 %v631
      %v710 = vunpack.c.l.b16 %v632
      %v711 = vunpack.c.h.b16 %v632
      %v712 = vunpack.c.l.b16 %v633
      %v713 = vunpack.c.h.b16 %v633
      %v714 = vunpack.c.l.b16 %v634
      %v715 = vunpack.c.h.b16 %v634
      %v716 = vunpack.c.l.b16 %v635
      %v717 = vunpack.c.h.b16 %v635
      %v718 = vunpack.c.l.b16 %v636
      %v719 = vunpack.c.h.b16 %v636
      %v720 = vunpack.c.l.b16 %v637
      %v721 = vunpack.c.h.b16 %v637
      %v722 = vunpack.c.l.b16 %v638
      %v723 = vunpack.c.h.b16 %v638
      %v724 = vunpack.c.l.b16 %v639
      %v725 = vunpack.c.h.b16 %v639
      %v726 = vunpack.c.l.b16 %v640
      %v727 = vunpack.c.h.b16 %v640
      %v728 = vunpack.c.l.b16 %v641
      %v729 = vunpack.c.h.b16 %v641
      %v730 = vunpack.c.l.b16 %v642
      %v731 = vunpack.c.h.b16 %v642
      %v732 = vunpack.c.l.b16 %v643
      %v733 = vunpack.c.h.b16 %v643
      %v734 = vunpack.c.l.b16 %v644
      %v735 = vunpack.c.h.b16 %v644
      %v736 = vunpack.c.l.b16 %v645
      %v737 = vunpack.c.h.b16 %v645
      %v738 = vunpack.c.l.b16 %v646
      %v739 = vunpack.c.h.b16 %v646
      %v740 = vunpack.c.l.b16 %v647
      %v741 = vunpack.c.h.b16 %v647
      %v742 = vunpack.c.l.b16 %v648
      %v743 = vunpack.c.h.b16 %v648
      %v744 = vunpack.c.l.b16 %v649
      %v745 = vunpack.c.h.b16 %v649
      %v746 = vpack.c.b16 %v686, %v682
      %v747 = vpack.c.b16 %v687, %v683
      %v748 = vpack.c.b16 %v688, %v684
      %v749 = vpack.c.b16 %v689, %v685
      %v750 = vpack.c.b16 %v694, %v690
      %v751 = vpack.c.b16 %v695, %v691
      %v752 = vpack.c.b16 %v696, %v692
      %v753 = vpack.c.b16 %v697, %v693
      %v754 = vpack.c.b16 %v702, %v698
      %v755 = vpack.c.b16 %v703, %v699
      %v756 = vpack.c.b16 %v704, %v700
      %v757 = vpack.c.b16 %v705, %v701
      %v758 = vpack.c.b16 %v710, %v706
      %v759 = vpack.c.b16 %v711, %v707
      %v760 = vpack.c.b16 %v712, %v708
      %v761 = vpack.c.b16 %v713, %v709
      %v762 = vpack.c.b16 %v718, %v714
      %v763 = vpack.c.b16 %v719, %v715
      %v764 = vpack.c.b16 %v720, %v716
      %v765 = vpack.c.b16 %v721, %v717
      %v766 = vpack.c.b16 %v726, %v722
      %v767 = vpack.c.b16 %v727, %v723
      %v768 = vpack.c.b16 %v728, %v724
      %v769 = vpack.c.b16 %v729, %v725
      %v770 = vpack.c.b16 %v734, %v730
      %v771 = vpack.c.b16 %v735, %v731
      %v772 = vpack.c.b16 %v736, %v732
      %v773 = vpack.c.b16 %v737, %v733
      %v774 = vpack.c.b16 %v742, %v738
      %v775 = vpack.c.b16 %v743, %v739
      %v776 = vpack.c.b16 %v744, %v740
      %v777 = vpack.c.b16 %v745, %v741
      %810 = vmatprep.subr.bf16.mxu0 %v747
      %811 = vmatpush1.bf16.msra.mxu0 %v746
      %812 = vmatprep.subr.bf16.mxu0 %v751
      %813 = vmatpush1.bf16.msra.mxu0 %v750
      %814 = vmatprep.subr.bf16.mxu0 %v755
      %815 = vmatpush1.bf16.msra.mxu0 %v754
      %816 = vmatprep.subr.bf16.mxu0 %v759
      %817 = vmatpush1.bf16.msra.mxu0 %v758
      %818 = vmatprep.subr.bf16.mxu0 %v763
      %819 = vmatpush1.bf16.msra.mxu0 %v762
      %820 = vmatprep.subr.bf16.mxu0 %v767
      %821 = vmatpush1.bf16.msra.mxu0 %v766
      %822 = vmatprep.subr.bf16.mxu0 %v771
      %823 = vmatpush1.bf16.msra.mxu0 %v770
      %824 = vmatprep.subr.bf16.mxu0 %v775
      %825 = vmatpush1.bf16.msra.mxu0 %v774
      %826 = vmatprep.subr.bf16.mxu0 0
      %827 = vmatpush1.bf16.msra.mxu0 0
      %828 = vmatprep.subr.bf16.mxu0 0
      %829 = vmatpush1.bf16.msra.mxu0 0
      %830 = vmatprep.subr.bf16.mxu0 0
      %831 = vmatpush1.bf16.msra.mxu0 0
      %832 = vmatprep.subr.bf16.mxu0 0
      %833 = vmatpush1.bf16.msra.mxu0 0
      %834 = vmatprep.subr.bf16.mxu0 0
      %835 = vmatpush1.bf16.msra.mxu0 0
      %836 = vmatprep.subr.bf16.mxu0 0
      %837 = vmatpush1.bf16.msra.mxu0 0
      %838 = vmatprep.subr.bf16.mxu0 0
      %839 = vmatpush1.bf16.msra.mxu0 0
      %840 = vmatprep.subr.bf16.mxu0 0
      %841 = vmatpush1.bf16.msra.mxu0 0
      %842 = vmatprep.mubr.bf16.mxu0 0
      %843 = vmatmul.mubr.bf16.gmra.mrb[0].mxu0 %v617
      %v844 = vpop.f32.mrb[0].mxu0
      %v845 = vadd.f32 0.0, %v844
      %v846 = vpop.f32.mrb[0].mxu0
      %v847 = vadd.f32 0.0, %v846
      %v848 = vpop.f32.mrb[0].mxu0
      %v849 = vadd.f32 0.0, %v848
      %v850 = vpop.f32.mrb[0].mxu0
      %v851 = vadd.f32 0.0, %v850
      %852 = vdwg.mxu0
      %853 = vmatprep.subr.bf16.mxu0 %v749
      %854 = vmatpush1.bf16.msra.mxu0 %v748
      %855 = vmatprep.subr.bf16.mxu0 %v753
      %856 = vmatpush1.bf16.msra.mxu0 %v752
      %857 = vmatprep.subr.bf16.mxu0 %v757
      %858 = vmatpush1.bf16.msra.mxu0 %v756
      %859 = vmatprep.subr.bf16.mxu0 %v761
      %860 = vmatpush1.bf16.msra.mxu0 %v760
      %861 = vmatprep.subr.bf16.mxu0 %v765
      %862 = vmatpush1.bf16.msra.mxu0 %v764
      %863 = vmatprep.subr.bf16.mxu0 %v769
      %864 = vmatpush1.bf16.msra.mxu0 %v768
      %865 = vmatprep.subr.bf16.mxu0 %v773
      %866 = vmatpush1.bf16.msra.mxu0 %v772
      %867 = vmatprep.subr.bf16.mxu0 %v777
      %868 = vmatpush1.bf16.msra.mxu0 %v776
      %869 = vmatprep.subr.bf16.mxu0 0
      %870 = vmatpush1.bf16.msra.mxu0 0
      %871 = vmatprep.subr.bf16.mxu0 0
      %872 = vmatpush1.bf16.msra.mxu0 0
      %873 = vmatprep.subr.bf16.mxu0 0
      %874 = vmatpush1.bf16.msra.mxu0 0
      %875 = vmatprep.subr.bf16.mxu0 0
      %876 = vmatpush1.bf16.msra.mxu0 0
      %877 = vmatprep.subr.bf16.mxu0 0
      %878 = vmatpush1.bf16.msra.mxu0 0
      %879 = vmatprep.subr.bf16.mxu0 0
      %880 = vmatpush1.bf16.msra.mxu0 0
      %881 = vmatprep.subr.bf16.mxu0 0
      %882 = vmatpush1.bf16.msra.mxu0 0
      %883 = vmatprep.subr.bf16.mxu0 0
      %884 = vmatpush1.bf16.msra.mxu0 0
      %885 = vmatprep.mubr.bf16.mxu0 0
      %886 = vmatmul.mubr.bf16.gmra.mrb[0].mxu0 %v617
      %v887 = vpop.f32.mrb[0].mxu0
      %v888 = vadd.f32 0.0, %v887
      %v889 = vpop.f32.mrb[0].mxu0
      %v890 = vadd.f32 0.0, %v889
      %v891 = vpop.f32.mrb[0].mxu0
      %v892 = vadd.f32 0.0, %v891
      %v893 = vpop.f32.mrb[0].mxu0
      %v894 = vadd.f32 0.0, %v893
      %895 = vdwg.mxu0
      %v896 = vld [vmem:[%s8] sm:$0xf]
      %v898 = vlaneseq
      %v899 = vshrl.u32 %v898, 7
      %v900 = vsub.s32 0, %v899
      %v901 = vrot.slane %v896, %v900
      %v902 = vlaneseq
      %v903 = vshrl.u32 %v902, 7
      %v904 = vsub.s32 1, %v903
      %v905 = vrot.slane %v896, %v904
      %v906 = vlaneseq
      %v907 = vshrl.u32 %v906, 7
      %v908 = vsub.s32 2, %v907
      %v909 = vrot.slane %v896, %v908
      %v910 = vlaneseq
      %v911 = vshrl.u32 %v910, 7
      %v912 = vsub.s32 3, %v911
      %v913 = vrot.slane %v896, %v912
      %v918 = vmul.f32 %v845, %v901
      %v919 = vmul.f32 %v847, %v905
      %v920 = vmul.f32 %v888, %v909
      %v921 = vmul.f32 %v890, %v913
      %v922 = vmul.f32 %v849, %v901
      %v923 = vmul.f32 %v851, %v905
      %v924 = vmul.f32 %v892, %v909
      %v925 = vmul.f32 %v894, %v913
      %v926 = vld [vmem:[%s9] sm:$0xf]
      %v928 = vlaneseq
      %v929 = vshrl.u32 %v928, 7
      %v930 = vsub.s32 0, %v929
      %v931 = vrot.slane %v926, %v930
      %v932 = vlaneseq
      %v933 = vshrl.u32 %v932, 7
      %v934 = vsub.s32 1, %v933
      %v935 = vrot.slane %v926, %v934
      %v936 = vlaneseq
      %v937 = vshrl.u32 %v936, 7
      %v938 = vsub.s32 2, %v937
      %v939 = vrot.slane %v926, %v938
      %v940 = vlaneseq
      %v941 = vshrl.u32 %v940, 7
      %v942 = vsub.s32 3, %v941
      %v943 = vrot.slane %v926, %v942
      %v948 = vadd.f32 %v918, %v931
      %v949 = vadd.f32 %v919, %v935
      %v950 = vadd.f32 %v920, %v939
      %v951 = vadd.f32 %v921, %v943
      %v952 = vadd.f32 %v922, %v931
      %v953 = vadd.f32 %v923, %v935
      %v954 = vadd.f32 %v924, %v939
      %v955 = vadd.f32 %v925, %v943
      %v956 = vmax.f32 %v948, 0.0
      %v957 = vmax.f32 %v949, 0.0
      %v958 = vmax.f32 %v950, 0.0
      %v959 = vmax.f32 %v951, 0.0
      %v960 = vmax.f32 %v952, 0.0
      %v961 = vmax.f32 %v953, 0.0
      %v962 = vmax.f32 %v954, 0.0
      %v963 = vmax.f32 %v955, 0.0
      %v964 = vld [vmem:[#allocation2] sm:$0xf]
      %v965 = vmax.f32 %v956, %v960
      %v966 = vrot.slane %v965, 4
      %v967 = vmax.f32 %v965, %v966
      %v968 = vrot.slane %v967, 2
      %v969 = vmax.f32 %v967, %v968
      %v970 = vrot.slane %v969, 1
      %v971 = vmax.f32 %v969, %v970
      %v972 = vmax.f32 %v957, %v961
      %v973 = vrot.slane %v972, 4
      %v974 = vmax.f32 %v972, %v973
      %v975 = vrot.slane %v974, 2
      %v976 = vmax.f32 %v974, %v975
      %v977 = vrot.slane %v976, 1
      %v978 = vmax.f32 %v976, %v977
      %v979 = vmax.f32 %v958, %v962
      %v980 = vrot.slane %v979, 4
      %v981 = vmax.f32 %v979, %v980
      %v982 = vrot.slane %v981, 2
      %v983 = vmax.f32 %v981, %v982
      %v984 = vrot.slane %v983, 1
      %v985 = vmax.f32 %v983, %v984
      %v986 = vmax.f32 %v959, %v963
      %v987 = vrot.slane %v986, 4
      %v988 = vmax.f32 %v986, %v987
      %v989 = vrot.slane %v988, 2
      %v990 = vmax.f32 %v988, %v989
      %v991 = vrot.slane %v990, 1
      %v992 = vmax.f32 %v990, %v991
      %v997 = vcombine.low %v971, %v978
      %v998 = vcombine.low %v985, %v992
      %v1000 = vunpack.c.l.s4 1966171168
      %v1001 = vunpack.c.0.s8 %v1000
      %v1002 = vlaneseq
      %v1003 = vshrl.u32 %v1002, 7
      %v1004 = vsub.s32 %v1001, %v1003
      %v1005 = vrot.slane %v997, %v1004
      %v1007 = vunpack.c.l.s4 1966171168
      %v1008 = vunpack.c.0.s8 %v1007
      %v1009 = vlaneseq
      %v1010 = vshrl.u32 %v1009, 7
      %v1011 = vsub.s32 %v1008, %v1010
      %v1012 = vrot.slane %v998, %v1011
      %v1013 = vcombine.low %v1005, %v1012
      %v1015 = vunpack.c.l.s4 1966171168
      %v1016 = vunpack.c.0.s8 %v1015
      %v1017 = vlaneseq
      %v1018 = vshrl.u32 %v1017, 7
      %v1019 = vsub.s32 %v1016, %v1018
      %v1020 = vrot.slane %v1013, %v1019
      %v1022 = vmax.f32 %v964, %v1020
      %v1023 = vlaneseq
      %vm1024 = vcmp.ge.s32.totalorder %v1023, 0
      %vm1025 = vcmp.lt.s32.totalorder %v1023, 512
      %vm1026 = vmand %vm1024, %vm1025
      %1027 = vst.msk [vmem:[#allocation2] sm:$0xf] %vm1026, %v1022
      // Predicated region
      $region65: #{pointnet_feat.7} parent=59 // pred_check
        %p1028 = pneg %p407
      $region66: #{pointnet_feat.7} parent=59 // pred_check_branch
        %1030 = sbr.rel (%p1028) target = $region68
      $region67: #{pointnet_feat.7} parent=59 // pred_region
        %v1031 = vld [vmem:[#allocation2] sm:$0xf]
        %1032 = vst.msk [vmem:[%s405] sm:$0xf] %vm1026, %v1031
      $region68: #{pointnet_feat.7} parent=59 // pred_fallthru
        _
      %p1033 = scmp.lt.s32.totalorder %s25, 1
      %s1034 = scalar_select %p1033, %s25, 1
      %s1035 = smul.addr %s1034, 4
      %s1036 = scalar_lea.vmem %s10, %s1035
      // Predicated region
      $region69: #{pointnet_feat.7} parent=59 // pred_check
        %p1037 = pneg %p273
      $region70: #{pointnet_feat.7} parent=59 // pred_check_branch
        %1039 = sbr.rel (%p1037) target = $region72
      $region71: #{pointnet_feat.7} parent=59 // pred_region
        _
      $region72: #{pointnet_feat.7} parent=59 // pred_fallthru
        _
    $region60: #{pointnet_feat.7} parent=5 // pred_fallthru
      _
    %p1040 = scmp.le.s32.totalorder 2, %s16
    // Predicated region
    $region73: #{pointnet_feat.7} parent=5 // pred_check
      %p1041 = pneg %p1040
    $region74: #{pointnet_feat.7} parent=5 // pred_check_branch
      %1043 = sbr.rel (%p1041) target = $region76
    $region75: #{pointnet_feat.7} parent=5 // pred_region
      %s1044 = ssub.s32 %s16, 2
      // Predicated region
      $region77: #{pointnet_feat.7} parent=75 // pred_check
        %p1045 = pneg %p279
      $region78: #{pointnet_feat.7} parent=75 // pred_check_branch
        %1047 = sbr.rel (%p1045) target = $region80
      $region79: #{pointnet_feat.7} parent=75 // pred_region
        %p1048 = scmp.lt.s32.totalorder %s27, 1
        %s1049 = scalar_select %p1048, %s27, 1
        %s1050 = smul.addr %s1049, 4
        %s1051 = scalar_lea.vmem %s10, %s1050
      $region80: #{pointnet_feat.7} parent=75 // pred_fallthru
        _
    $region76: #{pointnet_feat.7} parent=5 // pred_fallthru
      _
  $region6: #{pointnet_feat.7} parent=0 // loop_footer
    %s20 = sadd.s32 1, %s16
  $region7: #{pointnet_feat.7} parent=0 // loop_footer_branch
    %15 = sbr.rel target = $region3
  $region8: #{pointnet_feat.7} parent=0 // loop_exit
    _

// kernel: pointnet_feat.6
$region0: #{pointnet_feat.6}
  #allocation0 [shape = 'u32[]', space=smem, size = 0x4, offset = 0x4, fixed_abs, tag = 'smem constant byte address 0x4 - core index']
  #allocation1 [shape = 'u32[144,128]{1,0:T(1,128)}', space=vmem, size = 0x12000, scoped, tag = 'internal scratch']
  #allocation2 [shape = 'f32[1,256]{1,0:T(1,128)}', space=vmem, size = 0x400, scoped, tag = 'scratch operand']
  %s0 = inlined_call_operand.vmem [shape: bf16[2,16,64], index: 0, kind: input, shape index: {}]
  %s1 = inlined_call_operand.vmem [shape: bf16[64,64], index: 1, kind: input, shape index: {}]
  %s2 = inlined_call_operand.hbm [shape: f32[1,64], index: 2, kind: input, shape index: {}]
  %s3 = inlined_call_operand.hbm [shape: f32[1,64], index: 3, kind: input, shape index: {}]
  %s4 = inlined_call_operand.vmem [shape: bf16[64,256], index: 4, kind: input, shape index: {}]
  %s5 = inlined_call_operand.hbm [shape: f32[1,256], index: 5, kind: input, shape index: {}]
  %s6 = inlined_call_operand.hbm [shape: f32[1,256], index: 6, kind: input, shape index: {}]
  %s7 = inlined_call_operand.hbm [shape: f32[256,4096], index: 7, kind: input, shape index: {}]
  %s8 = inlined_call_operand.hbm [shape: f32[1,4096], index: 8, kind: input, shape index: {}]
  %s9 = inlined_call_operand.vmem [shape: f32[2,1,4096], index: 9, kind: output, shape index: {}]
  %s10 = sld [smem:[#allocation0]]
  $region101: #{pointnet_feat.6} parent=0
    _
  %s12 = ssub.s32 1, %s10
  %s13 = scalar_select 0, %s12, %s10
  $region1: #{pointnet_feat.6} parent=0
    #allocation3 [shape = 'u8[512]{0}', space=vmem, size = 0x400, scoped, tag = 'input window, operand 2, single buffered']
    #allocation4 [shape = 's32[2]{0}', space=sflag, size = 0x8, scoped, tag = 'scoped memory for pointnet_feat.6']
    #allocation5 [shape = 'u8[512]{0}', space=vmem, size = 0x400, scoped, tag = 'input window, operand 3, single buffered']
    #allocation6 [shape = 's32[1]{0}', space=sflag, size = 0x4, scoped, tag = 'scoped memory for pointnet_feat.6']
    #allocation7 [shape = 'u8[1024]{0}', space=vmem, size = 0x400, scoped, tag = 'input window, operand 5, single buffered']
    #allocation8 [shape = 'u8[1024]{0}', space=vmem, size = 0x400, scoped, tag = 'input window, operand 6, single buffered']
    #allocation9 [shape = 's32[1]{0}', space=sflag, size = 0x4, scoped, tag = 'scoped memory for pointnet_feat.6']
    #allocation10 [shape = 'u8[4194304]{0}', space=vmem, size = 0x400000, scoped, tag = 'input window, operand 7, single buffered']
    #allocation11 [shape = 'u8[16384]{0}', space=vmem, size = 0x4000, scoped, tag = 'input window, operand 8, single buffered']
    #allocation12 [shape = 's32[1]{0}', space=sflag, size = 0x4, scoped, tag = 'scoped memory for pointnet_feat.6']
    %14 = vsyncpa [#allocation4], 0
    %15 = vsyncpa [#allocation6], 0
    %16 = vsyncpa [#allocation9], 0
    %17 = vsyncpa [#allocation12], 0
    loop: start=0, step=1, limit=4
    $region2: #{pointnet_feat.6} parent=1 // loop_pre_header
      _
    $region3: #{pointnet_feat.6} parent=1 // loop_header
      %s19 = sphi 0, %s23
      %p20 = scmp.ge.s32.totalorder %s19, 4
      %s26 = sphi 0, %s38
      %s27 = sphi 0, %s34
      %s28 = sphi 0, %s26
      %s29 = sphi 0, %s27
      %s30 = sphi 0, %s28
      %s31 = sphi 0, %s29
      %s43 = sphi 0, %s45
      %s46 = sphi 0, %s43
      %s47 = sphi 0, %s46
      %s63 = sphi 0, %s47
      %s67 = sphi 0, %s67
      %s69 = sphi 0, %s67
      %s70 = sphi 0, %s69
      %s84 = sphi 0, %s70
      %s88 = sphi 0, %s88
      %s90 = sphi 0, %s88
      %s91 = sphi 0, %s90
      %s105 = sphi 0, %s91
      %s109 = sphi 0, %s109
      %s111 = sphi 0, %s109
      %s112 = sphi 0, %s111
      %s126 = sphi 0, %s112
      %s130 = sphi 0, %s130
      %s132 = sphi 0, %s130
      %s133 = sphi 0, %s132
      %s147 = sphi 0, %s133
      %s151 = sphi 0, %s151
      %s153 = sphi 0, %s151
      %s154 = sphi 0, %s153
      %s168 = sphi 0, %s154
      %s172 = sphi 0, %s172
      %s174 = sphi 0, %s172
      %s175 = sphi 0, %s174
      %s189 = sphi 0, %s175
      %s193 = sphi 0, %s193
      %s195 = sphi 0, %s193
      %s196 = sphi 0, %s195
      %s210 = sphi 0, %s196
      %s214 = sphi 0, %s214
      %s216 = sphi 0, %s214
      %s217 = sphi 0, %s216
      %s231 = sphi 0, %s217
      %s237 = sphi 0, %s239
      %s240 = sphi 0, %s237
      %s241 = sphi 0, %s240
      %s257 = sphi 0, %s241
    $region4: #{pointnet_feat.6} parent=1 // loop_header_branch
      %22 = sbr.rel (%p20) target = $region8
    $region5: #{pointnet_feat.6} parent=1 // loop_body
      %s24 = ssub.s32 %s19, 1
      %s25 = ssub.s32 %s19, 2
      %s32 = sadd.s32 1, %s27
      %p33 = scmp.ge.s32.totalorder %s32, 1
      %s34 = scalar_select %p33, 0, %s32
      %s35 = sadd.s32 1, %s26
      %s36 = scalar_select %p33, %s35, %s26
      %p37 = scmp.ge.s32.totalorder %s36, 2
      %s38 = scalar_select %p37, 0, %s36
      %s39 = ssub.s32 %s26, %s38
      %s40 = ssub.s32 %s27, %s34
      %s41 = sor.u32 %s39, %s40
      %p42 = scmp.eq.s32.totalorder %s41, 0
      %s44 = sadd.s32 %s43, 1
      %s45 = scalar_select %p42, %s43, %s44
      %p48 = pneg %p42
      %p49 = scmp.eq.s32.totalorder %s19, 1
      %p50 = por %p48, %p49
      %p51 = scmp.ne.s32.totalorder %s43, %s46
      %p52 = scmp.eq.s32.totalorder %s19, 0
      %p53 = por %p51, %p52
      %p54 = scmp.ne.s32.totalorder %s43, %s46
      %p55 = scmp.eq.s32.totalorder %s24, 1
      %p56 = por %p54, %p55
      %p57 = scmp.ne.s32.totalorder %s46, %s47
      %p58 = scmp.eq.s32.totalorder %s24, 0
      %p59 = por %p57, %p58
      %p60 = scmp.ne.s32.totalorder %s46, %s47
      %p61 = scmp.eq.s32.totalorder %s25, 1
      %p62 = por %p60, %p61
      %p64 = scmp.ne.s32.totalorder %s47, %s63
      %p65 = scmp.eq.s32.totalorder %s25, 0
      %p66 = por %p64, %p65
      %s68 = sadd.s32 %s67, 1
      %p71 = scmp.eq.s32.totalorder %s19, 1
      %p72 = scmp.ne.s32.totalorder %s67, %s69
      %p73 = scmp.eq.s32.totalorder %s19, 0
      %p74 = por %p72, %p73
      %p75 = scmp.ne.s32.totalorder %s67, %s69
      %p76 = scmp.eq.s32.totalorder %s24, 1
      %p77 = por %p75, %p76
      %p78 = scmp.ne.s32.totalorder %s69, %s70
      %p79 = scmp.eq.s32.totalorder %s24, 0
      %p80 = por %p78, %p79
      %p81 = scmp.ne.s32.totalorder %s69, %s70
      %p82 = scmp.eq.s32.totalorder %s25, 1
      %p83 = por %p81, %p82
      %p85 = scmp.ne.s32.totalorder %s70, %s84
      %p86 = scmp.eq.s32.totalorder %s25, 0
      %p87 = por %p85, %p86
      %s89 = sadd.s32 %s88, 1
      %p92 = scmp.eq.s32.totalorder %s19, 1
      %p93 = scmp.ne.s32.totalorder %s88, %s90
      %p94 = scmp.eq.s32.totalorder %s19, 0
      %p95 = por %p93, %p94
      %p96 = scmp.ne.s32.totalorder %s88, %s90
      %p97 = scmp.eq.s32.totalorder %s24, 1
      %p98 = por %p96, %p97
      %p99 = scmp.ne.s32.totalorder %s90, %s91
      %p100 = scmp.eq.s32.totalorder %s24, 0
      %p101 = por %p99, %p100
      %p102 = scmp.ne.s32.totalorder %s90, %s91
      %p103 = scmp.eq.s32.totalorder %s25, 1
      %p104 = por %p102, %p103
      %p106 = scmp.ne.s32.totalorder %s91, %s105
      %p107 = scmp.eq.s32.totalorder %s25, 0
      %p108 = por %p106, %p107
      %s110 = sadd.s32 %s109, 1
      %p113 = scmp.eq.s32.totalorder %s19, 1
      %p114 = scmp.ne.s32.totalorder %s109, %s111
      %p115 = scmp.eq.s32.totalorder %s19, 0
      %p116 = por %p114, %p115
      %p117 = scmp.ne.s32.totalorder %s109, %s111
      %p118 = scmp.eq.s32.totalorder %s24, 1
      %p119 = por %p117, %p118
      %p120 = scmp.ne.s32.totalorder %s111, %s112
      %p121 = scmp.eq.s32.totalorder %s24, 0
      %p122 = por %p120, %p121
      %p123 = scmp.ne.s32.totalorder %s111, %s112
      %p124 = scmp.eq.s32.totalorder %s25, 1
      %p125 = por %p123, %p124
      %p127 = scmp.ne.s32.totalorder %s112, %s126
      %p128 = scmp.eq.s32.totalorder %s25, 0
      %p129 = por %p127, %p128
      %s131 = sadd.s32 %s130, 1
      %p134 = scmp.eq.s32.totalorder %s19, 1
      %p135 = scmp.ne.s32.totalorder %s130, %s132
      %p136 = scmp.eq.s32.totalorder %s19, 0
      %p137 = por %p135, %p136
      %p138 = scmp.ne.s32.totalorder %s130, %s132
      %p139 = scmp.eq.s32.totalorder %s24, 1
      %p140 = por %p138, %p139
      %p141 = scmp.ne.s32.totalorder %s132, %s133
      %p142 = scmp.eq.s32.totalorder %s24, 0
      %p143 = por %p141, %p142
      %p144 = scmp.ne.s32.totalorder %s132, %s133
      %p145 = scmp.eq.s32.totalorder %s25, 1
      %p146 = por %p144, %p145
      %p148 = scmp.ne.s32.totalorder %s133, %s147
      %p149 = scmp.eq.s32.totalorder %s25, 0
      %p150 = por %p148, %p149
      %s152 = sadd.s32 %s151, 1
      %p155 = scmp.eq.s32.totalorder %s19, 1
      %p156 = scmp.ne.s32.totalorder %s151, %s153
      %p157 = scmp.eq.s32.totalorder %s19, 0
      %p158 = por %p156, %p157
      %p159 = scmp.ne.s32.totalorder %s151, %s153
      %p160 = scmp.eq.s32.totalorder %s24, 1
      %p161 = por %p159, %p160
      %p162 = scmp.ne.s32.totalorder %s153, %s154
      %p163 = scmp.eq.s32.totalorder %s24, 0
      %p164 = por %p162, %p163
      %p165 = scmp.ne.s32.totalorder %s153, %s154
      %p166 = scmp.eq.s32.totalorder %s25, 1
      %p167 = por %p165, %p166
      %p169 = scmp.ne.s32.totalorder %s154, %s168
      %p170 = scmp.eq.s32.totalorder %s25, 0
      %p171 = por %p169, %p170
      %s173 = sadd.s32 %s172, 1
      %p176 = scmp.eq.s32.totalorder %s19, 1
      %p177 = scmp.ne.s32.totalorder %s172, %s174
      %p178 = scmp.eq.s32.totalorder %s19, 0
      %p179 = por %p177, %p178
      %p180 = scmp.ne.s32.totalorder %s172, %s174
      %p181 = scmp.eq.s32.totalorder %s24, 1
      %p182 = por %p180, %p181
      %p183 = scmp.ne.s32.totalorder %s174, %s175
      %p184 = scmp.eq.s32.totalorder %s24, 0
      %p185 = por %p183, %p184
      %p186 = scmp.ne.s32.totalorder %s174, %s175
      %p187 = scmp.eq.s32.totalorder %s25, 1
      %p188 = por %p186, %p187
      %p190 = scmp.ne.s32.totalorder %s175, %s189
      %p191 = scmp.eq.s32.totalorder %s25, 0
      %p192 = por %p190, %p191
      %s194 = sadd.s32 %s193, 1
      %p197 = scmp.eq.s32.totalorder %s19, 1
      %p198 = scmp.ne.s32.totalorder %s193, %s195
      %p199 = scmp.eq.s32.totalorder %s19, 0
      %p200 = por %p198, %p199
      %p201 = scmp.ne.s32.totalorder %s193, %s195
      %p202 = scmp.eq.s32.totalorder %s24, 1
      %p203 = por %p201, %p202
      %p204 = scmp.ne.s32.totalorder %s195, %s196
      %p205 = scmp.eq.s32.totalorder %s24, 0
      %p206 = por %p204, %p205
      %p207 = scmp.ne.s32.totalorder %s195, %s196
      %p208 = scmp.eq.s32.totalorder %s25, 1
      %p209 = por %p207, %p208
      %p211 = scmp.ne.s32.totalorder %s196, %s210
      %p212 = scmp.eq.s32.totalorder %s25, 0
      %p213 = por %p211, %p212
      %s215 = sadd.s32 %s214, 1
      %p218 = scmp.eq.s32.totalorder %s19, 1
      %p219 = scmp.ne.s32.totalorder %s214, %s216
      %p220 = scmp.eq.s32.totalorder %s19, 0
      %p221 = por %p219, %p220
      %p222 = scmp.ne.s32.totalorder %s214, %s216
      %p223 = scmp.eq.s32.totalorder %s24, 1
      %p224 = por %p222, %p223
      %p225 = scmp.ne.s32.totalorder %s216, %s217
      %p226 = scmp.eq.s32.totalorder %s24, 0
      %p227 = por %p225, %p226
      %p228 = scmp.ne.s32.totalorder %s216, %s217
      %p229 = scmp.eq.s32.totalorder %s25, 1
      %p230 = por %p228, %p229
      %p232 = scmp.ne.s32.totalorder %s217, %s231
      %p233 = scmp.eq.s32.totalorder %s25, 0
      %p234 = por %p232, %p233
      %s235 = ssub.s32 %s26, %s38
      %p236 = scmp.eq.s32.totalorder %s235, 0
      %s238 = sadd.s32 %s237, 1
      %s239 = scalar_select %p236, %s237, %s238
      %p242 = pneg %p236
      %p243 = scmp.eq.s32.totalorder %s19, 1
      %p244 = por %p242, %p243
      %p245 = scmp.ne.s32.totalorder %s237, %s240
      %p246 = scmp.eq.s32.totalorder %s19, 0
      %p247 = por %p245, %p246
      %p248 = scmp.ne.s32.totalorder %s237, %s240
      %p249 = scmp.eq.s32.totalorder %s24, 1
      %p250 = por %p248, %p249
      %p251 = scmp.ne.s32.totalorder %s240, %s241
      %p252 = scmp.eq.s32.totalorder %s24, 0
      %p253 = por %p251, %p252
      %p254 = scmp.ne.s32.totalorder %s240, %s241
      %p255 = scmp.eq.s32.totalorder %s25, 1
      %p256 = por %p254, %p255
      %p258 = scmp.ne.s32.totalorder %s241, %s257
      %p259 = scmp.eq.s32.totalorder %s25, 0
      %p260 = por %p258, %p259
      %p261 = scmp.le.s32.totalorder 1, %s19
      %p262 = scmp.lt.s32.totalorder %s19, 3
      %p263 = pnand %p261, %p262
      %p264 = pneg %p263
      // Predicated region
      $region9: #{pointnet_feat.6} parent=5 // pred_check
        _
      $region10: #{pointnet_feat.6} parent=5 // pred_check_branch
        %266 = sbr.rel (%p263) target = $region12
      $region11: #{pointnet_feat.6} parent=5 // pred_region
        %s267 = ssub.s32 %s19, 1
        // Predicated region
        $region13: #{pointnet_feat.6} parent=11 // pred_check
          %p268 = pneg %p80
        $region14: #{pointnet_feat.6} parent=11 // pred_check_branch
          %270 = sbr.rel (%p268) target = $region16
        $region15: #{pointnet_feat.6} parent=11 // pred_region
          _
        $region16: #{pointnet_feat.6} parent=11 // pred_fallthru
          _
        // Predicated region
        $region17: #{pointnet_feat.6} parent=11 // pred_check
          %p271 = pneg %p101
        $region18: #{pointnet_feat.6} parent=11 // pred_check_branch
          %273 = sbr.rel (%p271) target = $region20
        $region19: #{pointnet_feat.6} parent=11 // pred_region
          %s275 = ssub.s32 16, 16
          %276 = vsyncadd [#allocation4], %s275
          %s278 = sshll.u32 [#allocation3], 4
          %s279 = int_to_ptr.vmem [resolvable:$true] %s278
          %281 = dma.hbm_to_vmem [thread:$0]  %s2, 16, %s279, [#allocation4]
        $region20: #{pointnet_feat.6} parent=11 // pred_fallthru
          _
        // Predicated region
        $region21: #{pointnet_feat.6} parent=11 // pred_check
          %p282 = pneg %p122
        $region22: #{pointnet_feat.6} parent=11 // pred_check_branch
          %284 = sbr.rel (%p282) target = $region24
        $region23: #{pointnet_feat.6} parent=11 // pred_region
          %s286 = ssub.s32 16, 16
          %287 = vsyncadd [#allocation6], %s286
          %s289 = sshll.u32 [#allocation5], 4
          %s290 = int_to_ptr.vmem [resolvable:$true] %s289
          %292 = dma.hbm_to_vmem [thread:$0]  %s3, 16, %s290, [#allocation6]
        $region24: #{pointnet_feat.6} parent=11 // pred_fallthru
          _
        // Predicated region
        $region25: #{pointnet_feat.6} parent=11 // pred_check
          %p293 = pneg %p143
        $region26: #{pointnet_feat.6} parent=11 // pred_check_branch
          %295 = sbr.rel (%p293) target = $region28
        $region27: #{pointnet_feat.6} parent=11 // pred_region
          _
        $region28: #{pointnet_feat.6} parent=11 // pred_fallthru
          _
        // Predicated region
        $region29: #{pointnet_feat.6} parent=11 // pred_check
          %p296 = pneg %p164
        $region30: #{pointnet_feat.6} parent=11 // pred_check_branch
          %298 = sbr.rel (%p296) target = $region32
        $region31: #{pointnet_feat.6} parent=11 // pred_region
          %s300 = ssub.s32 32, 32
          %301 = vsyncadd [#allocation6], %s300
          %s303 = sshll.u32 [#allocation7], 4
          %s304 = int_to_ptr.vmem [resolvable:$true] %s303
          %306 = dma.hbm_to_vmem [thread:$0]  %s5, 32, %s304, [#allocation6]
        $region32: #{pointnet_feat.6} parent=11 // pred_fallthru
          _
        // Predicated region
        $region33: #{pointnet_feat.6} parent=11 // pred_check
          %p307 = pneg %p185
        $region34: #{pointnet_feat.6} parent=11 // pred_check_branch
          %309 = sbr.rel (%p307) target = $region36
        $region35: #{pointnet_feat.6} parent=11 // pred_region
          %s311 = ssub.s32 32, 32
          %312 = vsyncadd [#allocation9], %s311
          %s314 = sshll.u32 [#allocation8], 4
          %s315 = int_to_ptr.vmem [resolvable:$true] %s314
          %317 = dma.hbm_to_vmem [thread:$0]  %s6, 32, %s315, [#allocation9]
        $region36: #{pointnet_feat.6} parent=11 // pred_fallthru
          _
        // Predicated region
        $region37: #{pointnet_feat.6} parent=11 // pred_check
          %p318 = pneg %p206
        $region38: #{pointnet_feat.6} parent=11 // pred_check_branch
          %320 = sbr.rel (%p318) target = $region40
        $region39: #{pointnet_feat.6} parent=11 // pred_region
          %s322 = ssub.s32 131072, 131072
          %323 = vsyncadd [#allocation9], %s322
          %s324 = sshll.u32 [#allocation10], 4
          %s325 = int_to_ptr.vmem [resolvable:$true] %s324
          %330 = dma.hbm_to_vmem [thread:$0]  %s7, 131072, %s325, [#allocation9], 4096, 4096, 256
        $region40: #{pointnet_feat.6} parent=11 // pred_fallthru
          _
        // Predicated region
        $region41: #{pointnet_feat.6} parent=11 // pred_check
          %p331 = pneg %p227
        $region42: #{pointnet_feat.6} parent=11 // pred_check_branch
          %333 = sbr.rel (%p331) target = $region44
        $region43: #{pointnet_feat.6} parent=11 // pred_region
          %s335 = ssub.s32 512, 512
          %336 = vsyncadd [#allocation12], %s335
          %s338 = sshll.u32 [#allocation11], 4
          %s339 = int_to_ptr.vmem [resolvable:$true] %s338
          %341 = dma.hbm_to_vmem [thread:$0]  %s8, 512, %s339, [#allocation12]
        $region44: #{pointnet_feat.6} parent=11 // pred_fallthru
          _
      $region12: #{pointnet_feat.6} parent=5 // pred_fallthru
        _
      %p342 = scmp.lt.s32.totalorder %s19, 2
      // Predicated region
      $region45: #{pointnet_feat.6} parent=5 // pred_check
        %p343 = pneg %p342
      $region46: #{pointnet_feat.6} parent=5 // pred_check_branch
        %345 = sbr.rel (%p343) target = $region48
      $region47: #{pointnet_feat.6} parent=5 // pred_region
        // Predicated region
        $region49: #{pointnet_feat.6} parent=47 // pred_check
          %p346 = pneg %p53
        $region50: #{pointnet_feat.6} parent=47 // pred_check_branch
          %348 = sbr.rel (%p346) target = $region52
        $region51: #{pointnet_feat.6} parent=47 // pred_region
          %s349 = smul.u32 2, %s27
          %p350 = scmp.lt.s32.totalorder %s26, 1
          %s351 = scalar_select %p350, %s26, 1
          %p352 = scmp.lt.s32.totalorder %s349, 1
          %s353 = scalar_select %p352, %s349, 1
          %s354 = smul.addr %s351, 2
          %s355 = sadd.s32 %s353, %s354
          %s356 = smul.addr %s355, 4
          %s357 = scalar_lea.vmem %s0, %s356
          %s358 = smul.u32 2, %s27
        $region52: #{pointnet_feat.6} parent=47 // pred_fallthru
          _
      $region48: #{pointnet_feat.6} parent=5 // pred_fallthru
        _
      %p359 = scmp.le.s32.totalorder 1, %s19
      %p360 = scmp.lt.s32.totalorder %s19, 3
      %p361 = pnand %p359, %p360
      %p362 = pneg %p361
      // Predicated region
      $region53: #{pointnet_feat.6} parent=5 // pred_check
        _
      $region54: #{pointnet_feat.6} parent=5 // pred_check_branch
        %364 = sbr.rel (%p361) target = $region56
      $region55: #{pointnet_feat.6} parent=5 // pred_region
        %s365 = ssub.s32 %s19, 1
        // Predicated region
        $region57: #{pointnet_feat.6} parent=55 // pred_check
          %p366 = pneg %p101
        $region58: #{pointnet_feat.6} parent=55 // pred_check_branch
          %368 = sbr.rel (%p366) target = $region60
        $region59: #{pointnet_feat.6} parent=55 // pred_region
          %369 = dma.done [#allocation4], 16
        $region60: #{pointnet_feat.6} parent=55 // pred_fallthru
          _
        // Predicated region
        $region61: #{pointnet_feat.6} parent=55 // pred_check
          %p370 = pneg %p122
        $region62: #{pointnet_feat.6} parent=55 // pred_check_branch
          %372 = sbr.rel (%p370) target = $region64
        $region63: #{pointnet_feat.6} parent=55 // pred_region
          %373 = dma.done [#allocation6], 16
        $region64: #{pointnet_feat.6} parent=55 // pred_fallthru
          _
        // Predicated region
        $region65: #{pointnet_feat.6} parent=55 // pred_check
          %p374 = pneg %p164
        $region66: #{pointnet_feat.6} parent=55 // pred_check_branch
          %376 = sbr.rel (%p374) target = $region68
        $region67: #{pointnet_feat.6} parent=55 // pred_region
          %377 = dma.done [#allocation6], 32
        $region68: #{pointnet_feat.6} parent=55 // pred_fallthru
          _
        // Predicated region
        $region69: #{pointnet_feat.6} parent=55 // pred_check
          %p378 = pneg %p185
        $region70: #{pointnet_feat.6} parent=55 // pred_check_branch
          %380 = sbr.rel (%p378) target = $region72
        $region71: #{pointnet_feat.6} parent=55 // pred_region
          %381 = dma.done [#allocation9], 32
        $region72: #{pointnet_feat.6} parent=55 // pred_fallthru
          _
        // Predicated region
        $region73: #{pointnet_feat.6} parent=55 // pred_check
          %p382 = pneg %p206
        $region74: #{pointnet_feat.6} parent=55 // pred_check_branch
          %384 = sbr.rel (%p382) target = $region76
        $region75: #{pointnet_feat.6} parent=55 // pred_region
          %385 = dma.done [#allocation9], 131072
        $region76: #{pointnet_feat.6} parent=55 // pred_fallthru
          _
        // Predicated region
        $region77: #{pointnet_feat.6} parent=55 // pred_check
          %p386 = pneg %p227
        $region78: #{pointnet_feat.6} parent=55 // pred_check_branch
          %388 = sbr.rel (%p386) target = $region80
        $region79: #{pointnet_feat.6} parent=55 // pred_region
          %389 = dma.done [#allocation12], 512
        $region80: #{pointnet_feat.6} parent=55 // pred_fallthru
          _
        %s390 = smul.u32 2, %s29
        %p391 = scmp.lt.s32.totalorder %s28, 1
        %s392 = scalar_select %p391, %s28, 1
        %p393 = scmp.lt.s32.totalorder %s390, 1
        %s394 = scalar_select %p393, %s390, 1
        %s395 = smul.addr %s392, 2
        %s396 = sadd.s32 %s394, %s395
        %s397 = smul.addr %s396, 4
        %s398 = scalar_lea.vmem %s0, %s397
        %p399 = pneg %p59
        %p400 = pneg %p56
        %p401 = pneg %p80
        %p402 = pneg %p77
        %p403 = pneg %p101
        %p404 = pneg %p98
        %p405 = pneg %p122
        %p406 = pneg %p119
        %p407 = pneg %p143
        %p408 = pneg %p140
        %p409 = pneg %p164
        %p410 = pneg %p161
        %p411 = pneg %p185
        %p412 = pneg %p182
        %p413 = pneg %p206
        %p414 = pneg %p203
        %p415 = pneg %p227
        %p416 = pneg %p224
        %p417 = pneg %p253
        %p418 = pneg %p250
        %p419 = scmp.lt.s32.totalorder %s28, 1
        %s420 = scalar_select %p419, %s28, 1
        %s421 = smul.addr %s420, 32
        %s422 = scalar_lea.vmem %s9, %s421
        %s423 = smul.u32 2, %s29
        %p424 = scmp.lt.s32.totalorder %s28, 1
        %s425 = scalar_select %p424, %s28, 1
        %p426 = scmp.lt.s32.totalorder %s423, 1
        %s427 = scalar_select %p426, %s423, 1
        %s428 = smul.addr %s425, 2
        %s429 = sadd.s32 %s427, %s428
        %s430 = smul.addr %s429, 4
        %s431 = scalar_lea.vmem %s0, %s430
        %s432 = smul.u32 2, %s29
        %p433 = scmp.lt.s32.totalorder %s28, 1
        %s434 = scalar_select %p433, %s28, 1
        %s435 = smul.addr %s434, 32
        %s436 = scalar_lea.vmem %s9, %s435
        %p438 = scmp.eq.s32.totalorder %s29, 0
        // Predicated region
        $region81: #{pointnet_feat.6} parent=55 // pred_check
          %p439 = pneg %p438
        $region82: #{pointnet_feat.6} parent=55 // pred_check_branch
          %441 = sbr.rel (%p439) target = $region84
        $region83: #{pointnet_feat.6} parent=55 // pred_region
          %v442 = vlaneseq
          %vm443 = vcmp.ge.s32.totalorder %v442, 0
          %vm444 = vcmp.lt.s32.totalorder %v442, 256
          %vm445 = vmand %vm443, %vm444
          %446 = vst.msk [vmem:[#allocation2] sm:$0x3] %vm445, -inf
        $region84: #{pointnet_feat.6} parent=55 // pred_fallthru
          _
        %v447 = vld [vmem:[%s431] sm:$0xf]
        %v448 = vld [vmem:[%s431 + $0x4] sm:$0xf]
        %v449 = vld [vmem:[%s1] sm:$0xf]
        %v450 = vld [vmem:[%s1 + $0x4] sm:$0xf]
        %v451 = vld [vmem:[%s1 + $0x8] sm:$0xf]
        %v452 = vld [vmem:[%s1 + $0xc] sm:$0xf]
        %v453 = vld [vmem:[%s1 + $0x10] sm:$0xf]
        %v454 = vld [vmem:[%s1 + $0x14] sm:$0xf]
        %v455 = vld [vmem:[%s1 + $0x18] sm:$0xf]
        %v456 = vld [vmem:[%s1 + $0x1c] sm:$0xf]
        %v459 = vunpack.c.l.b16 %v447
        %v460 = vunpack.c.l.b16 %v448
        %v461 = vpack.c.b16 %v460, %v459
        %v470 = vunpack.c.l.b16 %v449
        %v471 = vunpack.c.l.b16 %v450
        %v472 = vunpack.c.l.b16 %v451
        %v473 = vunpack.c.l.b16 %v452
        %v474 = vunpack.c.l.b16 %v453
        %v475 = vunpack.c.l.b16 %v454
        %v476 = vunpack.c.l.b16 %v455
        %v477 = vunpack.c.l.b16 %v456
        %v478 = vpack.c.b16 %v471, %v470
        %v479 = vpack.c.b16 %v473, %v472
        %v480 = vpack.c.b16 %v475, %v474
        %v481 = vpack.c.b16 %v477, %v476
        %vm486 = vcmask 523264
        %v488 = vsel %vm486, %v461, 0
        %490 = vmatprep.subr.bf16.mxu0 0
        %491 = vmatpush1.bf16.msra.mxu0 %v478
        %492 = vmatprep.subr.bf16.mxu0 0
        %493 = vmatpush1.bf16.msra.mxu0 %v479
        %494 = vmatprep.subr.bf16.mxu0 0
        %495 = vmatpush1.bf16.msra.mxu0 %v480
        %496 = vmatprep.subr.bf16.mxu0 0
        %497 = vmatpush1.bf16.msra.mxu0 %v481
        %498 = vmatprep.subr.bf16.mxu0 0
        %499 = vmatpush1.bf16.msra.mxu0 0
        %500 = vmatprep.subr.bf16.mxu0 0
        %501 = vmatpush1.bf16.msra.mxu0 0
        %502 = vmatprep.subr.bf16.mxu0 0
        %503 = vmatpush1.bf16.msra.mxu0 0
        %504 = vmatprep.subr.bf16.mxu0 0
        %505 = vmatpush1.bf16.msra.mxu0 0
        %506 = vmatprep.subr.bf16.mxu0 0
        %507 = vmatpush1.bf16.msra.mxu0 0
        %508 = vmatprep.subr.bf16.mxu0 0
        %509 = vmatpush1.bf16.msra.mxu0 0
        %510 = vmatprep.subr.bf16.mxu0 0
        %511 = vmatpush1.bf16.msra.mxu0 0
        %512 = vmatprep.subr.bf16.mxu0 0
        %513 = vmatpush1.bf16.msra.mxu0 0
        %514 = vmatprep.subr.bf16.mxu0 0
        %515 = vmatpush1.bf16.msra.mxu0 0
        %516 = vmatprep.subr.bf16.mxu0 0
        %517 = vmatpush1.bf16.msra.mxu0 0
        %518 = vmatprep.subr.bf16.mxu0 0
        %519 = vmatpush1.bf16.msra.mxu0 0
        %520 = vmatprep.subr.bf16.mxu0 0
        %521 = vmatpush1.bf16.msra.mxu0 0
        %522 = vmatprep.mubr.bf16.mxu0 0
        %523 = vmatmul.mubr.bf16.gmra.mrb[0].mxu0 %v488
        %v524 = vpop.f32.mrb[0].mxu0
        %v525 = vadd.f32 0.0, %v524
        %v526 = vpop.f32.mrb[0].mxu0
        %v527 = vpop.f32.mrb[0].mxu0
        %v528 = vadd.f32 0.0, %v527
        %v529 = vpop.f32.mrb[0].mxu0
        %530 = vdwg.mxu0
        %v531 = vld [vmem:[#allocation3] sm:$0x1]
        %v533 = vlaneseq
        %v534 = vshrl.u32 %v533, 7
        %v535 = vsub.s32 0, %v534
        %v536 = vrot.slane %v531, %v535
        %v538 = vmul.f32 %v525, %v536
        %v539 = vmul.f32 %v528, %v536
        %v540 = vld [vmem:[#allocation5] sm:$0x1]
        %v542 = vlaneseq
        %v543 = vshrl.u32 %v542, 7
        %v544 = vsub.s32 0, %v543
        %v545 = vrot.slane %v540, %v544
        %v547 = vadd.f32 %v538, %v545
        %v548 = vadd.f32 %v539, %v545
        %v549 = vmax.f32 %v547, 0.0
        %v550 = vmax.f32 %v548, 0.0
        %v551 = vpack.c.bf16 %v550, %v549
        %v552 = vld [vmem:[%s4] sm:$0xff]
        %v553 = vld [vmem:[%s4 + $0x8] sm:$0xff]
        %v554 = vld [vmem:[%s4 + $0x10] sm:$0xff]
        %v555 = vld [vmem:[%s4 + $0x18] sm:$0xff]
        %v556 = vld [vmem:[%s4 + $0x20] sm:$0xff]
        %v557 = vld [vmem:[%s4 + $0x28] sm:$0xff]
        %v558 = vld [vmem:[%s4 + $0x30] sm:$0xff]
        %v559 = vld [vmem:[%s4 + $0x38] sm:$0xff]
        %v568 = vunpack.c.l.b16 %v552
        %v569 = vunpack.c.h.b16 %v552
        %v570 = vunpack.c.l.b16 %v553
        %v571 = vunpack.c.h.b16 %v553
        %v572 = vunpack.c.l.b16 %v554
        %v573 = vunpack.c.h.b16 %v554
        %v574 = vunpack.c.l.b16 %v555
        %v575 = vunpack.c.h.b16 %v555
        %v576 = vunpack.c.l.b16 %v556
        %v577 = vunpack.c.h.b16 %v556
        %v578 = vunpack.c.l.b16 %v557
        %v579 = vunpack.c.h.b16 %v557
        %v580 = vunpack.c.l.b16 %v558
        %v581 = vunpack.c.h.b16 %v558
        %v582 = vunpack.c.l.b16 %v559
        %v583 = vunpack.c.h.b16 %v559
        %v584 = vpack.c.b16 %v570, %v568
        %v585 = vpack.c.b16 %v571, %v569
        %v586 = vpack.c.b16 %v574, %v572
        %v587 = vpack.c.b16 %v575, %v573
        %v588 = vpack.c.b16 %v578, %v576
        %v589 = vpack.c.b16 %v579, %v577
        %v590 = vpack.c.b16 %v582, %v580
        %v591 = vpack.c.b16 %v583, %v581
        %v601 = vsel %vm486, %v551, 0
        %603 = vmatprep.subr.bf16.mxu0 %v585
        %604 = vmatpush1.bf16.msra.mxu0 %v584
        %605 = vmatprep.subr.bf16.mxu0 %v587
        %606 = vmatpush1.bf16.msra.mxu0 %v586
        %607 = vmatprep.subr.bf16.mxu0 %v589
        %608 = vmatpush1.bf16.msra.mxu0 %v588
        %609 = vmatprep.subr.bf16.mxu0 %v591
        %610 = vmatpush1.bf16.msra.mxu0 %v590
        %611 = vmatprep.subr.bf16.mxu0 0
        %612 = vmatpush1.bf16.msra.mxu0 0
        %613 = vmatprep.subr.bf16.mxu0 0
        %614 = vmatpush1.bf16.msra.mxu0 0
        %615 = vmatprep.subr.bf16.mxu0 0
        %616 = vmatpush1.bf16.msra.mxu0 0
        %617 = vmatprep.subr.bf16.mxu0 0
        %618 = vmatpush1.bf16.msra.mxu0 0
        %619 = vmatprep.subr.bf16.mxu0 0
        %620 = vmatpush1.bf16.msra.mxu0 0
        %621 = vmatprep.subr.bf16.mxu0 0
        %622 = vmatpush1.bf16.msra.mxu0 0
        %623 = vmatprep.subr.bf16.mxu0 0
        %624 = vmatpush1.bf16.msra.mxu0 0
        %625 = vmatprep.subr.bf16.mxu0 0
        %626 = vmatpush1.bf16.msra.mxu0 0
        %627 = vmatprep.subr.bf16.mxu0 0
        %628 = vmatpush1.bf16.msra.mxu0 0
        %629 = vmatprep.subr.bf16.mxu0 0
        %630 = vmatpush1.bf16.msra.mxu0 0
        %631 = vmatprep.subr.bf16.mxu0 0
        %632 = vmatpush1.bf16.msra.mxu0 0
        %633 = vmatprep.subr.bf16.mxu0 0
        %634 = vmatpush1.bf16.msra.mxu0 0
        %635 = vmatprep.mubr.bf16.mxu0 0
        %636 = vmatmul.mubr.bf16.gmra.mrb[0].mxu0 %v601
        %v637 = vpop.f32.mrb[0].mxu0
        %v638 = vadd.f32 0.0, %v637
        %v639 = vpop.f32.mrb[0].mxu0
        %v640 = vadd.f32 0.0, %v639
        %v641 = vpop.f32.mrb[0].mxu0
        %v642 = vadd.f32 0.0, %v641
        %v643 = vpop.f32.mrb[0].mxu0
        %v644 = vadd.f32 0.0, %v643
        %645 = vdwg.mxu0
        %v646 = vld [vmem:[#allocation7] sm:$0x3]
        %v648 = vlaneseq
        %v649 = vshrl.u32 %v648, 7
        %v650 = vsub.s32 0, %v649
        %v651 = vrot.slane %v646, %v650
        %v652 = vlaneseq
        %v653 = vshrl.u32 %v652, 7
        %v654 = vsub.s32 1, %v653
        %v655 = vrot.slane %v646, %v654
        %v658 = vmul.f32 %v638, %v651
        %v659 = vmul.f32 %v640, %v655
        %v660 = vmul.f32 %v642, %v651
        %v661 = vmul.f32 %v644, %v655
        %v662 = vld [vmem:[#allocation8] sm:$0x3]
        %v664 = vlaneseq
        %v665 = vshrl.u32 %v664, 7
        %v666 = vsub.s32 0, %v665
        %v667 = vrot.slane %v662, %v666
        %v668 = vlaneseq
        %v669 = vshrl.u32 %v668, 7
        %v670 = vsub.s32 1, %v669
        %v671 = vrot.slane %v662, %v670
        %v674 = vadd.f32 %v658, %v667
        %v675 = vadd.f32 %v659, %v671
        %v676 = vadd.f32 %v660, %v667
        %v677 = vadd.f32 %v661, %v671
        %v678 = vmax.f32 %v674, 0.0
        %v679 = vmax.f32 %v675, 0.0
        %v680 = vmax.f32 %v676, 0.0
        %v681 = vmax.f32 %v677, 0.0
        %v682 = vld [vmem:[#allocation2] sm:$0x3]
        %v683 = vmax.f32 %v678, %v680
        %v684 = vrot.slane %v683, 4
        %v685 = vmax.f32 %v683, %v684
        %v686 = vrot.slane %v685, 2
        %v687 = vmax.f32 %v685, %v686
        %v688 = vrot.slane %v687, 1
        %v689 = vmax.f32 %v687, %v688
        %v690 = vmax.f32 %v679, %v681
        %v691 = vrot.slane %v690, 4
        %v692 = vmax.f32 %v690, %v691
        %v693 = vrot.slane %v692, 2
        %v694 = vmax.f32 %v692, %v693
        %v695 = vrot.slane %v694, 1
        %v696 = vmax.f32 %v694, %v695
        %v699 = vcombine.low %v689, %v696
        %v701 = vunpack.c.l.s4 1966171168
        %v702 = vunpack.c.0.s8 %v701
        %v703 = vlaneseq
        %v704 = vshrl.u32 %v703, 7
        %v705 = vsub.s32 %v702, %v704
        %v706 = vrot.slane %v699, %v705
        %v708 = vunpack.c.l.s4 1966171168
        %v709 = vunpack.c.0.s8 %v708
        %v710 = vlaneseq
        %v711 = vshrl.u32 %v710, 7
        %v712 = vsub.s32 %v709, %v711
        %v713 = vrot.slane %v706, %v712
        %v715 = vmax.f32 %v682, %v713
        %v716 = vlaneseq
        %vm717 = vcmp.ge.s32.totalorder %v716, 0
        %vm718 = vcmp.lt.s32.totalorder %v716, 256
        %vm719 = vmand %vm717, %vm718
        %720 = vst.msk [vmem:[#allocation2] sm:$0x3] %vm719, %v715
        // Predicated region
        $region85: #{pointnet_feat.6} parent=55 // pred_check
          %p721 = pneg %p438
        $region86: #{pointnet_feat.6} parent=55 // pred_check_branch
          %723 = sbr.rel (%p721) target = $region88
        $region87: #{pointnet_feat.6} parent=55 // pred_region
          %v724 = vld [vmem:[#allocation2] sm:$0x3]
          %v725 = vld [vmem:[#allocation10] sm:$0xff]
          %v726 = vld [vmem:[#allocation10 + $0x8] sm:$0xff]
          %v727 = vld [vmem:[#allocation10 + $0x10] sm:$0xff]
          %v728 = vld [vmem:[#allocation10 + $0x18] sm:$0xff]
          %v729 = vld [vmem:[#allocation10 + $0x20] sm:$0xff]
          %v730 = vld [vmem:[#allocation10 + $0x28] sm:$0xff]
          %v731 = vld [vmem:[#allocation10 + $0x30] sm:$0xff]
          %v732 = vld [vmem:[#allocation10 + $0x38] sm:$0xff]
          %v733 = vld [vmem:[#allocation10 + $0x40] sm:$0xff]
          %v734 = vld [vmem:[#allocation10 + $0x48] sm:$0xff]
          %v735 = vld [vmem:[#allocation10 + $0x50] sm:$0xff]
          %v736 = vld [vmem:[#allocation10 + $0x58] sm:$0xff]
          %v737 = vld [vmem:[#allocation10 + $0x60] sm:$0xff]
          %v738 = vld [vmem:[#allocation10 + $0x68] sm:$0xff]
          %v739 = vld [vmem:[#allocation10 + $0x70] sm:$0xff]
          %v740 = vld [vmem:[#allocation10 + $0x78] sm:$0xff]
          %v741 = vld [vmem:[#allocation10 + $0x80] sm:$0xff]
          %v742 = vld [vmem:[#allocation10 + $0x88] sm:$0xff]
          %v743 = vld [vmem:[#allocation10 + $0x90] sm:$0xff]
          %v744 = vld [vmem:[#allocation10 + $0x98] sm:$0xff]
          %v745 = vld [vmem:[#allocation10 + $0xa0] sm:$0xff]
          %v746 = vld [vmem:[#allocation10 + $0xa8] sm:$0xff]
          %v747 = vld [vmem:[#allocation10 + $0xb0] sm:$0xff]
          %v748 = vld [vmem:[#allocation10 + $0xb8] sm:$0xff]
          %v749 = vld [vmem:[#allocation10 + $0xc0] sm:$0xff]
          %v750 = vld [vmem:[#allocation10 + $0xc8] sm:$0xff]
          %v751 = vld [vmem:[#allocation10 + $0xd0] sm:$0xff]
          %v752 = vld [vmem:[#allocation10 + $0xd8] sm:$0xff]
          %v753 = vld [vmem:[#allocation10 + $0xe0] sm:$0xff]
          %v754 = vld [vmem:[#allocation10 + $0xe8] sm:$0xff]
          %v755 = vld [vmem:[#allocation10 + $0xf0] sm:$0xff]
          %v756 = vld [vmem:[#allocation10 + $0xf8] sm:$0xff]
          %v757 = vld [vmem:[#allocation10 + $0x100] sm:$0xff]
          %v758 = vld [vmem:[#allocation10 + $0x108] sm:$0xff]
          %v759 = vld [vmem:[#allocation10 + $0x110] sm:$0xff]
          %v760 = vld [vmem:[#allocation10 + $0x118] sm:$0xff]
          %v761 = vld [vmem:[#allocation10 + $0x120] sm:$0xff]
          %v762 = vld [vmem:[#allocation10 + $0x128] sm:$0xff]
          %v763 = vld [vmem:[#allocation10 + $0x130] sm:$0xff]
          %v764 = vld [vmem:[#allocation10 + $0x138] sm:$0xff]
          %v765 = vld [vmem:[#allocation10 + $0x140] sm:$0xff]
          %v766 = vld [vmem:[#allocation10 + $0x148] sm:$0xff]
          %v767 = vld [vmem:[#allocation10 + $0x150] sm:$0xff]
          %v768 = vld [vmem:[#allocation10 + $0x158] sm:$0xff]
          %v769 = vld [vmem:[#allocation10 + $0x160] sm:$0xff]
          %v770 = vld [vmem:[#allocation10 + $0x168] sm:$0xff]
          %v771 = vld [vmem:[#allocation10 + $0x170] sm:$0xff]
          %v772 = vld [vmem:[#allocation10 + $0x178] sm:$0xff]
          %v773 = vld [vmem:[#allocation10 + $0x180] sm:$0xff]
          %v774 = vld [vmem:[#allocation10 + $0x188] sm:$0xff]
          %v775 = vld [vmem:[#allocation10 + $0x190] sm:$0xff]
          %v776 = vld [vmem:[#allocation10 + $0x198] sm:$0xff]
          %v777 = vld [vmem:[#allocation10 + $0x1a0] sm:$0xff]
          %v778 = vld [vmem:[#allocation10 + $0x1a8] sm:$0xff]
          %v779 = vld [vmem:[#allocation10 + $0x1b0] sm:$0xff]
          %v780 = vld [vmem:[#allocation10 + $0x1b8] sm:$0xff]
          %v781 = vld [vmem:[#allocation10 + $0x1c0] sm:$0xff]
          %v782 = vld [vmem:[#allocation10 + $0x1c8] sm:$0xff]
          %v783 = vld [vmem:[#allocation10 + $0x1d0] sm:$0xff]
          %v784 = vld [vmem:[#allocation10 + $0x1d8] sm:$0xff]
          %v785 = vld [vmem:[#allocation10 + $0x1e0] sm:$0xff]
          %v786 = vld [vmem:[#allocation10 + $0x1e8] sm:$0xff]
          %v787 = vld [vmem:[#allocation10 + $0x1f0] sm:$0xff]
          %v788 = vld [vmem:[#allocation10 + $0x1f8] sm:$0xff]
          %v789 = vld [vmem:[#allocation10 + $0x200] sm:$0xff]
          %v790 = vld [vmem:[#allocation10 + $0x208] sm:$0xff]
          %v791 = vld [vmem:[#allocation10 + $0x210] sm:$0xff]
          %v792 = vld [vmem:[#allocation10 + $0x218] sm:$0xff]
          %v793 = vld [vmem:[#allocation10 + $0x220] sm:$0xff]
          %v794 = vld [vmem:[#allocation10 + $0x228] sm:$0xff]
          %v795 = vld [vmem:[#allocation10 + $0x230] sm:$0xff]
          %v796 = vld [vmem:[#allocation10 + $0x238] sm:$0xff]
          %v797 = vld [vmem:[#allocation10 + $0x240] sm:$0xff]
          %v798 = vld [vmem:[#allocation10 + $0x248] sm:$0xff]
          %v799 = vld [vmem:[#allocation10 + $0x250] sm:$0xff]
          %v800 = vld [vmem:[#allocation10 + $0x258] sm:$0xff]
          %v801 = vld [vmem:[#allocation10 + $0x260] sm:$0xff]
          %v802 = vld [vmem:[#allocation10 + $0x268] sm:$0xff]
          %v803 = vld [vmem:[#allocation10 + $0x270] sm:$0xff]
          %v804 = vld [vmem:[#allocation10 + $0x278] sm:$0xff]
          %v805 = vld [vmem:[#allocation10 + $0x280] sm:$0xff]
          %v806 = vld [vmem:[#allocation10 + $0x288] sm:$0xff]
          %v807 = vld [vmem:[#allocation10 + $0x290] sm:$0xff]
          %v808 = vld [vmem:[#allocation10 + $0x298] sm:$0xff]
          %v809 = vld [vmem:[#allocation10 + $0x2a0] sm:$0xff]
          %v810 = vld [vmem:[#allocation10 + $0x2a8] sm:$0xff]
          %v811 = vld [vmem:[#allocation10 + $0x2b0] sm:$0xff]
          %v812 = vld [vmem:[#allocation10 + $0x2b8] sm:$0xff]
          %v813 = vld [vmem:[#allocation10 + $0x2c0] sm:$0xff]
          %v814 = vld [vmem:[#allocation10 + $0x2c8] sm:$0xff]
          %v815 = vld [vmem:[#allocation10 + $0x2d0] sm:$0xff]
          %v816 = vld [vmem:[#allocation10 + $0x2d8] sm:$0xff]
          %v817 = vld [vmem:[#allocation10 + $0x2e0] sm:$0xff]
          %v818 = vld [vmem:[#allocation10 + $0x2e8] sm:$0xff]
          %v819 = vld [vmem:[#allocation10 + $0x2f0] sm:$0xff]
          %v820 = vld [vmem:[#allocation10 + $0x2f8] sm:$0xff]
          %v821 = vld [vmem:[#allocation10 + $0x300] sm:$0xff]
          %v822 = vld [vmem:[#allocation10 + $0x308] sm:$0xff]
          %v823 = vld [vmem:[#allocation10 + $0x310] sm:$0xff]
          %v824 = vld [vmem:[#allocation10 + $0x318] sm:$0xff]
          %v825 = vld [vmem:[#allocation10 + $0x320] sm:$0xff]
          %v826 = vld [vmem:[#allocation10 + $0x328] sm:$0xff]
          %v827 = vld [vmem:[#allocation10 + $0x330] sm:$0xff]
          %v828 = vld [vmem:[#allocation10 + $0x338] sm:$0xff]
          %v829 = vld [vmem:[#allocation10 + $0x340] sm:$0xff]
          %v830 = vld [vmem:[#allocation10 + $0x348] sm:$0xff]
          %v831 = vld [vmem:[#allocation10 + $0x350] sm:$0xff]
          %v832 = vld [vmem:[#allocation10 + $0x358] sm:$0xff]
          %v833 = vld [vmem:[#allocation10 + $0x360] sm:$0xff]
          %v834 = vld [vmem:[#allocation10 + $0x368] sm:$0xff]
          %v835 = vld [vmem:[#allocation10 + $0x370] sm:$0xff]
          %v836 = vld [vmem:[#allocation10 + $0x378] sm:$0xff]
          %v837 = vld [vmem:[#allocation10 + $0x380] sm:$0xff]
          %v838 = vld [vmem:[#allocation10 + $0x388] sm:$0xff]
          %v839 = vld [vmem:[#allocation10 + $0x390] sm:$0xff]
          %v840 = vld [vmem:[#allocation10 + $0x398] sm:$0xff]
          %v841 = vld [vmem:[#allocation10 + $0x3a0] sm:$0xff]
          %v842 = vld [vmem:[#allocation10 + $0x3a8] sm:$0xff]
          %v843 = vld [vmem:[#allocation10 + $0x3b0] sm:$0xff]
          %v844 = vld [vmem:[#allocation10 + $0x3b8] sm:$0xff]
          %v845 = vld [vmem:[#allocation10 + $0x3c0] sm:$0xff]
          %v846 = vld [vmem:[#allocation10 + $0x3c8] sm:$0xff]
          %v847 = vld [vmem:[#allocation10 + $0x3d0] sm:$0xff]
          %v848 = vld [vmem:[#allocation10 + $0x3d8] sm:$0xff]
          %v849 = vld [vmem:[#allocation10 + $0x3e0] sm:$0xff]
          %v850 = vld [vmem:[#allocation10 + $0x3e8] sm:$0xff]
          %v851 = vld [vmem:[#allocation10 + $0x3f0] sm:$0xff]
          %v852 = vld [vmem:[#allocation10 + $0x3f8] sm:$0xff]
          %v853 = vld [vmem:[#allocation10 + $0x400] sm:$0xff]
          %v854 = vld [vmem:[#allocation10 + $0x408] sm:$0xff]
          %v855 = vld [vmem:[#allocation10 + $0x410] sm:$0xff]
          %v856 = vld [vmem:[#allocation10 + $0x418] sm:$0xff]
          %v857 = vld [vmem:[#allocation10 + $0x420] sm:$0xff]
          %v858 = vld [vmem:[#allocation10 + $0x428] sm:$0xff]
          %v859 = vld [vmem:[#allocation10 + $0x430] sm:$0xff]
          %v860 = vld [vmem:[#allocation10 + $0x438] sm:$0xff]
          %v861 = vld [vmem:[#allocation10 + $0x440] sm:$0xff]
          %v862 = vld [vmem:[#allocation10 + $0x448] sm:$0xff]
          %v863 = vld [vmem:[#allocation10 + $0x450] sm:$0xff]
          %v864 = vld [vmem:[#allocation10 + $0x458] sm:$0xff]
          %v865 = vld [vmem:[#allocation10 + $0x460] sm:$0xff]
          %v866 = vld [vmem:[#allocation10 + $0x468] sm:$0xff]
          %v867 = vld [vmem:[#allocation10 + $0x470] sm:$0xff]
          %v868 = vld [vmem:[#allocation10 + $0x478] sm:$0xff]
          %v869 = vld [vmem:[#allocation10 + $0x480] sm:$0xff]
          %v870 = vld [vmem:[#allocation10 + $0x488] sm:$0xff]
          %v871 = vld [vmem:[#allocation10 + $0x490] sm:$0xff]
          %v872 = vld [vmem:[#allocation10 + $0x498] sm:$0xff]
          %v873 = vld [vmem:[#allocation10 + $0x4a0] sm:$0xff]
          %v874 = vld [vmem:[#allocation10 + $0x4a8] sm:$0xff]
          %v875 = vld [vmem:[#allocation10 + $0x4b0] sm:$0xff]
          %v876 = vld [vmem:[#allocation10 + $0x4b8] sm:$0xff]
          %v877 = vld [vmem:[#allocation10 + $0x4c0] sm:$0xff]
          %v878 = vld [vmem:[#allocation10 + $0x4c8] sm:$0xff]
          %v879 = vld [vmem:[#allocation10 + $0x4d0] sm:$0xff]
          %v880 = vld [vmem:[#allocation10 + $0x4d8] sm:$0xff]
          %v881 = vld [vmem:[#allocation10 + $0x4e0] sm:$0xff]
          %v882 = vld [vmem:[#allocation10 + $0x4e8] sm:$0xff]
          %v883 = vld [vmem:[#allocation10 + $0x4f0] sm:$0xff]
          %v884 = vld [vmem:[#allocation10 + $0x4f8] sm:$0xff]
          %v885 = vld [vmem:[#allocation10 + $0x500] sm:$0xff]
          %v886 = vld [vmem:[#allocation10 + $0x508] sm:$0xff]
          %v887 = vld [vmem:[#allocation10 + $0x510] sm:$0xff]
          %v888 = vld [vmem:[#allocation10 + $0x518] sm:$0xff]
          %v889 = vld [vmem:[#allocation10 + $0x520] sm:$0xff]
          %v890 = vld [vmem:[#allocation10 + $0x528] sm:$0xff]
          %v891 = vld [vmem:[#allocation10 + $0x530] sm:$0xff]
          %v892 = vld [vmem:[#allocation10 + $0x538] sm:$0xff]
          %v893 = vld [vmem:[#allocation10 + $0x540] sm:$0xff]
          %v894 = vld [vmem:[#allocation10 + $0x548] sm:$0xff]
          %v895 = vld [vmem:[#allocation10 + $0x550] sm:$0xff]
          %v896 = vld [vmem:[#allocation10 + $0x558] sm:$0xff]
          %v897 = vld [vmem:[#allocation10 + $0x560] sm:$0xff]
          %v898 = vld [vmem:[#allocation10 + $0x568] sm:$0xff]
          %v899 = vld [vmem:[#allocation10 + $0x570] sm:$0xff]
          %v900 = vld [vmem:[#allocation10 + $0x578] sm:$0xff]
          %v901 = vld [vmem:[#allocation10 + $0x580] sm:$0xff]
          %v902 = vld [vmem:[#allocation10 + $0x588] sm:$0xff]
          %v903 = vld [vmem:[#allocation10 + $0x590] sm:$0xff]
          %v904 = vld [vmem:[#allocation10 + $0x598] sm:$0xff]
          %v905 = vld [vmem:[#allocation10 + $0x5a0] sm:$0xff]
          %v906 = vld [vmem:[#allocation10 + $0x5a8] sm:$0xff]
          %v907 = vld [vmem:[#allocation10 + $0x5b0] sm:$0xff]
          %v908 = vld [vmem:[#allocation10 + $0x5b8] sm:$0xff]
          %v909 = vld [vmem:[#allocation10 + $0x5c0] sm:$0xff]
          %v910 = vld [vmem:[#allocation10 + $0x5c8] sm:$0xff]
          %v911 = vld [vmem:[#allocation10 + $0x5d0] sm:$0xff]
          %v912 = vld [vmem:[#allocation10 + $0x5d8] sm:$0xff]
          %v913 = vld [vmem:[#allocation10 + $0x5e0] sm:$0xff]
          %v914 = vld [vmem:[#allocation10 + $0x5e8] sm:$0xff]
          %v915 = vld [vmem:[#allocation10 + $0x5f0] sm:$0xff]
          %v916 = vld [vmem:[#allocation10 + $0x5f8] sm:$0xff]
          %v917 = vld [vmem:[#allocation10 + $0x600] sm:$0xff]
          %v918 = vld [vmem:[#allocation10 + $0x608] sm:$0xff]
          %v919 = vld [vmem:[#allocation10 + $0x610] sm:$0xff]
          %v920 = vld [vmem:[#allocation10 + $0x618] sm:$0xff]
          %v921 = vld [vmem:[#allocation10 + $0x620] sm:$0xff]
          %v922 = vld [vmem:[#allocation10 + $0x628] sm:$0xff]
          %v923 = vld [vmem:[#allocation10 + $0x630] sm:$0xff]
          %v924 = vld [vmem:[#allocation10 + $0x638] sm:$0xff]
          %v925 = vld [vmem:[#allocation10 + $0x640] sm:$0xff]
          %v926 = vld [vmem:[#allocation10 + $0x648] sm:$0xff]
          %v927 = vld [vmem:[#allocation10 + $0x650] sm:$0xff]
          %v928 = vld [vmem:[#allocation10 + $0x658] sm:$0xff]
          %v929 = vld [vmem:[#allocation10 + $0x660] sm:$0xff]
          %v930 = vld [vmem:[#allocation10 + $0x668] sm:$0xff]
          %v931 = vld [vmem:[#allocation10 + $0x670] sm:$0xff]
          %v932 = vld [vmem:[#allocation10 + $0x678] sm:$0xff]
          %v933 = vld [vmem:[#allocation10 + $0x680] sm:$0xff]
          %v934 = vld [vmem:[#allocation10 + $0x688] sm:$0xff]
          %v935 = vld [vmem:[#allocation10 + $0x690] sm:$0xff]
          %v936 = vld [vmem:[#allocation10 + $0x698] sm:$0xff]
          %v937 = vld [vmem:[#allocation10 + $0x6a0] sm:$0xff]
          %v938 = vld [vmem:[#allocation10 + $0x6a8] sm:$0xff]
          %v939 = vld [vmem:[#allocation10 + $0x6b0] sm:$0xff]
          %v940 = vld [vmem:[#allocation10 + $0x6b8] sm:$0xff]
          %v941 = vld [vmem:[#allocation10 + $0x6c0] sm:$0xff]
          %v942 = vld [vmem:[#allocation10 + $0x6c8] sm:$0xff]
          %v943 = vld [vmem:[#allocation10 + $0x6d0] sm:$0xff]
          %v944 = vld [vmem:[#allocation10 + $0x6d8] sm:$0xff]
          %v945 = vld [vmem:[#allocation10 + $0x6e0] sm:$0xff]
          %v946 = vld [vmem:[#allocation10 + $0x6e8] sm:$0xff]
          %v947 = vld [vmem:[#allocation10 + $0x6f0] sm:$0xff]
          %v948 = vld [vmem:[#allocation10 + $0x6f8] sm:$0xff]
          %v949 = vld [vmem:[#allocation10 + $0x700] sm:$0xff]
          %v950 = vld [vmem:[#allocation10 + $0x708] sm:$0xff]
          %v951 = vld [vmem:[#allocation10 + $0x710] sm:$0xff]
          %v952 = vld [vmem:[#allocation10 + $0x718] sm:$0xff]
          %v953 = vld [vmem:[#allocation10 + $0x720] sm:$0xff]
          %v954 = vld [vmem:[#allocation10 + $0x728] sm:$0xff]
          %v955 = vld [vmem:[#allocation10 + $0x730] sm:$0xff]
          %v956 = vld [vmem:[#allocation10 + $0x738] sm:$0xff]
          %v957 = vld [vmem:[#allocation10 + $0x740] sm:$0xff]
          %v958 = vld [vmem:[#allocation10 + $0x748] sm:$0xff]
          %v959 = vld [vmem:[#allocation10 + $0x750] sm:$0xff]
          %v960 = vld [vmem:[#allocation10 + $0x758] sm:$0xff]
          %v961 = vld [vmem:[#allocation10 + $0x760] sm:$0xff]
          %v962 = vld [vmem:[#allocation10 + $0x768] sm:$0xff]
          %v963 = vld [vmem:[#allocation10 + $0x770] sm:$0xff]
          %v964 = vld [vmem:[#allocation10 + $0x778] sm:$0xff]
          %v965 = vld [vmem:[#allocation10 + $0x780] sm:$0xff]
          %v966 = vld [vmem:[#allocation10 + $0x788] sm:$0xff]
          %v967 = vld [vmem:[#allocation10 + $0x790] sm:$0xff]
          %v968 = vld [vmem:[#allocation10 + $0x798] sm:$0xff]
          %v969 = vld [vmem:[#allocation10 + $0x7a0] sm:$0xff]
          %v970 = vld [vmem:[#allocation10 + $0x7a8] sm:$0xff]
          %v971 = vld [vmem:[#allocation10 + $0x7b0] sm:$0xff]
          %v972 = vld [vmem:[#allocation10 + $0x7b8] sm:$0xff]
          %v973 = vld [vmem:[#allocation10 + $0x7c0] sm:$0xff]
          %v974 = vld [vmem:[#allocation10 + $0x7c8] sm:$0xff]
          %v975 = vld [vmem:[#allocation10 + $0x7d0] sm:$0xff]
          %v976 = vld [vmem:[#allocation10 + $0x7d8] sm:$0xff]
          %v977 = vld [vmem:[#allocation10 + $0x7e0] sm:$0xff]
          %v978 = vld [vmem:[#allocation10 + $0x7e8] sm:$0xff]
          %v979 = vld [vmem:[#allocation10 + $0x7f0] sm:$0xff]
          %v980 = vld [vmem:[#allocation10 + $0x7f8] sm:$0xff]
          %v981 = vld [vmem:[#allocation10 + $0x800] sm:$0xff]
          %v982 = vld [vmem:[#allocation10 + $0x808] sm:$0xff]
          %v983 = vld [vmem:[#allocation10 + $0x810] sm:$0xff]
          %v984 = vld [vmem:[#allocation10 + $0x818] sm:$0xff]
          %v985 = vld [vmem:[#allocation10 + $0x820] sm:$0xff]
          %v986 = vld [vmem:[#allocation10 + $0x828] sm:$0xff]
          %v987 = vld [vmem:[#allocation10 + $0x830] sm:$0xff]
          %v988 = vld [vmem:[#allocation10 + $0x838] sm:$0xff]
          %v989 = vld [vmem:[#allocation10 + $0x840] sm:$0xff]
          %v990 = vld [vmem:[#allocation10 + $0x848] sm:$0xff]
          %v991 = vld [vmem:[#allocation10 + $0x850] sm:$0xff]
          %v992 = vld [vmem:[#allocation10 + $0x858] sm:$0xff]
          %v993 = vld [vmem:[#allocation10 + $0x860] sm:$0xff]
          %v994 = vld [vmem:[#allocation10 + $0x868] sm:$0xff]
          %v995 = vld [vmem:[#allocation10 + $0x870] sm:$0xff]
          %v996 = vld [vmem:[#allocation10 + $0x878] sm:$0xff]
          %v997 = vld [vmem:[#allocation10 + $0x880] sm:$0xff]
          %v998 = vld [vmem:[#allocation10 + $0x888] sm:$0xff]
          %v999 = vld [vmem:[#allocation10 + $0x890] sm:$0xff]
          %v1000 = vld [vmem:[#allocation10 + $0x898] sm:$0xff]
          %v1001 = vld [vmem:[#allocation10 + $0x8a0] sm:$0xff]
          %v1002 = vld [vmem:[#allocation10 + $0x8a8] sm:$0xff]
          %v1003 = vld [vmem:[#allocation10 + $0x8b0] sm:$0xff]
          %v1004 = vld [vmem:[#allocation10 + $0x8b8] sm:$0xff]
          %v1005 = vld [vmem:[#allocation10 + $0x8c0] sm:$0xff]
          %v1006 = vld [vmem:[#allocation10 + $0x8c8] sm:$0xff]
          %v1007 = vld [vmem:[#allocation10 + $0x8d0] sm:$0xff]
          %v1008 = vld [vmem:[#allocation10 + $0x8d8] sm:$0xff]
          %v1009 = vld [vmem:[#allocation10 + $0x8e0] sm:$0xff]
          %v1010 = vld [vmem:[#allocation10 + $0x8e8] sm:$0xff]
          %v1011 = vld [vmem:[#allocation10 + $0x8f0] sm:$0xff]
          %v1012 = vld [vmem:[#allocation10 + $0x8f8] sm:$0xff]
          %v1013 = vld [vmem:[#allocation10 + $0x900] sm:$0xff]
          %v1014 = vld [vmem:[#allocation10 + $0x908] sm:$0xff]
          %v1015 = vld [vmem:[#allocation10 + $0x910] sm:$0xff]
          %v1016 = vld [vmem:[#allocation10 + $0x918] sm:$0xff]
          %v1017 = vld [vmem:[#allocation10 + $0x920] sm:$0xff]
          %v1018 = vld [vmem:[#allocation10 + $0x928] sm:$0xff]
          %v1019 = vld [vmem:[#allocation10 + $0x930] sm:$0xff]
          %v1020 = vld [vmem:[#allocation10 + $0x938] sm:$0xff]
          %v1021 = vld [vmem:[#allocation10 + $0x940] sm:$0xff]
          %v1022 = vld [vmem:[#allocation10 + $0x948] sm:$0xff]
          %v1023 = vld [vmem:[#allocation10 + $0x950] sm:$0xff]
          %v1024 = vld [vmem:[#allocation10 + $0x958] sm:$0xff]
          %v1025 = vld [vmem:[#allocation10 + $0x960] sm:$0xff]
          %v1026 = vld [vmem:[#allocation10 + $0x968] sm:$0xff]
          %v1027 = vld [vmem:[#allocation10 + $0x970] sm:$0xff]
          %v1028 = vld [vmem:[#allocation10 + $0x978] sm:$0xff]
          %v1029 = vld [vmem:[#allocation10 + $0x980] sm:$0xff]
          %v1030 = vld [vmem:[#allocation10 + $0x988] sm:$0xff]
          %v1031 = vld [vmem:[#allocation10 + $0x990] sm:$0xff]
          %v1032 = vld [vmem:[#allocation10 + $0x998] sm:$0xff]
          %v1033 = vld [vmem:[#allocation10 + $0x9a0] sm:$0xff]
          %v1034 = vld [vmem:[#allocation10 + $0x9a8] sm:$0xff]
          %v1035 = vld [vmem:[#allocation10 + $0x9b0] sm:$0xff]
          %v1036 = vld [vmem:[#allocation10 + $0x9b8] sm:$0xff]
          %v1037 = vld [vmem:[#allocation10 + $0x9c0] sm:$0xff]
          %v1038 = vld [vmem:[#allocation10 + $0x9c8] sm:$0xff]
          %v1039 = vld [vmem:[#allocation10 + $0x9d0] sm:$0xff]
          %v1040 = vld [vmem:[#allocation10 + $0x9d8] sm:$0xff]
          %v1041 = vld [vmem:[#allocation10 + $0x9e0] sm:$0xff]
          %v1042 = vld [vmem:[#allocation10 + $0x9e8] sm:$0xff]
          %v1043 = vld [vmem:[#allocation10 + $0x9f0] sm:$0xff]
          %v1044 = vld [vmem:[#allocation10 + $0x9f8] sm:$0xff]
          %v1045 = vld [vmem:[#allocation10 + $0xa00] sm:$0xff]
          %v1046 = vld [vmem:[#allocation10 + $0xa08] sm:$0xff]
          %v1047 = vld [vmem:[#allocation10 + $0xa10] sm:$0xff]
          %v1048 = vld [vmem:[#allocation10 + $0xa18] sm:$0xff]
          %v1049 = vld [vmem:[#allocation10 + $0xa20] sm:$0xff]
          %v1050 = vld [vmem:[#allocation10 + $0xa28] sm:$0xff]
          %v1051 = vld [vmem:[#allocation10 + $0xa30] sm:$0xff]
          %v1052 = vld [vmem:[#allocation10 + $0xa38] sm:$0xff]
          %v1053 = vld [vmem:[#allocation10 + $0xa40] sm:$0xff]
          %v1054 = vld [vmem:[#allocation10 + $0xa48] sm:$0xff]
          %v1055 = vld [vmem:[#allocation10 + $0xa50] sm:$0xff]
          %v1056 = vld [vmem:[#allocation10 + $0xa58] sm:$0xff]
          %v1057 = vld [vmem:[#allocation10 + $0xa60] sm:$0xff]
          %v1058 = vld [vmem:[#allocation10 + $0xa68] sm:$0xff]
          %v1059 = vld [vmem:[#allocation10 + $0xa70] sm:$0xff]
          %v1060 = vld [vmem:[#allocation10 + $0xa78] sm:$0xff]
          %v1061 = vld [vmem:[#allocation10 + $0xa80] sm:$0xff]
          %v1062 = vld [vmem:[#allocation10 + $0xa88] sm:$0xff]
          %v1063 = vld [vmem:[#allocation10 + $0xa90] sm:$0xff]
          %v1064 = vld [vmem:[#allocation10 + $0xa98] sm:$0xff]
          %v1065 = vld [vmem:[#allocation10 + $0xaa0] sm:$0xff]
          %v1066 = vld [vmem:[#allocation10 + $0xaa8] sm:$0xff]
          %v1067 = vld [vmem:[#allocation10 + $0xab0] sm:$0xff]
          %v1068 = vld [vmem:[#allocation10 + $0xab8] sm:$0xff]
          %v1069 = vld [vmem:[#allocation10 + $0xac0] sm:$0xff]
          %v1070 = vld [vmem:[#allocation10 + $0xac8] sm:$0xff]
          %v1071 = vld [vmem:[#allocation10 + $0xad0] sm:$0xff]
          %v1072 = vld [vmem:[#allocation10 + $0xad8] sm:$0xff]
          %v1073 = vld [vmem:[#allocation10 + $0xae0] sm:$0xff]
          %v1074 = vld [vmem:[#allocation10 + $0xae8] sm:$0xff]
          %v1075 = vld [vmem:[#allocation10 + $0xaf0] sm:$0xff]
          %v1076 = vld [vmem:[#allocation10 + $0xaf8] sm:$0xff]
          %v1077 = vld [vmem:[#allocation10 + $0xb00] sm:$0xff]
          %v1078 = vld [vmem:[#allocation10 + $0xb08] sm:$0xff]
          %v1079 = vld [vmem:[#allocation10 + $0xb10] sm:$0xff]
          %v1080 = vld [vmem:[#allocation10 + $0xb18] sm:$0xff]
          %v1081 = vld [vmem:[#allocation10 + $0xb20] sm:$0xff]
          %v1082 = vld [vmem:[#allocation10 + $0xb28] sm:$0xff]
          %v1083 = vld [vmem:[#allocation10 + $0xb30] sm:$0xff]
          %v1084 = vld [vmem:[#allocation10 + $0xb38] sm:$0xff]
          %v1085 = vld [vmem:[#allocation10 + $0xb40] sm:$0xff]
          %v1086 = vld [vmem:[#allocation10 + $0xb48] sm:$0xff]
          %v1087 = vld [vmem:[#allocation10 + $0xb50] sm:$0xff]
          %v1088 = vld [vmem:[#allocation10 + $0xb58] sm:$0xff]
          %v1089 = vld [vmem:[#allocation10 + $0xb60] sm:$0xff]
          %v1090 = vld [vmem:[#allocation10 + $0xb68] sm:$0xff]
          %v1091 = vld [vmem:[#allocation10 + $0xb70] sm:$0xff]
          %v1092 = vld [vmem:[#allocation10 + $0xb78] sm:$0xff]
          %v1093 = vld [vmem:[#allocation10 + $0xb80] sm:$0xff]
          %v1094 = vld [vmem:[#allocation10 + $0xb88] sm:$0xff]
          %v1095 = vld [vmem:[#allocation10 + $0xb90] sm:$0xff]
          %v1096 = vld [vmem:[#allocation10 + $0xb98] sm:$0xff]
          %v1097 = vld [vmem:[#allocation10 + $0xba0] sm:$0xff]
          %v1098 = vld [vmem:[#allocation10 + $0xba8] sm:$0xff]
          %v1099 = vld [vmem:[#allocation10 + $0xbb0] sm:$0xff]
          %v1100 = vld [vmem:[#allocation10 + $0xbb8] sm:$0xff]
          %v1101 = vld [vmem:[#allocation10 + $0xbc0] sm:$0xff]
          %v1102 = vld [vmem:[#allocation10 + $0xbc8] sm:$0xff]
          %v1103 = vld [vmem:[#allocation10 + $0xbd0] sm:$0xff]
          %v1104 = vld [vmem:[#allocation10 + $0xbd8] sm:$0xff]
          %v1105 = vld [vmem:[#allocation10 + $0xbe0] sm:$0xff]
          %v1106 = vld [vmem:[#allocation10 + $0xbe8] sm:$0xff]
          %v1107 = vld [vmem:[#allocation10 + $0xbf0] sm:$0xff]
          %v1108 = vld [vmem:[#allocation10 + $0xbf8] sm:$0xff]
          %v1109 = vld [vmem:[#allocation10 + $0xc00] sm:$0xff]
          %v1110 = vld [vmem:[#allocation10 + $0xc08] sm:$0xff]
          %v1111 = vld [vmem:[#allocation10 + $0xc10] sm:$0xff]
          %v1112 = vld [vmem:[#allocation10 + $0xc18] sm:$0xff]
          %v1113 = vld [vmem:[#allocation10 + $0xc20] sm:$0xff]
          %v1114 = vld [vmem:[#allocation10 + $0xc28] sm:$0xff]
          %v1115 = vld [vmem:[#allocation10 + $0xc30] sm:$0xff]
          %v1116 = vld [vmem:[#allocation10 + $0xc38] sm:$0xff]
          %v1117 = vld [vmem:[#allocation10 + $0xc40] sm:$0xff]
          %v1118 = vld [vmem:[#allocation10 + $0xc48] sm:$0xff]
          %v1119 = vld [vmem:[#allocation10 + $0xc50] sm:$0xff]
          %v1120 = vld [vmem:[#allocation10 + $0xc58] sm:$0xff]
          %v1121 = vld [vmem:[#allocation10 + $0xc60] sm:$0xff]
          %v1122 = vld [vmem:[#allocation10 + $0xc68] sm:$0xff]
          %v1123 = vld [vmem:[#allocation10 + $0xc70] sm:$0xff]
          %v1124 = vld [vmem:[#allocation10 + $0xc78] sm:$0xff]
          %v1125 = vld [vmem:[#allocation10 + $0xc80] sm:$0xff]
          %v1126 = vld [vmem:[#allocation10 + $0xc88] sm:$0xff]
          %v1127 = vld [vmem:[#allocation10 + $0xc90] sm:$0xff]
          %v1128 = vld [vmem:[#allocation10 + $0xc98] sm:$0xff]
          %v1129 = vld [vmem:[#allocation10 + $0xca0] sm:$0xff]
          %v1130 = vld [vmem:[#allocation10 + $0xca8] sm:$0xff]
          %v1131 = vld [vmem:[#allocation10 + $0xcb0] sm:$0xff]
          %v1132 = vld [vmem:[#allocation10 + $0xcb8] sm:$0xff]
          %v1133 = vld [vmem:[#allocation10 + $0xcc0] sm:$0xff]
          %v1134 = vld [vmem:[#allocation10 + $0xcc8] sm:$0xff]
          %v1135 = vld [vmem:[#allocation10 + $0xcd0] sm:$0xff]
          %v1136 = vld [vmem:[#allocation10 + $0xcd8] sm:$0xff]
          %v1137 = vld [vmem:[#allocation10 + $0xce0] sm:$0xff]
          %v1138 = vld [vmem:[#allocation10 + $0xce8] sm:$0xff]
          %v1139 = vld [vmem:[#allocation10 + $0xcf0] sm:$0xff]
          %v1140 = vld [vmem:[#allocation10 + $0xcf8] sm:$0xff]
          %v1141 = vld [vmem:[#allocation10 + $0xd00] sm:$0xff]
          %v1142 = vld [vmem:[#allocation10 + $0xd08] sm:$0xff]
          %v1143 = vld [vmem:[#allocation10 + $0xd10] sm:$0xff]
          %v1144 = vld [vmem:[#allocation10 + $0xd18] sm:$0xff]
          %v1145 = vld [vmem:[#allocation10 + $0xd20] sm:$0xff]
          %v1146 = vld [vmem:[#allocation10 + $0xd28] sm:$0xff]
          %v1147 = vld [vmem:[#allocation10 + $0xd30] sm:$0xff]
          %v1148 = vld [vmem:[#allocation10 + $0xd38] sm:$0xff]
          %v1149 = vld [vmem:[#allocation10 + $0xd40] sm:$0xff]
          %v1150 = vld [vmem:[#allocation10 + $0xd48] sm:$0xff]
          %v1151 = vld [vmem:[#allocation10 + $0xd50] sm:$0xff]
          %v1152 = vld [vmem:[#allocation10 + $0xd58] sm:$0xff]
          %v1153 = vld [vmem:[#allocation10 + $0xd60] sm:$0xff]
          %v1154 = vld [vmem:[#allocation10 + $0xd68] sm:$0xff]
          %v1155 = vld [vmem:[#allocation10 + $0xd70] sm:$0xff]
          %v1156 = vld [vmem:[#allocation10 + $0xd78] sm:$0xff]
          %v1157 = vld [vmem:[#allocation10 + $0xd80] sm:$0xff]
          %v1158 = vld [vmem:[#allocation10 + $0xd88] sm:$0xff]
          %v1159 = vld [vmem:[#allocation10 + $0xd90] sm:$0xff]
          %v1160 = vld [vmem:[#allocation10 + $0xd98] sm:$0xff]
          %v1161 = vld [vmem:[#allocation10 + $0xda0] sm:$0xff]
          %v1162 = vld [vmem:[#allocation10 + $0xda8] sm:$0xff]
          %v1163 = vld [vmem:[#allocation10 + $0xdb0] sm:$0xff]
          %v1164 = vld [vmem:[#allocation10 + $0xdb8] sm:$0xff]
          %v1165 = vld [vmem:[#allocation10 + $0xdc0] sm:$0xff]
          %v1166 = vld [vmem:[#allocation10 + $0xdc8] sm:$0xff]
          %v1167 = vld [vmem:[#allocation10 + $0xdd0] sm:$0xff]
          %v1168 = vld [vmem:[#allocation10 + $0xdd8] sm:$0xff]
          %v1169 = vld [vmem:[#allocation10 + $0xde0] sm:$0xff]
          %v1170 = vld [vmem:[#allocation10 + $0xde8] sm:$0xff]
          %v1171 = vld [vmem:[#allocation10 + $0xdf0] sm:$0xff]
          %v1172 = vld [vmem:[#allocation10 + $0xdf8] sm:$0xff]
          %v1173 = vld [vmem:[#allocation10 + $0xe00] sm:$0xff]
          %v1174 = vld [vmem:[#allocation10 + $0xe08] sm:$0xff]
          %v1175 = vld [vmem:[#allocation10 + $0xe10] sm:$0xff]
          %v1176 = vld [vmem:[#allocation10 + $0xe18] sm:$0xff]
          %v1177 = vld [vmem:[#allocation10 + $0xe20] sm:$0xff]
          %v1178 = vld [vmem:[#allocation10 + $0xe28] sm:$0xff]
          %v1179 = vld [vmem:[#allocation10 + $0xe30] sm:$0xff]
          %v1180 = vld [vmem:[#allocation10 + $0xe38] sm:$0xff]
          %v1181 = vld [vmem:[#allocation10 + $0xe40] sm:$0xff]
          %v1182 = vld [vmem:[#allocation10 + $0xe48] sm:$0xff]
          %v1183 = vld [vmem:[#allocation10 + $0xe50] sm:$0xff]
          %v1184 = vld [vmem:[#allocation10 + $0xe58] sm:$0xff]
          %v1185 = vld [vmem:[#allocation10 + $0xe60] sm:$0xff]
          %v1186 = vld [vmem:[#allocation10 + $0xe68] sm:$0xff]
          %v1187 = vld [vmem:[#allocation10 + $0xe70] sm:$0xff]
          %v1188 = vld [vmem:[#allocation10 + $0xe78] sm:$0xff]
          %v1189 = vld [vmem:[#allocation10 + $0xe80] sm:$0xff]
          %v1190 = vld [vmem:[#allocation10 + $0xe88] sm:$0xff]
          %v1191 = vld [vmem:[#allocation10 + $0xe90] sm:$0xff]
          %v1192 = vld [vmem:[#allocation10 + $0xe98] sm:$0xff]
          %v1193 = vld [vmem:[#allocation10 + $0xea0] sm:$0xff]
          %v1194 = vld [vmem:[#allocation10 + $0xea8] sm:$0xff]
          %v1195 = vld [vmem:[#allocation10 + $0xeb0] sm:$0xff]
          %v1196 = vld [vmem:[#allocation10 + $0xeb8] sm:$0xff]
          %v1197 = vld [vmem:[#allocation10 + $0xec0] sm:$0xff]
          %v1198 = vld [vmem:[#allocation10 + $0xec8] sm:$0xff]
          %v1199 = vld [vmem:[#allocation10 + $0xed0] sm:$0xff]
          %v1200 = vld [vmem:[#allocation10 + $0xed8] sm:$0xff]
          %v1201 = vld [vmem:[#allocation10 + $0xee0] sm:$0xff]
          %v1202 = vld [vmem:[#allocation10 + $0xee8] sm:$0xff]
          %v1203 = vld [vmem:[#allocation10 + $0xef0] sm:$0xff]
          %v1204 = vld [vmem:[#allocation10 + $0xef8] sm:$0xff]
          %v1205 = vld [vmem:[#allocation10 + $0xf00] sm:$0xff]
          %v1206 = vld [vmem:[#allocation10 + $0xf08] sm:$0xff]
          %v1207 = vld [vmem:[#allocation10 + $0xf10] sm:$0xff]
          %v1208 = vld [vmem:[#allocation10 + $0xf18] sm:$0xff]
          %v1209 = vld [vmem:[#allocation10 + $0xf20] sm:$0xff]
          %v1210 = vld [vmem:[#allocation10 + $0xf28] sm:$0xff]
          %v1211 = vld [vmem:[#allocation10 + $0xf30] sm:$0xff]
          %v1212 = vld [vmem:[#allocation10 + $0xf38] sm:$0xff]
          %v1213 = vld [vmem:[#allocation10 + $0xf40] sm:$0xff]
          %v1214 = vld [vmem:[#allocation10 + $0xf48] sm:$0xff]
          %v1215 = vld [vmem:[#allocation10 + $0xf50] sm:$0xff]
          %v1216 = vld [vmem:[#allocation10 + $0xf58] sm:$0xff]
          %v1217 = vld [vmem:[#allocation10 + $0xf60] sm:$0xff]
          %v1218 = vld [vmem:[#allocation10 + $0xf68] sm:$0xff]
          %v1219 = vld [vmem:[#allocation10 + $0xf70] sm:$0xff]
          %v1220 = vld [vmem:[#allocation10 + $0xf78] sm:$0xff]
          %v1221 = vld [vmem:[#allocation10 + $0xf80] sm:$0xff]
          %v1222 = vld [vmem:[#allocation10 + $0xf88] sm:$0xff]
          %v1223 = vld [vmem:[#allocation10 + $0xf90] sm:$0xff]
          %v1224 = vld [vmem:[#allocation10 + $0xf98] sm:$0xff]
          %v1225 = vld [vmem:[#allocation10 + $0xfa0] sm:$0xff]
          %v1226 = vld [vmem:[#allocation10 + $0xfa8] sm:$0xff]
          %v1227 = vld [vmem:[#allocation10 + $0xfb0] sm:$0xff]
          %v1228 = vld [vmem:[#allocation10 + $0xfb8] sm:$0xff]
          %v1229 = vld [vmem:[#allocation10 + $0xfc0] sm:$0xff]
          %v1230 = vld [vmem:[#allocation10 + $0xfc8] sm:$0xff]
          %v1231 = vld [vmem:[#allocation10 + $0xfd0] sm:$0xff]
          %v1232 = vld [vmem:[#allocation10 + $0xfd8] sm:$0xff]
          %v1233 = vld [vmem:[#allocation10 + $0xfe0] sm:$0xff]
          %v1234 = vld [vmem:[#allocation10 + $0xfe8] sm:$0xff]
          %v1235 = vld [vmem:[#allocation10 + $0xff0] sm:$0xff]
          %v1236 = vld [vmem:[#allocation10 + $0xff8] sm:$0xff]
          %v1237 = vld [vmem:[#allocation10 + $0x1000] sm:$0xff]
          %v1238 = vld [vmem:[#allocation10 + $0x1008] sm:$0xff]
          %v1239 = vld [vmem:[#allocation10 + $0x1010] sm:$0xff]
          %v1240 = vld [vmem:[#allocation10 + $0x1018] sm:$0xff]
          %v1241 = vld [vmem:[#allocation10 + $0x1020] sm:$0xff]
          %v1242 = vld [vmem:[#allocation10 + $0x1028] sm:$0xff]
          %v1243 = vld [vmem:[#allocation10 + $0x1030] sm:$0xff]
          %v1244 = vld [vmem:[#allocation10 + $0x1038] sm:$0xff]
          %v1245 = vld [vmem:[#allocation10 + $0x1040] sm:$0xff]
          %v1246 = vld [vmem:[#allocation10 + $0x1048] sm:$0xff]
          %v1247 = vld [vmem:[#allocation10 + $0x1050] sm:$0xff]
          %v1248 = vld [vmem:[#allocation10 + $0x1058] sm:$0xff]
          %v1249 = vld [vmem:[#allocation10 + $0x1060] sm:$0xff]
          %v1250 = vld [vmem:[#allocation10 + $0x1068] sm:$0xff]
          %v1251 = vld [vmem:[#allocation10 + $0x1070] sm:$0xff]
          %v1252 = vld [vmem:[#allocation10 + $0x1078] sm:$0xff]
          %v1253 = vld [vmem:[#allocation10 + $0x1080] sm:$0xff]
          %v1254 = vld [vmem:[#allocation10 + $0x1088] sm:$0xff]
          %v1255 = vld [vmem:[#allocation10 + $0x1090] sm:$0xff]
          %v1256 = vld [vmem:[#allocation10 + $0x1098] sm:$0xff]
          %v1257 = vld [vmem:[#allocation10 + $0x10a0] sm:$0xff]
          %v1258 = vld [vmem:[#allocation10 + $0x10a8] sm:$0xff]
          %v1259 = vld [vmem:[#allocation10 + $0x10b0] sm:$0xff]
          %v1260 = vld [vmem:[#allocation10 + $0x10b8] sm:$0xff]
          %v1261 = vld [vmem:[#allocation10 + $0x10c0] sm:$0xff]
          %v1262 = vld [vmem:[#allocation10 + $0x10c8] sm:$0xff]
          %v1263 = vld [vmem:[#allocation10 + $0x10d0] sm:$0xff]
          %v1264 = vld [vmem:[#allocation10 + $0x10d8] sm:$0xff]
          %v1265 = vld [vmem:[#allocation10 + $0x10e0] sm:$0xff]
          %v1266 = vld [vmem:[#allocation10 + $0x10e8] sm:$0xff]
          %v1267 = vld [vmem:[#allocation10 + $0x10f0] sm:$0xff]
          %v1268 = vld [vmem:[#allocation10 + $0x10f8] sm:$0xff]
          %v1269 = vld [vmem:[#allocation10 + $0x1100] sm:$0xff]
          %v1270 = vld [vmem:[#allocation10 + $0x1108] sm:$0xff]
          %v1271 = vld [vmem:[#allocation10 + $0x1110] sm:$0xff]
          %v1272 = vld [vmem:[#allocation10 + $0x1118] sm:$0xff]
          %v1273 = vld [vmem:[#allocation10 + $0x1120] sm:$0xff]
          %v1274 = vld [vmem:[#allocation10 + $0x1128] sm:$0xff]
          %v1275 = vld [vmem:[#allocation10 + $0x1130] sm:$0xff]
          %v1276 = vld [vmem:[#allocation10 + $0x1138] sm:$0xff]
          %v1277 = vld [vmem:[#allocation10 + $0x1140] sm:$0xff]
          %v1278 = vld [vmem:[#allocation10 + $0x1148] sm:$0xff]
          %v1279 = vld [vmem:[#allocation10 + $0x1150] sm:$0xff]
          %v1280 = vld [vmem:[#allocation10 + $0x1158] sm:$0xff]
          %v1281 = vld [vmem:[#allocation10 + $0x1160] sm:$0xff]
          %v1282 = vld [vmem:[#allocation10 + $0x1168] sm:$0xff]
          %v1283 = vld [vmem:[#allocation10 + $0x1170] sm:$0xff]
          %v1284 = vld [vmem:[#allocation10 + $0x1178] sm:$0xff]
          %v1285 = vld [vmem:[#allocation10 + $0x1180] sm:$0xff]
          %v1286 = vld [vmem:[#allocation10 + $0x1188] sm:$0xff]
          %v1287 = vld [vmem:[#allocation10 + $0x1190] sm:$0xff]
          %v1288 = vld [vmem:[#allocation10 + $0x1198] sm:$0xff]
          %v1289 = vld [vmem:[#allocation10 + $0x11a0] sm:$0xff]
          %v1290 = vld [vmem:[#allocation10 + $0x11a8] sm:$0xff]
          %v1291 = vld [vmem:[#allocation10 + $0x11b0] sm:$0xff]
          %v1292 = vld [vmem:[#allocation10 + $0x11b8] sm:$0xff]
          %v1293 = vld [vmem:[#allocation10 + $0x11c0] sm:$0xff]
          %v1294 = vld [vmem:[#allocation10 + $0x11c8] sm:$0xff]
          %v1295 = vld [vmem:[#allocation10 + $0x11d0] sm:$0xff]
          %v1296 = vld [vmem:[#allocation10 + $0x11d8] sm:$0xff]
          %v1297 = vld [vmem:[#allocation10 + $0x11e0] sm:$0xff]
          %v1298 = vld [vmem:[#allocation10 + $0x11e8] sm:$0xff]
          %v1299 = vld [vmem:[#allocation10 + $0x11f0] sm:$0xff]
          %v1300 = vld [vmem:[#allocation10 + $0x11f8] sm:$0xff]
          %v1301 = vld [vmem:[#allocation10 + $0x1200] sm:$0xff]
          %v1302 = vld [vmem:[#allocation10 + $0x1208] sm:$0xff]
          %v1303 = vld [vmem:[#allocation10 + $0x1210] sm:$0xff]
          %v1304 = vld [vmem:[#allocation10 + $0x1218] sm:$0xff]
          %v1305 = vld [vmem:[#allocation10 + $0x1220] sm:$0xff]
          %v1306 = vld [vmem:[#allocation10 + $0x1228] sm:$0xff]
          %v1307 = vld [vmem:[#allocation10 + $0x1230] sm:$0xff]
          %v1308 = vld [vmem:[#allocation10 + $0x1238] sm:$0xff]
          %v1309 = vld [vmem:[#allocation10 + $0x1240] sm:$0xff]
          %v1310 = vld [vmem:[#allocation10 + $0x1248] sm:$0xff]
          %v1311 = vld [vmem:[#allocation10 + $0x1250] sm:$0xff]
          %v1312 = vld [vmem:[#allocation10 + $0x1258] sm:$0xff]
          %v1313 = vld [vmem:[#allocation10 + $0x1260] sm:$0xff]
          %v1314 = vld [vmem:[#allocation10 + $0x1268] sm:$0xff]
          %v1315 = vld [vmem:[#allocation10 + $0x1270] sm:$0xff]
          %v1316 = vld [vmem:[#allocation10 + $0x1278] sm:$0xff]
          %v1317 = vld [vmem:[#allocation10 + $0x1280] sm:$0xff]
          %v1318 = vld [vmem:[#allocation10 + $0x1288] sm:$0xff]
          %v1319 = vld [vmem:[#allocation10 + $0x1290] sm:$0xff]
          %v1320 = vld [vmem:[#allocation10 + $0x1298] sm:$0xff]
          %v1321 = vld [vmem:[#allocation10 + $0x12a0] sm:$0xff]
          %v1322 = vld [vmem:[#allocation10 + $0x12a8] sm:$0xff]
          %v1323 = vld [vmem:[#allocation10 + $0x12b0] sm:$0xff]
          %v1324 = vld [vmem:[#allocation10 + $0x12b8] sm:$0xff]
          %v1325 = vld [vmem:[#allocation10 + $0x12c0] sm:$0xff]
          %v1326 = vld [vmem:[#allocation10 + $0x12c8] sm:$0xff]
          %v1327 = vld [vmem:[#allocation10 + $0x12d0] sm:$0xff]
          %v1328 = vld [vmem:[#allocation10 + $0x12d8] sm:$0xff]
          %v1329 = vld [vmem:[#allocation10 + $0x12e0] sm:$0xff]
          %v1330 = vld [vmem:[#allocation10 + $0x12e8] sm:$0xff]
          %v1331 = vld [vmem:[#allocation10 + $0x12f0] sm:$0xff]
          %v1332 = vld [vmem:[#allocation10 + $0x12f8] sm:$0xff]
          %v1333 = vld [vmem:[#allocation10 + $0x1300] sm:$0xff]
          %v1334 = vld [vmem:[#allocation10 + $0x1308] sm:$0xff]
          %v1335 = vld [vmem:[#allocation10 + $0x1310] sm:$0xff]
          %v1336 = vld [vmem:[#allocation10 + $0x1318] sm:$0xff]
          %v1337 = vld [vmem:[#allocation10 + $0x1320] sm:$0xff]
          %v1338 = vld [vmem:[#allocation10 + $0x1328] sm:$0xff]
          %v1339 = vld [vmem:[#allocation10 + $0x1330] sm:$0xff]
          %v1340 = vld [vmem:[#allocation10 + $0x1338] sm:$0xff]
          %v1341 = vld [vmem:[#allocation10 + $0x1340] sm:$0xff]
          %v1342 = vld [vmem:[#allocation10 + $0x1348] sm:$0xff]
          %v1343 = vld [vmem:[#allocation10 + $0x1350] sm:$0xff]
          %v1344 = vld [vmem:[#allocation10 + $0x1358] sm:$0xff]
          %v1345 = vld [vmem:[#allocation10 + $0x1360] sm:$0xff]
          %v1346 = vld [vmem:[#allocation10 + $0x1368] sm:$0xff]
          %v1347 = vld [vmem:[#allocation10 + $0x1370] sm:$0xff]
          %v1348 = vld [vmem:[#allocation10 + $0x1378] sm:$0xff]
          %v1349 = vld [vmem:[#allocation10 + $0x1380] sm:$0xff]
          %v1350 = vld [vmem:[#allocation10 + $0x1388] sm:$0xff]
          %v1351 = vld [vmem:[#allocation10 + $0x1390] sm:$0xff]
          %v1352 = vld [vmem:[#allocation10 + $0x1398] sm:$0xff]
          %v1353 = vld [vmem:[#allocation10 + $0x13a0] sm:$0xff]
          %v1354 = vld [vmem:[#allocation10 + $0x13a8] sm:$0xff]
          %v1355 = vld [vmem:[#allocation10 + $0x13b0] sm:$0xff]
          %v1356 = vld [vmem:[#allocation10 + $0x13b8] sm:$0xff]
          %v1357 = vld [vmem:[#allocation10 + $0x13c0] sm:$0xff]
          %v1358 = vld [vmem:[#allocation10 + $0x13c8] sm:$0xff]
          %v1359 = vld [vmem:[#allocation10 + $0x13d0] sm:$0xff]
          %v1360 = vld [vmem:[#allocation10 + $0x13d8] sm:$0xff]
          %v1361 = vld [vmem:[#allocation10 + $0x13e0] sm:$0xff]
          %v1362 = vld [vmem:[#allocation10 + $0x13e8] sm:$0xff]
          %v1363 = vld [vmem:[#allocation10 + $0x13f0] sm:$0xff]
          %v1364 = vld [vmem:[#allocation10 + $0x13f8] sm:$0xff]
          %v1365 = vld [vmem:[#allocation10 + $0x1400] sm:$0xff]
          %v1366 = vld [vmem:[#allocation10 + $0x1408] sm:$0xff]
          %v1367 = vld [vmem:[#allocation10 + $0x1410] sm:$0xff]
          %v1368 = vld [vmem:[#allocation10 + $0x1418] sm:$0xff]
          %v1369 = vld [vmem:[#allocation10 + $0x1420] sm:$0xff]
          %v1370 = vld [vmem:[#allocation10 + $0x1428] sm:$0xff]
          %v1371 = vld [vmem:[#allocation10 + $0x1430] sm:$0xff]
          %v1372 = vld [vmem:[#allocation10 + $0x1438] sm:$0xff]
          %v1373 = vld [vmem:[#allocation10 + $0x1440] sm:$0xff]
          %v1374 = vld [vmem:[#allocation10 + $0x1448] sm:$0xff]
          %v1375 = vld [vmem:[#allocation10 + $0x1450] sm:$0xff]
          %v1376 = vld [vmem:[#allocation10 + $0x1458] sm:$0xff]
          %v1377 = vld [vmem:[#allocation10 + $0x1460] sm:$0xff]
          %v1378 = vld [vmem:[#allocation10 + $0x1468] sm:$0xff]
          %v1379 = vld [vmem:[#allocation10 + $0x1470] sm:$0xff]
          %v1380 = vld [vmem:[#allocation10 + $0x1478] sm:$0xff]
          %v1381 = vld [vmem:[#allocation10 + $0x1480] sm:$0xff]
          %v1382 = vld [vmem:[#allocation10 + $0x1488] sm:$0xff]
          %v1383 = vld [vmem:[#allocation10 + $0x1490] sm:$0xff]
          %v1384 = vld [vmem:[#allocation10 + $0x1498] sm:$0xff]
          %v1385 = vld [vmem:[#allocation10 + $0x14a0] sm:$0xff]
          %v1386 = vld [vmem:[#allocation10 + $0x14a8] sm:$0xff]
          %v1387 = vld [vmem:[#allocation10 + $0x14b0] sm:$0xff]
          %v1388 = vld [vmem:[#allocation10 + $0x14b8] sm:$0xff]
          %v1389 = vld [vmem:[#allocation10 + $0x14c0] sm:$0xff]
          %v1390 = vld [vmem:[#allocation10 + $0x14c8] sm:$0xff]
          %v1391 = vld [vmem:[#allocation10 + $0x14d0] sm:$0xff]
          %v1392 = vld [vmem:[#allocation10 + $0x14d8] sm:$0xff]
          %v1393 = vld [vmem:[#allocation10 + $0x14e0] sm:$0xff]
          %v1394 = vld [vmem:[#allocation10 + $0x14e8] sm:$0xff]
          %v1395 = vld [vmem:[#allocation10 + $0x14f0] sm:$0xff]
          %v1396 = vld [vmem:[#allocation10 + $0x14f8] sm:$0xff]
          %v1397 = vld [vmem:[#allocation10 + $0x1500] sm:$0xff]
          %v1398 = vld [vmem:[#allocation10 + $0x1508] sm:$0xff]
          %v1399 = vld [vmem:[#allocation10 + $0x1510] sm:$0xff]
          %v1400 = vld [vmem:[#allocation10 + $0x1518] sm:$0xff]
          %v1401 = vld [vmem:[#allocation10 + $0x1520] sm:$0xff]
          %v1402 = vld [vmem:[#allocation10 + $0x1528] sm:$0xff]
          %v1403 = vld [vmem:[#allocation10 + $0x1530] sm:$0xff]
          %v1404 = vld [vmem:[#allocation10 + $0x1538] sm:$0xff]
          %v1405 = vld [vmem:[#allocation10 + $0x1540] sm:$0xff]
          %v1406 = vld [vmem:[#allocation10 + $0x1548] sm:$0xff]
          %v1407 = vld [vmem:[#allocation10 + $0x1550] sm:$0xff]
          %v1408 = vld [vmem:[#allocation10 + $0x1558] sm:$0xff]
          %v1409 = vld [vmem:[#allocation10 + $0x1560] sm:$0xff]
          %v1410 = vld [vmem:[#allocation10 + $0x1568] sm:$0xff]
          %v1411 = vld [vmem:[#allocation10 + $0x1570] sm:$0xff]
          %v1412 = vld [vmem:[#allocation10 + $0x1578] sm:$0xff]
          %v1413 = vld [vmem:[#allocation10 + $0x1580] sm:$0xff]
          %v1414 = vld [vmem:[#allocation10 + $0x1588] sm:$0xff]
          %v1415 = vld [vmem:[#allocation10 + $0x1590] sm:$0xff]
          %v1416 = vld [vmem:[#allocation10 + $0x1598] sm:$0xff]
          %v1417 = vld [vmem:[#allocation10 + $0x15a0] sm:$0xff]
          %v1418 = vld [vmem:[#allocation10 + $0x15a8] sm:$0xff]
          %v1419 = vld [vmem:[#allocation10 + $0x15b0] sm:$0xff]
          %v1420 = vld [vmem:[#allocation10 + $0x15b8] sm:$0xff]
          %v1421 = vld [vmem:[#allocation10 + $0x15c0] sm:$0xff]
          %v1422 = vld [vmem:[#allocation10 + $0x15c8] sm:$0xff]
          %v1423 = vld [vmem:[#allocation10 + $0x15d0] sm:$0xff]
          %v1424 = vld [vmem:[#allocation10 + $0x15d8] sm:$0xff]
          %v1425 = vld [vmem:[#allocation10 + $0x15e0] sm:$0xff]
          %v1426 = vld [vmem:[#allocation10 + $0x15e8] sm:$0xff]
          %v1427 = vld [vmem:[#allocation10 + $0x15f0] sm:$0xff]
          %v1428 = vld [vmem:[#allocation10 + $0x15f8] sm:$0xff]
          %v1429 = vld [vmem:[#allocation10 + $0x1600] sm:$0xff]
          %v1430 = vld [vmem:[#allocation10 + $0x1608] sm:$0xff]
          %v1431 = vld [vmem:[#allocation10 + $0x1610] sm:$0xff]
          %v1432 = vld [vmem:[#allocation10 + $0x1618] sm:$0xff]
          %v1433 = vld [vmem:[#allocation10 + $0x1620] sm:$0xff]
          %v1434 = vld [vmem:[#allocation10 + $0x1628] sm:$0xff]
          %v1435 = vld [vmem:[#allocation10 + $0x1630] sm:$0xff]
          %v1436 = vld [vmem:[#allocation10 + $0x1638] sm:$0xff]
          %v1437 = vld [vmem:[#allocation10 + $0x1640] sm:$0xff]
          %v1438 = vld [vmem:[#allocation10 + $0x1648] sm:$0xff]
          %v1439 = vld [vmem:[#allocation10 + $0x1650] sm:$0xff]
          %v1440 = vld [vmem:[#allocation10 + $0x1658] sm:$0xff]
          %v1441 = vld [vmem:[#allocation10 + $0x1660] sm:$0xff]
          %v1442 = vld [vmem:[#allocation10 + $0x1668] sm:$0xff]
          %v1443 = vld [vmem:[#allocation10 + $0x1670] sm:$0xff]
          %v1444 = vld [vmem:[#allocation10 + $0x1678] sm:$0xff]
          %v1445 = vld [vmem:[#allocation10 + $0x1680] sm:$0xff]
          %v1446 = vld [vmem:[#allocation10 + $0x1688] sm:$0xff]
          %v1447 = vld [vmem:[#allocation10 + $0x1690] sm:$0xff]
          %v1448 = vld [vmem:[#allocation10 + $0x1698] sm:$0xff]
          %v1449 = vld [vmem:[#allocation10 + $0x16a0] sm:$0xff]
          %v1450 = vld [vmem:[#allocation10 + $0x16a8] sm:$0xff]
          %v1451 = vld [vmem:[#allocation10 + $0x16b0] sm:$0xff]
          %v1452 = vld [vmem:[#allocation10 + $0x16b8] sm:$0xff]
          %v1453 = vld [vmem:[#allocation10 + $0x16c0] sm:$0xff]
          %v1454 = vld [vmem:[#allocation10 + $0x16c8] sm:$0xff]
          %v1455 = vld [vmem:[#allocation10 + $0x16d0] sm:$0xff]
          %v1456 = vld [vmem:[#allocation10 + $0x16d8] sm:$0xff]
          %v1457 = vld [vmem:[#allocation10 + $0x16e0] sm:$0xff]
          %v1458 = vld [vmem:[#allocation10 + $0x16e8] sm:$0xff]
          %v1459 = vld [vmem:[#allocation10 + $0x16f0] sm:$0xff]
          %v1460 = vld [vmem:[#allocation10 + $0x16f8] sm:$0xff]
          %v1461 = vld [vmem:[#allocation10 + $0x1700] sm:$0xff]
          %v1462 = vld [vmem:[#allocation10 + $0x1708] sm:$0xff]
          %v1463 = vld [vmem:[#allocation10 + $0x1710] sm:$0xff]
          %v1464 = vld [vmem:[#allocation10 + $0x1718] sm:$0xff]
          %v1465 = vld [vmem:[#allocation10 + $0x1720] sm:$0xff]
          %v1466 = vld [vmem:[#allocation10 + $0x1728] sm:$0xff]
          %v1467 = vld [vmem:[#allocation10 + $0x1730] sm:$0xff]
          %v1468 = vld [vmem:[#allocation10 + $0x1738] sm:$0xff]
          %v1469 = vld [vmem:[#allocation10 + $0x1740] sm:$0xff]
          %v1470 = vld [vmem:[#allocation10 + $0x1748] sm:$0xff]
          %v1471 = vld [vmem:[#allocation10 + $0x1750] sm:$0xff]
          %v1472 = vld [vmem:[#allocation10 + $0x1758] sm:$0xff]
          %v1473 = vld [vmem:[#allocation10 + $0x1760] sm:$0xff]
          %v1474 = vld [vmem:[#allocation10 + $0x1768] sm:$0xff]
          %v1475 = vld [vmem:[#allocation10 + $0x1770] sm:$0xff]
          %v1476 = vld [vmem:[#allocation10 + $0x1778] sm:$0xff]
          %v1477 = vld [vmem:[#allocation10 + $0x1780] sm:$0xff]
          %v1478 = vld [vmem:[#allocation10 + $0x1788] sm:$0xff]
          %v1479 = vld [vmem:[#allocation10 + $0x1790] sm:$0xff]
          %v1480 = vld [vmem:[#allocation10 + $0x1798] sm:$0xff]
          %v1481 = vld [vmem:[#allocation10 + $0x17a0] sm:$0xff]
          %v1482 = vld [vmem:[#allocation10 + $0x17a8] sm:$0xff]
          %v1483 = vld [vmem:[#allocation10 + $0x17b0] sm:$0xff]
          %v1484 = vld [vmem:[#allocation10 + $0x17b8] sm:$0xff]
          %v1485 = vld [vmem:[#allocation10 + $0x17c0] sm:$0xff]
          %v1486 = vld [vmem:[#allocation10 + $0x17c8] sm:$0xff]
          %v1487 = vld [vmem:[#allocation10 + $0x17d0] sm:$0xff]
          %v1488 = vld [vmem:[#allocation10 + $0x17d8] sm:$0xff]
          %v1489 = vld [vmem:[#allocation10 + $0x17e0] sm:$0xff]
          %v1490 = vld [vmem:[#allocation10 + $0x17e8] sm:$0xff]
          %v1491 = vld [vmem:[#allocation10 + $0x17f0] sm:$0xff]
          %v1492 = vld [vmem:[#allocation10 + $0x17f8] sm:$0xff]
          %v1493 = vld [vmem:[#allocation10 + $0x1800] sm:$0xff]
          %v1494 = vld [vmem:[#allocation10 + $0x1808] sm:$0xff]
          %v1495 = vld [vmem:[#allocation10 + $0x1810] sm:$0xff]
          %v1496 = vld [vmem:[#allocation10 + $0x1818] sm:$0xff]
          %v1497 = vld [vmem:[#allocation10 + $0x1820] sm:$0xff]
          %v1498 = vld [vmem:[#allocation10 + $0x1828] sm:$0xff]
          %v1499 = vld [vmem:[#allocation10 + $0x1830] sm:$0xff]
          %v1500 = vld [vmem:[#allocation10 + $0x1838] sm:$0xff]
          %v1501 = vld [vmem:[#allocation10 + $0x1840] sm:$0xff]
          %v1502 = vld [vmem:[#allocation10 + $0x1848] sm:$0xff]
          %v1503 = vld [vmem:[#allocation10 + $0x1850] sm:$0xff]
          %v1504 = vld [vmem:[#allocation10 + $0x1858] sm:$0xff]
          %v1505 = vld [vmem:[#allocation10 + $0x1860] sm:$0xff]
          %v1506 = vld [vmem:[#allocation10 + $0x1868] sm:$0xff]
          %v1507 = vld [vmem:[#allocation10 + $0x1870] sm:$0xff]
          %v1508 = vld [vmem:[#allocation10 + $0x1878] sm:$0xff]
          %v1509 = vld [vmem:[#allocation10 + $0x1880] sm:$0xff]
          %v1510 = vld [vmem:[#allocation10 + $0x1888] sm:$0xff]
          %v1511 = vld [vmem:[#allocation10 + $0x1890] sm:$0xff]
          %v1512 = vld [vmem:[#allocation10 + $0x1898] sm:$0xff]
          %v1513 = vld [vmem:[#allocation10 + $0x18a0] sm:$0xff]
          %v1514 = vld [vmem:[#allocation10 + $0x18a8] sm:$0xff]
          %v1515 = vld [vmem:[#allocation10 + $0x18b0] sm:$0xff]
          %v1516 = vld [vmem:[#allocation10 + $0x18b8] sm:$0xff]
          %v1517 = vld [vmem:[#allocation10 + $0x18c0] sm:$0xff]
          %v1518 = vld [vmem:[#allocation10 + $0x18c8] sm:$0xff]
          %v1519 = vld [vmem:[#allocation10 + $0x18d0] sm:$0xff]
          %v1520 = vld [vmem:[#allocation10 + $0x18d8] sm:$0xff]
          %v1521 = vld [vmem:[#allocation10 + $0x18e0] sm:$0xff]
          %v1522 = vld [vmem:[#allocation10 + $0x18e8] sm:$0xff]
          %v1523 = vld [vmem:[#allocation10 + $0x18f0] sm:$0xff]
          %v1524 = vld [vmem:[#allocation10 + $0x18f8] sm:$0xff]
          %v1525 = vld [vmem:[#allocation10 + $0x1900] sm:$0xff]
          %v1526 = vld [vmem:[#allocation10 + $0x1908] sm:$0xff]
          %v1527 = vld [vmem:[#allocation10 + $0x1910] sm:$0xff]
          %v1528 = vld [vmem:[#allocation10 + $0x1918] sm:$0xff]
          %v1529 = vld [vmem:[#allocation10 + $0x1920] sm:$0xff]
          %v1530 = vld [vmem:[#allocation10 + $0x1928] sm:$0xff]
          %v1531 = vld [vmem:[#allocation10 + $0x1930] sm:$0xff]
          %v1532 = vld [vmem:[#allocation10 + $0x1938] sm:$0xff]
          %v1533 = vld [vmem:[#allocation10 + $0x1940] sm:$0xff]
          %v1534 = vld [vmem:[#allocation10 + $0x1948] sm:$0xff]
          %v1535 = vld [vmem:[#allocation10 + $0x1950] sm:$0xff]
          %v1536 = vld [vmem:[#allocation10 + $0x1958] sm:$0xff]
          %v1537 = vld [vmem:[#allocation10 + $0x1960] sm:$0xff]
          %v1538 = vld [vmem:[#allocation10 + $0x1968] sm:$0xff]
          %v1539 = vld [vmem:[#allocation10 + $0x1970] sm:$0xff]
          %v1540 = vld [vmem:[#allocation10 + $0x1978] sm:$0xff]
          %v1541 = vld [vmem:[#allocation10 + $0x1980] sm:$0xff]
          %v1542 = vld [vmem:[#allocation10 + $0x1988] sm:$0xff]
          %v1543 = vld [vmem:[#allocation10 + $0x1990] sm:$0xff]
          %v1544 = vld [vmem:[#allocation10 + $0x1998] sm:$0xff]
          %v1545 = vld [vmem:[#allocation10 + $0x19a0] sm:$0xff]
          %v1546 = vld [vmem:[#allocation10 + $0x19a8] sm:$0xff]
          %v1547 = vld [vmem:[#allocation10 + $0x19b0] sm:$0xff]
          %v1548 = vld [vmem:[#allocation10 + $0x19b8] sm:$0xff]
          %v1549 = vld [vmem:[#allocation10 + $0x19c0] sm:$0xff]
          %v1550 = vld [vmem:[#allocation10 + $0x19c8] sm:$0xff]
          %v1551 = vld [vmem:[#allocation10 + $0x19d0] sm:$0xff]
          %v1552 = vld [vmem:[#allocation10 + $0x19d8] sm:$0xff]
          %v1553 = vld [vmem:[#allocation10 + $0x19e0] sm:$0xff]
          %v1554 = vld [vmem:[#allocation10 + $0x19e8] sm:$0xff]
          %v1555 = vld [vmem:[#allocation10 + $0x19f0] sm:$0xff]
          %v1556 = vld [vmem:[#allocation10 + $0x19f8] sm:$0xff]
          %v1557 = vld [vmem:[#allocation10 + $0x1a00] sm:$0xff]
          %v1558 = vld [vmem:[#allocation10 + $0x1a08] sm:$0xff]
          %v1559 = vld [vmem:[#allocation10 + $0x1a10] sm:$0xff]
          %v1560 = vld [vmem:[#allocation10 + $0x1a18] sm:$0xff]
          %v1561 = vld [vmem:[#allocation10 + $0x1a20] sm:$0xff]
          %v1562 = vld [vmem:[#allocation10 + $0x1a28] sm:$0xff]
          %v1563 = vld [vmem:[#allocation10 + $0x1a30] sm:$0xff]
          %v1564 = vld [vmem:[#allocation10 + $0x1a38] sm:$0xff]
          %v1565 = vld [vmem:[#allocation10 + $0x1a40] sm:$0xff]
          %v1566 = vld [vmem:[#allocation10 + $0x1a48] sm:$0xff]
          %v1567 = vld [vmem:[#allocation10 + $0x1a50] sm:$0xff]
          %v1568 = vld [vmem:[#allocation10 + $0x1a58] sm:$0xff]
          %v1569 = vld [vmem:[#allocation10 + $0x1a60] sm:$0xff]
          %v1570 = vld [vmem:[#allocation10 + $0x1a68] sm:$0xff]
          %v1571 = vld [vmem:[#allocation10 + $0x1a70] sm:$0xff]
          %v1572 = vld [vmem:[#allocation10 + $0x1a78] sm:$0xff]
          %v1573 = vld [vmem:[#allocation10 + $0x1a80] sm:$0xff]
          %v1574 = vld [vmem:[#allocation10 + $0x1a88] sm:$0xff]
          %v1575 = vld [vmem:[#allocation10 + $0x1a90] sm:$0xff]
          %v1576 = vld [vmem:[#allocation10 + $0x1a98] sm:$0xff]
          %v1577 = vld [vmem:[#allocation10 + $0x1aa0] sm:$0xff]
          %v1578 = vld [vmem:[#allocation10 + $0x1aa8] sm:$0xff]
          %v1579 = vld [vmem:[#allocation10 + $0x1ab0] sm:$0xff]
          %v1580 = vld [vmem:[#allocation10 + $0x1ab8] sm:$0xff]
          %v1581 = vld [vmem:[#allocation10 + $0x1ac0] sm:$0xff]
          %v1582 = vld [vmem:[#allocation10 + $0x1ac8] sm:$0xff]
          %v1583 = vld [vmem:[#allocation10 + $0x1ad0] sm:$0xff]
          %v1584 = vld [vmem:[#allocation10 + $0x1ad8] sm:$0xff]
          %v1585 = vld [vmem:[#allocation10 + $0x1ae0] sm:$0xff]
          %v1586 = vld [vmem:[#allocation10 + $0x1ae8] sm:$0xff]
          %v1587 = vld [vmem:[#allocation10 + $0x1af0] sm:$0xff]
          %v1588 = vld [vmem:[#allocation10 + $0x1af8] sm:$0xff]
          %v1589 = vld [vmem:[#allocation10 + $0x1b00] sm:$0xff]
          %v1590 = vld [vmem:[#allocation10 + $0x1b08] sm:$0xff]
          %v1591 = vld [vmem:[#allocation10 + $0x1b10] sm:$0xff]
          %v1592 = vld [vmem:[#allocation10 + $0x1b18] sm:$0xff]
          %v1593 = vld [vmem:[#allocation10 + $0x1b20] sm:$0xff]
          %v1594 = vld [vmem:[#allocation10 + $0x1b28] sm:$0xff]
          %v1595 = vld [vmem:[#allocation10 + $0x1b30] sm:$0xff]
          %v1596 = vld [vmem:[#allocation10 + $0x1b38] sm:$0xff]
          %v1597 = vld [vmem:[#allocation10 + $0x1b40] sm:$0xff]
          %v1598 = vld [vmem:[#allocation10 + $0x1b48] sm:$0xff]
          %v1599 = vld [vmem:[#allocation10 + $0x1b50] sm:$0xff]
          %v1600 = vld [vmem:[#allocation10 + $0x1b58] sm:$0xff]
          %v1601 = vld [vmem:[#allocation10 + $0x1b60] sm:$0xff]
          %v1602 = vld [vmem:[#allocation10 + $0x1b68] sm:$0xff]
          %v1603 = vld [vmem:[#allocation10 + $0x1b70] sm:$0xff]
          %v1604 = vld [vmem:[#allocation10 + $0x1b78] sm:$0xff]
          %v1605 = vld [vmem:[#allocation10 + $0x1b80] sm:$0xff]
          %v1606 = vld [vmem:[#allocation10 + $0x1b88] sm:$0xff]
          %v1607 = vld [vmem:[#allocation10 + $0x1b90] sm:$0xff]
          %v1608 = vld [vmem:[#allocation10 + $0x1b98] sm:$0xff]
          %v1609 = vld [vmem:[#allocation10 + $0x1ba0] sm:$0xff]
          %v1610 = vld [vmem:[#allocation10 + $0x1ba8] sm:$0xff]
          %v1611 = vld [vmem:[#allocation10 + $0x1bb0] sm:$0xff]
          %v1612 = vld [vmem:[#allocation10 + $0x1bb8] sm:$0xff]
          %v1613 = vld [vmem:[#allocation10 + $0x1bc0] sm:$0xff]
          %v1614 = vld [vmem:[#allocation10 + $0x1bc8] sm:$0xff]
          %v1615 = vld [vmem:[#allocation10 + $0x1bd0] sm:$0xff]
          %v1616 = vld [vmem:[#allocation10 + $0x1bd8] sm:$0xff]
          %v1617 = vld [vmem:[#allocation10 + $0x1be0] sm:$0xff]
          %v1618 = vld [vmem:[#allocation10 + $0x1be8] sm:$0xff]
          %v1619 = vld [vmem:[#allocation10 + $0x1bf0] sm:$0xff]
          %v1620 = vld [vmem:[#allocation10 + $0x1bf8] sm:$0xff]
          %v1621 = vld [vmem:[#allocation10 + $0x1c00] sm:$0xff]
          %v1622 = vld [vmem:[#allocation10 + $0x1c08] sm:$0xff]
          %v1623 = vld [vmem:[#allocation10 + $0x1c10] sm:$0xff]
          %v1624 = vld [vmem:[#allocation10 + $0x1c18] sm:$0xff]
          %v1625 = vld [vmem:[#allocation10 + $0x1c20] sm:$0xff]
          %v1626 = vld [vmem:[#allocation10 + $0x1c28] sm:$0xff]
          %v1627 = vld [vmem:[#allocation10 + $0x1c30] sm:$0xff]
          %v1628 = vld [vmem:[#allocation10 + $0x1c38] sm:$0xff]
          %v1629 = vld [vmem:[#allocation10 + $0x1c40] sm:$0xff]
          %v1630 = vld [vmem:[#allocation10 + $0x1c48] sm:$0xff]
          %v1631 = vld [vmem:[#allocation10 + $0x1c50] sm:$0xff]
          %v1632 = vld [vmem:[#allocation10 + $0x1c58] sm:$0xff]
          %v1633 = vld [vmem:[#allocation10 + $0x1c60] sm:$0xff]
          %v1634 = vld [vmem:[#allocation10 + $0x1c68] sm:$0xff]
          %v1635 = vld [vmem:[#allocation10 + $0x1c70] sm:$0xff]
          %v1636 = vld [vmem:[#allocation10 + $0x1c78] sm:$0xff]
          %v1637 = vld [vmem:[#allocation10 + $0x1c80] sm:$0xff]
          %v1638 = vld [vmem:[#allocation10 + $0x1c88] sm:$0xff]
          %v1639 = vld [vmem:[#allocation10 + $0x1c90] sm:$0xff]
          %v1640 = vld [vmem:[#allocation10 + $0x1c98] sm:$0xff]
          %v1641 = vld [vmem:[#allocation10 + $0x1ca0] sm:$0xff]
          %v1642 = vld [vmem:[#allocation10 + $0x1ca8] sm:$0xff]
          %v1643 = vld [vmem:[#allocation10 + $0x1cb0] sm:$0xff]
          %v1644 = vld [vmem:[#allocation10 + $0x1cb8] sm:$0xff]
          %v1645 = vld [vmem:[#allocation10 + $0x1cc0] sm:$0xff]
          %v1646 = vld [vmem:[#allocation10 + $0x1cc8] sm:$0xff]
          %v1647 = vld [vmem:[#allocation10 + $0x1cd0] sm:$0xff]
          %v1648 = vld [vmem:[#allocation10 + $0x1cd8] sm:$0xff]
          %v1649 = vld [vmem:[#allocation10 + $0x1ce0] sm:$0xff]
          %v1650 = vld [vmem:[#allocation10 + $0x1ce8] sm:$0xff]
          %v1651 = vld [vmem:[#allocation10 + $0x1cf0] sm:$0xff]
          %v1652 = vld [vmem:[#allocation10 + $0x1cf8] sm:$0xff]
          %v1653 = vld [vmem:[#allocation10 + $0x1d00] sm:$0xff]
          %v1654 = vld [vmem:[#allocation10 + $0x1d08] sm:$0xff]
          %v1655 = vld [vmem:[#allocation10 + $0x1d10] sm:$0xff]
          %v1656 = vld [vmem:[#allocation10 + $0x1d18] sm:$0xff]
          %v1657 = vld [vmem:[#allocation10 + $0x1d20] sm:$0xff]
          %v1658 = vld [vmem:[#allocation10 + $0x1d28] sm:$0xff]
          %v1659 = vld [vmem:[#allocation10 + $0x1d30] sm:$0xff]
          %v1660 = vld [vmem:[#allocation10 + $0x1d38] sm:$0xff]
          %v1661 = vld [vmem:[#allocation10 + $0x1d40] sm:$0xff]
          %v1662 = vld [vmem:[#allocation10 + $0x1d48] sm:$0xff]
          %v1663 = vld [vmem:[#allocation10 + $0x1d50] sm:$0xff]
          %v1664 = vld [vmem:[#allocation10 + $0x1d58] sm:$0xff]
          %v1665 = vld [vmem:[#allocation10 + $0x1d60] sm:$0xff]
          %v1666 = vld [vmem:[#allocation10 + $0x1d68] sm:$0xff]
          %v1667 = vld [vmem:[#allocation10 + $0x1d70] sm:$0xff]
          %v1668 = vld [vmem:[#allocation10 + $0x1d78] sm:$0xff]
          %v1669 = vld [vmem:[#allocation10 + $0x1d80] sm:$0xff]
          %v1670 = vld [vmem:[#allocation10 + $0x1d88] sm:$0xff]
          %v1671 = vld [vmem:[#allocation10 + $0x1d90] sm:$0xff]
          %v1672 = vld [vmem:[#allocation10 + $0x1d98] sm:$0xff]
          %v1673 = vld [vmem:[#allocation10 + $0x1da0] sm:$0xff]
          %v1674 = vld [vmem:[#allocation10 + $0x1da8] sm:$0xff]
          %v1675 = vld [vmem:[#allocation10 + $0x1db0] sm:$0xff]
          %v1676 = vld [vmem:[#allocation10 + $0x1db8] sm:$0xff]
          %v1677 = vld [vmem:[#allocation10 + $0x1dc0] sm:$0xff]
          %v1678 = vld [vmem:[#allocation10 + $0x1dc8] sm:$0xff]
          %v1679 = vld [vmem:[#allocation10 + $0x1dd0] sm:$0xff]
          %v1680 = vld [vmem:[#allocation10 + $0x1dd8] sm:$0xff]
          %v1681 = vld [vmem:[#allocation10 + $0x1de0] sm:$0xff]
          %v1682 = vld [vmem:[#allocation10 + $0x1de8] sm:$0xff]
          %v1683 = vld [vmem:[#allocation10 + $0x1df0] sm:$0xff]
          %v1684 = vld [vmem:[#allocation10 + $0x1df8] sm:$0xff]
          %v1685 = vld [vmem:[#allocation10 + $0x1e00] sm:$0xff]
          %v1686 = vld [vmem:[#allocation10 + $0x1e08] sm:$0xff]
          %v1687 = vld [vmem:[#allocation10 + $0x1e10] sm:$0xff]
          %v1688 = vld [vmem:[#allocation10 + $0x1e18] sm:$0xff]
          %v1689 = vld [vmem:[#allocation10 + $0x1e20] sm:$0xff]
          %v1690 = vld [vmem:[#allocation10 + $0x1e28] sm:$0xff]
          %v1691 = vld [vmem:[#allocation10 + $0x1e30] sm:$0xff]
          %v1692 = vld [vmem:[#allocation10 + $0x1e38] sm:$0xff]
          %v1693 = vld [vmem:[#allocation10 + $0x1e40] sm:$0xff]
          %v1694 = vld [vmem:[#allocation10 + $0x1e48] sm:$0xff]
          %v1695 = vld [vmem:[#allocation10 + $0x1e50] sm:$0xff]
          %v1696 = vld [vmem:[#allocation10 + $0x1e58] sm:$0xff]
          %v1697 = vld [vmem:[#allocation10 + $0x1e60] sm:$0xff]
          %v1698 = vld [vmem:[#allocation10 + $0x1e68] sm:$0xff]
          %v1699 = vld [vmem:[#allocation10 + $0x1e70] sm:$0xff]
          %v1700 = vld [vmem:[#allocation10 + $0x1e78] sm:$0xff]
          %v1701 = vld [vmem:[#allocation10 + $0x1e80] sm:$0xff]
          %v1702 = vld [vmem:[#allocation10 + $0x1e88] sm:$0xff]
          %v1703 = vld [vmem:[#allocation10 + $0x1e90] sm:$0xff]
          %v1704 = vld [vmem:[#allocation10 + $0x1e98] sm:$0xff]
          %v1705 = vld [vmem:[#allocation10 + $0x1ea0] sm:$0xff]
          %v1706 = vld [vmem:[#allocation10 + $0x1ea8] sm:$0xff]
          %v1707 = vld [vmem:[#allocation10 + $0x1eb0] sm:$0xff]
          %v1708 = vld [vmem:[#allocation10 + $0x1eb8] sm:$0xff]
          %v1709 = vld [vmem:[#allocation10 + $0x1ec0] sm:$0xff]
          %v1710 = vld [vmem:[#allocation10 + $0x1ec8] sm:$0xff]
          %v1711 = vld [vmem:[#allocation10 + $0x1ed0] sm:$0xff]
          %v1712 = vld [vmem:[#allocation10 + $0x1ed8] sm:$0xff]
          %v1713 = vld [vmem:[#allocation10 + $0x1ee0] sm:$0xff]
          %v1714 = vld [vmem:[#allocation10 + $0x1ee8] sm:$0xff]
          %v1715 = vld [vmem:[#allocation10 + $0x1ef0] sm:$0xff]
          %v1716 = vld [vmem:[#allocation10 + $0x1ef8] sm:$0xff]
          %v1717 = vld [vmem:[#allocation10 + $0x1f00] sm:$0xff]
          %v1718 = vld [vmem:[#allocation10 + $0x1f08] sm:$0xff]
          %v1719 = vld [vmem:[#allocation10 + $0x1f10] sm:$0xff]
          %v1720 = vld [vmem:[#allocation10 + $0x1f18] sm:$0xff]
          %v1721 = vld [vmem:[#allocation10 + $0x1f20] sm:$0xff]
          %v1722 = vld [vmem:[#allocation10 + $0x1f28] sm:$0xff]
          %v1723 = vld [vmem:[#allocation10 + $0x1f30] sm:$0xff]
          %v1724 = vld [vmem:[#allocation10 + $0x1f38] sm:$0xff]
          %v1725 = vld [vmem:[#allocation10 + $0x1f40] sm:$0xff]
          %v1726 = vld [vmem:[#allocation10 + $0x1f48] sm:$0xff]
          %v1727 = vld [vmem:[#allocation10 + $0x1f50] sm:$0xff]
          %v1728 = vld [vmem:[#allocation10 + $0x1f58] sm:$0xff]
          %v1729 = vld [vmem:[#allocation10 + $0x1f60] sm:$0xff]
          %v1730 = vld [vmem:[#allocation10 + $0x1f68] sm:$0xff]
          %v1731 = vld [vmem:[#allocation10 + $0x1f70] sm:$0xff]
          %v1732 = vld [vmem:[#allocation10 + $0x1f78] sm:$0xff]
          %v1733 = vld [vmem:[#allocation10 + $0x1f80] sm:$0xff]
          %v1734 = vld [vmem:[#allocation10 + $0x1f88] sm:$0xff]
          %v1735 = vld [vmem:[#allocation10 + $0x1f90] sm:$0xff]
          %v1736 = vld [vmem:[#allocation10 + $0x1f98] sm:$0xff]
          %v1737 = vld [vmem:[#allocation10 + $0x1fa0] sm:$0xff]
          %v1738 = vld [vmem:[#allocation10 + $0x1fa8] sm:$0xff]
          %v1739 = vld [vmem:[#allocation10 + $0x1fb0] sm:$0xff]
          %v1740 = vld [vmem:[#allocation10 + $0x1fb8] sm:$0xff]
          %v1741 = vld [vmem:[#allocation10 + $0x1fc0] sm:$0xff]
          %v1742 = vld [vmem:[#allocation10 + $0x1fc8] sm:$0xff]
          %v1743 = vld [vmem:[#allocation10 + $0x1fd0] sm:$0xff]
          %v1744 = vld [vmem:[#allocation10 + $0x1fd8] sm:$0xff]
          %v1745 = vld [vmem:[#allocation10 + $0x1fe0] sm:$0xff]
          %v1746 = vld [vmem:[#allocation10 + $0x1fe8] sm:$0xff]
          %v1747 = vld [vmem:[#allocation10 + $0x1ff0] sm:$0xff]
          %v1748 = vld [vmem:[#allocation10 + $0x1ff8] sm:$0xff]
          %v1749 = vld [vmem:[#allocation11] sm:$0xff]
          %v1750 = vld [vmem:[#allocation11 + $0x8] sm:$0xff]
          %v1751 = vld [vmem:[#allocation11 + $0x10] sm:$0xff]
          %v1752 = vld [vmem:[#allocation11 + $0x18] sm:$0xff]
          %v1754 = vlaneseq
          %v1755 = vshrl.u32 %v1754, 7
          %v1756 = vsub.s32 0, %v1755
          %v1757 = vrot.slane %v724, %v1756
          %v1758 = vlaneseq
          %v1759 = vshrl.u32 %v1758, 7
          %v1760 = vsub.s32 1, %v1759
          %v1761 = vrot.slane %v724, %v1760
          %v1768 = vlaneseq
          %v1769 = vshrl.u32 %v1768, 7
          %v1770 = vsub.s32 0, %v1769
          %v1771 = vrot.slane %v1749, %v1770
          %v1772 = vlaneseq
          %v1773 = vshrl.u32 %v1772, 7
          %v1774 = vsub.s32 1, %v1773
          %v1775 = vrot.slane %v1749, %v1774
          %v1776 = vlaneseq
          %v1777 = vshrl.u32 %v1776, 7
          %v1778 = vsub.s32 2, %v1777
          %v1779 = vrot.slane %v1749, %v1778
          %v1780 = vlaneseq
          %v1781 = vshrl.u32 %v1780, 7
          %v1782 = vsub.s32 3, %v1781
          %v1783 = vrot.slane %v1749, %v1782
          %v1784 = vlaneseq
          %v1785 = vshrl.u32 %v1784, 7
          %v1786 = vsub.s32 4, %v1785
          %v1787 = vrot.slane %v1749, %v1786
          %v1788 = vlaneseq
          %v1789 = vshrl.u32 %v1788, 7
          %v1790 = vsub.s32 5, %v1789
          %v1791 = vrot.slane %v1749, %v1790
          %v1792 = vlaneseq
          %v1793 = vshrl.u32 %v1792, 7
          %v1794 = vsub.s32 6, %v1793
          %v1795 = vrot.slane %v1749, %v1794
          %v1796 = vlaneseq
          %v1797 = vshrl.u32 %v1796, 7
          %v1798 = vsub.s32 7, %v1797
          %v1799 = vrot.slane %v1749, %v1798
          %v1800 = vlaneseq
          %v1801 = vshrl.u32 %v1800, 7
          %v1802 = vsub.s32 0, %v1801
          %v1803 = vrot.slane %v1750, %v1802
          %v1804 = vlaneseq
          %v1805 = vshrl.u32 %v1804, 7
          %v1806 = vsub.s32 1, %v1805
          %v1807 = vrot.slane %v1750, %v1806
          %v1808 = vlaneseq
          %v1809 = vshrl.u32 %v1808, 7
          %v1810 = vsub.s32 2, %v1809
          %v1811 = vrot.slane %v1750, %v1810
          %v1812 = vlaneseq
          %v1813 = vshrl.u32 %v1812, 7
          %v1814 = vsub.s32 3, %v1813
          %v1815 = vrot.slane %v1750, %v1814
          %v1816 = vlaneseq
          %v1817 = vshrl.u32 %v1816, 7
          %v1818 = vsub.s32 4, %v1817
          %v1819 = vrot.slane %v1750, %v1818
          %v1820 = vlaneseq
          %v1821 = vshrl.u32 %v1820, 7
          %v1822 = vsub.s32 5, %v1821
          %v1823 = vrot.slane %v1750, %v1822
          %v1824 = vlaneseq
          %v1825 = vshrl.u32 %v1824, 7
          %v1826 = vsub.s32 6, %v1825
          %v1827 = vrot.slane %v1750, %v1826
          %v1828 = vlaneseq
          %v1829 = vshrl.u32 %v1828, 7
          %v1830 = vsub.s32 7, %v1829
          %v1831 = vrot.slane %v1750, %v1830
          %v1832 = vlaneseq
          %v1833 = vshrl.u32 %v1832, 7
          %v1834 = vsub.s32 0, %v1833
          %v1835 = vrot.slane %v1751, %v1834
          %v1836 = vlaneseq
          %v1837 = vshrl.u32 %v1836, 7
          %v1838 = vsub.s32 1, %v1837
          %v1839 = vrot.slane %v1751, %v1838
          %v1840 = vlaneseq
          %v1841 = vshrl.u32 %v1840, 7
          %v1842 = vsub.s32 2, %v1841
          %v1843 = vrot.slane %v1751, %v1842
          %v1844 = vlaneseq
          %v1845 = vshrl.u32 %v1844, 7
          %v1846 = vsub.s32 3, %v1845
          %v1847 = vrot.slane %v1751, %v1846
          %v1848 = vlaneseq
          %v1849 = vshrl.u32 %v1848, 7
          %v1850 = vsub.s32 4, %v1849
          %v1851 = vrot.slane %v1751, %v1850
          %v1852 = vlaneseq
          %v1853 = vshrl.u32 %v1852, 7
          %v1854 = vsub.s32 5, %v1853
          %v1855 = vrot.slane %v1751, %v1854
          %v1856 = vlaneseq
          %v1857 = vshrl.u32 %v1856, 7
          %v1858 = vsub.s32 6, %v1857
          %v1859 = vrot.slane %v1751, %v1858
          %v1860 = vlaneseq
          %v1861 = vshrl.u32 %v1860, 7
          %v1862 = vsub.s32 7, %v1861
          %v1863 = vrot.slane %v1751, %v1862
          %v1864 = vlaneseq
          %v1865 = vshrl.u32 %v1864, 7
          %v1866 = vsub.s32 0, %v1865
          %v1867 = vrot.slane %v1752, %v1866
          %v1868 = vlaneseq
          %v1869 = vshrl.u32 %v1868, 7
          %v1870 = vsub.s32 1, %v1869
          %v1871 = vrot.slane %v1752, %v1870
          %v1872 = vlaneseq
          %v1873 = vshrl.u32 %v1872, 7
          %v1874 = vsub.s32 2, %v1873
          %v1875 = vrot.slane %v1752, %v1874
          %v1876 = vlaneseq
          %v1877 = vshrl.u32 %v1876, 7
          %v1878 = vsub.s32 3, %v1877
          %v1879 = vrot.slane %v1752, %v1878
          %v1880 = vlaneseq
          %v1881 = vshrl.u32 %v1880, 7
          %v1882 = vsub.s32 4, %v1881
          %v1883 = vrot.slane %v1752, %v1882
          %v1884 = vlaneseq
          %v1885 = vshrl.u32 %v1884, 7
          %v1886 = vsub.s32 5, %v1885
          %v1887 = vrot.slane %v1752, %v1886
          %v1888 = vlaneseq
          %v1889 = vshrl.u32 %v1888, 7
          %v1890 = vsub.s32 6, %v1889
          %v1891 = vrot.slane %v1752, %v1890
          %v1892 = vlaneseq
          %v1893 = vshrl.u32 %v1892, 7
          %v1894 = vsub.s32 7, %v1893
          %v1895 = vrot.slane %v1752, %v1894
          %1928 = vmatprep.subr.mxu0 %v726
          %1929 = vmatpush1.msra.mxu0 %v725
          %1930 = vmatprep.subr.mxu0 %v758
          %1931 = vmatpush1.msra.mxu0 %v757
          %1932 = vmatprep.subr.mxu0 %v790
          %1933 = vmatpush1.msra.mxu0 %v789
          %1934 = vmatprep.subr.mxu0 %v822
          %1935 = vmatpush1.msra.mxu0 %v821
          %1936 = vmatprep.subr.mxu0 %v854
          %1937 = vmatpush1.msra.mxu0 %v853
          %1938 = vmatprep.subr.mxu0 %v886
          %1939 = vmatpush1.msra.mxu0 %v885
          %1940 = vmatprep.subr.mxu0 %v918
          %1941 = vmatpush1.msra.mxu0 %v917
          %1942 = vmatprep.subr.mxu0 %v950
          %1943 = vmatpush1.msra.mxu0 %v949
          %1944 = vmatprep.subr.mxu0 %v982
          %1945 = vmatpush1.msra.mxu0 %v981
          %1946 = vmatprep.subr.mxu0 %v1014
          %1947 = vmatpush1.msra.mxu0 %v1013
          %1948 = vmatprep.subr.mxu0 %v1046
          %1949 = vmatpush1.msra.mxu0 %v1045
          %1950 = vmatprep.subr.mxu0 %v1078
          %1951 = vmatpush1.msra.mxu0 %v1077
          %1952 = vmatprep.subr.mxu0 %v1110
          %1953 = vmatpush1.msra.mxu0 %v1109
          %1954 = vmatprep.subr.mxu0 %v1142
          %1955 = vmatpush1.msra.mxu0 %v1141
          %1956 = vmatprep.subr.mxu0 %v1174
          %1957 = vmatpush1.msra.mxu0 %v1173
          %1958 = vmatprep.subr.mxu0 %v1206
          %1959 = vmatpush1.msra.mxu0 %v1205
          %1960 = vmatprep.subr.mxu0 %v1238
          %1961 = vmatpush1.msra.mxu0 %v1237
          %1962 = vmatprep.subr.mxu0 %v1270
          %1963 = vmatpush1.msra.mxu0 %v1269
          %1964 = vmatprep.subr.mxu0 %v1302
          %1965 = vmatpush1.msra.mxu0 %v1301
          %1966 = vmatprep.subr.mxu0 %v1334
          %1967 = vmatpush1.msra.mxu0 %v1333
          %1968 = vmatprep.subr.mxu0 %v1366
          %1969 = vmatpush1.msra.mxu0 %v1365
          %1970 = vmatprep.subr.mxu0 %v1398
          %1971 = vmatpush1.msra.mxu0 %v1397
          %1972 = vmatprep.subr.mxu0 %v1430
          %1973 = vmatpush1.msra.mxu0 %v1429
          %1974 = vmatprep.subr.mxu0 %v1462
          %1975 = vmatpush1.msra.mxu0 %v1461
          %1976 = vmatprep.subr.mxu0 %v1494
          %1977 = vmatpush1.msra.mxu0 %v1493
          %1978 = vmatprep.subr.mxu0 %v1526
          %1979 = vmatpush1.msra.mxu0 %v1525
          %1980 = vmatprep.subr.mxu0 %v1558
          %1981 = vmatpush1.msra.mxu0 %v1557
          %1982 = vmatprep.subr.mxu0 %v1590
          %1983 = vmatpush1.msra.mxu0 %v1589
          %1984 = vmatprep.subr.mxu0 %v1622
          %1985 = vmatpush1.msra.mxu0 %v1621
          %1986 = vmatprep.subr.mxu0 %v1654
          %1987 = vmatpush1.msra.mxu0 %v1653
          %1988 = vmatprep.subr.mxu0 %v1686
          %1989 = vmatpush1.msra.mxu0 %v1685
          %1990 = vmatprep.subr.mxu0 %v1718
          %1991 = vmatpush1.msra.mxu0 %v1717
          %1992 = vmatprep.mubr.f32.mxu0 %v1761
          %1993 = vmatmul.mubr.f32.gmra.mrb[0].mxu0 %v1757
          %v1994 = vpop.f32.mrb[0].mxu0
          %v1995 = vadd.f32 %v1771, %v1994
          %v1996 = vpop.f32.mrb[0].mxu0
          %v1997 = vadd.f32 %v1775, %v1996
          %1998 = vdwg.mxu0
          %1999 = vmatprep.subr.mxu0 %v728
          %2000 = vmatpush1.msra.mxu0 %v727
          %2001 = vmatprep.subr.mxu0 %v760
          %2002 = vmatpush1.msra.mxu0 %v759
          %2003 = vmatprep.subr.mxu0 %v792
          %2004 = vmatpush1.msra.mxu0 %v791
          %2005 = vmatprep.subr.mxu0 %v824
          %2006 = vmatpush1.msra.mxu0 %v823
          %2007 = vmatprep.subr.mxu0 %v856
          %2008 = vmatpush1.msra.mxu0 %v855
          %2009 = vmatprep.subr.mxu0 %v888
          %2010 = vmatpush1.msra.mxu0 %v887
          %2011 = vmatprep.subr.mxu0 %v920
          %2012 = vmatpush1.msra.mxu0 %v919
          %2013 = vmatprep.subr.mxu0 %v952
          %2014 = vmatpush1.msra.mxu0 %v951
          %2015 = vmatprep.subr.mxu0 %v984
          %2016 = vmatpush1.msra.mxu0 %v983
          %2017 = vmatprep.subr.mxu0 %v1016
          %2018 = vmatpush1.msra.mxu0 %v1015
          %2019 = vmatprep.subr.mxu0 %v1048
          %2020 = vmatpush1.msra.mxu0 %v1047
          %2021 = vmatprep.subr.mxu0 %v1080
          %2022 = vmatpush1.msra.mxu0 %v1079
          %2023 = vmatprep.subr.mxu0 %v1112
          %2024 = vmatpush1.msra.mxu0 %v1111
          %2025 = vmatprep.subr.mxu0 %v1144
          %2026 = vmatpush1.msra.mxu0 %v1143
          %2027 = vmatprep.subr.mxu0 %v1176
          %2028 = vmatpush1.msra.mxu0 %v1175
          %2029 = vmatprep.subr.mxu0 %v1208
          %2030 = vmatpush1.msra.mxu0 %v1207
          %2031 = vmatprep.subr.mxu0 %v1240
          %2032 = vmatpush1.msra.mxu0 %v1239
          %2033 = vmatprep.subr.mxu0 %v1272
          %2034 = vmatpush1.msra.mxu0 %v1271
          %2035 = vmatprep.subr.mxu0 %v1304
          %2036 = vmatpush1.msra.mxu0 %v1303
          %2037 = vmatprep.subr.mxu0 %v1336
          %2038 = vmatpush1.msra.mxu0 %v1335
          %2039 = vmatprep.subr.mxu0 %v1368
          %2040 = vmatpush1.msra.mxu0 %v1367
          %2041 = vmatprep.subr.mxu0 %v1400
          %2042 = vmatpush1.msra.mxu0 %v1399
          %2043 = vmatprep.subr.mxu0 %v1432
          %2044 = vmatpush1.msra.mxu0 %v1431
          %2045 = vmatprep.subr.mxu0 %v1464
          %2046 = vmatpush1.msra.mxu0 %v1463
          %2047 = vmatprep.subr.mxu0 %v1496
          %2048 = vmatpush1.msra.mxu0 %v1495
          %2049 = vmatprep.subr.mxu0 %v1528
          %2050 = vmatpush1.msra.mxu0 %v1527
          %2051 = vmatprep.subr.mxu0 %v1560
          %2052 = vmatpush1.msra.mxu0 %v1559
          %2053 = vmatprep.subr.mxu0 %v1592
          %2054 = vmatpush1.msra.mxu0 %v1591
          %2055 = vmatprep.subr.mxu0 %v1624
          %2056 = vmatpush1.msra.mxu0 %v1623
          %2057 = vmatprep.subr.mxu0 %v1656
          %2058 = vmatpush1.msra.mxu0 %v1655
          %2059 = vmatprep.subr.mxu0 %v1688
          %2060 = vmatpush1.msra.mxu0 %v1687
          %2061 = vmatprep.subr.mxu0 %v1720
          %2062 = vmatpush1.msra.mxu0 %v1719
          %2063 = vmatprep.mubr.f32.mxu0 %v1761
          %2064 = vmatmul.mubr.f32.gmra.mrb[0].mxu0 %v1757
          %v2065 = vpop.f32.mrb[0].mxu0
          %v2066 = vadd.f32 %v1779, %v2065
          %v2067 = vpop.f32.mrb[0].mxu0
          %v2068 = vadd.f32 %v1783, %v2067
          %2069 = vdwg.mxu0
          %2070 = vmatprep.subr.mxu0 %v730
          %2071 = vmatpush1.msra.mxu0 %v729
          %2072 = vmatprep.subr.mxu0 %v762
          %2073 = vmatpush1.msra.mxu0 %v761
          %2074 = vmatprep.subr.mxu0 %v794
          %2075 = vmatpush1.msra.mxu0 %v793
          %2076 = vmatprep.subr.mxu0 %v826
          %2077 = vmatpush1.msra.mxu0 %v825
          %2078 = vmatprep.subr.mxu0 %v858
          %2079 = vmatpush1.msra.mxu0 %v857
          %2080 = vmatprep.subr.mxu0 %v890
          %2081 = vmatpush1.msra.mxu0 %v889
          %2082 = vmatprep.subr.mxu0 %v922
          %2083 = vmatpush1.msra.mxu0 %v921
          %2084 = vmatprep.subr.mxu0 %v954
          %2085 = vmatpush1.msra.mxu0 %v953
          %2086 = vmatprep.subr.mxu0 %v986
          %2087 = vmatpush1.msra.mxu0 %v985
          %2088 = vmatprep.subr.mxu0 %v1018
          %2089 = vmatpush1.msra.mxu0 %v1017
          %2090 = vmatprep.subr.mxu0 %v1050
          %2091 = vmatpush1.msra.mxu0 %v1049
          %2092 = vmatprep.subr.mxu0 %v1082
          %2093 = vmatpush1.msra.mxu0 %v1081
          %2094 = vmatprep.subr.mxu0 %v1114
          %2095 = vmatpush1.msra.mxu0 %v1113
          %2096 = vmatprep.subr.mxu0 %v1146
          %2097 = vmatpush1.msra.mxu0 %v1145
          %2098 = vmatprep.subr.mxu0 %v1178
          %2099 = vmatpush1.msra.mxu0 %v1177
          %2100 = vmatprep.subr.mxu0 %v1210
          %2101 = vmatpush1.msra.mxu0 %v1209
          %2102 = vmatprep.subr.mxu0 %v1242
          %2103 = vmatpush1.msra.mxu0 %v1241
          %2104 = vmatprep.subr.mxu0 %v1274
          %2105 = vmatpush1.msra.mxu0 %v1273
          %2106 = vmatprep.subr.mxu0 %v1306
          %2107 = vmatpush1.msra.mxu0 %v1305
          %2108 = vmatprep.subr.mxu0 %v1338
          %2109 = vmatpush1.msra.mxu0 %v1337
          %2110 = vmatprep.subr.mxu0 %v1370
          %2111 = vmatpush1.msra.mxu0 %v1369
          %2112 = vmatprep.subr.mxu0 %v1402
          %2113 = vmatpush1.msra.mxu0 %v1401
          %2114 = vmatprep.subr.mxu0 %v1434
          %2115 = vmatpush1.msra.mxu0 %v1433
          %2116 = vmatprep.subr.mxu0 %v1466
          %2117 = vmatpush1.msra.mxu0 %v1465
          %2118 = vmatprep.subr.mxu0 %v1498
          %2119 = vmatpush1.msra.mxu0 %v1497
          %2120 = vmatprep.subr.mxu0 %v1530
          %2121 = vmatpush1.msra.mxu0 %v1529
          %2122 = vmatprep.subr.mxu0 %v1562
          %2123 = vmatpush1.msra.mxu0 %v1561
          %2124 = vmatprep.subr.mxu0 %v1594
          %2125 = vmatpush1.msra.mxu0 %v1593
          %2126 = vmatprep.subr.mxu0 %v1626
          %2127 = vmatpush1.msra.mxu0 %v1625
          %2128 = vmatprep.subr.mxu0 %v1658
          %2129 = vmatpush1.msra.mxu0 %v1657
          %2130 = vmatprep.subr.mxu0 %v1690
          %2131 = vmatpush1.msra.mxu0 %v1689
          %2132 = vmatprep.subr.mxu0 %v1722
          %2133 = vmatpush1.msra.mxu0 %v1721
          %2134 = vmatprep.mubr.f32.mxu0 %v1761
          %2135 = vmatmul.mubr.f32.gmra.mrb[0].mxu0 %v1757
          %v2136 = vpop.f32.mrb[0].mxu0
          %v2137 = vadd.f32 %v1787, %v2136
          %v2138 = vpop.f32.mrb[0].mxu0
          %v2139 = vadd.f32 %v1791, %v2138
          %2140 = vdwg.mxu0
          %2141 = vmatprep.subr.mxu0 %v732
          %2142 = vmatpush1.msra.mxu0 %v731
          %2143 = vmatprep.subr.mxu0 %v764
          %2144 = vmatpush1.msra.mxu0 %v763
          %2145 = vmatprep.subr.mxu0 %v796
          %2146 = vmatpush1.msra.mxu0 %v795
          %2147 = vmatprep.subr.mxu0 %v828
          %2148 = vmatpush1.msra.mxu0 %v827
          %2149 = vmatprep.subr.mxu0 %v860
          %2150 = vmatpush1.msra.mxu0 %v859
          %2151 = vmatprep.subr.mxu0 %v892
          %2152 = vmatpush1.msra.mxu0 %v891
          %2153 = vmatprep.subr.mxu0 %v924
          %2154 = vmatpush1.msra.mxu0 %v923
          %2155 = vmatprep.subr.mxu0 %v956
          %2156 = vmatpush1.msra.mxu0 %v955
          %2157 = vmatprep.subr.mxu0 %v988
          %2158 = vmatpush1.msra.mxu0 %v987
          %2159 = vmatprep.subr.mxu0 %v1020
          %2160 = vmatpush1.msra.mxu0 %v1019
          %2161 = vmatprep.subr.mxu0 %v1052
          %2162 = vmatpush1.msra.mxu0 %v1051
          %2163 = vmatprep.subr.mxu0 %v1084
          %2164 = vmatpush1.msra.mxu0 %v1083
          %2165 = vmatprep.subr.mxu0 %v1116
          %2166 = vmatpush1.msra.mxu0 %v1115
          %2167 = vmatprep.subr.mxu0 %v1148
          %2168 = vmatpush1.msra.mxu0 %v1147
          %2169 = vmatprep.subr.mxu0 %v1180
          %2170 = vmatpush1.msra.mxu0 %v1179
          %2171 = vmatprep.subr.mxu0 %v1212
          %2172 = vmatpush1.msra.mxu0 %v1211
          %2173 = vmatprep.subr.mxu0 %v1244
          %2174 = vmatpush1.msra.mxu0 %v1243
          %2175 = vmatprep.subr.mxu0 %v1276
          %2176 = vmatpush1.msra.mxu0 %v1275
          %2177 = vmatprep.subr.mxu0 %v1308
          %2178 = vmatpush1.msra.mxu0 %v1307
          %2179 = vmatprep.subr.mxu0 %v1340
          %2180 = vmatpush1.msra.mxu0 %v1339
          %2181 = vmatprep.subr.mxu0 %v1372
          %2182 = vmatpush1.msra.mxu0 %v1371
          %2183 = vmatprep.subr.mxu0 %v1404
          %2184 = vmatpush1.msra.mxu0 %v1403
          %2185 = vmatprep.subr.mxu0 %v1436
          %2186 = vmatpush1.msra.mxu0 %v1435
          %2187 = vmatprep.subr.mxu0 %v1468
          %2188 = vmatpush1.msra.mxu0 %v1467
          %2189 = vmatprep.subr.mxu0 %v1500
          %2190 = vmatpush1.msra.mxu0 %v1499
          %2191 = vmatprep.subr.mxu0 %v1532
          %2192 = vmatpush1.msra.mxu0 %v1531
          %2193 = vmatprep.subr.mxu0 %v1564
          %2194 = vmatpush1.msra.mxu0 %v1563
          %2195 = vmatprep.subr.mxu0 %v1596
          %2196 = vmatpush1.msra.mxu0 %v1595
          %2197 = vmatprep.subr.mxu0 %v1628
          %2198 = vmatpush1.msra.mxu0 %v1627
          %2199 = vmatprep.subr.mxu0 %v1660
          %2200 = vmatpush1.msra.mxu0 %v1659
          %2201 = vmatprep.subr.mxu0 %v1692
          %2202 = vmatpush1.msra.mxu0 %v1691
          %2203 = vmatprep.subr.mxu0 %v1724
          %2204 = vmatpush1.msra.mxu0 %v1723
          %2205 = vmatprep.mubr.f32.mxu0 %v1761
          %2206 = vmatmul.mubr.f32.gmra.mrb[0].mxu0 %v1757
          %v2207 = vpop.f32.mrb[0].mxu0
          %v2208 = vadd.f32 %v1795, %v2207
          %v2209 = vpop.f32.mrb[0].mxu0
          %v2210 = vadd.f32 %v1799, %v2209
          %2211 = vdwg.mxu0
          %2212 = vmatprep.subr.mxu0 %v734
          %2213 = vmatpush1.msra.mxu0 %v733
          %2214 = vmatprep.subr.mxu0 %v766
          %2215 = vmatpush1.msra.mxu0 %v765
          %2216 = vmatprep.subr.mxu0 %v798
          %2217 = vmatpush1.msra.mxu0 %v797
          %2218 = vmatprep.subr.mxu0 %v830
          %2219 = vmatpush1.msra.mxu0 %v829
          %2220 = vmatprep.subr.mxu0 %v862
          %2221 = vmatpush1.msra.mxu0 %v861
          %2222 = vmatprep.subr.mxu0 %v894
          %2223 = vmatpush1.msra.mxu0 %v893
          %2224 = vmatprep.subr.mxu0 %v926
          %2225 = vmatpush1.msra.mxu0 %v925
          %2226 = vmatprep.subr.mxu0 %v958
          %2227 = vmatpush1.msra.mxu0 %v957
          %2228 = vmatprep.subr.mxu0 %v990
          %2229 = vmatpush1.msra.mxu0 %v989
          %2230 = vmatprep.subr.mxu0 %v1022
          %2231 = vmatpush1.msra.mxu0 %v1021
          %2232 = vmatprep.subr.mxu0 %v1054
          %2233 = vmatpush1.msra.mxu0 %v1053
          %2234 = vmatprep.subr.mxu0 %v1086
          %2235 = vmatpush1.msra.mxu0 %v1085
          %2236 = vmatprep.subr.mxu0 %v1118
          %2237 = vmatpush1.msra.mxu0 %v1117
          %2238 = vmatprep.subr.mxu0 %v1150
          %2239 = vmatpush1.msra.mxu0 %v1149
          %2240 = vmatprep.subr.mxu0 %v1182
          %2241 = vmatpush1.msra.mxu0 %v1181
          %2242 = vmatprep.subr.mxu0 %v1214
          %2243 = vmatpush1.msra.mxu0 %v1213
          %2244 = vmatprep.subr.mxu0 %v1246
          %2245 = vmatpush1.msra.mxu0 %v1245
          %2246 = vmatprep.subr.mxu0 %v1278
          %2247 = vmatpush1.msra.mxu0 %v1277
          %2248 = vmatprep.subr.mxu0 %v1310
          %2249 = vmatpush1.msra.mxu0 %v1309
          %2250 = vmatprep.subr.mxu0 %v1342
          %2251 = vmatpush1.msra.mxu0 %v1341
          %2252 = vmatprep.subr.mxu0 %v1374
          %2253 = vmatpush1.msra.mxu0 %v1373
          %2254 = vmatprep.subr.mxu0 %v1406
          %2255 = vmatpush1.msra.mxu0 %v1405
          %2256 = vmatprep.subr.mxu0 %v1438
          %2257 = vmatpush1.msra.mxu0 %v1437
          %2258 = vmatprep.subr.mxu0 %v1470
          %2259 = vmatpush1.msra.mxu0 %v1469
          %2260 = vmatprep.subr.mxu0 %v1502
          %2261 = vmatpush1.msra.mxu0 %v1501
          %2262 = vmatprep.subr.mxu0 %v1534
          %2263 = vmatpush1.msra.mxu0 %v1533
          %2264 = vmatprep.subr.mxu0 %v1566
          %2265 = vmatpush1.msra.mxu0 %v1565
          %2266 = vmatprep.subr.mxu0 %v1598
          %2267 = vmatpush1.msra.mxu0 %v1597
          %2268 = vmatprep.subr.mxu0 %v1630
          %2269 = vmatpush1.msra.mxu0 %v1629
          %2270 = vmatprep.subr.mxu0 %v1662
          %2271 = vmatpush1.msra.mxu0 %v1661
          %2272 = vmatprep.subr.mxu0 %v1694
          %2273 = vmatpush1.msra.mxu0 %v1693
          %2274 = vmatprep.subr.mxu0 %v1726
          %2275 = vmatpush1.msra.mxu0 %v1725
          %2276 = vmatprep.mubr.f32.mxu0 %v1761
          %2277 = vmatmul.mubr.f32.gmra.mrb[0].mxu0 %v1757
          %v2278 = vpop.f32.mrb[0].mxu0
          %v2279 = vadd.f32 %v1803, %v2278
          %v2280 = vpop.f32.mrb[0].mxu0
          %v2281 = vadd.f32 %v1807, %v2280
          %2282 = vdwg.mxu0
          %2283 = vmatprep.subr.mxu0 %v736
          %2284 = vmatpush1.msra.mxu0 %v735
          %2285 = vmatprep.subr.mxu0 %v768
          %2286 = vmatpush1.msra.mxu0 %v767
          %2287 = vmatprep.subr.mxu0 %v800
          %2288 = vmatpush1.msra.mxu0 %v799
          %2289 = vmatprep.subr.mxu0 %v832
          %2290 = vmatpush1.msra.mxu0 %v831
          %2291 = vmatprep.subr.mxu0 %v864
          %2292 = vmatpush1.msra.mxu0 %v863
          %2293 = vmatprep.subr.mxu0 %v896
          %2294 = vmatpush1.msra.mxu0 %v895
          %2295 = vmatprep.subr.mxu0 %v928
          %2296 = vmatpush1.msra.mxu0 %v927
          %2297 = vmatprep.subr.mxu0 %v960
          %2298 = vmatpush1.msra.mxu0 %v959
          %2299 = vmatprep.subr.mxu0 %v992
          %2300 = vmatpush1.msra.mxu0 %v991
          %2301 = vmatprep.subr.mxu0 %v1024
          %2302 = vmatpush1.msra.mxu0 %v1023
          %2303 = vmatprep.subr.mxu0 %v1056
          %2304 = vmatpush1.msra.mxu0 %v1055
          %2305 = vmatprep.subr.mxu0 %v1088
          %2306 = vmatpush1.msra.mxu0 %v1087
          %2307 = vmatprep.subr.mxu0 %v1120
          %2308 = vmatpush1.msra.mxu0 %v1119
          %2309 = vmatprep.subr.mxu0 %v1152
          %2310 = vmatpush1.msra.mxu0 %v1151
          %2311 = vmatprep.subr.mxu0 %v1184
          %2312 = vmatpush1.msra.mxu0 %v1183
          %2313 = vmatprep.subr.mxu0 %v1216
          %2314 = vmatpush1.msra.mxu0 %v1215
          %2315 = vmatprep.subr.mxu0 %v1248
          %2316 = vmatpush1.msra.mxu0 %v1247
          %2317 = vmatprep.subr.mxu0 %v1280
          %2318 = vmatpush1.msra.mxu0 %v1279
          %2319 = vmatprep.subr.mxu0 %v1312
          %2320 = vmatpush1.msra.mxu0 %v1311
          %2321 = vmatprep.subr.mxu0 %v1344
          %2322 = vmatpush1.msra.mxu0 %v1343
          %2323 = vmatprep.subr.mxu0 %v1376
          %2324 = vmatpush1.msra.mxu0 %v1375
          %2325 = vmatprep.subr.mxu0 %v1408
          %2326 = vmatpush1.msra.mxu0 %v1407
          %2327 = vmatprep.subr.mxu0 %v1440
          %2328 = vmatpush1.msra.mxu0 %v1439
          %2329 = vmatprep.subr.mxu0 %v1472
          %2330 = vmatpush1.msra.mxu0 %v1471
          %2331 = vmatprep.subr.mxu0 %v1504
          %2332 = vmatpush1.msra.mxu0 %v1503
          %2333 = vmatprep.subr.mxu0 %v1536
          %2334 = vmatpush1.msra.mxu0 %v1535
          %2335 = vmatprep.subr.mxu0 %v1568
          %2336 = vmatpush1.msra.mxu0 %v1567
          %2337 = vmatprep.subr.mxu0 %v1600
          %2338 = vmatpush1.msra.mxu0 %v1599
          %2339 = vmatprep.subr.mxu0 %v1632
          %2340 = vmatpush1.msra.mxu0 %v1631
          %2341 = vmatprep.subr.mxu0 %v1664
          %2342 = vmatpush1.msra.mxu0 %v1663
          %2343 = vmatprep.subr.mxu0 %v1696
          %2344 = vmatpush1.msra.mxu0 %v1695
          %2345 = vmatprep.subr.mxu0 %v1728
          %2346 = vmatpush1.msra.mxu0 %v1727
          %2347 = vmatprep.mubr.f32.mxu0 %v1761
          %2348 = vmatmul.mubr.f32.gmra.mrb[0].mxu0 %v1757
          %v2349 = vpop.f32.mrb[0].mxu0
          %v2350 = vadd.f32 %v1811, %v2349
          %v2351 = vpop.f32.mrb[0].mxu0
          %v2352 = vadd.f32 %v1815, %v2351
          %2353 = vdwg.mxu0
          %2354 = vmatprep.subr.mxu0 %v738
          %2355 = vmatpush1.msra.mxu0 %v737
          %2356 = vmatprep.subr.mxu0 %v770
          %2357 = vmatpush1.msra.mxu0 %v769
          %2358 = vmatprep.subr.mxu0 %v802
          %2359 = vmatpush1.msra.mxu0 %v801
          %2360 = vmatprep.subr.mxu0 %v834
          %2361 = vmatpush1.msra.mxu0 %v833
          %2362 = vmatprep.subr.mxu0 %v866
          %2363 = vmatpush1.msra.mxu0 %v865
          %2364 = vmatprep.subr.mxu0 %v898
          %2365 = vmatpush1.msra.mxu0 %v897
          %2366 = vmatprep.subr.mxu0 %v930
          %2367 = vmatpush1.msra.mxu0 %v929
          %2368 = vmatprep.subr.mxu0 %v962
          %2369 = vmatpush1.msra.mxu0 %v961
          %2370 = vmatprep.subr.mxu0 %v994
          %2371 = vmatpush1.msra.mxu0 %v993
          %2372 = vmatprep.subr.mxu0 %v1026
          %2373 = vmatpush1.msra.mxu0 %v1025
          %2374 = vmatprep.subr.mxu0 %v1058
          %2375 = vmatpush1.msra.mxu0 %v1057
          %2376 = vmatprep.subr.mxu0 %v1090
          %2377 = vmatpush1.msra.mxu0 %v1089
          %2378 = vmatprep.subr.mxu0 %v1122
          %2379 = vmatpush1.msra.mxu0 %v1121
          %2380 = vmatprep.subr.mxu0 %v1154
          %2381 = vmatpush1.msra.mxu0 %v1153
          %2382 = vmatprep.subr.mxu0 %v1186
          %2383 = vmatpush1.msra.mxu0 %v1185
          %2384 = vmatprep.subr.mxu0 %v1218
          %2385 = vmatpush1.msra.mxu0 %v1217
          %2386 = vmatprep.subr.mxu0 %v1250
          %2387 = vmatpush1.msra.mxu0 %v1249
          %2388 = vmatprep.subr.mxu0 %v1282
          %2389 = vmatpush1.msra.mxu0 %v1281
          %2390 = vmatprep.subr.mxu0 %v1314
          %2391 = vmatpush1.msra.mxu0 %v1313
          %2392 = vmatprep.subr.mxu0 %v1346
          %2393 = vmatpush1.msra.mxu0 %v1345
          %2394 = vmatprep.subr.mxu0 %v1378
          %2395 = vmatpush1.msra.mxu0 %v1377
          %2396 = vmatprep.subr.mxu0 %v1410
          %2397 = vmatpush1.msra.mxu0 %v1409
          %2398 = vmatprep.subr.mxu0 %v1442
          %2399 = vmatpush1.msra.mxu0 %v1441
          %2400 = vmatprep.subr.mxu0 %v1474
          %2401 = vmatpush1.msra.mxu0 %v1473
          %2402 = vmatprep.subr.mxu0 %v1506
          %2403 = vmatpush1.msra.mxu0 %v1505
          %2404 = vmatprep.subr.mxu0 %v1538
          %2405 = vmatpush1.msra.mxu0 %v1537
          %2406 = vmatprep.subr.mxu0 %v1570
          %2407 = vmatpush1.msra.mxu0 %v1569
          %2408 = vmatprep.subr.mxu0 %v1602
          %2409 = vmatpush1.msra.mxu0 %v1601
          %2410 = vmatprep.subr.mxu0 %v1634
          %2411 = vmatpush1.msra.mxu0 %v1633
          %2412 = vmatprep.subr.mxu0 %v1666
          %2413 = vmatpush1.msra.mxu0 %v1665
          %2414 = vmatprep.subr.mxu0 %v1698
          %2415 = vmatpush1.msra.mxu0 %v1697
          %2416 = vmatprep.subr.mxu0 %v1730
          %2417 = vmatpush1.msra.mxu0 %v1729
          %2418 = vmatprep.mubr.f32.mxu0 %v1761
          %2419 = vmatmul.mubr.f32.gmra.mrb[0].mxu0 %v1757
          %v2420 = vpop.f32.mrb[0].mxu0
          %v2421 = vadd.f32 %v1819, %v2420
          %v2422 = vpop.f32.mrb[0].mxu0
          %v2423 = vadd.f32 %v1823, %v2422
          %2424 = vdwg.mxu0
          %2425 = vmatprep.subr.mxu0 %v740
          %2426 = vmatpush1.msra.mxu0 %v739
          %2427 = vmatprep.subr.mxu0 %v772
          %2428 = vmatpush1.msra.mxu0 %v771
          %2429 = vmatprep.subr.mxu0 %v804
          %2430 = vmatpush1.msra.mxu0 %v803
          %2431 = vmatprep.subr.mxu0 %v836
          %2432 = vmatpush1.msra.mxu0 %v835
          %2433 = vmatprep.subr.mxu0 %v868
          %2434 = vmatpush1.msra.mxu0 %v867
          %2435 = vmatprep.subr.mxu0 %v900
          %2436 = vmatpush1.msra.mxu0 %v899
          %2437 = vmatprep.subr.mxu0 %v932
          %2438 = vmatpush1.msra.mxu0 %v931
          %2439 = vmatprep.subr.mxu0 %v964
          %2440 = vmatpush1.msra.mxu0 %v963
          %2441 = vmatprep.subr.mxu0 %v996
          %2442 = vmatpush1.msra.mxu0 %v995
          %2443 = vmatprep.subr.mxu0 %v1028
          %2444 = vmatpush1.msra.mxu0 %v1027
          %2445 = vmatprep.subr.mxu0 %v1060
          %2446 = vmatpush1.msra.mxu0 %v1059
          %2447 = vmatprep.subr.mxu0 %v1092
          %2448 = vmatpush1.msra.mxu0 %v1091
          %2449 = vmatprep.subr.mxu0 %v1124
          %2450 = vmatpush1.msra.mxu0 %v1123
          %2451 = vmatprep.subr.mxu0 %v1156
          %2452 = vmatpush1.msra.mxu0 %v1155
          %2453 = vmatprep.subr.mxu0 %v1188
          %2454 = vmatpush1.msra.mxu0 %v1187
          %2455 = vmatprep.subr.mxu0 %v1220
          %2456 = vmatpush1.msra.mxu0 %v1219
          %2457 = vmatprep.subr.mxu0 %v1252
          %2458 = vmatpush1.msra.mxu0 %v1251
          %2459 = vmatprep.subr.mxu0 %v1284
          %2460 = vmatpush1.msra.mxu0 %v1283
          %2461 = vmatprep.subr.mxu0 %v1316
          %2462 = vmatpush1.msra.mxu0 %v1315
          %2463 = vmatprep.subr.mxu0 %v1348
          %2464 = vmatpush1.msra.mxu0 %v1347
          %2465 = vmatprep.subr.mxu0 %v1380
          %2466 = vmatpush1.msra.mxu0 %v1379
          %2467 = vmatprep.subr.mxu0 %v1412
          %2468 = vmatpush1.msra.mxu0 %v1411
          %2469 = vmatprep.subr.mxu0 %v1444
          %2470 = vmatpush1.msra.mxu0 %v1443
          %2471 = vmatprep.subr.mxu0 %v1476
          %2472 = vmatpush1.msra.mxu0 %v1475
          %2473 = vmatprep.subr.mxu0 %v1508
          %2474 = vmatpush1.msra.mxu0 %v1507
          %2475 = vmatprep.subr.mxu0 %v1540
          %2476 = vmatpush1.msra.mxu0 %v1539
          %2477 = vmatprep.subr.mxu0 %v1572
          %2478 = vmatpush1.msra.mxu0 %v1571
          %2479 = vmatprep.subr.mxu0 %v1604
          %2480 = vmatpush1.msra.mxu0 %v1603
          %2481 = vmatprep.subr.mxu0 %v1636
          %2482 = vmatpush1.msra.mxu0 %v1635
          %2483 = vmatprep.subr.mxu0 %v1668
          %2484 = vmatpush1.msra.mxu0 %v1667
          %2485 = vmatprep.subr.mxu0 %v1700
          %2486 = vmatpush1.msra.mxu0 %v1699
          %2487 = vmatprep.subr.mxu0 %v1732
          %2488 = vmatpush1.msra.mxu0 %v1731
          %2489 = vmatprep.mubr.f32.mxu0 %v1761
          %2490 = vmatmul.mubr.f32.gmra.mrb[0].mxu0 %v1757
          %v2491 = vpop.f32.mrb[0].mxu0
          %v2492 = vadd.f32 %v1827, %v2491
          %v2493 = vpop.f32.mrb[0].mxu0
          %v2494 = vadd.f32 %v1831, %v2493
          %2495 = vdwg.mxu0
          %2496 = vmatprep.subr.mxu0 %v742
          %2497 = vmatpush1.msra.mxu0 %v741
          %2498 = vmatprep.subr.mxu0 %v774
          %2499 = vmatpush1.msra.mxu0 %v773
          %2500 = vmatprep.subr.mxu0 %v806
          %2501 = vmatpush1.msra.mxu0 %v805
          %2502 = vmatprep.subr.mxu0 %v838
          %2503 = vmatpush1.msra.mxu0 %v837
          %2504 = vmatprep.subr.mxu0 %v870
          %2505 = vmatpush1.msra.mxu0 %v869
          %2506 = vmatprep.subr.mxu0 %v902
          %2507 = vmatpush1.msra.mxu0 %v901
          %2508 = vmatprep.subr.mxu0 %v934
          %2509 = vmatpush1.msra.mxu0 %v933
          %2510 = vmatprep.subr.mxu0 %v966
          %2511 = vmatpush1.msra.mxu0 %v965
          %2512 = vmatprep.subr.mxu0 %v998
          %2513 = vmatpush1.msra.mxu0 %v997
          %2514 = vmatprep.subr.mxu0 %v1030
          %2515 = vmatpush1.msra.mxu0 %v1029
          %2516 = vmatprep.subr.mxu0 %v1062
          %2517 = vmatpush1.msra.mxu0 %v1061
          %2518 = vmatprep.subr.mxu0 %v1094
          %2519 = vmatpush1.msra.mxu0 %v1093
          %2520 = vmatprep.subr.mxu0 %v1126
          %2521 = vmatpush1.msra.mxu0 %v1125
          %2522 = vmatprep.subr.mxu0 %v1158
          %2523 = vmatpush1.msra.mxu0 %v1157
          %2524 = vmatprep.subr.mxu0 %v1190
          %2525 = vmatpush1.msra.mxu0 %v1189
          %2526 = vmatprep.subr.mxu0 %v1222
          %2527 = vmatpush1.msra.mxu0 %v1221
          %2528 = vmatprep.subr.mxu0 %v1254
          %2529 = vmatpush1.msra.mxu0 %v1253
          %2530 = vmatprep.subr.mxu0 %v1286
          %2531 = vmatpush1.msra.mxu0 %v1285
          %2532 = vmatprep.subr.mxu0 %v1318
          %2533 = vmatpush1.msra.mxu0 %v1317
          %2534 = vmatprep.subr.mxu0 %v1350
          %2535 = vmatpush1.msra.mxu0 %v1349
          %2536 = vmatprep.subr.mxu0 %v1382
          %2537 = vmatpush1.msra.mxu0 %v1381
          %2538 = vmatprep.subr.mxu0 %v1414
          %2539 = vmatpush1.msra.mxu0 %v1413
          %2540 = vmatprep.subr.mxu0 %v1446
          %2541 = vmatpush1.msra.mxu0 %v1445
          %2542 = vmatprep.subr.mxu0 %v1478
          %2543 = vmatpush1.msra.mxu0 %v1477
          %2544 = vmatprep.subr.mxu0 %v1510
          %2545 = vmatpush1.msra.mxu0 %v1509
          %2546 = vmatprep.subr.mxu0 %v1542
          %2547 = vmatpush1.msra.mxu0 %v1541
          %2548 = vmatprep.subr.mxu0 %v1574
          %2549 = vmatpush1.msra.mxu0 %v1573
          %2550 = vmatprep.subr.mxu0 %v1606
          %2551 = vmatpush1.msra.mxu0 %v1605
          %2552 = vmatprep.subr.mxu0 %v1638
          %2553 = vmatpush1.msra.mxu0 %v1637
          %2554 = vmatprep.subr.mxu0 %v1670
          %2555 = vmatpush1.msra.mxu0 %v1669
          %2556 = vmatprep.subr.mxu0 %v1702
          %2557 = vmatpush1.msra.mxu0 %v1701
          %2558 = vmatprep.subr.mxu0 %v1734
          %2559 = vmatpush1.msra.mxu0 %v1733
          %2560 = vmatprep.mubr.f32.mxu0 %v1761
          %2561 = vmatmul.mubr.f32.gmra.mrb[0].mxu0 %v1757
          %v2562 = vpop.f32.mrb[0].mxu0
          %v2563 = vadd.f32 %v1835, %v2562
          %v2564 = vpop.f32.mrb[0].mxu0
          %v2565 = vadd.f32 %v1839, %v2564
          %2566 = vdwg.mxu0
          %2567 = vmatprep.subr.mxu0 %v744
          %2568 = vmatpush1.msra.mxu0 %v743
          %2569 = vmatprep.subr.mxu0 %v776
          %2570 = vmatpush1.msra.mxu0 %v775
          %2571 = vmatprep.subr.mxu0 %v808
          %2572 = vmatpush1.msra.mxu0 %v807
          %2573 = vmatprep.subr.mxu0 %v840
          %2574 = vmatpush1.msra.mxu0 %v839
          %2575 = vmatprep.subr.mxu0 %v872
          %2576 = vmatpush1.msra.mxu0 %v871
          %2577 = vmatprep.subr.mxu0 %v904
          %2578 = vmatpush1.msra.mxu0 %v903
          %2579 = vmatprep.subr.mxu0 %v936
          %2580 = vmatpush1.msra.mxu0 %v935
          %2581 = vmatprep.subr.mxu0 %v968
          %2582 = vmatpush1.msra.mxu0 %v967
          %2583 = vmatprep.subr.mxu0 %v1000
          %2584 = vmatpush1.msra.mxu0 %v999
          %2585 = vmatprep.subr.mxu0 %v1032
          %2586 = vmatpush1.msra.mxu0 %v1031
          %2587 = vmatprep.subr.mxu0 %v1064
          %2588 = vmatpush1.msra.mxu0 %v1063
          %2589 = vmatprep.subr.mxu0 %v1096
          %2590 = vmatpush1.msra.mxu0 %v1095
          %2591 = vmatprep.subr.mxu0 %v1128
          %2592 = vmatpush1.msra.mxu0 %v1127
          %2593 = vmatprep.subr.mxu0 %v1160
          %2594 = vmatpush1.msra.mxu0 %v1159
          %2595 = vmatprep.subr.mxu0 %v1192
          %2596 = vmatpush1.msra.mxu0 %v1191
          %2597 = vmatprep.subr.mxu0 %v1224
          %2598 = vmatpush1.msra.mxu0 %v1223
          %2599 = vmatprep.subr.mxu0 %v1256
          %2600 = vmatpush1.msra.mxu0 %v1255
          %2601 = vmatprep.subr.mxu0 %v1288
          %2602 = vmatpush1.msra.mxu0 %v1287
          %2603 = vmatprep.subr.mxu0 %v1320
          %2604 = vmatpush1.msra.mxu0 %v1319
          %2605 = vmatprep.subr.mxu0 %v1352
          %2606 = vmatpush1.msra.mxu0 %v1351
          %2607 = vmatprep.subr.mxu0 %v1384
          %2608 = vmatpush1.msra.mxu0 %v1383
          %2609 = vmatprep.subr.mxu0 %v1416
          %2610 = vmatpush1.msra.mxu0 %v1415
          %2611 = vmatprep.subr.mxu0 %v1448
          %2612 = vmatpush1.msra.mxu0 %v1447
          %2613 = vmatprep.subr.mxu0 %v1480
          %2614 = vmatpush1.msra.mxu0 %v1479
          %2615 = vmatprep.subr.mxu0 %v1512
          %2616 = vmatpush1.msra.mxu0 %v1511
          %2617 = vmatprep.subr.mxu0 %v1544
          %2618 = vmatpush1.msra.mxu0 %v1543
          %2619 = vmatprep.subr.mxu0 %v1576
          %2620 = vmatpush1.msra.mxu0 %v1575
          %2621 = vmatprep.subr.mxu0 %v1608
          %2622 = vmatpush1.msra.mxu0 %v1607
          %2623 = vmatprep.subr.mxu0 %v1640
          %2624 = vmatpush1.msra.mxu0 %v1639
          %2625 = vmatprep.subr.mxu0 %v1672
          %2626 = vmatpush1.msra.mxu0 %v1671
          %2627 = vmatprep.subr.mxu0 %v1704
          %2628 = vmatpush1.msra.mxu0 %v1703
          %2629 = vmatprep.subr.mxu0 %v1736
          %2630 = vmatpush1.msra.mxu0 %v1735
          %2631 = vmatprep.mubr.f32.mxu0 %v1761
          %2632 = vmatmul.mubr.f32.gmra.mrb[0].mxu0 %v1757
          %v2633 = vpop.f32.mrb[0].mxu0
          %v2634 = vadd.f32 %v1843, %v2633
          %v2635 = vpop.f32.mrb[0].mxu0
          %v2636 = vadd.f32 %v1847, %v2635
          %2637 = vdwg.mxu0
          %2638 = vmatprep.subr.mxu0 %v746
          %2639 = vmatpush1.msra.mxu0 %v745
          %2640 = vmatprep.subr.mxu0 %v778
          %2641 = vmatpush1.msra.mxu0 %v777
          %2642 = vmatprep.subr.mxu0 %v810
          %2643 = vmatpush1.msra.mxu0 %v809
          %2644 = vmatprep.subr.mxu0 %v842
          %2645 = vmatpush1.msra.mxu0 %v841
          %2646 = vmatprep.subr.mxu0 %v874
          %2647 = vmatpush1.msra.mxu0 %v873
          %2648 = vmatprep.subr.mxu0 %v906
          %2649 = vmatpush1.msra.mxu0 %v905
          %2650 = vmatprep.subr.mxu0 %v938
          %2651 = vmatpush1.msra.mxu0 %v937
          %2652 = vmatprep.subr.mxu0 %v970
          %2653 = vmatpush1.msra.mxu0 %v969
          %2654 = vmatprep.subr.mxu0 %v1002
          %2655 = vmatpush1.msra.mxu0 %v1001
          %2656 = vmatprep.subr.mxu0 %v1034
          %2657 = vmatpush1.msra.mxu0 %v1033
          %2658 = vmatprep.subr.mxu0 %v1066
          %2659 = vmatpush1.msra.mxu0 %v1065
          %2660 = vmatprep.subr.mxu0 %v1098
          %2661 = vmatpush1.msra.mxu0 %v1097
          %2662 = vmatprep.subr.mxu0 %v1130
          %2663 = vmatpush1.msra.mxu0 %v1129
          %2664 = vmatprep.subr.mxu0 %v1162
          %2665 = vmatpush1.msra.mxu0 %v1161
          %2666 = vmatprep.subr.mxu0 %v1194
          %2667 = vmatpush1.msra.mxu0 %v1193
          %2668 = vmatprep.subr.mxu0 %v1226
          %2669 = vmatpush1.msra.mxu0 %v1225
          %2670 = vmatprep.subr.mxu0 %v1258
          %2671 = vmatpush1.msra.mxu0 %v1257
          %2672 = vmatprep.subr.mxu0 %v1290
          %2673 = vmatpush1.msra.mxu0 %v1289
          %2674 = vmatprep.subr.mxu0 %v1322
          %2675 = vmatpush1.msra.mxu0 %v1321
          %2676 = vmatprep.subr.mxu0 %v1354
          %2677 = vmatpush1.msra.mxu0 %v1353
          %2678 = vmatprep.subr.mxu0 %v1386
          %2679 = vmatpush1.msra.mxu0 %v1385
          %2680 = vmatprep.subr.mxu0 %v1418
          %2681 = vmatpush1.msra.mxu0 %v1417
          %2682 = vmatprep.subr.mxu0 %v1450
          %2683 = vmatpush1.msra.mxu0 %v1449
          %2684 = vmatprep.subr.mxu0 %v1482
          %2685 = vmatpush1.msra.mxu0 %v1481
          %2686 = vmatprep.subr.mxu0 %v1514
          %2687 = vmatpush1.msra.mxu0 %v1513
          %2688 = vmatprep.subr.mxu0 %v1546
          %2689 = vmatpush1.msra.mxu0 %v1545
          %2690 = vmatprep.subr.mxu0 %v1578
          %2691 = vmatpush1.msra.mxu0 %v1577
          %2692 = vmatprep.subr.mxu0 %v1610
          %2693 = vmatpush1.msra.mxu0 %v1609
          %2694 = vmatprep.subr.mxu0 %v1642
          %2695 = vmatpush1.msra.mxu0 %v1641
          %2696 = vmatprep.subr.mxu0 %v1674
          %2697 = vmatpush1.msra.mxu0 %v1673
          %2698 = vmatprep.subr.mxu0 %v1706
          %2699 = vmatpush1.msra.mxu0 %v1705
          %2700 = vmatprep.subr.mxu0 %v1738
          %2701 = vmatpush1.msra.mxu0 %v1737
          %2702 = vmatprep.mubr.f32.mxu0 %v1761
          %2703 = vmatmul.mubr.f32.gmra.mrb[0].mxu0 %v1757
          %v2704 = vpop.f32.mrb[0].mxu0
          %v2705 = vadd.f32 %v1851, %v2704
          %v2706 = vpop.f32.mrb[0].mxu0
          %v2707 = vadd.f32 %v1855, %v2706
          %2708 = vdwg.mxu0
          %2709 = vmatprep.subr.mxu0 %v748
          %2710 = vmatpush1.msra.mxu0 %v747
          %2711 = vmatprep.subr.mxu0 %v780
          %2712 = vmatpush1.msra.mxu0 %v779
          %2713 = vmatprep.subr.mxu0 %v812
          %2714 = vmatpush1.msra.mxu0 %v811
          %2715 = vmatprep.subr.mxu0 %v844
          %2716 = vmatpush1.msra.mxu0 %v843
          %2717 = vmatprep.subr.mxu0 %v876
          %2718 = vmatpush1.msra.mxu0 %v875
          %2719 = vmatprep.subr.mxu0 %v908
          %2720 = vmatpush1.msra.mxu0 %v907
          %2721 = vmatprep.subr.mxu0 %v940
          %2722 = vmatpush1.msra.mxu0 %v939
          %2723 = vmatprep.subr.mxu0 %v972
          %2724 = vmatpush1.msra.mxu0 %v971
          %2725 = vmatprep.subr.mxu0 %v1004
          %2726 = vmatpush1.msra.mxu0 %v1003
          %2727 = vmatprep.subr.mxu0 %v1036
          %2728 = vmatpush1.msra.mxu0 %v1035
          %2729 = vmatprep.subr.mxu0 %v1068
          %2730 = vmatpush1.msra.mxu0 %v1067
          %2731 = vmatprep.subr.mxu0 %v1100
          %2732 = vmatpush1.msra.mxu0 %v1099
          %2733 = vmatprep.subr.mxu0 %v1132
          %2734 = vmatpush1.msra.mxu0 %v1131
          %2735 = vmatprep.subr.mxu0 %v1164
          %2736 = vmatpush1.msra.mxu0 %v1163
          %2737 = vmatprep.subr.mxu0 %v1196
          %2738 = vmatpush1.msra.mxu0 %v1195
          %2739 = vmatprep.subr.mxu0 %v1228
          %2740 = vmatpush1.msra.mxu0 %v1227
          %2741 = vmatprep.subr.mxu0 %v1260
          %2742 = vmatpush1.msra.mxu0 %v1259
          %2743 = vmatprep.subr.mxu0 %v1292
          %2744 = vmatpush1.msra.mxu0 %v1291
          %2745 = vmatprep.subr.mxu0 %v1324
          %2746 = vmatpush1.msra.mxu0 %v1323
          %2747 = vmatprep.subr.mxu0 %v1356
          %2748 = vmatpush1.msra.mxu0 %v1355
          %2749 = vmatprep.subr.mxu0 %v1388
          %2750 = vmatpush1.msra.mxu0 %v1387
          %2751 = vmatprep.subr.mxu0 %v1420
          %2752 = vmatpush1.msra.mxu0 %v1419
          %2753 = vmatprep.subr.mxu0 %v1452
          %2754 = vmatpush1.msra.mxu0 %v1451
          %2755 = vmatprep.subr.mxu0 %v1484
          %2756 = vmatpush1.msra.mxu0 %v1483
          %2757 = vmatprep.subr.mxu0 %v1516
          %2758 = vmatpush1.msra.mxu0 %v1515
          %2759 = vmatprep.subr.mxu0 %v1548
          %2760 = vmatpush1.msra.mxu0 %v1547
          %2761 = vmatprep.subr.mxu0 %v1580
          %2762 = vmatpush1.msra.mxu0 %v1579
          %2763 = vmatprep.subr.mxu0 %v1612
          %2764 = vmatpush1.msra.mxu0 %v1611
          %2765 = vmatprep.subr.mxu0 %v1644
          %2766 = vmatpush1.msra.mxu0 %v1643
          %2767 = vmatprep.subr.mxu0 %v1676
          %2768 = vmatpush1.msra.mxu0 %v1675
          %2769 = vmatprep.subr.mxu0 %v1708
          %2770 = vmatpush1.msra.mxu0 %v1707
          %2771 = vmatprep.subr.mxu0 %v1740
          %2772 = vmatpush1.msra.mxu0 %v1739
          %2773 = vmatprep.mubr.f32.mxu0 %v1761
          %2774 = vmatmul.mubr.f32.gmra.mrb[0].mxu0 %v1757
          %v2775 = vpop.f32.mrb[0].mxu0
          %v2776 = vadd.f32 %v1859, %v2775
          %v2777 = vpop.f32.mrb[0].mxu0
          %v2778 = vadd.f32 %v1863, %v2777
          %2779 = vdwg.mxu0
          %2780 = vmatprep.subr.mxu0 %v750
          %2781 = vmatpush1.msra.mxu0 %v749
          %2782 = vmatprep.subr.mxu0 %v782
          %2783 = vmatpush1.msra.mxu0 %v781
          %2784 = vmatprep.subr.mxu0 %v814
          %2785 = vmatpush1.msra.mxu0 %v813
          %2786 = vmatprep.subr.mxu0 %v846
          %2787 = vmatpush1.msra.mxu0 %v845
          %2788 = vmatprep.subr.mxu0 %v878
          %2789 = vmatpush1.msra.mxu0 %v877
          %2790 = vmatprep.subr.mxu0 %v910
          %2791 = vmatpush1.msra.mxu0 %v909
          %2792 = vmatprep.subr.mxu0 %v942
          %2793 = vmatpush1.msra.mxu0 %v941
          %2794 = vmatprep.subr.mxu0 %v974
          %2795 = vmatpush1.msra.mxu0 %v973
          %2796 = vmatprep.subr.mxu0 %v1006
          %2797 = vmatpush1.msra.mxu0 %v1005
          %2798 = vmatprep.subr.mxu0 %v1038
          %2799 = vmatpush1.msra.mxu0 %v1037
          %2800 = vmatprep.subr.mxu0 %v1070
          %2801 = vmatpush1.msra.mxu0 %v1069
          %2802 = vmatprep.subr.mxu0 %v1102
          %2803 = vmatpush1.msra.mxu0 %v1101
          %2804 = vmatprep.subr.mxu0 %v1134
          %2805 = vmatpush1.msra.mxu0 %v1133
          %2806 = vmatprep.subr.mxu0 %v1166
          %2807 = vmatpush1.msra.mxu0 %v1165
          %2808 = vmatprep.subr.mxu0 %v1198
          %2809 = vmatpush1.msra.mxu0 %v1197
          %2810 = vmatprep.subr.mxu0 %v1230
          %2811 = vmatpush1.msra.mxu0 %v1229
          %2812 = vmatprep.subr.mxu0 %v1262
          %2813 = vmatpush1.msra.mxu0 %v1261
          %2814 = vmatprep.subr.mxu0 %v1294
          %2815 = vmatpush1.msra.mxu0 %v1293
          %2816 = vmatprep.subr.mxu0 %v1326
          %2817 = vmatpush1.msra.mxu0 %v1325
          %2818 = vmatprep.subr.mxu0 %v1358
          %2819 = vmatpush1.msra.mxu0 %v1357
          %2820 = vmatprep.subr.mxu0 %v1390
          %2821 = vmatpush1.msra.mxu0 %v1389
          %2822 = vmatprep.subr.mxu0 %v1422
          %2823 = vmatpush1.msra.mxu0 %v1421
          %2824 = vmatprep.subr.mxu0 %v1454
          %2825 = vmatpush1.msra.mxu0 %v1453
          %2826 = vmatprep.subr.mxu0 %v1486
          %2827 = vmatpush1.msra.mxu0 %v1485
          %2828 = vmatprep.subr.mxu0 %v1518
          %2829 = vmatpush1.msra.mxu0 %v1517
          %2830 = vmatprep.subr.mxu0 %v1550
          %2831 = vmatpush1.msra.mxu0 %v1549
          %2832 = vmatprep.subr.mxu0 %v1582
          %2833 = vmatpush1.msra.mxu0 %v1581
          %2834 = vmatprep.subr.mxu0 %v1614
          %2835 = vmatpush1.msra.mxu0 %v1613
          %2836 = vmatprep.subr.mxu0 %v1646
          %2837 = vmatpush1.msra.mxu0 %v1645
          %2838 = vmatprep.subr.mxu0 %v1678
          %2839 = vmatpush1.msra.mxu0 %v1677
          %2840 = vmatprep.subr.mxu0 %v1710
          %2841 = vmatpush1.msra.mxu0 %v1709
          %2842 = vmatprep.subr.mxu0 %v1742
          %2843 = vmatpush1.msra.mxu0 %v1741
          %2844 = vmatprep.mubr.f32.mxu0 %v1761
          %2845 = vmatmul.mubr.f32.gmra.mrb[0].mxu0 %v1757
          %v2846 = vpop.f32.mrb[0].mxu0
          %v2847 = vadd.f32 %v1867, %v2846
          %v2848 = vpop.f32.mrb[0].mxu0
          %v2849 = vadd.f32 %v1871, %v2848
          %2850 = vdwg.mxu0
          %2851 = vmatprep.subr.mxu0 %v752
          %2852 = vmatpush1.msra.mxu0 %v751
          %2853 = vmatprep.subr.mxu0 %v784
          %2854 = vmatpush1.msra.mxu0 %v783
          %2855 = vmatprep.subr.mxu0 %v816
          %2856 = vmatpush1.msra.mxu0 %v815
          %2857 = vmatprep.subr.mxu0 %v848
          %2858 = vmatpush1.msra.mxu0 %v847
          %2859 = vmatprep.subr.mxu0 %v880
          %2860 = vmatpush1.msra.mxu0 %v879
          %2861 = vmatprep.subr.mxu0 %v912
          %2862 = vmatpush1.msra.mxu0 %v911
          %2863 = vmatprep.subr.mxu0 %v944
          %2864 = vmatpush1.msra.mxu0 %v943
          %2865 = vmatprep.subr.mxu0 %v976
          %2866 = vmatpush1.msra.mxu0 %v975
          %2867 = vmatprep.subr.mxu0 %v1008
          %2868 = vmatpush1.msra.mxu0 %v1007
          %2869 = vmatprep.subr.mxu0 %v1040
          %2870 = vmatpush1.msra.mxu0 %v1039
          %2871 = vmatprep.subr.mxu0 %v1072
          %2872 = vmatpush1.msra.mxu0 %v1071
          %2873 = vmatprep.subr.mxu0 %v1104
          %2874 = vmatpush1.msra.mxu0 %v1103
          %2875 = vmatprep.subr.mxu0 %v1136
          %2876 = vmatpush1.msra.mxu0 %v1135
          %2877 = vmatprep.subr.mxu0 %v1168
          %2878 = vmatpush1.msra.mxu0 %v1167
          %2879 = vmatprep.subr.mxu0 %v1200
          %2880 = vmatpush1.msra.mxu0 %v1199
          %2881 = vmatprep.subr.mxu0 %v1232
          %2882 = vmatpush1.msra.mxu0 %v1231
          %2883 = vmatprep.subr.mxu0 %v1264
          %2884 = vmatpush1.msra.mxu0 %v1263
          %2885 = vmatprep.subr.mxu0 %v1296
          %2886 = vmatpush1.msra.mxu0 %v1295
          %2887 = vmatprep.subr.mxu0 %v1328
          %2888 = vmatpush1.msra.mxu0 %v1327
          %2889 = vmatprep.subr.mxu0 %v1360
          %2890 = vmatpush1.msra.mxu0 %v1359
          %2891 = vmatprep.subr.mxu0 %v1392
          %2892 = vmatpush1.msra.mxu0 %v1391
          %2893 = vmatprep.subr.mxu0 %v1424
          %2894 = vmatpush1.msra.mxu0 %v1423
          %2895 = vmatprep.subr.mxu0 %v1456
          %2896 = vmatpush1.msra.mxu0 %v1455
          %2897 = vmatprep.subr.mxu0 %v1488
          %2898 = vmatpush1.msra.mxu0 %v1487
          %2899 = vmatprep.subr.mxu0 %v1520
          %2900 = vmatpush1.msra.mxu0 %v1519
          %2901 = vmatprep.subr.mxu0 %v1552
          %2902 = vmatpush1.msra.mxu0 %v1551
          %2903 = vmatprep.subr.mxu0 %v1584
          %2904 = vmatpush1.msra.mxu0 %v1583
          %2905 = vmatprep.subr.mxu0 %v1616
          %2906 = vmatpush1.msra.mxu0 %v1615
          %2907 = vmatprep.subr.mxu0 %v1648
          %2908 = vmatpush1.msra.mxu0 %v1647
          %2909 = vmatprep.subr.mxu0 %v1680
          %2910 = vmatpush1.msra.mxu0 %v1679
          %2911 = vmatprep.subr.mxu0 %v1712
          %2912 = vmatpush1.msra.mxu0 %v1711
          %2913 = vmatprep.subr.mxu0 %v1744
          %2914 = vmatpush1.msra.mxu0 %v1743
          %2915 = vmatprep.mubr.f32.mxu0 %v1761
          %2916 = vmatmul.mubr.f32.gmra.mrb[0].mxu0 %v1757
          %v2917 = vpop.f32.mrb[0].mxu0
          %v2918 = vadd.f32 %v1875, %v2917
          %v2919 = vpop.f32.mrb[0].mxu0
          %v2920 = vadd.f32 %v1879, %v2919
          %2921 = vdwg.mxu0
          %2922 = vmatprep.subr.mxu0 %v754
          %2923 = vmatpush1.msra.mxu0 %v753
          %2924 = vmatprep.subr.mxu0 %v786
          %2925 = vmatpush1.msra.mxu0 %v785
          %2926 = vmatprep.subr.mxu0 %v818
          %2927 = vmatpush1.msra.mxu0 %v817
          %2928 = vmatprep.subr.mxu0 %v850
          %2929 = vmatpush1.msra.mxu0 %v849
          %2930 = vmatprep.subr.mxu0 %v882
          %2931 = vmatpush1.msra.mxu0 %v881
          %2932 = vmatprep.subr.mxu0 %v914
          %2933 = vmatpush1.msra.mxu0 %v913
          %2934 = vmatprep.subr.mxu0 %v946
          %2935 = vmatpush1.msra.mxu0 %v945
          %2936 = vmatprep.subr.mxu0 %v978
          %2937 = vmatpush1.msra.mxu0 %v977
          %2938 = vmatprep.subr.mxu0 %v1010
          %2939 = vmatpush1.msra.mxu0 %v1009
          %2940 = vmatprep.subr.mxu0 %v1042
          %2941 = vmatpush1.msra.mxu0 %v1041
          %2942 = vmatprep.subr.mxu0 %v1074
          %2943 = vmatpush1.msra.mxu0 %v1073
          %2944 = vmatprep.subr.mxu0 %v1106
          %2945 = vmatpush1.msra.mxu0 %v1105
          %2946 = vmatprep.subr.mxu0 %v1138
          %2947 = vmatpush1.msra.mxu0 %v1137
          %2948 = vmatprep.subr.mxu0 %v1170
          %2949 = vmatpush1.msra.mxu0 %v1169
          %2950 = vmatprep.subr.mxu0 %v1202
          %2951 = vmatpush1.msra.mxu0 %v1201
          %2952 = vmatprep.subr.mxu0 %v1234
          %2953 = vmatpush1.msra.mxu0 %v1233
          %2954 = vmatprep.subr.mxu0 %v1266
          %2955 = vmatpush1.msra.mxu0 %v1265
          %2956 = vmatprep.subr.mxu0 %v1298
          %2957 = vmatpush1.msra.mxu0 %v1297
          %2958 = vmatprep.subr.mxu0 %v1330
          %2959 = vmatpush1.msra.mxu0 %v1329
          %2960 = vmatprep.subr.mxu0 %v1362
          %2961 = vmatpush1.msra.mxu0 %v1361
          %2962 = vmatprep.subr.mxu0 %v1394
          %2963 = vmatpush1.msra.mxu0 %v1393
          %2964 = vmatprep.subr.mxu0 %v1426
          %2965 = vmatpush1.msra.mxu0 %v1425
          %2966 = vmatprep.subr.mxu0 %v1458
          %2967 = vmatpush1.msra.mxu0 %v1457
          %2968 = vmatprep.subr.mxu0 %v1490
          %2969 = vmatpush1.msra.mxu0 %v1489
          %2970 = vmatprep.subr.mxu0 %v1522
          %2971 = vmatpush1.msra.mxu0 %v1521
          %2972 = vmatprep.subr.mxu0 %v1554
          %2973 = vmatpush1.msra.mxu0 %v1553
          %2974 = vmatprep.subr.mxu0 %v1586
          %2975 = vmatpush1.msra.mxu0 %v1585
          %2976 = vmatprep.subr.mxu0 %v1618
          %2977 = vmatpush1.msra.mxu0 %v1617
          %2978 = vmatprep.subr.mxu0 %v1650
          %2979 = vmatpush1.msra.mxu0 %v1649
          %2980 = vmatprep.subr.mxu0 %v1682
          %2981 = vmatpush1.msra.mxu0 %v1681
          %2982 = vmatprep.subr.mxu0 %v1714
          %2983 = vmatpush1.msra.mxu0 %v1713
          %2984 = vmatprep.subr.mxu0 %v1746
          %2985 = vmatpush1.msra.mxu0 %v1745
          %2986 = vmatprep.mubr.f32.mxu0 %v1761
          %2987 = vmatmul.mubr.f32.gmra.mrb[0].mxu0 %v1757
          %v2988 = vpop.f32.mrb[0].mxu0
          %v2989 = vadd.f32 %v1883, %v2988
          %v2990 = vpop.f32.mrb[0].mxu0
          %v2991 = vadd.f32 %v1887, %v2990
          %2992 = vdwg.mxu0
          %2993 = vmatprep.subr.mxu0 %v756
          %2994 = vmatpush1.msra.mxu0 %v755
          %2995 = vmatprep.subr.mxu0 %v788
          %2996 = vmatpush1.msra.mxu0 %v787
          %2997 = vmatprep.subr.mxu0 %v820
          %2998 = vmatpush1.msra.mxu0 %v819
          %2999 = vmatprep.subr.mxu0 %v852
          %3000 = vmatpush1.msra.mxu0 %v851
          %3001 = vmatprep.subr.mxu0 %v884
          %3002 = vmatpush1.msra.mxu0 %v883
          %3003 = vmatprep.subr.mxu0 %v916
          %3004 = vmatpush1.msra.mxu0 %v915
          %3005 = vmatprep.subr.mxu0 %v948
          %3006 = vmatpush1.msra.mxu0 %v947
          %3007 = vmatprep.subr.mxu0 %v980
          %3008 = vmatpush1.msra.mxu0 %v979
          %3009 = vmatprep.subr.mxu0 %v1012
          %3010 = vmatpush1.msra.mxu0 %v1011
          %3011 = vmatprep.subr.mxu0 %v1044
          %3012 = vmatpush1.msra.mxu0 %v1043
          %3013 = vmatprep.subr.mxu0 %v1076
          %3014 = vmatpush1.msra.mxu0 %v1075
          %3015 = vmatprep.subr.mxu0 %v1108
          %3016 = vmatpush1.msra.mxu0 %v1107
          %3017 = vmatprep.subr.mxu0 %v1140
          %3018 = vmatpush1.msra.mxu0 %v1139
          %3019 = vmatprep.subr.mxu0 %v1172
          %3020 = vmatpush1.msra.mxu0 %v1171
          %3021 = vmatprep.subr.mxu0 %v1204
          %3022 = vmatpush1.msra.mxu0 %v1203
          %3023 = vmatprep.subr.mxu0 %v1236
          %3024 = vmatpush1.msra.mxu0 %v1235
          %3025 = vmatprep.subr.mxu0 %v1268
          %3026 = vmatpush1.msra.mxu0 %v1267
          %3027 = vmatprep.subr.mxu0 %v1300
          %3028 = vmatpush1.msra.mxu0 %v1299
          %3029 = vmatprep.subr.mxu0 %v1332
          %3030 = vmatpush1.msra.mxu0 %v1331
          %3031 = vmatprep.subr.mxu0 %v1364
          %3032 = vmatpush1.msra.mxu0 %v1363
          %3033 = vmatprep.subr.mxu0 %v1396
          %3034 = vmatpush1.msra.mxu0 %v1395
          %3035 = vmatprep.subr.mxu0 %v1428
          %3036 = vmatpush1.msra.mxu0 %v1427
          %3037 = vmatprep.subr.mxu0 %v1460
          %3038 = vmatpush1.msra.mxu0 %v1459
          %3039 = vmatprep.subr.mxu0 %v1492
          %3040 = vmatpush1.msra.mxu0 %v1491
          %3041 = vmatprep.subr.mxu0 %v1524
          %3042 = vmatpush1.msra.mxu0 %v1523
          %3043 = vmatprep.subr.mxu0 %v1556
          %3044 = vmatpush1.msra.mxu0 %v1555
          %3045 = vmatprep.subr.mxu0 %v1588
          %3046 = vmatpush1.msra.mxu0 %v1587
          %3047 = vmatprep.subr.mxu0 %v1620
          %3048 = vmatpush1.msra.mxu0 %v1619
          %3049 = vmatprep.subr.mxu0 %v1652
          %3050 = vmatpush1.msra.mxu0 %v1651
          %3051 = vmatprep.subr.mxu0 %v1684
          %3052 = vmatpush1.msra.mxu0 %v1683
          %3053 = vmatprep.subr.mxu0 %v1716
          %3054 = vmatpush1.msra.mxu0 %v1715
          %3055 = vmatprep.subr.mxu0 %v1748
          %3056 = vmatpush1.msra.mxu0 %v1747
          %3057 = vmatprep.mubr.f32.mxu0 %v1761
          %3058 = vmatmul.mubr.f32.gmra.mrb[0].mxu0 %v1757
          %v3059 = vpop.f32.mrb[0].mxu0
          %v3060 = vadd.f32 %v1891, %v3059
          %v3061 = vpop.f32.mrb[0].mxu0
          %v3062 = vadd.f32 %v1895, %v3061
          %3063 = vdwg.mxu0
          %v3096 = vcombine.low %v1995, %v1997
          %v3097 = vcombine.low %v2066, %v2068
          %v3098 = vcombine.low %v2137, %v2139
          %v3099 = vcombine.low %v2208, %v2210
          %v3101 = vunpack.c.l.s4 1966171168
          %v3102 = vunpack.c.0.s8 %v3101
          %v3103 = vlaneseq
          %v3104 = vshrl.u32 %v3103, 7
          %v3105 = vsub.s32 %v3102, %v3104
          %v3106 = vrot.slane %v3096, %v3105
          %v3108 = vunpack.c.l.s4 1966171168
          %v3109 = vunpack.c.0.s8 %v3108
          %v3110 = vlaneseq
          %v3111 = vshrl.u32 %v3110, 7
          %v3112 = vsub.s32 %v3109, %v3111
          %v3113 = vrot.slane %v3097, %v3112
          %v3115 = vunpack.c.l.s4 1966171168
          %v3116 = vunpack.c.0.s8 %v3115
          %v3117 = vlaneseq
          %v3118 = vshrl.u32 %v3117, 7
          %v3119 = vsub.s32 %v3116, %v3118
          %v3120 = vrot.slane %v3098, %v3119
          %v3122 = vunpack.c.l.s4 1966171168
          %v3123 = vunpack.c.0.s8 %v3122
          %v3124 = vlaneseq
          %v3125 = vshrl.u32 %v3124, 7
          %v3126 = vsub.s32 %v3123, %v3125
          %v3127 = vrot.slane %v3099, %v3126
          %v3128 = vcombine.low %v3106, %v3113
          %v3129 = vcombine.low %v3120, %v3127
          %v3131 = vunpack.c.l.s4 1966171168
          %v3132 = vunpack.c.0.s8 %v3131
          %v3133 = vlaneseq
          %v3134 = vshrl.u32 %v3133, 7
          %v3135 = vsub.s32 %v3132, %v3134
          %v3136 = vrot.slane %v3128, %v3135
          %v3138 = vunpack.c.l.s4 1966171168
          %v3139 = vunpack.c.0.s8 %v3138
          %v3140 = vlaneseq
          %v3141 = vshrl.u32 %v3140, 7
          %v3142 = vsub.s32 %v3139, %v3141
          %v3143 = vrot.slane %v3129, %v3142
          %v3144 = vcombine.low %v3136, %v3143
          %v3145 = vcombine.low %v2279, %v2281
          %v3146 = vcombine.low %v2350, %v2352
          %v3147 = vcombine.low %v2421, %v2423
          %v3148 = vcombine.low %v2492, %v2494
          %v3150 = vunpack.c.l.s4 1966171168
          %v3151 = vunpack.c.0.s8 %v3150
          %v3152 = vlaneseq
          %v3153 = vshrl.u32 %v3152, 7
          %v3154 = vsub.s32 %v3151, %v3153
          %v3155 = vrot.slane %v3145, %v3154
          %v3157 = vunpack.c.l.s4 1966171168
          %v3158 = vunpack.c.0.s8 %v3157
          %v3159 = vlaneseq
          %v3160 = vshrl.u32 %v3159, 7
          %v3161 = vsub.s32 %v3158, %v3160
          %v3162 = vrot.slane %v3146, %v3161
          %v3164 = vunpack.c.l.s4 1966171168
          %v3165 = vunpack.c.0.s8 %v3164
          %v3166 = vlaneseq
          %v3167 = vshrl.u32 %v3166, 7
          %v3168 = vsub.s32 %v3165, %v3167
          %v3169 = vrot.slane %v3147, %v3168
          %v3171 = vunpack.c.l.s4 1966171168
          %v3172 = vunpack.c.0.s8 %v3171
          %v3173 = vlaneseq
          %v3174 = vshrl.u32 %v3173, 7
          %v3175 = vsub.s32 %v3172, %v3174
          %v3176 = vrot.slane %v3148, %v3175
          %v3177 = vcombine.low %v3155, %v3162
          %v3178 = vcombine.low %v3169, %v3176
          %v3180 = vunpack.c.l.s4 1966171168
          %v3181 = vunpack.c.0.s8 %v3180
          %v3182 = vlaneseq
          %v3183 = vshrl.u32 %v3182, 7
          %v3184 = vsub.s32 %v3181, %v3183
          %v3185 = vrot.slane %v3177, %v3184
          %v3187 = vunpack.c.l.s4 1966171168
          %v3188 = vunpack.c.0.s8 %v3187
          %v3189 = vlaneseq
          %v3190 = vshrl.u32 %v3189, 7
          %v3191 = vsub.s32 %v3188, %v3190
          %v3192 = vrot.slane %v3178, %v3191
          %v3193 = vcombine.low %v3185, %v3192
          %v3194 = vcombine.low %v2563, %v2565
          %v3195 = vcombine.low %v2634, %v2636
          %v3196 = vcombine.low %v2705, %v2707
          %v3197 = vcombine.low %v2776, %v2778
          %v3199 = vunpack.c.l.s4 1966171168
          %v3200 = vunpack.c.0.s8 %v3199
          %v3201 = vlaneseq
          %v3202 = vshrl.u32 %v3201, 7
          %v3203 = vsub.s32 %v3200, %v3202
          %v3204 = vrot.slane %v3194, %v3203
          %v3206 = vunpack.c.l.s4 1966171168
          %v3207 = vunpack.c.0.s8 %v3206
          %v3208 = vlaneseq
          %v3209 = vshrl.u32 %v3208, 7
          %v3210 = vsub.s32 %v3207, %v3209
          %v3211 = vrot.slane %v3195, %v3210
          %v3213 = vunpack.c.l.s4 1966171168
          %v3214 = vunpack.c.0.s8 %v3213
          %v3215 = vlaneseq
          %v3216 = vshrl.u32 %v3215, 7
          %v3217 = vsub.s32 %v3214, %v3216
          %v3218 = vrot.slane %v3196, %v3217
          %v3220 = vunpack.c.l.s4 1966171168
          %v3221 = vunpack.c.0.s8 %v3220
          %v3222 = vlaneseq
          %v3223 = vshrl.u32 %v3222, 7
          %v3224 = vsub.s32 %v3221, %v3223
          %v3225 = vrot.slane %v3197, %v3224
          %v3226 = vcombine.low %v3204, %v3211
          %v3227 = vcombine.low %v3218, %v3225
          %v3229 = vunpack.c.l.s4 1966171168
          %v3230 = vunpack.c.0.s8 %v3229
          %v3231 = vlaneseq
          %v3232 = vshrl.u32 %v3231, 7
          %v3233 = vsub.s32 %v3230, %v3232
          %v3234 = vrot.slane %v3226, %v3233
          %v3236 = vunpack.c.l.s4 1966171168
          %v3237 = vunpack.c.0.s8 %v3236
          %v3238 = vlaneseq
          %v3239 = vshrl.u32 %v3238, 7
          %v3240 = vsub.s32 %v3237, %v3239
          %v3241 = vrot.slane %v3227, %v3240
          %v3242 = vcombine.low %v3234, %v3241
          %v3243 = vcombine.low %v2847, %v2849
          %v3244 = vcombine.low %v2918, %v2920
          %v3245 = vcombine.low %v2989, %v2991
          %v3246 = vcombine.low %v3060, %v3062
          %v3248 = vunpack.c.l.s4 1966171168
          %v3249 = vunpack.c.0.s8 %v3248
          %v3250 = vlaneseq
          %v3251 = vshrl.u32 %v3250, 7
          %v3252 = vsub.s32 %v3249, %v3251
          %v3253 = vrot.slane %v3243, %v3252
          %v3255 = vunpack.c.l.s4 1966171168
          %v3256 = vunpack.c.0.s8 %v3255
          %v3257 = vlaneseq
          %v3258 = vshrl.u32 %v3257, 7
          %v3259 = vsub.s32 %v3256, %v3258
          %v3260 = vrot.slane %v3244, %v3259
          %v3262 = vunpack.c.l.s4 1966171168
          %v3263 = vunpack.c.0.s8 %v3262
          %v3264 = vlaneseq
          %v3265 = vshrl.u32 %v3264, 7
          %v3266 = vsub.s32 %v3263, %v3265
          %v3267 = vrot.slane %v3245, %v3266
          %v3269 = vunpack.c.l.s4 1966171168
          %v3270 = vunpack.c.0.s8 %v3269
          %v3271 = vlaneseq
          %v3272 = vshrl.u32 %v3271, 7
          %v3273 = vsub.s32 %v3270, %v3272
          %v3274 = vrot.slane %v3246, %v3273
          %v3275 = vcombine.low %v3253, %v3260
          %v3276 = vcombine.low %v3267, %v3274
          %v3278 = vunpack.c.l.s4 1966171168
          %v3279 = vunpack.c.0.s8 %v3278
          %v3280 = vlaneseq
          %v3281 = vshrl.u32 %v3280, 7
          %v3282 = vsub.s32 %v3279, %v3281
          %v3283 = vrot.slane %v3275, %v3282
          %v3285 = vunpack.c.l.s4 1966171168
          %v3286 = vunpack.c.0.s8 %v3285
          %v3287 = vlaneseq
          %v3288 = vshrl.u32 %v3287, 7
          %v3289 = vsub.s32 %v3286, %v3288
          %v3290 = vrot.slane %v3276, %v3289
          %v3291 = vcombine.low %v3283, %v3290
          %3296 = vst [vmem:[%s436] sm:$0xff] %v3144
          %3297 = vst [vmem:[%s436 + $0x8] sm:$0xff] %v3193
          %3298 = vst [vmem:[%s436 + $0x10] sm:$0xff] %v3242
          %3299 = vst [vmem:[%s436 + $0x18] sm:$0xff] %v3291
        $region88: #{pointnet_feat.6} parent=55 // pred_fallthru
          _
        %p3300 = scmp.lt.s32.totalorder %s28, 1
        %s3301 = scalar_select %p3300, %s28, 1
        %s3302 = smul.addr %s3301, 32
        %s3303 = scalar_lea.vmem %s9, %s3302
        // Predicated region
        $region89: #{pointnet_feat.6} parent=55 // pred_check
          %p3304 = pneg %p250
        $region90: #{pointnet_feat.6} parent=55 // pred_check_branch
          %3306 = sbr.rel (%p3304) target = $region92
        $region91: #{pointnet_feat.6} parent=55 // pred_region
          _
        $region92: #{pointnet_feat.6} parent=55 // pred_fallthru
          _
      $region56: #{pointnet_feat.6} parent=5 // pred_fallthru
        _
      %p3307 = scmp.le.s32.totalorder 2, %s19
      // Predicated region
      $region93: #{pointnet_feat.6} parent=5 // pred_check
        %p3308 = pneg %p3307
      $region94: #{pointnet_feat.6} parent=5 // pred_check_branch
        %3310 = sbr.rel (%p3308) target = $region96
      $region95: #{pointnet_feat.6} parent=5 // pred_region
        %s3311 = ssub.s32 %s19, 2
        // Predicated region
        $region97: #{pointnet_feat.6} parent=95 // pred_check
          %p3312 = pneg %p256
        $region98: #{pointnet_feat.6} parent=95 // pred_check_branch
          %3314 = sbr.rel (%p3312) target = $region100
        $region99: #{pointnet_feat.6} parent=95 // pred_region
          %p3315 = scmp.lt.s32.totalorder %s30, 1
          %s3316 = scalar_select %p3315, %s30, 1
          %s3317 = smul.addr %s3316, 32
          %s3318 = scalar_lea.vmem %s9, %s3317
        $region100: #{pointnet_feat.6} parent=95 // pred_fallthru
          _
      $region96: #{pointnet_feat.6} parent=5 // pred_fallthru
        _
    $region6: #{pointnet_feat.6} parent=1 // loop_footer
      %s23 = sadd.s32 1, %s19
    $region7: #{pointnet_feat.6} parent=1 // loop_footer_branch
      %18 = sbr.rel target = $region3
    $region8: #{pointnet_feat.6} parent=1 // loop_exit
      _
    %3319 = vsyncpa [#allocation4], 1
    %s3320 = scalar_lea.sflag [#allocation4], 1
    %3321 = vsyncpa %s3320, 1
    %3322 = vsyncpa [#allocation6], 1
    %3323 = vsyncpa [#allocation9], 1
    %3324 = vsyncpa [#allocation12], 1

</llo_original>
